<compile_context>
chip_gen: v5e
topology: v5e:2x2
jax: 0.10.0
libtpu: 0.0.40
codegen_flags: <defaults>
</compile_context>

<pallas_src>
import functools

import jax
import jax.numpy as jnp
import numpy as np
from jax.experimental import pallas as pl
from jax.experimental.pallas import tpu as pltpu

SIGMA = 0.5
EPS = 1e-7
CROP_SIZE = 224
DS_RATIO = 16

TI = 128   # anchors handled per grid step (mapped to the 128-lane axis)
JC = 32    # j-chunk size inside the kernel (bounds 3-D intermediates to ~4 MB)


# ----------------------------------------------------------------------------
# Pallas kernel: RDLoss forward, one block of TI anchors per grid step.
# ----------------------------------------------------------------------------
def _rd_loss_kernel(feat_cs_ref, feat_b_ref, lab_col_ref, lab_row_ref,
                    lab_slab_ref, o_ref, *, n, ti, jc, sigma, eps):
    """Layout: 2-D tensors are [m (other sample, sublanes), a (anchor, lanes)];
    3-D tensors put the j (threshold sample) index on the leading axis.
    Output o[m, a] = F1[a, m] - log(D[a, m] + eps) for valid off-diagonal
    pairs, 0 elsewhere; the wrapper sums it and scales by -1/(n*(n-1))."""
    b = pl.program_id(0)
    npad = o_ref.shape[0]

    # ---- pairwise distances (exact; channels on the tiny leading axis) ----
    diff = feat_cs_ref[...] - feat_b_ref[...]                 # (C, NP, TI)
    d2 = jnp.sum(diff * diff, axis=0)                         # (NP, TI)
    f0 = -sigma * jnp.sqrt(d2)                                # F[a, m] as [m, a]

    m_idx = jax.lax.broadcasted_iota(jnp.int32, (npad, 1), 0)          # sample
    a_idx = b * ti + jax.lax.broadcasted_iota(jnp.int32, (1, ti), 1)   # anchor
    valid_m = m_idx < n                                       # (NP, 1)
    valid_a = a_idx < n                                       # (1, TI)
    offdiag = m_idx != a_idx                                  # (NP, TI)

    # ---- per-anchor row shift + softmax over m (sublane reductions) ----
    f_max = jnp.max(jnp.where(valid_m, f0, -1e30), axis=0, keepdims=True)
    f1 = f0 - f_max                                           # (NP, TI)
    e = jnp.where(valid_m, jnp.exp(f1), 0.0)
    sum_e = jnp.sum(e, axis=0, keepdims=True)                 # (1, TI)
    inv = pl.reciprocal(sum_e, approx=True)                   # EUP slot
    inv = inv * (2.0 - sum_e * inv)                           # one Newton step
    s_m = jnp.where(valid_m & offdiag, e * inv, 0.0)          # masked softmax

    # label distances R[a, m], stored [m, a]
    r_t = jnp.abs(lab_col_ref[...] - lab_row_ref[...])        # (NP, TI)

    # F1 part of every (anchor, other-sample) loss term.
    o_ref[...] = jnp.where(valid_m & valid_a & offdiag, f1, 0.0)

    # ---- D[a, j] = sum_{m != a} [R[a, m] >= R[a, j]] * softmax(F)[a, m] ----
    # j-chunked so the (JC, NP, TI) intermediates stay ~4 MB; reduction runs
    # over the sublane axis (cheap VPU adds).
    n_chunks = npad // jc

    def chunk(c, carry):
        j0 = pl.multiple_of(c * jc, jc)
        thr = jnp.abs(lab_slab_ref[pl.ds(j0, jc), :, :]
                      - lab_row_ref[...][None, :, :])          # (JC, 1, TI)
        ge = r_t[None, :, :] >= thr                            # (JC, NP, TI)
        d = jnp.sum(jnp.where(ge, s_m[None, :, :], 0.0), axis=1)   # (JC, TI)
        j_idx = j0 + jax.lax.broadcasted_iota(jnp.int32, (jc, 1), 0)
        sel = (j_idx < n) & valid_a & (j_idx != a_idx)         # (JC, TI)
        o_ref[pl.ds(j0, jc), :] = (
            o_ref[pl.ds(j0, jc), :] - jnp.where(sel, jnp.log(d + eps), 0.0))
        return carry

    jax.lax.fori_loop(0, n_chunks, chunk, 0)


def rd_loss_pallas(feat, lab, sigma=SIGMA):
    """feat: (n, C) float32, lab: (n,) float32 -> scalar RD loss."""
    n, c = feat.shape
    ti, jc = TI, JC
    npad = ((n + ti - 1) // ti) * ti
    nblk = npad // ti

    feat_p = jnp.zeros((npad, c), jnp.float32).at[:n, :].set(
        feat.astype(jnp.float32))
    lab_p = jnp.zeros((npad,), jnp.float32).at[:n].set(lab.astype(jnp.float32))

    feat_t = feat_p.T                                  # (C, NP)
    feat_cs = feat_t.reshape(c, npad, 1)               # samples on sublanes
    feat_b3 = feat_t.reshape(c, 1, npad)               # samples on lanes
    lab_col = lab_p.reshape(npad, 1)
    lab_row = lab_p.reshape(1, npad)
    lab_slab = lab_p.reshape(npad, 1, 1)               # samples on leading axis

    kernel = functools.partial(_rd_loss_kernel, n=n, ti=ti, jc=jc,
                               sigma=sigma, eps=EPS)
    out = pl.pallas_call(
        kernel,
        grid=(nblk,),
        in_specs=[
            pl.BlockSpec((c, npad, 1), lambda i: (0, 0, 0)),   # feat, [c, m, 1]
            pl.BlockSpec((c, 1, ti), lambda i: (0, 0, i)),     # feat, [c, 1, a]
            pl.BlockSpec((npad, 1), lambda i: (0, 0)),         # labels, column
            pl.BlockSpec((1, ti), lambda i: (0, i)),           # anchor labels, row
            pl.BlockSpec((npad, 1, 1), lambda i: (0, 0, 0)),   # labels, leading axis
        ],
        out_specs=pl.BlockSpec((npad, ti), lambda i: (0, i)),
        out_shape=jax.ShapeDtypeStruct((npad, nblk * ti), jnp.float32),
        compiler_params=pltpu.CompilerParams(
            dimension_semantics=("parallel",),
            vmem_limit_bytes=32 * 1024 * 1024),
    )(feat_cs, feat_b3, lab_col, lab_row, lab_slab)
    return -jnp.sum(out) / float(n * (n - 1))


# ----------------------------------------------------------------------------
# Glue: maxpool + subregion histogram + full CL1 forward
# ----------------------------------------------------------------------------
def maxpool2x2_flatten(feature):
    """(1, C, H, W) -> (P, C), P = (H//2)*(W//2); matches
    mp(feature).flatten(2).transpose(1, 2)[0].
    NOTE: per perf review this 4*P*C-element pool stays in plain JAX (XLA
    fuses it); a dedicated pallas_call costs more in launch/layout than the op."""
    _, C, H, W = feature.shape
    pooled = feature[0].reshape(C, H // 2, 2, W // 2, 2).max(axis=(2, 4))
    return pooled.reshape(C, -1).T.astype(jnp.float32)


def subregion(all_points, crop_size=CROP_SIZE, ds_ratio=DS_RATIO):
    # TODO(synk): tiny data-dependent scatter-add; kept in plain JAX glue.
    H = crop_size // ds_ratio
    idx = jnp.floor_divide(all_points, ds_ratio).astype(jnp.int32)
    x = jnp.minimum(idx[:, 0], H - 1)
    y = jnp.minimum(idx[:, 1], H - 1)
    return jnp.zeros((H, H), jnp.int32).at[y, x].add(1)


def cl1_forward(feature, points):
    assert feature.shape[0] == 1
    all_points = jnp.concatenate(points, axis=0)
    label = subregion(all_points)                       # (14, 14) int32
    pooled = maxpool2x2_flatten(feature)                # (P, C)
    lab = label.reshape(-1).astype(jnp.float32)         # (P,)
    assert pooled.shape[0] == lab.shape[0]
    return rd_loss_pallas(pooled, lab, sigma=SIGMA)


# ----------------------------------------------------------------------------
# Pure-JAX reference (mirrors the PyTorch module) for validation
# ----------------------------------------------------------------------------
def _rd_loss_ref(feature, label, sigma=SIGMA):
    F = -jnp.linalg.norm(feature[:, None, :] - feature[None, :, :], axis=-1) * sigma
    R = jnp.abs(label[:, None, :] - label[None, :, :]).sum(-1)
    F = F - jnp.max(F, axis=1, keepdims=True)
    scaled_F = jax.nn.softmax(F, axis=1)
    n = F.shape[0]
    idx = jnp.asarray(
        np.asarray([[j for j in range(n) if j != i] for i in range(n)],
                   dtype=np.int32))
    F_nd = jnp.take_along_axis(F, idx, axis=1)
    S_nd = jnp.take_along_axis(scaled_F, idx, axis=1)
    R_nd = jnp.take_along_axis(R, idx, axis=1)
    pos_F = F_nd.T
    pos_R = R_nd.T
    neg_mask = (R_nd[None, :, :] >= pos_R[:, :, None]).astype(jnp.float32)
    pos_log_probs = pos_F - jnp.log(
        (neg_mask * S_nd[None, :, :]).sum(-1) + 1e-7)
    return -(pos_log_probs / (n * (n - 1))).sum()


def _cl1_ref(feature, points):
    all_points = jnp.concatenate(points, axis=0)
    label = subregion(all_points)
    _, C, H, W = feature.shape
    pooled = feature[0].reshape(C, H // 2, 2, W // 2, 2).max(axis=(2, 4))
    feat = pooled.reshape(C, -1).T.astype(jnp.float32)
    lab = label.reshape(-1, 1).astype(jnp.float32)
    return _rd_loss_ref(feat, lab)


# ----------------------------------------------------------------------------
if __name__ == "__main__":
    key = jax.random.PRNGKey(0)
    k1, k2, k3 = jax.random.split(key, 3)
    # spatial 28x28 so pooled positions (14*14=196) match the hard-coded
    # 14x14 subregion label grid of the module.
    feature = jax.random.normal(k1, (1, 4, 28, 28), jnp.float32)
    points = [
        jax.random.uniform(k2, (12, 2), jnp.float32, 0.0, float(CROP_SIZE)),
        jax.random.uniform(k3, (8, 2), jnp.float32, 0.0, float(CROP_SIZE)),
    ]

    loss = cl1_forward(feature, points)
    loss = jax.block_until_ready(loss)

    ref = _cl1_ref(feature, points)
    assert bool(jnp.isfinite(loss))
    np.testing.assert_allclose(np.asarray(loss), np.asarray(ref),
                               rtol=2e-3, atol=2e-3)
    print("KERNEL_OK")
</pallas_src>

<mosaic_0001>
module attributes {stable_mosaic.version = 11 : i64} {
  func.func @_rd_loss_kernel(%arg0: i32, %arg1: memref<4x256x1xf32, #tpu.memory_space<vmem>>, %arg2: memref<4x1x128xf32, #tpu.memory_space<vmem>>, %arg3: memref<256x1xf32, #tpu.memory_space<vmem>>, %arg4: memref<1x128xf32, #tpu.memory_space<vmem>>, %arg5: memref<256x1x1xf32, #tpu.memory_space<vmem>>, %arg6: memref<256x128xf32, #tpu.memory_space<vmem>>) attributes {dimension_semantics = [#tpu.dimension_semantics<parallel>], iteration_bounds = array<i64: 2>, scalar_prefetch = 0 : i64, scratch_operands = 0 : i64, tpu.core_type = #tpu.core_type<tc>, window_params = [{pipeline_mode = #tpu.pipeline_mode<synchronous>, transform_indices = @transform_0, window_bounds = array<i64: 4, 256, 1>}, {transform_indices = @transform_1, window_bounds = array<i64: 4, 1, 128>}, {pipeline_mode = #tpu.pipeline_mode<synchronous>, transform_indices = @transform_2, window_bounds = array<i64: 256, 1>}, {transform_indices = @transform_3, window_bounds = array<i64: 1, 128>}, {pipeline_mode = #tpu.pipeline_mode<synchronous>, transform_indices = @transform_4, window_bounds = array<i64: 256, 1, 1>}, {transform_indices = @transform_5, window_bounds = array<i64: 256, 128>}]} {
    %c0 = arith.constant 0 : index
    %c0_0 = arith.constant 0 : index
    %c0_1 = arith.constant 0 : index
    %0 = vector.load %arg1[%c0, %c0_0, %c0_1] : memref<4x256x1xf32, #tpu.memory_space<vmem>>, vector<4x256x1xf32>
    %c0_2 = arith.constant 0 : index
    %c0_3 = arith.constant 0 : index
    %c0_4 = arith.constant 0 : index
    %1 = vector.load %arg2[%c0_2, %c0_3, %c0_4] : memref<4x1x128xf32, #tpu.memory_space<vmem>>, vector<4x1x128xf32>
    %2 = vector.broadcast %0 : vector<4x256x1xf32> to vector<4x256x128xf32>
    %3 = vector.broadcast %1 : vector<4x1x128xf32> to vector<4x256x128xf32>
    %4 = arith.subf %2, %3 : vector<4x256x128xf32>
    %5 = arith.mulf %4, %4 : vector<4x256x128xf32>
    %cst = arith.constant dense<0.000000e+00> : vector<256x128xf32>
    %6 = vector.multi_reduction <add>, %5, %cst [0] : vector<4x256x128xf32> to vector<256x128xf32>
    %7 = math.sqrt %6 : vector<256x128xf32>
    %cst_5 = arith.constant -5.000000e-01 : f32
    %8 = vector.broadcast %cst_5 : f32 to vector<256x128xf32>
    %9 = arith.mulf %8, %7 : vector<256x128xf32>
    %10 = tpu.iota {dimensions = array<i32: 0>} : vector<256x1xi32>
    %c128_i32 = arith.constant 128 : i32
    %11 = arith.muli %arg0, %c128_i32 : i32
    %12 = tpu.iota {dimensions = array<i32: 1>} : vector<1x128xi32>
    %13 = vector.broadcast %11 : i32 to vector<1x128xi32>
    %14 = arith.addi %13, %12 : vector<1x128xi32>
    %c196_i32 = arith.constant 196 : i32
    %15 = vector.broadcast %c196_i32 : i32 to vector<256x1xi32>
    %16 = arith.cmpi slt, %10, %15 : vector<256x1xi32>
    %c196_i32_6 = arith.constant 196 : i32
    %17 = vector.broadcast %c196_i32_6 : i32 to vector<1x128xi32>
    %18 = arith.cmpi slt, %14, %17 : vector<1x128xi32>
    %19 = vector.broadcast %10 : vector<256x1xi32> to vector<256x128xi32>
    %20 = vector.broadcast %14 : vector<1x128xi32> to vector<256x128xi32>
    %21 = arith.cmpi ne, %19, %20 : vector<256x128xi32>
    %cst_7 = arith.constant -1.000000e+30 : f32
    %22 = vector.shape_cast %16 : vector<256x1xi1> to vector<256x1xi1>
    %23 = vector.broadcast %22 : vector<256x1xi1> to vector<256x128xi1>
    %24 = vector.broadcast %cst_7 : f32 to vector<256x128xf32>
    %25 = arith.select %23, %9, %24 : vector<256x128xi1>, vector<256x128xf32>
    %cst_8 = arith.constant dense<0xFF800000> : vector<128xf32>
    %26 = vector.multi_reduction <maximumf>, %25, %cst_8 [0] : vector<256x128xf32> to vector<128xf32>
    %27 = vector.shape_cast %26 : vector<128xf32> to vector<1x128xf32>
    %28 = vector.broadcast %27 : vector<1x128xf32> to vector<256x128xf32>
    %29 = arith.subf %9, %28 : vector<256x128xf32>
    %30 = math.exp %29 : vector<256x128xf32>
    %cst_9 = arith.constant 0.000000e+00 : f32
    %31 = vector.shape_cast %16 : vector<256x1xi1> to vector<256x1xi1>
    %32 = vector.broadcast %31 : vector<256x1xi1> to vector<256x128xi1>
    %33 = vector.broadcast %cst_9 : f32 to vector<256x128xf32>
    %34 = arith.select %32, %30, %33 : vector<256x128xi1>, vector<256x128xf32>
    %cst_10 = arith.constant dense<0.000000e+00> : vector<128xf32>
    %35 = vector.multi_reduction <add>, %34, %cst_10 [0] : vector<256x128xf32> to vector<128xf32>
    %36 = vector.shape_cast %35 : vector<128xf32> to vector<1x128xf32>
    %37 = tpu.reciprocal %36 {approx = true} : vector<1x128xf32> -> vector<1x128xf32>
    %38 = arith.mulf %36, %37 : vector<1x128xf32>
    %cst_11 = arith.constant 2.000000e+00 : f32
    %39 = vector.broadcast %cst_11 : f32 to vector<1x128xf32>
    %40 = arith.subf %39, %38 : vector<1x128xf32>
    %41 = arith.mulf %37, %40 : vector<1x128xf32>
    %42 = vector.broadcast %16 : vector<256x1xi1> to vector<256x128xi1>
    %43 = arith.andi %42, %21 : vector<256x128xi1>
    %44 = vector.broadcast %41 : vector<1x128xf32> to vector<256x128xf32>
    %45 = arith.mulf %34, %44 : vector<256x128xf32>
    %cst_12 = arith.constant 0.000000e+00 : f32
    %46 = vector.broadcast %cst_12 : f32 to vector<256x128xf32>
    %47 = arith.select %43, %45, %46 : vector<256x128xi1>, vector<256x128xf32>
    %c0_13 = arith.constant 0 : index
    %c0_14 = arith.constant 0 : index
    %48 = vector.load %arg3[%c0_13, %c0_14] : memref<256x1xf32, #tpu.memory_space<vmem>>, vector<256x1xf32>
    %c0_15 = arith.constant 0 : index
    %c0_16 = arith.constant 0 : index
    %49 = vector.load %arg4[%c0_15, %c0_16] : memref<1x128xf32, #tpu.memory_space<vmem>>, vector<1x128xf32>
    %50 = vector.broadcast %48 : vector<256x1xf32> to vector<256x128xf32>
    %51 = vector.broadcast %49 : vector<1x128xf32> to vector<256x128xf32>
    %52 = arith.subf %50, %51 : vector<256x128xf32>
    %53 = math.absf %52 : vector<256x128xf32>
    %54 = vector.broadcast %16 : vector<256x1xi1> to vector<256x128xi1>
    %55 = vector.broadcast %18 : vector<1x128xi1> to vector<256x128xi1>
    %56 = arith.andi %54, %55 : vector<256x128xi1>
    %57 = arith.andi %56, %21 : vector<256x128xi1>
    %cst_17 = arith.constant 0.000000e+00 : f32
    %58 = vector.broadcast %cst_17 : f32 to vector<256x128xf32>
    %59 = arith.select %57, %29, %58 : vector<256x128xi1>, vector<256x128xf32>
    %c0_18 = arith.constant 0 : index
    %c0_19 = arith.constant 0 : index
    %60 = vector.load %arg6[%c0_18, %c0_19] : memref<256x128xf32, #tpu.memory_space<vmem>>, vector<256x128xf32>
    tpu.vector_store %arg6[%c0_18, %c0_19], %59 {strides = array<i32>} : memref<256x128xf32, #tpu.memory_space<vmem>>, vector<256x128xf32>,
    %c0_i32 = arith.constant 0 : i32
    %c8_i32 = arith.constant 8 : i32
    %61 = arith.addi %c0_i32, %c8_i32 : i32
    %c1_i32 = arith.constant 1 : i32
    scf.for %arg7 = %c0_i32 to %61 step %c1_i32  : i32 {
      %c32_i32 = arith.constant 32 : i32
      %62 = arith.muli %arg7, %c32_i32 : i32
      %63 = tpu.assume_multiple %62, 32 : i32
      %64 = arith.index_cast %63 : i32 to index
      %c0_21 = arith.constant 0 : index
      %c0_22 = arith.constant 0 : index
      %65 = vector.load %arg5[%64, %c0_21, %c0_22] : memref<256x1x1xf32, #tpu.memory_space<vmem>>, vector<32x1x1xf32>
      %c0_23 = arith.constant 0 : index
      %c0_24 = arith.constant 0 : index
      %66 = vector.load %arg4[%c0_23, %c0_24] : memref<1x128xf32, #tpu.memory_space<vmem>>, vector<1x128xf32>
      %67 = vector.shape_cast %66 : vector<1x128xf32> to vector<1x1x128xf32>
      %68 = vector.broadcast %65 : vector<32x1x1xf32> to vector<32x1x128xf32>
      %69 = vector.broadcast %67 : vector<1x1x128xf32> to vector<32x1x128xf32>
      %70 = arith.subf %68, %69 : vector<32x1x128xf32>
      %71 = math.absf %70 : vector<32x1x128xf32>
      %72 = vector.shape_cast %53 : vector<256x128xf32> to vector<1x256x128xf32>
      %73 = vector.broadcast %72 : vector<1x256x128xf32> to vector<32x256x128xf32>
      %74 = vector.broadcast %71 : vector<32x1x128xf32> to vector<32x256x128xf32>
      %75 = arith.cmpf oge, %73, %74 : vector<32x256x128xf32>
      %76 = vector.shape_cast %47 : vector<256x128xf32> to vector<1x256x128xf32>
      %cst_25 = arith.constant 0.000000e+00 : f32
      %77 = vector.shape_cast %76 : vector<1x256x128xf32> to vector<1x256x128xf32>
      %78 = vector.broadcast %77 : vector<1x256x128xf32> to vector<32x256x128xf32>
      %79 = vector.broadcast %cst_25 : f32 to vector<32x256x128xf32>
      %80 = arith.select %75, %78, %79 : vector<32x256x128xi1>, vector<32x256x128xf32>
      %cst_26 = arith.constant dense<0.000000e+00> : vector<32x128xf32>
      %81 = vector.multi_reduction <add>, %80, %cst_26 [1] : vector<32x256x128xf32> to vector<32x128xf32>
      %82 = tpu.iota {dimensions = array<i32: 0>} : vector<32x1xi32>
      %83 = vector.broadcast %63 : i32 to vector<32x1xi32>
      %84 = arith.addi %83, %82 : vector<32x1xi32>
      %c196_i32_27 = arith.constant 196 : i32
      %85 = vector.broadcast %c196_i32_27 : i32 to vector<32x1xi32>
      %86 = arith.cmpi slt, %84, %85 : vector<32x1xi32>
      %87 = vector.broadcast %86 : vector<32x1xi1> to vector<32x128xi1>
      %88 = vector.broadcast %18 : vector<1x128xi1> to vector<32x128xi1>
      %89 = arith.andi %87, %88 : vector<32x128xi1>
      %90 = vector.broadcast %84 : vector<32x1xi32> to vector<32x128xi32>
      %91 = vector.broadcast %14 : vector<1x128xi32> to vector<32x128xi32>
      %92 = arith.cmpi ne, %90, %91 : vector<32x128xi32>
      %93 = arith.andi %89, %92 : vector<32x128xi1>
      %94 = arith.index_cast %63 : i32 to index
      %c0_28 = arith.constant 0 : index
      %95 = vector.load %arg6[%94, %c0_28] : memref<256x128xf32, #tpu.memory_space<vmem>>, vector<32x128xf32>
      %cst_29 = arith.constant 1.000000e-07 : f32
      %96 = vector.broadcast %cst_29 : f32 to vector<32x128xf32>
      %97 = arith.addf %81, %96 : vector<32x128xf32>
      %98 = math.log %97 : vector<32x128xf32>
      %cst_30 = arith.constant 0.000000e+00 : f32
      %99 = vector.broadcast %cst_30 : f32 to vector<32x128xf32>
      %100 = arith.select %93, %98, %99 : vector<32x128xi1>, vector<32x128xf32>
      %101 = arith.subf %95, %100 : vector<32x128xf32>
      %102 = arith.index_cast %63 : i32 to index
      %c0_31 = arith.constant 0 : index
      %103 = vector.load %arg6[%102, %c0_31] : memref<256x128xf32, #tpu.memory_space<vmem>>, vector<32x128xf32>
      tpu.vector_store %arg6[%102, %c0_31], %101 {strides = array<i32>} : memref<256x128xf32, #tpu.memory_space<vmem>>, vector<32x128xf32>,
    }
    %c8_i32_20 = arith.constant 8 : i32
    return
  }
  func.func @transform_0(%arg0: i32) -> (i32, i32, i32) {
    %c0_i32 = arith.constant 0 : i32
    %c0_i32_0 = arith.constant 0 : i32
    %c0_i32_1 = arith.constant 0 : i32
    %c0_i32_2 = arith.constant 0 : i32
    return %c0_i32, %c0_i32_0, %c0_i32_1 : i32, i32, i32
  }
  func.func @transform_1(%arg0: i32) -> (i32, i32, i32) {
    %c0_i32 = arith.constant 0 : i32
    %c0_i32_0 = arith.constant 0 : i32
    %c0_i32_1 = arith.constant 0 : i32
    return %c0_i32, %c0_i32_0, %arg0 : i32, i32, i32
  }
  func.func @transform_2(%arg0: i32) -> (i32, i32) {
    %c0_i32 = arith.constant 0 : i32
    %c0_i32_0 = arith.constant 0 : i32
    %c0_i32_1 = arith.constant 0 : i32
    return %c0_i32, %c0_i32_0 : i32, i32
  }
  func.func @transform_3(%arg0: i32) -> (i32, i32) {
    %c0_i32 = arith.constant 0 : i32
    %c0_i32_0 = arith.constant 0 : i32
    return %c0_i32, %arg0 : i32, i32
  }
  func.func @transform_4(%arg0: i32) -> (i32, i32, i32) {
    %c0_i32 = arith.constant 0 : i32
    %c0_i32_0 = arith.constant 0 : i32
    %c0_i32_1 = arith.constant 0 : i32
    %c0_i32_2 = arith.constant 0 : i32
    return %c0_i32, %c0_i32_0, %c0_i32_1 : i32, i32, i32
  }
  func.func @transform_5(%arg0: i32) -> (i32, i32) {
    %c0_i32 = arith.constant 0 : i32
    %c0_i32_0 = arith.constant 0 : i32
    return %c0_i32, %arg0 : i32, i32
  }
}

</mosaic_0001>

<llo_original>
// kernel: tpu_custom_call.1
$region0: #{tpu_custom_call.1}
  #allocation0 [shape = 'u32[]', space=smem, size = 0x4, offset = 0x4, fixed_abs, tag = 'smem constant byte address 0x4 - core index']
  #allocation1 [shape = 'u32[72,128]{1,0:T(1,128)}', space=vmem, size = 0x9000, scoped, tag = 'internal scratch']
  %s0 = inlined_call_operand.vmem [shape: f32[4,256,1], index: 0, kind: input, shape index: {}]
  %s1 = inlined_call_operand.vmem [shape: f32[4,1,256], index: 1, kind: input, shape index: {}]
  %s2 = inlined_call_operand.vmem [shape: f32[256,1], index: 2, kind: input, shape index: {}]
  %s3 = inlined_call_operand.vmem [shape: f32[1,256], index: 3, kind: input, shape index: {}]
  %s4 = inlined_call_operand.vmem [shape: f32[256,1,1], index: 4, kind: input, shape index: {}]
  %s5 = inlined_call_operand.hbm [shape: f32[256,256], index: 5, kind: output, shape index: {}]
  %s6 = sld [smem:[#allocation0]]
  $region94: #{tpu_custom_call.1} parent=0
    _
  %s8 = ssub.s32 1, %s6
  %s9 = scalar_select 0, %s8, %s6
  $region1: #{tpu_custom_call.1} parent=0
    #allocation2 [shape = 'u8[4096]{0}', space=vmem, size = 0x1000, scoped, tag = 'input window, operand 1']
    #allocation3 [shape = 'u8[262144]{0}', space=vmem, size = 0x40000, scoped, tag = 'output window, operand 0']
    #allocation4 [shape = 's32[2]{0}', space=sflag, size = 0x8, scoped, tag = 'scoped memory for tpu_custom_call.1']
    %10 = vsyncpa [#allocation4], 0
    %s11 = scalar_lea.sflag [#allocation4], 1
    %12 = vsyncpa %s11, 0
    loop: start=0, step=1, limit=4
    $region2: #{tpu_custom_call.1} parent=1 // loop_pre_header
      _
    $region3: #{tpu_custom_call.1} parent=1 // loop_header
      %s14 = sphi 0, %s18
      %p15 = scmp.ge.s32.totalorder %s14, 4
      %s22 = sphi 0, %s22
      %s24 = sphi 0, %s22
      %s25 = sphi 0, %s24
      %s39 = sphi 0, %s25
      %s45 = sphi 0, %s47
      %s48 = sphi 0, %s45
      %s49 = sphi 0, %s48
      %s65 = sphi 0, %s49
      %s69 = sphi 0, %s69
      %s71 = sphi 0, %s69
      %s72 = sphi 0, %s71
      %s86 = sphi 0, %s72
      %s92 = sphi 0, %s94
      %s95 = sphi 0, %s92
      %s96 = sphi 0, %s95
      %s112 = sphi 0, %s96
      %s116 = sphi 0, %s116
      %s118 = sphi 0, %s116
      %s119 = sphi 0, %s118
      %s133 = sphi 0, %s119
      %s139 = sphi 0, %s141
      %s142 = sphi 0, %s139
      %s143 = sphi 0, %s142
      %s159 = sphi 0, %s143
    $region4: #{tpu_custom_call.1} parent=1 // loop_header_branch
      %17 = sbr.rel (%p15) target = $region8
    $region5: #{tpu_custom_call.1} parent=1 // loop_body
      %s19 = ssub.s32 %s14, 1
      %s20 = ssub.s32 %s14, 2
      %s21 = sadd.s32 %s14, 1
      %s23 = sadd.s32 %s22, 1
      %p26 = scmp.eq.s32.totalorder %s14, 1
      %p27 = scmp.ne.s32.totalorder %s22, %s24
      %p28 = scmp.eq.s32.totalorder %s14, 0
      %p29 = por %p27, %p28
      %p30 = scmp.ne.s32.totalorder %s22, %s24
      %p31 = scmp.eq.s32.totalorder %s19, 1
      %p32 = por %p30, %p31
      %p33 = scmp.ne.s32.totalorder %s24, %s25
      %p34 = scmp.eq.s32.totalorder %s19, 0
      %p35 = por %p33, %p34
      %p36 = scmp.ne.s32.totalorder %s24, %s25
      %p37 = scmp.eq.s32.totalorder %s20, 1
      %p38 = por %p36, %p37
      %p40 = scmp.ne.s32.totalorder %s25, %s39
      %p41 = scmp.eq.s32.totalorder %s20, 0
      %p42 = por %p40, %p41
      %s43 = ssub.s32 %s14, %s21
      %p44 = scmp.eq.s32.totalorder %s43, 0
      %s46 = sadd.s32 %s45, 1
      %s47 = scalar_select %p44, %s45, %s46
      %p50 = pneg %p44
      %p51 = scmp.eq.s32.totalorder %s14, 1
      %p52 = por %p50, %p51
      %p53 = scmp.ne.s32.totalorder %s45, %s48
      %p54 = scmp.eq.s32.totalorder %s14, 0
      %p55 = por %p53, %p54
      %p56 = scmp.ne.s32.totalorder %s45, %s48
      %p57 = scmp.eq.s32.totalorder %s19, 1
      %p58 = por %p56, %p57
      %p59 = scmp.ne.s32.totalorder %s48, %s49
      %p60 = scmp.eq.s32.totalorder %s19, 0
      %p61 = por %p59, %p60
      %p62 = scmp.ne.s32.totalorder %s48, %s49
      %p63 = scmp.eq.s32.totalorder %s20, 1
      %p64 = por %p62, %p63
      %p66 = scmp.ne.s32.totalorder %s49, %s65
      %p67 = scmp.eq.s32.totalorder %s20, 0
      %p68 = por %p66, %p67
      %s70 = sadd.s32 %s69, 1
      %p73 = scmp.eq.s32.totalorder %s14, 1
      %p74 = scmp.ne.s32.totalorder %s69, %s71
      %p75 = scmp.eq.s32.totalorder %s14, 0
      %p76 = por %p74, %p75
      %p77 = scmp.ne.s32.totalorder %s69, %s71
      %p78 = scmp.eq.s32.totalorder %s19, 1
      %p79 = por %p77, %p78
      %p80 = scmp.ne.s32.totalorder %s71, %s72
      %p81 = scmp.eq.s32.totalorder %s19, 0
      %p82 = por %p80, %p81
      %p83 = scmp.ne.s32.totalorder %s71, %s72
      %p84 = scmp.eq.s32.totalorder %s20, 1
      %p85 = por %p83, %p84
      %p87 = scmp.ne.s32.totalorder %s72, %s86
      %p88 = scmp.eq.s32.totalorder %s20, 0
      %p89 = por %p87, %p88
      %s90 = ssub.s32 %s14, %s21
      %p91 = scmp.eq.s32.totalorder %s90, 0
      %s93 = sadd.s32 %s92, 1
      %s94 = scalar_select %p91, %s92, %s93
      %p97 = pneg %p91
      %p98 = scmp.eq.s32.totalorder %s14, 1
      %p99 = por %p97, %p98
      %p100 = scmp.ne.s32.totalorder %s92, %s95
      %p101 = scmp.eq.s32.totalorder %s14, 0
      %p102 = por %p100, %p101
      %p103 = scmp.ne.s32.totalorder %s92, %s95
      %p104 = scmp.eq.s32.totalorder %s19, 1
      %p105 = por %p103, %p104
      %p106 = scmp.ne.s32.totalorder %s95, %s96
      %p107 = scmp.eq.s32.totalorder %s19, 0
      %p108 = por %p106, %p107
      %p109 = scmp.ne.s32.totalorder %s95, %s96
      %p110 = scmp.eq.s32.totalorder %s20, 1
      %p111 = por %p109, %p110
      %p113 = scmp.ne.s32.totalorder %s96, %s112
      %p114 = scmp.eq.s32.totalorder %s20, 0
      %p115 = por %p113, %p114
      %s117 = sadd.s32 %s116, 1
      %p120 = scmp.eq.s32.totalorder %s14, 1
      %p121 = scmp.ne.s32.totalorder %s116, %s118
      %p122 = scmp.eq.s32.totalorder %s14, 0
      %p123 = por %p121, %p122
      %p124 = scmp.ne.s32.totalorder %s116, %s118
      %p125 = scmp.eq.s32.totalorder %s19, 1
      %p126 = por %p124, %p125
      %p127 = scmp.ne.s32.totalorder %s118, %s119
      %p128 = scmp.eq.s32.totalorder %s19, 0
      %p129 = por %p127, %p128
      %p130 = scmp.ne.s32.totalorder %s118, %s119
      %p131 = scmp.eq.s32.totalorder %s20, 1
      %p132 = por %p130, %p131
      %p134 = scmp.ne.s32.totalorder %s119, %s133
      %p135 = scmp.eq.s32.totalorder %s20, 0
      %p136 = por %p134, %p135
      %s137 = ssub.s32 %s14, %s21
      %p138 = scmp.eq.s32.totalorder %s137, 0
      %s140 = sadd.s32 %s139, 1
      %s141 = scalar_select %p138, %s139, %s140
      %p144 = pneg %p138
      %p145 = scmp.eq.s32.totalorder %s14, 1
      %p146 = por %p144, %p145
      %p147 = scmp.ne.s32.totalorder %s139, %s142
      %p148 = scmp.eq.s32.totalorder %s14, 0
      %p149 = por %p147, %p148
      %p150 = scmp.ne.s32.totalorder %s139, %s142
      %p151 = scmp.eq.s32.totalorder %s19, 1
      %p152 = por %p150, %p151
      %p153 = scmp.ne.s32.totalorder %s142, %s143
      %p154 = scmp.eq.s32.totalorder %s19, 0
      %p155 = por %p153, %p154
      %p156 = scmp.ne.s32.totalorder %s142, %s143
      %p157 = scmp.eq.s32.totalorder %s20, 1
      %p158 = por %p156, %p157
      %p160 = scmp.ne.s32.totalorder %s143, %s159
      %p161 = scmp.eq.s32.totalorder %s20, 0
      %p162 = por %p160, %p161
      %p163 = scmp.le.s32.totalorder 1, %s14
      %p164 = scmp.lt.s32.totalorder %s14, 3
      %p165 = pnand %p163, %p164
      %p166 = pneg %p165
      // Predicated region
      $region9: #{tpu_custom_call.1} parent=5 // pred_check
        _
      $region10: #{tpu_custom_call.1} parent=5 // pred_check_branch
        %168 = sbr.rel (%p165) target = $region12
      $region11: #{tpu_custom_call.1} parent=5 // pred_region
        %s169 = ssub.s32 %s14, 1
        // Predicated region
        $region13: #{tpu_custom_call.1} parent=11 // pred_check
          %p170 = pneg %p35
        $region14: #{tpu_custom_call.1} parent=11 // pred_check_branch
          %172 = sbr.rel (%p170) target = $region16
        $region15: #{tpu_custom_call.1} parent=11 // pred_region
          _
        $region16: #{tpu_custom_call.1} parent=11 // pred_fallthru
          _
        // Predicated region
        $region17: #{tpu_custom_call.1} parent=11 // pred_check
          %p173 = pneg %p82
        $region18: #{tpu_custom_call.1} parent=11 // pred_check_branch
          %175 = sbr.rel (%p173) target = $region20
        $region19: #{tpu_custom_call.1} parent=11 // pred_region
          _
        $region20: #{tpu_custom_call.1} parent=11 // pred_fallthru
          _
        // Predicated region
        $region21: #{tpu_custom_call.1} parent=11 // pred_check
          %p176 = pneg %p129
        $region22: #{tpu_custom_call.1} parent=11 // pred_check_branch
          %178 = sbr.rel (%p176) target = $region24
        $region23: #{tpu_custom_call.1} parent=11 // pred_region
          _
        $region24: #{tpu_custom_call.1} parent=11 // pred_fallthru
          _
      $region12: #{tpu_custom_call.1} parent=5 // pred_fallthru
        _
      %p179 = scmp.lt.s32.totalorder %s14, 2
      // Predicated region
      $region25: #{tpu_custom_call.1} parent=5 // pred_check
        %p180 = pneg %p179
      $region26: #{tpu_custom_call.1} parent=5 // pred_check_branch
        %182 = sbr.rel (%p180) target = $region28
      $region27: #{tpu_custom_call.1} parent=5 // pred_region
        // Predicated region
        $region29: #{tpu_custom_call.1} parent=27 // pred_check
          %p183 = pneg %p55
        $region30: #{tpu_custom_call.1} parent=27 // pred_check_branch
          %185 = sbr.rel (%p183) target = $region32
        $region31: #{tpu_custom_call.1} parent=27 // pred_region
          %s186 = sand.u32 %s45, 1
          %s187 = sand.u32 %s45, 1
          %s188 = smul.addr %s187, 4
          %s189 = scalar_lea.vmem [#allocation2], %s188
          %s190 = scalar_lea.vmem %s1, %s14
          // Predicated region
          $region33: #{tpu_custom_call.1} parent=31 // pred_check
            _
          $region34: #{tpu_custom_call.1} parent=31 // pred_check_branch
            %192 = sbr.rel (0) target = $region36
          $region35: #{tpu_custom_call.1} parent=31 // pred_region
            // Predicated region
            $region37: #{tpu_custom_call.1} parent=35 // pred_check
              _
            $region38: #{tpu_custom_call.1} parent=35 // pred_check_branch
              %194 = sbr.rel target = $region40
            $region39: #{tpu_custom_call.1} parent=35 // pred_region
              // Predicated region
              $region52: #{tpu_custom_call.1} parent=39 // pred_check
                _
              $region53: #{tpu_custom_call.1} parent=39 // pred_check_branch
                %216 = sbr.rel (0) target = $region55
              $region54: #{tpu_custom_call.1} parent=39 // pred_region
                %s218 = ssub.s32 2, 1
                loop: start=0, step=1, limit=1
                $region56: #{tpu_custom_call.1} parent=54 // loop_pre_header
                  _
                $region57: #{tpu_custom_call.1} parent=54 // loop_header
                  %s220 = sphi 0, %s224
                  %p221 = scmp.ge.s32.totalorder %s220, 1
                  %s225 = sphi %s190, %s190
                  %s226 = sphi %s189, %s189
                $region58: #{tpu_custom_call.1} parent=54 // loop_header_branch
                  %223 = sbr.rel (%p221) target = $region62
                $region59: #{tpu_custom_call.1} parent=54 // loop_body
                  %v227 = vld [vmem:[%s225] sm:%s218]
                  %228 = vst [vmem:[%s226] sm:%s218] %v227
                  %v229 = vld [vmem:[%s225 + $0x2] sm:%s218]
                  %230 = vst [vmem:[%s226 + $0x1] sm:%s218] %v229
                  %v231 = vld [vmem:[%s225 + $0x4] sm:%s218]
                  %232 = vst [vmem:[%s226 + $0x2] sm:%s218] %v231
                  %v233 = vld [vmem:[%s225 + $0x6] sm:%s218]
                  %234 = vst [vmem:[%s226 + $0x3] sm:%s218] %v233
                $region60: #{tpu_custom_call.1} parent=54 // loop_footer
                  %s224 = sadd.s32 1, %s220
                $region61: #{tpu_custom_call.1} parent=54 // loop_footer_branch
                  %219 = sbr.rel target = $region57
                $region62: #{tpu_custom_call.1} parent=54 // loop_exit
                  _
              $region55: #{tpu_custom_call.1} parent=39 // pred_fallthru
                _
            $region40: #{tpu_custom_call.1} parent=35 // pred_fallthru
              _
            // Predicated region
            $region41: #{tpu_custom_call.1} parent=35 // pred_check
              _
            $region42: #{tpu_custom_call.1} parent=35 // pred_check_branch
              %196 = sbr.rel (0) target = $region44
            $region43: #{tpu_custom_call.1} parent=35 // pred_region
              %s198 = ssub.s32 2, 1
              loop: start=0, step=1, limit=1
              $region45: #{tpu_custom_call.1} parent=43 // loop_pre_header
                _
              $region46: #{tpu_custom_call.1} parent=43 // loop_header
                %s200 = sphi 0, %s204
                %p201 = scmp.ge.s32.totalorder %s200, 1
                %s205 = sphi %s190, %s190
                %s206 = sphi %s189, %s189
              $region47: #{tpu_custom_call.1} parent=43 // loop_header_branch
                %203 = sbr.rel (%p201) target = $region51
              $region48: #{tpu_custom_call.1} parent=43 // loop_body
                %v207 = vld [vmem:[%s205] sm:%s198]
                %208 = vst [vmem:[%s206] sm:%s198] %v207
                %v209 = vld [vmem:[%s205 + $0x2] sm:%s198]
                %210 = vst [vmem:[%s206 + $0x1] sm:%s198] %v209
                %v211 = vld [vmem:[%s205 + $0x4] sm:%s198]
                %212 = vst [vmem:[%s206 + $0x2] sm:%s198] %v211
                %v213 = vld [vmem:[%s205 + $0x6] sm:%s198]
                %214 = vst [vmem:[%s206 + $0x3] sm:%s198] %v213
              $region49: #{tpu_custom_call.1} parent=43 // loop_footer
                %s204 = sadd.s32 1, %s200
              $region50: #{tpu_custom_call.1} parent=43 // loop_footer_branch
                %199 = sbr.rel target = $region46
              $region51: #{tpu_custom_call.1} parent=43 // loop_exit
                _
            $region44: #{tpu_custom_call.1} parent=35 // pred_fallthru
              _
          $region36: #{tpu_custom_call.1} parent=31 // pred_fallthru
            _
          %235 = vnop
        $region32: #{tpu_custom_call.1} parent=27 // pred_fallthru
          _
        // Predicated region
        $region63: #{tpu_custom_call.1} parent=27 // pred_check
          %p236 = pneg %p102
        $region64: #{tpu_custom_call.1} parent=27 // pred_check_branch
          %238 = sbr.rel (%p236) target = $region66
        $region65: #{tpu_custom_call.1} parent=27 // pred_region
          %p239 = scmp.lt.s32.totalorder %s14, 1
          %s240 = scalar_select %p239, %s14, 1
          %s241 = scalar_lea.vmem %s3, %s240
        $region66: #{tpu_custom_call.1} parent=27 // pred_fallthru
          _
      $region28: #{tpu_custom_call.1} parent=5 // pred_fallthru
        _
      %p242 = scmp.le.s32.totalorder 1, %s14
      %p243 = scmp.lt.s32.totalorder %s14, 3
      %p244 = pnand %p242, %p243
      %p245 = pneg %p244
      // Predicated region
      $region67: #{tpu_custom_call.1} parent=5 // pred_check
        _
      $region68: #{tpu_custom_call.1} parent=5 // pred_check_branch
        %247 = sbr.rel (%p244) target = $region70
      $region69: #{tpu_custom_call.1} parent=5 // pred_region
        %s248 = ssub.s32 %s14, 1
        %s249 = sand.u32 %s48, 1
        %s250 = sand.u32 %s48, 1
        %s251 = smul.addr %s250, 4
        %s252 = scalar_lea.vmem [#allocation2], %s251
        // Predicated region
        $region71: #{tpu_custom_call.1} parent=69 // pred_check
          %p253 = pneg %p61
        $region72: #{tpu_custom_call.1} parent=69 // pred_check_branch
          %255 = sbr.rel (%p253) target = $region74
        $region73: #{tpu_custom_call.1} parent=69 // pred_region
          _
        $region74: #{tpu_custom_call.1} parent=69 // pred_fallthru
          _
        %p256 = pneg %p35
        %p257 = pneg %p32
        %s258 = sand.u32 %s48, 1
        %s259 = sand.u32 %s48, 1
        %s260 = smul.addr %s259, 4
        %s261 = scalar_lea.vmem [#allocation2], %s260
        %p262 = pneg %p61
        %p263 = pneg %p58
        %p264 = pneg %p82
        %p265 = pneg %p79
        %p266 = scmp.lt.s32.totalorder %s19, 1
        %s267 = scalar_select %p266, %s19, 1
        %s268 = scalar_lea.vmem %s3, %s267
        %p269 = pneg %p108
        %p270 = pneg %p105
        %p271 = pneg %p129
        %p272 = pneg %p126
        %p273 = pneg %p155
        %p274 = pneg %p152
        %s275 = sand.u32 %s142, 1
        %s276 = scalar_lea.sflag [#allocation4], %s275
        %s277 = sand.u32 %s142, 1
        %s278 = smul.addr %s277, 256
        %s279 = scalar_lea.vmem [#allocation3], %s278
        %p280 = scmp.lt.s32.totalorder %s19, 1
        %s281 = scalar_select %p280, %s19, 1
        %s282 = scalar_lea.vmem %s3, %s281
        %v283 = vld [vmem:[%s0] sm:$0xff]
        %v284 = vld [vmem:[%s0 + $0x8] sm:$0xff]
        %v285 = vld [vmem:[%s0 + $0x10] sm:$0xff]
        %v286 = vld [vmem:[%s0 + $0x18] sm:$0xff]
        %v287 = vld [vmem:[%s0 + $0x20] sm:$0xff]
        %v288 = vld [vmem:[%s0 + $0x28] sm:$0xff]
        %v289 = vld [vmem:[%s0 + $0x30] sm:$0xff]
        %v290 = vld [vmem:[%s0 + $0x38] sm:$0xff]
        %v291 = vld [vmem:[%s0 + $0x40] sm:$0xff]
        %v292 = vld [vmem:[%s0 + $0x48] sm:$0xff]
        %v293 = vld [vmem:[%s0 + $0x50] sm:$0xff]
        %v294 = vld [vmem:[%s0 + $0x58] sm:$0xff]
        %v295 = vld [vmem:[%s0 + $0x60] sm:$0xff]
        %v296 = vld [vmem:[%s0 + $0x68] sm:$0xff]
        %v297 = vld [vmem:[%s0 + $0x70] sm:$0xff]
        %v298 = vld [vmem:[%s0 + $0x78] sm:$0xff]
        %v299 = vld [vmem:[%s0 + $0x80] sm:$0xff]
        %v300 = vld [vmem:[%s0 + $0x88] sm:$0xff]
        %v301 = vld [vmem:[%s0 + $0x90] sm:$0xff]
        %v302 = vld [vmem:[%s0 + $0x98] sm:$0xff]
        %v303 = vld [vmem:[%s0 + $0xa0] sm:$0xff]
        %v304 = vld [vmem:[%s0 + $0xa8] sm:$0xff]
        %v305 = vld [vmem:[%s0 + $0xb0] sm:$0xff]
        %v306 = vld [vmem:[%s0 + $0xb8] sm:$0xff]
        %v307 = vld [vmem:[%s0 + $0xc0] sm:$0xff]
        %v308 = vld [vmem:[%s0 + $0xc8] sm:$0xff]
        %v309 = vld [vmem:[%s0 + $0xd0] sm:$0xff]
        %v310 = vld [vmem:[%s0 + $0xd8] sm:$0xff]
        %v311 = vld [vmem:[%s0 + $0xe0] sm:$0xff]
        %v312 = vld [vmem:[%s0 + $0xe8] sm:$0xff]
        %v313 = vld [vmem:[%s0 + $0xf0] sm:$0xff]
        %v314 = vld [vmem:[%s0 + $0xf8] sm:$0xff]
        %v315 = vld [vmem:[%s0 + $0x100] sm:$0xff]
        %v316 = vld [vmem:[%s0 + $0x108] sm:$0xff]
        %v317 = vld [vmem:[%s0 + $0x110] sm:$0xff]
        %v318 = vld [vmem:[%s0 + $0x118] sm:$0xff]
        %v319 = vld [vmem:[%s0 + $0x120] sm:$0xff]
        %v320 = vld [vmem:[%s0 + $0x128] sm:$0xff]
        %v321 = vld [vmem:[%s0 + $0x130] sm:$0xff]
        %v322 = vld [vmem:[%s0 + $0x138] sm:$0xff]
        %v323 = vld [vmem:[%s0 + $0x140] sm:$0xff]
        %v324 = vld [vmem:[%s0 + $0x148] sm:$0xff]
        %v325 = vld [vmem:[%s0 + $0x150] sm:$0xff]
        %v326 = vld [vmem:[%s0 + $0x158] sm:$0xff]
        %v327 = vld [vmem:[%s0 + $0x160] sm:$0xff]
        %v328 = vld [vmem:[%s0 + $0x168] sm:$0xff]
        %v329 = vld [vmem:[%s0 + $0x170] sm:$0xff]
        %v330 = vld [vmem:[%s0 + $0x178] sm:$0xff]
        %v331 = vld [vmem:[%s0 + $0x180] sm:$0xff]
        %v332 = vld [vmem:[%s0 + $0x188] sm:$0xff]
        %v333 = vld [vmem:[%s0 + $0x190] sm:$0xff]
        %v334 = vld [vmem:[%s0 + $0x198] sm:$0xff]
        %v335 = vld [vmem:[%s0 + $0x1a0] sm:$0xff]
        %v336 = vld [vmem:[%s0 + $0x1a8] sm:$0xff]
        %v337 = vld [vmem:[%s0 + $0x1b0] sm:$0xff]
        %v338 = vld [vmem:[%s0 + $0x1b8] sm:$0xff]
        %v339 = vld [vmem:[%s0 + $0x1c0] sm:$0xff]
        %v340 = vld [vmem:[%s0 + $0x1c8] sm:$0xff]
        %v341 = vld [vmem:[%s0 + $0x1d0] sm:$0xff]
        %v342 = vld [vmem:[%s0 + $0x1d8] sm:$0xff]
        %v343 = vld [vmem:[%s0 + $0x1e0] sm:$0xff]
        %v344 = vld [vmem:[%s0 + $0x1e8] sm:$0xff]
        %v345 = vld [vmem:[%s0 + $0x1f0] sm:$0xff]
        %v346 = vld [vmem:[%s0 + $0x1f8] sm:$0xff]
        %v347 = vld [vmem:[%s0 + $0x200] sm:$0xff]
        %v348 = vld [vmem:[%s0 + $0x208] sm:$0xff]
        %v349 = vld [vmem:[%s0 + $0x210] sm:$0xff]
        %v350 = vld [vmem:[%s0 + $0x218] sm:$0xff]
        %v351 = vld [vmem:[%s0 + $0x220] sm:$0xff]
        %v352 = vld [vmem:[%s0 + $0x228] sm:$0xff]
        %v353 = vld [vmem:[%s0 + $0x230] sm:$0xff]
        %v354 = vld [vmem:[%s0 + $0x238] sm:$0xff]
        %v355 = vld [vmem:[%s0 + $0x240] sm:$0xff]
        %v356 = vld [vmem:[%s0 + $0x248] sm:$0xff]
        %v357 = vld [vmem:[%s0 + $0x250] sm:$0xff]
        %v358 = vld [vmem:[%s0 + $0x258] sm:$0xff]
        %v359 = vld [vmem:[%s0 + $0x260] sm:$0xff]
        %v360 = vld [vmem:[%s0 + $0x268] sm:$0xff]
        %v361 = vld [vmem:[%s0 + $0x270] sm:$0xff]
        %v362 = vld [vmem:[%s0 + $0x278] sm:$0xff]
        %v363 = vld [vmem:[%s0 + $0x280] sm:$0xff]
        %v364 = vld [vmem:[%s0 + $0x288] sm:$0xff]
        %v365 = vld [vmem:[%s0 + $0x290] sm:$0xff]
        %v366 = vld [vmem:[%s0 + $0x298] sm:$0xff]
        %v367 = vld [vmem:[%s0 + $0x2a0] sm:$0xff]
        %v368 = vld [vmem:[%s0 + $0x2a8] sm:$0xff]
        %v369 = vld [vmem:[%s0 + $0x2b0] sm:$0xff]
        %v370 = vld [vmem:[%s0 + $0x2b8] sm:$0xff]
        %v371 = vld [vmem:[%s0 + $0x2c0] sm:$0xff]
        %v372 = vld [vmem:[%s0 + $0x2c8] sm:$0xff]
        %v373 = vld [vmem:[%s0 + $0x2d0] sm:$0xff]
        %v374 = vld [vmem:[%s0 + $0x2d8] sm:$0xff]
        %v375 = vld [vmem:[%s0 + $0x2e0] sm:$0xff]
        %v376 = vld [vmem:[%s0 + $0x2e8] sm:$0xff]
        %v377 = vld [vmem:[%s0 + $0x2f0] sm:$0xff]
        %v378 = vld [vmem:[%s0 + $0x2f8] sm:$0xff]
        %v379 = vld [vmem:[%s0 + $0x300] sm:$0xff]
        %v380 = vld [vmem:[%s0 + $0x308] sm:$0xff]
        %v381 = vld [vmem:[%s0 + $0x310] sm:$0xff]
        %v382 = vld [vmem:[%s0 + $0x318] sm:$0xff]
        %v383 = vld [vmem:[%s0 + $0x320] sm:$0xff]
        %v384 = vld [vmem:[%s0 + $0x328] sm:$0xff]
        %v385 = vld [vmem:[%s0 + $0x330] sm:$0xff]
        %v386 = vld [vmem:[%s0 + $0x338] sm:$0xff]
        %v387 = vld [vmem:[%s0 + $0x340] sm:$0xff]
        %v388 = vld [vmem:[%s0 + $0x348] sm:$0xff]
        %v389 = vld [vmem:[%s0 + $0x350] sm:$0xff]
        %v390 = vld [vmem:[%s0 + $0x358] sm:$0xff]
        %v391 = vld [vmem:[%s0 + $0x360] sm:$0xff]
        %v392 = vld [vmem:[%s0 + $0x368] sm:$0xff]
        %v393 = vld [vmem:[%s0 + $0x370] sm:$0xff]
        %v394 = vld [vmem:[%s0 + $0x378] sm:$0xff]
        %v395 = vld [vmem:[%s0 + $0x380] sm:$0xff]
        %v396 = vld [vmem:[%s0 + $0x388] sm:$0xff]
        %v397 = vld [vmem:[%s0 + $0x390] sm:$0xff]
        %v398 = vld [vmem:[%s0 + $0x398] sm:$0xff]
        %v399 = vld [vmem:[%s0 + $0x3a0] sm:$0xff]
        %v400 = vld [vmem:[%s0 + $0x3a8] sm:$0xff]
        %v401 = vld [vmem:[%s0 + $0x3b0] sm:$0xff]
        %v402 = vld [vmem:[%s0 + $0x3b8] sm:$0xff]
        %v403 = vld [vmem:[%s0 + $0x3c0] sm:$0xff]
        %v404 = vld [vmem:[%s0 + $0x3c8] sm:$0xff]
        %v405 = vld [vmem:[%s0 + $0x3d0] sm:$0xff]
        %v406 = vld [vmem:[%s0 + $0x3d8] sm:$0xff]
        %v407 = vld [vmem:[%s0 + $0x3e0] sm:$0xff]
        %v408 = vld [vmem:[%s0 + $0x3e8] sm:$0xff]
        %v409 = vld [vmem:[%s0 + $0x3f0] sm:$0xff]
        %v410 = vld [vmem:[%s0 + $0x3f8] sm:$0xff]
        %v411 = vld [vmem:[%s252] sm:$0x1]
        %v412 = vld [vmem:[%s252 + $0x1] sm:$0x1]
        %v413 = vld [vmem:[%s252 + $0x2] sm:$0x1]
        %v414 = vld [vmem:[%s252 + $0x3] sm:$0x1]
        %416 = vset.pattern.permute.xlu0 0
        %417 = vperm.xlu0 %416, %v283
        %v418 = vpop.permute.xlu0 %417
        %421 = vset.pattern.permute.xlu0 0
        %422 = vperm.xlu0 %421, %v284
        %v423 = vpop.permute.xlu0 %422
        %426 = vset.pattern.permute.xlu0 0
        %427 = vperm.xlu0 %426, %v285
        %v428 = vpop.permute.xlu0 %427
        %431 = vset.pattern.permute.xlu0 0
        %432 = vperm.xlu0 %431, %v286
        %v433 = vpop.permute.xlu0 %432
        %436 = vset.pattern.permute.xlu0 0
        %437 = vperm.xlu0 %436, %v287
        %v438 = vpop.permute.xlu0 %437
        %441 = vset.pattern.permute.xlu0 0
        %442 = vperm.xlu0 %441, %v288
        %v443 = vpop.permute.xlu0 %442
        %446 = vset.pattern.permute.xlu0 0
        %447 = vperm.xlu0 %446, %v289
        %v448 = vpop.permute.xlu0 %447
        %451 = vset.pattern.permute.xlu0 0
        %452 = vperm.xlu0 %451, %v290
        %v453 = vpop.permute.xlu0 %452
        %456 = vset.pattern.permute.xlu0 0
        %457 = vperm.xlu0 %456, %v291
        %v458 = vpop.permute.xlu0 %457
        %461 = vset.pattern.permute.xlu0 0
        %462 = vperm.xlu0 %461, %v292
        %v463 = vpop.permute.xlu0 %462
        %466 = vset.pattern.permute.xlu0 0
        %467 = vperm.xlu0 %466, %v293
        %v468 = vpop.permute.xlu0 %467
        %471 = vset.pattern.permute.xlu0 0
        %472 = vperm.xlu0 %471, %v294
        %v473 = vpop.permute.xlu0 %472
        %476 = vset.pattern.permute.xlu0 0
        %477 = vperm.xlu0 %476, %v295
        %v478 = vpop.permute.xlu0 %477
        %481 = vset.pattern.permute.xlu0 0
        %482 = vperm.xlu0 %481, %v296
        %v483 = vpop.permute.xlu0 %482
        %486 = vset.pattern.permute.xlu0 0
        %487 = vperm.xlu0 %486, %v297
        %v488 = vpop.permute.xlu0 %487
        %491 = vset.pattern.permute.xlu0 0
        %492 = vperm.xlu0 %491, %v298
        %v493 = vpop.permute.xlu0 %492
        %496 = vset.pattern.permute.xlu0 0
        %497 = vperm.xlu0 %496, %v299
        %v498 = vpop.permute.xlu0 %497
        %501 = vset.pattern.permute.xlu0 0
        %502 = vperm.xlu0 %501, %v300
        %v503 = vpop.permute.xlu0 %502
        %506 = vset.pattern.permute.xlu0 0
        %507 = vperm.xlu0 %506, %v301
        %v508 = vpop.permute.xlu0 %507
        %511 = vset.pattern.permute.xlu0 0
        %512 = vperm.xlu0 %511, %v302
        %v513 = vpop.permute.xlu0 %512
        %516 = vset.pattern.permute.xlu0 0
        %517 = vperm.xlu0 %516, %v303
        %v518 = vpop.permute.xlu0 %517
        %521 = vset.pattern.permute.xlu0 0
        %522 = vperm.xlu0 %521, %v304
        %v523 = vpop.permute.xlu0 %522
        %526 = vset.pattern.permute.xlu0 0
        %527 = vperm.xlu0 %526, %v305
        %v528 = vpop.permute.xlu0 %527
        %531 = vset.pattern.permute.xlu0 0
        %532 = vperm.xlu0 %531, %v306
        %v533 = vpop.permute.xlu0 %532
        %536 = vset.pattern.permute.xlu0 0
        %537 = vperm.xlu0 %536, %v307
        %v538 = vpop.permute.xlu0 %537
        %541 = vset.pattern.permute.xlu0 0
        %542 = vperm.xlu0 %541, %v308
        %v543 = vpop.permute.xlu0 %542
        %546 = vset.pattern.permute.xlu0 0
        %547 = vperm.xlu0 %546, %v309
        %v548 = vpop.permute.xlu0 %547
        %551 = vset.pattern.permute.xlu0 0
        %552 = vperm.xlu0 %551, %v310
        %v553 = vpop.permute.xlu0 %552
        %556 = vset.pattern.permute.xlu0 0
        %557 = vperm.xlu0 %556, %v311
        %v558 = vpop.permute.xlu0 %557
        %561 = vset.pattern.permute.xlu0 0
        %562 = vperm.xlu0 %561, %v312
        %v563 = vpop.permute.xlu0 %562
        %566 = vset.pattern.permute.xlu0 0
        %567 = vperm.xlu0 %566, %v313
        %v568 = vpop.permute.xlu0 %567
        %571 = vset.pattern.permute.xlu0 0
        %572 = vperm.xlu0 %571, %v314
        %v573 = vpop.permute.xlu0 %572
        %576 = vset.pattern.permute.xlu0 0
        %577 = vperm.xlu0 %576, %v315
        %v578 = vpop.permute.xlu0 %577
        %581 = vset.pattern.permute.xlu0 0
        %582 = vperm.xlu0 %581, %v316
        %v583 = vpop.permute.xlu0 %582
        %586 = vset.pattern.permute.xlu0 0
        %587 = vperm.xlu0 %586, %v317
        %v588 = vpop.permute.xlu0 %587
        %591 = vset.pattern.permute.xlu0 0
        %592 = vperm.xlu0 %591, %v318
        %v593 = vpop.permute.xlu0 %592
        %596 = vset.pattern.permute.xlu0 0
        %597 = vperm.xlu0 %596, %v319
        %v598 = vpop.permute.xlu0 %597
        %601 = vset.pattern.permute.xlu0 0
        %602 = vperm.xlu0 %601, %v320
        %v603 = vpop.permute.xlu0 %602
        %606 = vset.pattern.permute.xlu0 0
        %607 = vperm.xlu0 %606, %v321
        %v608 = vpop.permute.xlu0 %607
        %611 = vset.pattern.permute.xlu0 0
        %612 = vperm.xlu0 %611, %v322
        %v613 = vpop.permute.xlu0 %612
        %616 = vset.pattern.permute.xlu0 0
        %617 = vperm.xlu0 %616, %v323
        %v618 = vpop.permute.xlu0 %617
        %621 = vset.pattern.permute.xlu0 0
        %622 = vperm.xlu0 %621, %v324
        %v623 = vpop.permute.xlu0 %622
        %626 = vset.pattern.permute.xlu0 0
        %627 = vperm.xlu0 %626, %v325
        %v628 = vpop.permute.xlu0 %627
        %631 = vset.pattern.permute.xlu0 0
        %632 = vperm.xlu0 %631, %v326
        %v633 = vpop.permute.xlu0 %632
        %636 = vset.pattern.permute.xlu0 0
        %637 = vperm.xlu0 %636, %v327
        %v638 = vpop.permute.xlu0 %637
        %641 = vset.pattern.permute.xlu0 0
        %642 = vperm.xlu0 %641, %v328
        %v643 = vpop.permute.xlu0 %642
        %646 = vset.pattern.permute.xlu0 0
        %647 = vperm.xlu0 %646, %v329
        %v648 = vpop.permute.xlu0 %647
        %651 = vset.pattern.permute.xlu0 0
        %652 = vperm.xlu0 %651, %v330
        %v653 = vpop.permute.xlu0 %652
        %656 = vset.pattern.permute.xlu0 0
        %657 = vperm.xlu0 %656, %v331
        %v658 = vpop.permute.xlu0 %657
        %661 = vset.pattern.permute.xlu0 0
        %662 = vperm.xlu0 %661, %v332
        %v663 = vpop.permute.xlu0 %662
        %666 = vset.pattern.permute.xlu0 0
        %667 = vperm.xlu0 %666, %v333
        %v668 = vpop.permute.xlu0 %667
        %671 = vset.pattern.permute.xlu0 0
        %672 = vperm.xlu0 %671, %v334
        %v673 = vpop.permute.xlu0 %672
        %676 = vset.pattern.permute.xlu0 0
        %677 = vperm.xlu0 %676, %v335
        %v678 = vpop.permute.xlu0 %677
        %681 = vset.pattern.permute.xlu0 0
        %682 = vperm.xlu0 %681, %v336
        %v683 = vpop.permute.xlu0 %682
        %686 = vset.pattern.permute.xlu0 0
        %687 = vperm.xlu0 %686, %v337
        %v688 = vpop.permute.xlu0 %687
        %691 = vset.pattern.permute.xlu0 0
        %692 = vperm.xlu0 %691, %v338
        %v693 = vpop.permute.xlu0 %692
        %696 = vset.pattern.permute.xlu0 0
        %697 = vperm.xlu0 %696, %v339
        %v698 = vpop.permute.xlu0 %697
        %701 = vset.pattern.permute.xlu0 0
        %702 = vperm.xlu0 %701, %v340
        %v703 = vpop.permute.xlu0 %702
        %706 = vset.pattern.permute.xlu0 0
        %707 = vperm.xlu0 %706, %v341
        %v708 = vpop.permute.xlu0 %707
        %711 = vset.pattern.permute.xlu0 0
        %712 = vperm.xlu0 %711, %v342
        %v713 = vpop.permute.xlu0 %712
        %716 = vset.pattern.permute.xlu0 0
        %717 = vperm.xlu0 %716, %v343
        %v718 = vpop.permute.xlu0 %717
        %721 = vset.pattern.permute.xlu0 0
        %722 = vperm.xlu0 %721, %v344
        %v723 = vpop.permute.xlu0 %722
        %726 = vset.pattern.permute.xlu0 0
        %727 = vperm.xlu0 %726, %v345
        %v728 = vpop.permute.xlu0 %727
        %731 = vset.pattern.permute.xlu0 0
        %732 = vperm.xlu0 %731, %v346
        %v733 = vpop.permute.xlu0 %732
        %736 = vset.pattern.permute.xlu0 0
        %737 = vperm.xlu0 %736, %v347
        %v738 = vpop.permute.xlu0 %737
        %741 = vset.pattern.permute.xlu0 0
        %742 = vperm.xlu0 %741, %v348
        %v743 = vpop.permute.xlu0 %742
        %746 = vset.pattern.permute.xlu0 0
        %747 = vperm.xlu0 %746, %v349
        %v748 = vpop.permute.xlu0 %747
        %751 = vset.pattern.permute.xlu0 0
        %752 = vperm.xlu0 %751, %v350
        %v753 = vpop.permute.xlu0 %752
        %756 = vset.pattern.permute.xlu0 0
        %757 = vperm.xlu0 %756, %v351
        %v758 = vpop.permute.xlu0 %757
        %761 = vset.pattern.permute.xlu0 0
        %762 = vperm.xlu0 %761, %v352
        %v763 = vpop.permute.xlu0 %762
        %766 = vset.pattern.permute.xlu0 0
        %767 = vperm.xlu0 %766, %v353
        %v768 = vpop.permute.xlu0 %767
        %771 = vset.pattern.permute.xlu0 0
        %772 = vperm.xlu0 %771, %v354
        %v773 = vpop.permute.xlu0 %772
        %776 = vset.pattern.permute.xlu0 0
        %777 = vperm.xlu0 %776, %v355
        %v778 = vpop.permute.xlu0 %777
        %781 = vset.pattern.permute.xlu0 0
        %782 = vperm.xlu0 %781, %v356
        %v783 = vpop.permute.xlu0 %782
        %786 = vset.pattern.permute.xlu0 0
        %787 = vperm.xlu0 %786, %v357
        %v788 = vpop.permute.xlu0 %787
        %791 = vset.pattern.permute.xlu0 0
        %792 = vperm.xlu0 %791, %v358
        %v793 = vpop.permute.xlu0 %792
        %796 = vset.pattern.permute.xlu0 0
        %797 = vperm.xlu0 %796, %v359
        %v798 = vpop.permute.xlu0 %797
        %801 = vset.pattern.permute.xlu0 0
        %802 = vperm.xlu0 %801, %v360
        %v803 = vpop.permute.xlu0 %802
        %806 = vset.pattern.permute.xlu0 0
        %807 = vperm.xlu0 %806, %v361
        %v808 = vpop.permute.xlu0 %807
        %811 = vset.pattern.permute.xlu0 0
        %812 = vperm.xlu0 %811, %v362
        %v813 = vpop.permute.xlu0 %812
        %816 = vset.pattern.permute.xlu0 0
        %817 = vperm.xlu0 %816, %v363
        %v818 = vpop.permute.xlu0 %817
        %821 = vset.pattern.permute.xlu0 0
        %822 = vperm.xlu0 %821, %v364
        %v823 = vpop.permute.xlu0 %822
        %826 = vset.pattern.permute.xlu0 0
        %827 = vperm.xlu0 %826, %v365
        %v828 = vpop.permute.xlu0 %827
        %831 = vset.pattern.permute.xlu0 0
        %832 = vperm.xlu0 %831, %v366
        %v833 = vpop.permute.xlu0 %832
        %836 = vset.pattern.permute.xlu0 0
        %837 = vperm.xlu0 %836, %v367
        %v838 = vpop.permute.xlu0 %837
        %841 = vset.pattern.permute.xlu0 0
        %842 = vperm.xlu0 %841, %v368
        %v843 = vpop.permute.xlu0 %842
        %846 = vset.pattern.permute.xlu0 0
        %847 = vperm.xlu0 %846, %v369
        %v848 = vpop.permute.xlu0 %847
        %851 = vset.pattern.permute.xlu0 0
        %852 = vperm.xlu0 %851, %v370
        %v853 = vpop.permute.xlu0 %852
        %856 = vset.pattern.permute.xlu0 0
        %857 = vperm.xlu0 %856, %v371
        %v858 = vpop.permute.xlu0 %857
        %861 = vset.pattern.permute.xlu0 0
        %862 = vperm.xlu0 %861, %v372
        %v863 = vpop.permute.xlu0 %862
        %866 = vset.pattern.permute.xlu0 0
        %867 = vperm.xlu0 %866, %v373
        %v868 = vpop.permute.xlu0 %867
        %871 = vset.pattern.permute.xlu0 0
        %872 = vperm.xlu0 %871, %v374
        %v873 = vpop.permute.xlu0 %872
        %876 = vset.pattern.permute.xlu0 0
        %877 = vperm.xlu0 %876, %v375
        %v878 = vpop.permute.xlu0 %877
        %881 = vset.pattern.permute.xlu0 0
        %882 = vperm.xlu0 %881, %v376
        %v883 = vpop.permute.xlu0 %882
        %886 = vset.pattern.permute.xlu0 0
        %887 = vperm.xlu0 %886, %v377
        %v888 = vpop.permute.xlu0 %887
        %891 = vset.pattern.permute.xlu0 0
        %892 = vperm.xlu0 %891, %v378
        %v893 = vpop.permute.xlu0 %892
        %896 = vset.pattern.permute.xlu0 0
        %897 = vperm.xlu0 %896, %v379
        %v898 = vpop.permute.xlu0 %897
        %901 = vset.pattern.permute.xlu0 0
        %902 = vperm.xlu0 %901, %v380
        %v903 = vpop.permute.xlu0 %902
        %906 = vset.pattern.permute.xlu0 0
        %907 = vperm.xlu0 %906, %v381
        %v908 = vpop.permute.xlu0 %907
        %911 = vset.pattern.permute.xlu0 0
        %912 = vperm.xlu0 %911, %v382
        %v913 = vpop.permute.xlu0 %912
        %916 = vset.pattern.permute.xlu0 0
        %917 = vperm.xlu0 %916, %v383
        %v918 = vpop.permute.xlu0 %917
        %921 = vset.pattern.permute.xlu0 0
        %922 = vperm.xlu0 %921, %v384
        %v923 = vpop.permute.xlu0 %922
        %926 = vset.pattern.permute.xlu0 0
        %927 = vperm.xlu0 %926, %v385
        %v928 = vpop.permute.xlu0 %927
        %931 = vset.pattern.permute.xlu0 0
        %932 = vperm.xlu0 %931, %v386
        %v933 = vpop.permute.xlu0 %932
        %936 = vset.pattern.permute.xlu0 0
        %937 = vperm.xlu0 %936, %v387
        %v938 = vpop.permute.xlu0 %937
        %941 = vset.pattern.permute.xlu0 0
        %942 = vperm.xlu0 %941, %v388
        %v943 = vpop.permute.xlu0 %942
        %946 = vset.pattern.permute.xlu0 0
        %947 = vperm.xlu0 %946, %v389
        %v948 = vpop.permute.xlu0 %947
        %951 = vset.pattern.permute.xlu0 0
        %952 = vperm.xlu0 %951, %v390
        %v953 = vpop.permute.xlu0 %952
        %956 = vset.pattern.permute.xlu0 0
        %957 = vperm.xlu0 %956, %v391
        %v958 = vpop.permute.xlu0 %957
        %961 = vset.pattern.permute.xlu0 0
        %962 = vperm.xlu0 %961, %v392
        %v963 = vpop.permute.xlu0 %962
        %966 = vset.pattern.permute.xlu0 0
        %967 = vperm.xlu0 %966, %v393
        %v968 = vpop.permute.xlu0 %967
        %971 = vset.pattern.permute.xlu0 0
        %972 = vperm.xlu0 %971, %v394
        %v973 = vpop.permute.xlu0 %972
        %976 = vset.pattern.permute.xlu0 0
        %977 = vperm.xlu0 %976, %v395
        %v978 = vpop.permute.xlu0 %977
        %981 = vset.pattern.permute.xlu0 0
        %982 = vperm.xlu0 %981, %v396
        %v983 = vpop.permute.xlu0 %982
        %986 = vset.pattern.permute.xlu0 0
        %987 = vperm.xlu0 %986, %v397
        %v988 = vpop.permute.xlu0 %987
        %991 = vset.pattern.permute.xlu0 0
        %992 = vperm.xlu0 %991, %v398
        %v993 = vpop.permute.xlu0 %992
        %996 = vset.pattern.permute.xlu0 0
        %997 = vperm.xlu0 %996, %v399
        %v998 = vpop.permute.xlu0 %997
        %1001 = vset.pattern.permute.xlu0 0
        %1002 = vperm.xlu0 %1001, %v400
        %v1003 = vpop.permute.xlu0 %1002
        %1006 = vset.pattern.permute.xlu0 0
        %1007 = vperm.xlu0 %1006, %v401
        %v1008 = vpop.permute.xlu0 %1007
        %1011 = vset.pattern.permute.xlu0 0
        %1012 = vperm.xlu0 %1011, %v402
        %v1013 = vpop.permute.xlu0 %1012
        %1016 = vset.pattern.permute.xlu0 0
        %1017 = vperm.xlu0 %1016, %v403
        %v1018 = vpop.permute.xlu0 %1017
        %1021 = vset.pattern.permute.xlu0 0
        %1022 = vperm.xlu0 %1021, %v404
        %v1023 = vpop.permute.xlu0 %1022
        %1026 = vset.pattern.permute.xlu0 0
        %1027 = vperm.xlu0 %1026, %v405
        %v1028 = vpop.permute.xlu0 %1027
        %1031 = vset.pattern.permute.xlu0 0
        %1032 = vperm.xlu0 %1031, %v406
        %v1033 = vpop.permute.xlu0 %1032
        %1036 = vset.pattern.permute.xlu0 0
        %1037 = vperm.xlu0 %1036, %v407
        %v1038 = vpop.permute.xlu0 %1037
        %1041 = vset.pattern.permute.xlu0 0
        %1042 = vperm.xlu0 %1041, %v408
        %v1043 = vpop.permute.xlu0 %1042
        %1046 = vset.pattern.permute.xlu0 0
        %1047 = vperm.xlu0 %1046, %v409
        %v1048 = vpop.permute.xlu0 %1047
        %1051 = vset.pattern.permute.xlu0 0
        %1052 = vperm.xlu0 %1051, %v410
        %v1053 = vpop.permute.xlu0 %1052
        %v1059 = vperm.slane %v411, 0
        %v1060 = vperm.slane %v412, 0
        %v1061 = vperm.slane %v413, 0
        %v1062 = vperm.slane %v414, 0
        %v1067 = vsub.f32 %v418, %v1059
        %v1068 = vsub.f32 %v423, %v1059
        %v1069 = vsub.f32 %v428, %v1059
        %v1070 = vsub.f32 %v433, %v1059
        %v1071 = vsub.f32 %v438, %v1059
        %v1072 = vsub.f32 %v443, %v1059
        %v1073 = vsub.f32 %v448, %v1059
        %v1074 = vsub.f32 %v453, %v1059
        %v1075 = vsub.f32 %v458, %v1059
        %v1076 = vsub.f32 %v463, %v1059
        %v1077 = vsub.f32 %v468, %v1059
        %v1078 = vsub.f32 %v473, %v1059
        %v1079 = vsub.f32 %v478, %v1059
        %v1080 = vsub.f32 %v483, %v1059
        %v1081 = vsub.f32 %v488, %v1059
        %v1082 = vsub.f32 %v493, %v1059
        %v1083 = vsub.f32 %v498, %v1059
        %v1084 = vsub.f32 %v503, %v1059
        %v1085 = vsub.f32 %v508, %v1059
        %v1086 = vsub.f32 %v513, %v1059
        %v1087 = vsub.f32 %v518, %v1059
        %v1088 = vsub.f32 %v523, %v1059
        %v1089 = vsub.f32 %v528, %v1059
        %v1090 = vsub.f32 %v533, %v1059
        %v1091 = vsub.f32 %v538, %v1059
        %v1092 = vsub.f32 %v543, %v1059
        %v1093 = vsub.f32 %v548, %v1059
        %v1094 = vsub.f32 %v553, %v1059
        %v1095 = vsub.f32 %v558, %v1059
        %v1096 = vsub.f32 %v563, %v1059
        %v1097 = vsub.f32 %v568, %v1059
        %v1098 = vsub.f32 %v573, %v1059
        %v1099 = vsub.f32 %v578, %v1060
        %v1100 = vsub.f32 %v583, %v1060
        %v1101 = vsub.f32 %v588, %v1060
        %v1102 = vsub.f32 %v593, %v1060
        %v1103 = vsub.f32 %v598, %v1060
        %v1104 = vsub.f32 %v603, %v1060
        %v1105 = vsub.f32 %v608, %v1060
        %v1106 = vsub.f32 %v613, %v1060
        %v1107 = vsub.f32 %v618, %v1060
        %v1108 = vsub.f32 %v623, %v1060
        %v1109 = vsub.f32 %v628, %v1060
        %v1110 = vsub.f32 %v633, %v1060
        %v1111 = vsub.f32 %v638, %v1060
        %v1112 = vsub.f32 %v643, %v1060
        %v1113 = vsub.f32 %v648, %v1060
        %v1114 = vsub.f32 %v653, %v1060
        %v1115 = vsub.f32 %v658, %v1060
        %v1116 = vsub.f32 %v663, %v1060
        %v1117 = vsub.f32 %v668, %v1060
        %v1118 = vsub.f32 %v673, %v1060
        %v1119 = vsub.f32 %v678, %v1060
        %v1120 = vsub.f32 %v683, %v1060
        %v1121 = vsub.f32 %v688, %v1060
        %v1122 = vsub.f32 %v693, %v1060
        %v1123 = vsub.f32 %v698, %v1060
        %v1124 = vsub.f32 %v703, %v1060
        %v1125 = vsub.f32 %v708, %v1060
        %v1126 = vsub.f32 %v713, %v1060
        %v1127 = vsub.f32 %v718, %v1060
        %v1128 = vsub.f32 %v723, %v1060
        %v1129 = vsub.f32 %v728, %v1060
        %v1130 = vsub.f32 %v733, %v1060
        %v1131 = vsub.f32 %v738, %v1061
        %v1132 = vsub.f32 %v743, %v1061
        %v1133 = vsub.f32 %v748, %v1061
        %v1134 = vsub.f32 %v753, %v1061
        %v1135 = vsub.f32 %v758, %v1061
        %v1136 = vsub.f32 %v763, %v1061
        %v1137 = vsub.f32 %v768, %v1061
        %v1138 = vsub.f32 %v773, %v1061
        %v1139 = vsub.f32 %v778, %v1061
        %v1140 = vsub.f32 %v783, %v1061
        %v1141 = vsub.f32 %v788, %v1061
        %v1142 = vsub.f32 %v793, %v1061
        %v1143 = vsub.f32 %v798, %v1061
        %v1144 = vsub.f32 %v803, %v1061
        %v1145 = vsub.f32 %v808, %v1061
        %v1146 = vsub.f32 %v813, %v1061
        %v1147 = vsub.f32 %v818, %v1061
        %v1148 = vsub.f32 %v823, %v1061
        %v1149 = vsub.f32 %v828, %v1061
        %v1150 = vsub.f32 %v833, %v1061
        %v1151 = vsub.f32 %v838, %v1061
        %v1152 = vsub.f32 %v843, %v1061
        %v1153 = vsub.f32 %v848, %v1061
        %v1154 = vsub.f32 %v853, %v1061
        %v1155 = vsub.f32 %v858, %v1061
        %v1156 = vsub.f32 %v863, %v1061
        %v1157 = vsub.f32 %v868, %v1061
        %v1158 = vsub.f32 %v873, %v1061
        %v1159 = vsub.f32 %v878, %v1061
        %v1160 = vsub.f32 %v883, %v1061
        %v1161 = vsub.f32 %v888, %v1061
        %v1162 = vsub.f32 %v893, %v1061
        %v1163 = vsub.f32 %v898, %v1062
        %v1164 = vsub.f32 %v903, %v1062
        %v1165 = vsub.f32 %v908, %v1062
        %v1166 = vsub.f32 %v913, %v1062
        %v1167 = vsub.f32 %v918, %v1062
        %v1168 = vsub.f32 %v923, %v1062
        %v1169 = vsub.f32 %v928, %v1062
        %v1170 = vsub.f32 %v933, %v1062
        %v1171 = vsub.f32 %v938, %v1062
        %v1172 = vsub.f32 %v943, %v1062
        %v1173 = vsub.f32 %v948, %v1062
        %v1174 = vsub.f32 %v953, %v1062
        %v1175 = vsub.f32 %v958, %v1062
        %v1176 = vsub.f32 %v963, %v1062
        %v1177 = vsub.f32 %v968, %v1062
        %v1178 = vsub.f32 %v973, %v1062
        %v1179 = vsub.f32 %v978, %v1062
        %v1180 = vsub.f32 %v983, %v1062
        %v1181 = vsub.f32 %v988, %v1062
        %v1182 = vsub.f32 %v993, %v1062
        %v1183 = vsub.f32 %v998, %v1062
        %v1184 = vsub.f32 %v1003, %v1062
        %v1185 = vsub.f32 %v1008, %v1062
        %v1186 = vsub.f32 %v1013, %v1062
        %v1187 = vsub.f32 %v1018, %v1062
        %v1188 = vsub.f32 %v1023, %v1062
        %v1189 = vsub.f32 %v1028, %v1062
        %v1190 = vsub.f32 %v1033, %v1062
        %v1191 = vsub.f32 %v1038, %v1062
        %v1192 = vsub.f32 %v1043, %v1062
        %v1193 = vsub.f32 %v1048, %v1062
        %v1194 = vsub.f32 %v1053, %v1062
        %v1195 = vmul.f32 %v1067, %v1067
        %v1196 = vmul.f32 %v1068, %v1068
        %v1197 = vmul.f32 %v1069, %v1069
        %v1198 = vmul.f32 %v1070, %v1070
        %v1199 = vmul.f32 %v1071, %v1071
        %v1200 = vmul.f32 %v1072, %v1072
        %v1201 = vmul.f32 %v1073, %v1073
        %v1202 = vmul.f32 %v1074, %v1074
        %v1203 = vmul.f32 %v1075, %v1075
        %v1204 = vmul.f32 %v1076, %v1076
        %v1205 = vmul.f32 %v1077, %v1077
        %v1206 = vmul.f32 %v1078, %v1078
        %v1207 = vmul.f32 %v1079, %v1079
        %v1208 = vmul.f32 %v1080, %v1080
        %v1209 = vmul.f32 %v1081, %v1081
        %v1210 = vmul.f32 %v1082, %v1082
        %v1211 = vmul.f32 %v1083, %v1083
        %v1212 = vmul.f32 %v1084, %v1084
        %v1213 = vmul.f32 %v1085, %v1085
        %v1214 = vmul.f32 %v1086, %v1086
        %v1215 = vmul.f32 %v1087, %v1087
        %v1216 = vmul.f32 %v1088, %v1088
        %v1217 = vmul.f32 %v1089, %v1089
        %v1218 = vmul.f32 %v1090, %v1090
        %v1219 = vmul.f32 %v1091, %v1091
        %v1220 = vmul.f32 %v1092, %v1092
        %v1221 = vmul.f32 %v1093, %v1093
        %v1222 = vmul.f32 %v1094, %v1094
        %v1223 = vmul.f32 %v1095, %v1095
        %v1224 = vmul.f32 %v1096, %v1096
        %v1225 = vmul.f32 %v1097, %v1097
        %v1226 = vmul.f32 %v1098, %v1098
        %v1227 = vmul.f32 %v1099, %v1099
        %v1228 = vmul.f32 %v1100, %v1100
        %v1229 = vmul.f32 %v1101, %v1101
        %v1230 = vmul.f32 %v1102, %v1102
        %v1231 = vmul.f32 %v1103, %v1103
        %v1232 = vmul.f32 %v1104, %v1104
        %v1233 = vmul.f32 %v1105, %v1105
        %v1234 = vmul.f32 %v1106, %v1106
        %v1235 = vmul.f32 %v1107, %v1107
        %v1236 = vmul.f32 %v1108, %v1108
        %v1237 = vmul.f32 %v1109, %v1109
        %v1238 = vmul.f32 %v1110, %v1110
        %v1239 = vmul.f32 %v1111, %v1111
        %v1240 = vmul.f32 %v1112, %v1112
        %v1241 = vmul.f32 %v1113, %v1113
        %v1242 = vmul.f32 %v1114, %v1114
        %v1243 = vmul.f32 %v1115, %v1115
        %v1244 = vmul.f32 %v1116, %v1116
        %v1245 = vmul.f32 %v1117, %v1117
        %v1246 = vmul.f32 %v1118, %v1118
        %v1247 = vmul.f32 %v1119, %v1119
        %v1248 = vmul.f32 %v1120, %v1120
        %v1249 = vmul.f32 %v1121, %v1121
        %v1250 = vmul.f32 %v1122, %v1122
        %v1251 = vmul.f32 %v1123, %v1123
        %v1252 = vmul.f32 %v1124, %v1124
        %v1253 = vmul.f32 %v1125, %v1125
        %v1254 = vmul.f32 %v1126, %v1126
        %v1255 = vmul.f32 %v1127, %v1127
        %v1256 = vmul.f32 %v1128, %v1128
        %v1257 = vmul.f32 %v1129, %v1129
        %v1258 = vmul.f32 %v1130, %v1130
        %v1259 = vmul.f32 %v1131, %v1131
        %v1260 = vmul.f32 %v1132, %v1132
        %v1261 = vmul.f32 %v1133, %v1133
        %v1262 = vmul.f32 %v1134, %v1134
        %v1263 = vmul.f32 %v1135, %v1135
        %v1264 = vmul.f32 %v1136, %v1136
        %v1265 = vmul.f32 %v1137, %v1137
        %v1266 = vmul.f32 %v1138, %v1138
        %v1267 = vmul.f32 %v1139, %v1139
        %v1268 = vmul.f32 %v1140, %v1140
        %v1269 = vmul.f32 %v1141, %v1141
        %v1270 = vmul.f32 %v1142, %v1142
        %v1271 = vmul.f32 %v1143, %v1143
        %v1272 = vmul.f32 %v1144, %v1144
        %v1273 = vmul.f32 %v1145, %v1145
        %v1274 = vmul.f32 %v1146, %v1146
        %v1275 = vmul.f32 %v1147, %v1147
        %v1276 = vmul.f32 %v1148, %v1148
        %v1277 = vmul.f32 %v1149, %v1149
        %v1278 = vmul.f32 %v1150, %v1150
        %v1279 = vmul.f32 %v1151, %v1151
        %v1280 = vmul.f32 %v1152, %v1152
        %v1281 = vmul.f32 %v1153, %v1153
        %v1282 = vmul.f32 %v1154, %v1154
        %v1283 = vmul.f32 %v1155, %v1155
        %v1284 = vmul.f32 %v1156, %v1156
        %v1285 = vmul.f32 %v1157, %v1157
        %v1286 = vmul.f32 %v1158, %v1158
        %v1287 = vmul.f32 %v1159, %v1159
        %v1288 = vmul.f32 %v1160, %v1160
        %v1289 = vmul.f32 %v1161, %v1161
        %v1290 = vmul.f32 %v1162, %v1162
        %v1291 = vmul.f32 %v1163, %v1163
        %v1292 = vmul.f32 %v1164, %v1164
        %v1293 = vmul.f32 %v1165, %v1165
        %v1294 = vmul.f32 %v1166, %v1166
        %v1295 = vmul.f32 %v1167, %v1167
        %v1296 = vmul.f32 %v1168, %v1168
        %v1297 = vmul.f32 %v1169, %v1169
        %v1298 = vmul.f32 %v1170, %v1170
        %v1299 = vmul.f32 %v1171, %v1171
        %v1300 = vmul.f32 %v1172, %v1172
        %v1301 = vmul.f32 %v1173, %v1173
        %v1302 = vmul.f32 %v1174, %v1174
        %v1303 = vmul.f32 %v1175, %v1175
        %v1304 = vmul.f32 %v1176, %v1176
        %v1305 = vmul.f32 %v1177, %v1177
        %v1306 = vmul.f32 %v1178, %v1178
        %v1307 = vmul.f32 %v1179, %v1179
        %v1308 = vmul.f32 %v1180, %v1180
        %v1309 = vmul.f32 %v1181, %v1181
        %v1310 = vmul.f32 %v1182, %v1182
        %v1311 = vmul.f32 %v1183, %v1183
        %v1312 = vmul.f32 %v1184, %v1184
        %v1313 = vmul.f32 %v1185, %v1185
        %v1314 = vmul.f32 %v1186, %v1186
        %v1315 = vmul.f32 %v1187, %v1187
        %v1316 = vmul.f32 %v1188, %v1188
        %v1317 = vmul.f32 %v1189, %v1189
        %v1318 = vmul.f32 %v1190, %v1190
        %v1319 = vmul.f32 %v1191, %v1191
        %v1320 = vmul.f32 %v1192, %v1192
        %v1321 = vmul.f32 %v1193, %v1193
        %v1322 = vmul.f32 %v1194, %v1194
        %v1323 = vadd.f32 %v1195, %v1227
        %v1324 = vadd.f32 %v1323, %v1259
        %v1325 = vadd.f32 %v1324, %v1291
        %v1326 = vadd.f32 %v1196, %v1228
        %v1327 = vadd.f32 %v1326, %v1260
        %v1328 = vadd.f32 %v1327, %v1292
        %v1329 = vadd.f32 %v1197, %v1229
        %v1330 = vadd.f32 %v1329, %v1261
        %v1331 = vadd.f32 %v1330, %v1293
        %v1332 = vadd.f32 %v1198, %v1230
        %v1333 = vadd.f32 %v1332, %v1262
        %v1334 = vadd.f32 %v1333, %v1294
        %v1335 = vadd.f32 %v1199, %v1231
        %v1336 = vadd.f32 %v1335, %v1263
        %v1337 = vadd.f32 %v1336, %v1295
        %v1338 = vadd.f32 %v1200, %v1232
        %v1339 = vadd.f32 %v1338, %v1264
        %v1340 = vadd.f32 %v1339, %v1296
        %v1341 = vadd.f32 %v1201, %v1233
        %v1342 = vadd.f32 %v1341, %v1265
        %v1343 = vadd.f32 %v1342, %v1297
        %v1344 = vadd.f32 %v1202, %v1234
        %v1345 = vadd.f32 %v1344, %v1266
        %v1346 = vadd.f32 %v1345, %v1298
        %v1347 = vadd.f32 %v1203, %v1235
        %v1348 = vadd.f32 %v1347, %v1267
        %v1349 = vadd.f32 %v1348, %v1299
        %v1350 = vadd.f32 %v1204, %v1236
        %v1351 = vadd.f32 %v1350, %v1268
        %v1352 = vadd.f32 %v1351, %v1300
        %v1353 = vadd.f32 %v1205, %v1237
        %v1354 = vadd.f32 %v1353, %v1269
        %v1355 = vadd.f32 %v1354, %v1301
        %v1356 = vadd.f32 %v1206, %v1238
        %v1357 = vadd.f32 %v1356, %v1270
        %v1358 = vadd.f32 %v1357, %v1302
        %v1359 = vadd.f32 %v1207, %v1239
        %v1360 = vadd.f32 %v1359, %v1271
        %v1361 = vadd.f32 %v1360, %v1303
        %v1362 = vadd.f32 %v1208, %v1240
        %v1363 = vadd.f32 %v1362, %v1272
        %v1364 = vadd.f32 %v1363, %v1304
        %v1365 = vadd.f32 %v1209, %v1241
        %v1366 = vadd.f32 %v1365, %v1273
        %v1367 = vadd.f32 %v1366, %v1305
        %v1368 = vadd.f32 %v1210, %v1242
        %v1369 = vadd.f32 %v1368, %v1274
        %v1370 = vadd.f32 %v1369, %v1306
        %v1371 = vadd.f32 %v1211, %v1243
        %v1372 = vadd.f32 %v1371, %v1275
        %v1373 = vadd.f32 %v1372, %v1307
        %v1374 = vadd.f32 %v1212, %v1244
        %v1375 = vadd.f32 %v1374, %v1276
        %v1376 = vadd.f32 %v1375, %v1308
        %v1377 = vadd.f32 %v1213, %v1245
        %v1378 = vadd.f32 %v1377, %v1277
        %v1379 = vadd.f32 %v1378, %v1309
        %v1380 = vadd.f32 %v1214, %v1246
        %v1381 = vadd.f32 %v1380, %v1278
        %v1382 = vadd.f32 %v1381, %v1310
        %v1383 = vadd.f32 %v1215, %v1247
        %v1384 = vadd.f32 %v1383, %v1279
        %v1385 = vadd.f32 %v1384, %v1311
        %v1386 = vadd.f32 %v1216, %v1248
        %v1387 = vadd.f32 %v1386, %v1280
        %v1388 = vadd.f32 %v1387, %v1312
        %v1389 = vadd.f32 %v1217, %v1249
        %v1390 = vadd.f32 %v1389, %v1281
        %v1391 = vadd.f32 %v1390, %v1313
        %v1392 = vadd.f32 %v1218, %v1250
        %v1393 = vadd.f32 %v1392, %v1282
        %v1394 = vadd.f32 %v1393, %v1314
        %v1395 = vadd.f32 %v1219, %v1251
        %v1396 = vadd.f32 %v1395, %v1283
        %v1397 = vadd.f32 %v1396, %v1315
        %v1398 = vadd.f32 %v1220, %v1252
        %v1399 = vadd.f32 %v1398, %v1284
        %v1400 = vadd.f32 %v1399, %v1316
        %v1401 = vadd.f32 %v1221, %v1253
        %v1402 = vadd.f32 %v1401, %v1285
        %v1403 = vadd.f32 %v1402, %v1317
        %v1404 = vadd.f32 %v1222, %v1254
        %v1405 = vadd.f32 %v1404, %v1286
        %v1406 = vadd.f32 %v1405, %v1318
        %v1407 = vadd.f32 %v1223, %v1255
        %v1408 = vadd.f32 %v1407, %v1287
        %v1409 = vadd.f32 %v1408, %v1319
        %v1410 = vadd.f32 %v1224, %v1256
        %v1411 = vadd.f32 %v1410, %v1288
        %v1412 = vadd.f32 %v1411, %v1320
        %v1413 = vadd.f32 %v1225, %v1257
        %v1414 = vadd.f32 %v1413, %v1289
        %v1415 = vadd.f32 %v1414, %v1321
        %v1416 = vadd.f32 %v1226, %v1258
        %v1417 = vadd.f32 %v1416, %v1290
        %v1418 = vadd.f32 %v1417, %v1322
        %v1419 = vrsqrt.pop %v1325
        %v1420 = vmul.f32 %v1419, %v1325
        %v1421 = vmul.f32 %v1420, %v1419
        %v1422 = vmul.f32 0.5, %v1421
        %v1423 = vsub.f32 1.5, %v1422
        %v1424 = vmul.f32 %v1419, %v1423
        %v1425 = vmul.f32 %v1325, %v1424
        %vm1426 = vcmp.eq.f32.partialorder %v1325, inf
        %v1427 = vsel %vm1426, %v1325, %v1425
        %vm1428 = vcmp.eq.f32.partialorder %v1325, 0.0
        %v1429 = vand.u32 %v1325, 2147483648
        %v1430 = vsel %vm1428, %v1429, %v1427
        %v1431 = vrsqrt.pop %v1328
        %v1432 = vmul.f32 %v1431, %v1328
        %v1433 = vmul.f32 %v1432, %v1431
        %v1434 = vmul.f32 0.5, %v1433
        %v1435 = vsub.f32 1.5, %v1434
        %v1436 = vmul.f32 %v1431, %v1435
        %v1437 = vmul.f32 %v1328, %v1436
        %vm1438 = vcmp.eq.f32.partialorder %v1328, inf
        %v1439 = vsel %vm1438, %v1328, %v1437
        %vm1440 = vcmp.eq.f32.partialorder %v1328, 0.0
        %v1441 = vand.u32 %v1328, 2147483648
        %v1442 = vsel %vm1440, %v1441, %v1439
        %v1443 = vrsqrt.pop %v1331
        %v1444 = vmul.f32 %v1443, %v1331
        %v1445 = vmul.f32 %v1444, %v1443
        %v1446 = vmul.f32 0.5, %v1445
        %v1447 = vsub.f32 1.5, %v1446
        %v1448 = vmul.f32 %v1443, %v1447
        %v1449 = vmul.f32 %v1331, %v1448
        %vm1450 = vcmp.eq.f32.partialorder %v1331, inf
        %v1451 = vsel %vm1450, %v1331, %v1449
        %vm1452 = vcmp.eq.f32.partialorder %v1331, 0.0
        %v1453 = vand.u32 %v1331, 2147483648
        %v1454 = vsel %vm1452, %v1453, %v1451
        %v1455 = vrsqrt.pop %v1334
        %v1456 = vmul.f32 %v1455, %v1334
        %v1457 = vmul.f32 %v1456, %v1455
        %v1458 = vmul.f32 0.5, %v1457
        %v1459 = vsub.f32 1.5, %v1458
        %v1460 = vmul.f32 %v1455, %v1459
        %v1461 = vmul.f32 %v1334, %v1460
        %vm1462 = vcmp.eq.f32.partialorder %v1334, inf
        %v1463 = vsel %vm1462, %v1334, %v1461
        %vm1464 = vcmp.eq.f32.partialorder %v1334, 0.0
        %v1465 = vand.u32 %v1334, 2147483648
        %v1466 = vsel %vm1464, %v1465, %v1463
        %v1467 = vrsqrt.pop %v1337
        %v1468 = vmul.f32 %v1467, %v1337
        %v1469 = vmul.f32 %v1468, %v1467
        %v1470 = vmul.f32 0.5, %v1469
        %v1471 = vsub.f32 1.5, %v1470
        %v1472 = vmul.f32 %v1467, %v1471
        %v1473 = vmul.f32 %v1337, %v1472
        %vm1474 = vcmp.eq.f32.partialorder %v1337, inf
        %v1475 = vsel %vm1474, %v1337, %v1473
        %vm1476 = vcmp.eq.f32.partialorder %v1337, 0.0
        %v1477 = vand.u32 %v1337, 2147483648
        %v1478 = vsel %vm1476, %v1477, %v1475
        %v1479 = vrsqrt.pop %v1340
        %v1480 = vmul.f32 %v1479, %v1340
        %v1481 = vmul.f32 %v1480, %v1479
        %v1482 = vmul.f32 0.5, %v1481
        %v1483 = vsub.f32 1.5, %v1482
        %v1484 = vmul.f32 %v1479, %v1483
        %v1485 = vmul.f32 %v1340, %v1484
        %vm1486 = vcmp.eq.f32.partialorder %v1340, inf
        %v1487 = vsel %vm1486, %v1340, %v1485
        %vm1488 = vcmp.eq.f32.partialorder %v1340, 0.0
        %v1489 = vand.u32 %v1340, 2147483648
        %v1490 = vsel %vm1488, %v1489, %v1487
        %v1491 = vrsqrt.pop %v1343
        %v1492 = vmul.f32 %v1491, %v1343
        %v1493 = vmul.f32 %v1492, %v1491
        %v1494 = vmul.f32 0.5, %v1493
        %v1495 = vsub.f32 1.5, %v1494
        %v1496 = vmul.f32 %v1491, %v1495
        %v1497 = vmul.f32 %v1343, %v1496
        %vm1498 = vcmp.eq.f32.partialorder %v1343, inf
        %v1499 = vsel %vm1498, %v1343, %v1497
        %vm1500 = vcmp.eq.f32.partialorder %v1343, 0.0
        %v1501 = vand.u32 %v1343, 2147483648
        %v1502 = vsel %vm1500, %v1501, %v1499
        %v1503 = vrsqrt.pop %v1346
        %v1504 = vmul.f32 %v1503, %v1346
        %v1505 = vmul.f32 %v1504, %v1503
        %v1506 = vmul.f32 0.5, %v1505
        %v1507 = vsub.f32 1.5, %v1506
        %v1508 = vmul.f32 %v1503, %v1507
        %v1509 = vmul.f32 %v1346, %v1508
        %vm1510 = vcmp.eq.f32.partialorder %v1346, inf
        %v1511 = vsel %vm1510, %v1346, %v1509
        %vm1512 = vcmp.eq.f32.partialorder %v1346, 0.0
        %v1513 = vand.u32 %v1346, 2147483648
        %v1514 = vsel %vm1512, %v1513, %v1511
        %v1515 = vrsqrt.pop %v1349
        %v1516 = vmul.f32 %v1515, %v1349
        %v1517 = vmul.f32 %v1516, %v1515
        %v1518 = vmul.f32 0.5, %v1517
        %v1519 = vsub.f32 1.5, %v1518
        %v1520 = vmul.f32 %v1515, %v1519
        %v1521 = vmul.f32 %v1349, %v1520
        %vm1522 = vcmp.eq.f32.partialorder %v1349, inf
        %v1523 = vsel %vm1522, %v1349, %v1521
        %vm1524 = vcmp.eq.f32.partialorder %v1349, 0.0
        %v1525 = vand.u32 %v1349, 2147483648
        %v1526 = vsel %vm1524, %v1525, %v1523
        %v1527 = vrsqrt.pop %v1352
        %v1528 = vmul.f32 %v1527, %v1352
        %v1529 = vmul.f32 %v1528, %v1527
        %v1530 = vmul.f32 0.5, %v1529
        %v1531 = vsub.f32 1.5, %v1530
        %v1532 = vmul.f32 %v1527, %v1531
        %v1533 = vmul.f32 %v1352, %v1532
        %vm1534 = vcmp.eq.f32.partialorder %v1352, inf
        %v1535 = vsel %vm1534, %v1352, %v1533
        %vm1536 = vcmp.eq.f32.partialorder %v1352, 0.0
        %v1537 = vand.u32 %v1352, 2147483648
        %v1538 = vsel %vm1536, %v1537, %v1535
        %v1539 = vrsqrt.pop %v1355
        %v1540 = vmul.f32 %v1539, %v1355
        %v1541 = vmul.f32 %v1540, %v1539
        %v1542 = vmul.f32 0.5, %v1541
        %v1543 = vsub.f32 1.5, %v1542
        %v1544 = vmul.f32 %v1539, %v1543
        %v1545 = vmul.f32 %v1355, %v1544
        %vm1546 = vcmp.eq.f32.partialorder %v1355, inf
        %v1547 = vsel %vm1546, %v1355, %v1545
        %vm1548 = vcmp.eq.f32.partialorder %v1355, 0.0
        %v1549 = vand.u32 %v1355, 2147483648
        %v1550 = vsel %vm1548, %v1549, %v1547
        %v1551 = vrsqrt.pop %v1358
        %v1552 = vmul.f32 %v1551, %v1358
        %v1553 = vmul.f32 %v1552, %v1551
        %v1554 = vmul.f32 0.5, %v1553
        %v1555 = vsub.f32 1.5, %v1554
        %v1556 = vmul.f32 %v1551, %v1555
        %v1557 = vmul.f32 %v1358, %v1556
        %vm1558 = vcmp.eq.f32.partialorder %v1358, inf
        %v1559 = vsel %vm1558, %v1358, %v1557
        %vm1560 = vcmp.eq.f32.partialorder %v1358, 0.0
        %v1561 = vand.u32 %v1358, 2147483648
        %v1562 = vsel %vm1560, %v1561, %v1559
        %v1563 = vrsqrt.pop %v1361
        %v1564 = vmul.f32 %v1563, %v1361
        %v1565 = vmul.f32 %v1564, %v1563
        %v1566 = vmul.f32 0.5, %v1565
        %v1567 = vsub.f32 1.5, %v1566
        %v1568 = vmul.f32 %v1563, %v1567
        %v1569 = vmul.f32 %v1361, %v1568
        %vm1570 = vcmp.eq.f32.partialorder %v1361, inf
        %v1571 = vsel %vm1570, %v1361, %v1569
        %vm1572 = vcmp.eq.f32.partialorder %v1361, 0.0
        %v1573 = vand.u32 %v1361, 2147483648
        %v1574 = vsel %vm1572, %v1573, %v1571
        %v1575 = vrsqrt.pop %v1364
        %v1576 = vmul.f32 %v1575, %v1364
        %v1577 = vmul.f32 %v1576, %v1575
        %v1578 = vmul.f32 0.5, %v1577
        %v1579 = vsub.f32 1.5, %v1578
        %v1580 = vmul.f32 %v1575, %v1579
        %v1581 = vmul.f32 %v1364, %v1580
        %vm1582 = vcmp.eq.f32.partialorder %v1364, inf
        %v1583 = vsel %vm1582, %v1364, %v1581
        %vm1584 = vcmp.eq.f32.partialorder %v1364, 0.0
        %v1585 = vand.u32 %v1364, 2147483648
        %v1586 = vsel %vm1584, %v1585, %v1583
        %v1587 = vrsqrt.pop %v1367
        %v1588 = vmul.f32 %v1587, %v1367
        %v1589 = vmul.f32 %v1588, %v1587
        %v1590 = vmul.f32 0.5, %v1589
        %v1591 = vsub.f32 1.5, %v1590
        %v1592 = vmul.f32 %v1587, %v1591
        %v1593 = vmul.f32 %v1367, %v1592
        %vm1594 = vcmp.eq.f32.partialorder %v1367, inf
        %v1595 = vsel %vm1594, %v1367, %v1593
        %vm1596 = vcmp.eq.f32.partialorder %v1367, 0.0
        %v1597 = vand.u32 %v1367, 2147483648
        %v1598 = vsel %vm1596, %v1597, %v1595
        %v1599 = vrsqrt.pop %v1370
        %v1600 = vmul.f32 %v1599, %v1370
        %v1601 = vmul.f32 %v1600, %v1599
        %v1602 = vmul.f32 0.5, %v1601
        %v1603 = vsub.f32 1.5, %v1602
        %v1604 = vmul.f32 %v1599, %v1603
        %v1605 = vmul.f32 %v1370, %v1604
        %vm1606 = vcmp.eq.f32.partialorder %v1370, inf
        %v1607 = vsel %vm1606, %v1370, %v1605
        %vm1608 = vcmp.eq.f32.partialorder %v1370, 0.0
        %v1609 = vand.u32 %v1370, 2147483648
        %v1610 = vsel %vm1608, %v1609, %v1607
        %v1611 = vrsqrt.pop %v1373
        %v1612 = vmul.f32 %v1611, %v1373
        %v1613 = vmul.f32 %v1612, %v1611
        %v1614 = vmul.f32 0.5, %v1613
        %v1615 = vsub.f32 1.5, %v1614
        %v1616 = vmul.f32 %v1611, %v1615
        %v1617 = vmul.f32 %v1373, %v1616
        %vm1618 = vcmp.eq.f32.partialorder %v1373, inf
        %v1619 = vsel %vm1618, %v1373, %v1617
        %vm1620 = vcmp.eq.f32.partialorder %v1373, 0.0
        %v1621 = vand.u32 %v1373, 2147483648
        %v1622 = vsel %vm1620, %v1621, %v1619
        %v1623 = vrsqrt.pop %v1376
        %v1624 = vmul.f32 %v1623, %v1376
        %v1625 = vmul.f32 %v1624, %v1623
        %v1626 = vmul.f32 0.5, %v1625
        %v1627 = vsub.f32 1.5, %v1626
        %v1628 = vmul.f32 %v1623, %v1627
        %v1629 = vmul.f32 %v1376, %v1628
        %vm1630 = vcmp.eq.f32.partialorder %v1376, inf
        %v1631 = vsel %vm1630, %v1376, %v1629
        %vm1632 = vcmp.eq.f32.partialorder %v1376, 0.0
        %v1633 = vand.u32 %v1376, 2147483648
        %v1634 = vsel %vm1632, %v1633, %v1631
        %v1635 = vrsqrt.pop %v1379
        %v1636 = vmul.f32 %v1635, %v1379
        %v1637 = vmul.f32 %v1636, %v1635
        %v1638 = vmul.f32 0.5, %v1637
        %v1639 = vsub.f32 1.5, %v1638
        %v1640 = vmul.f32 %v1635, %v1639
        %v1641 = vmul.f32 %v1379, %v1640
        %vm1642 = vcmp.eq.f32.partialorder %v1379, inf
        %v1643 = vsel %vm1642, %v1379, %v1641
        %vm1644 = vcmp.eq.f32.partialorder %v1379, 0.0
        %v1645 = vand.u32 %v1379, 2147483648
        %v1646 = vsel %vm1644, %v1645, %v1643
        %v1647 = vrsqrt.pop %v1382
        %v1648 = vmul.f32 %v1647, %v1382
        %v1649 = vmul.f32 %v1648, %v1647
        %v1650 = vmul.f32 0.5, %v1649
        %v1651 = vsub.f32 1.5, %v1650
        %v1652 = vmul.f32 %v1647, %v1651
        %v1653 = vmul.f32 %v1382, %v1652
        %vm1654 = vcmp.eq.f32.partialorder %v1382, inf
        %v1655 = vsel %vm1654, %v1382, %v1653
        %vm1656 = vcmp.eq.f32.partialorder %v1382, 0.0
        %v1657 = vand.u32 %v1382, 2147483648
        %v1658 = vsel %vm1656, %v1657, %v1655
        %v1659 = vrsqrt.pop %v1385
        %v1660 = vmul.f32 %v1659, %v1385
        %v1661 = vmul.f32 %v1660, %v1659
        %v1662 = vmul.f32 0.5, %v1661
        %v1663 = vsub.f32 1.5, %v1662
        %v1664 = vmul.f32 %v1659, %v1663
        %v1665 = vmul.f32 %v1385, %v1664
        %vm1666 = vcmp.eq.f32.partialorder %v1385, inf
        %v1667 = vsel %vm1666, %v1385, %v1665
        %vm1668 = vcmp.eq.f32.partialorder %v1385, 0.0
        %v1669 = vand.u32 %v1385, 2147483648
        %v1670 = vsel %vm1668, %v1669, %v1667
        %v1671 = vrsqrt.pop %v1388
        %v1672 = vmul.f32 %v1671, %v1388
        %v1673 = vmul.f32 %v1672, %v1671
        %v1674 = vmul.f32 0.5, %v1673
        %v1675 = vsub.f32 1.5, %v1674
        %v1676 = vmul.f32 %v1671, %v1675
        %v1677 = vmul.f32 %v1388, %v1676
        %vm1678 = vcmp.eq.f32.partialorder %v1388, inf
        %v1679 = vsel %vm1678, %v1388, %v1677
        %vm1680 = vcmp.eq.f32.partialorder %v1388, 0.0
        %v1681 = vand.u32 %v1388, 2147483648
        %v1682 = vsel %vm1680, %v1681, %v1679
        %v1683 = vrsqrt.pop %v1391
        %v1684 = vmul.f32 %v1683, %v1391
        %v1685 = vmul.f32 %v1684, %v1683
        %v1686 = vmul.f32 0.5, %v1685
        %v1687 = vsub.f32 1.5, %v1686
        %v1688 = vmul.f32 %v1683, %v1687
        %v1689 = vmul.f32 %v1391, %v1688
        %vm1690 = vcmp.eq.f32.partialorder %v1391, inf
        %v1691 = vsel %vm1690, %v1391, %v1689
        %vm1692 = vcmp.eq.f32.partialorder %v1391, 0.0
        %v1693 = vand.u32 %v1391, 2147483648
        %v1694 = vsel %vm1692, %v1693, %v1691
        %v1695 = vrsqrt.pop %v1394
        %v1696 = vmul.f32 %v1695, %v1394
        %v1697 = vmul.f32 %v1696, %v1695
        %v1698 = vmul.f32 0.5, %v1697
        %v1699 = vsub.f32 1.5, %v1698
        %v1700 = vmul.f32 %v1695, %v1699
        %v1701 = vmul.f32 %v1394, %v1700
        %vm1702 = vcmp.eq.f32.partialorder %v1394, inf
        %v1703 = vsel %vm1702, %v1394, %v1701
        %vm1704 = vcmp.eq.f32.partialorder %v1394, 0.0
        %v1705 = vand.u32 %v1394, 2147483648
        %v1706 = vsel %vm1704, %v1705, %v1703
        %v1707 = vrsqrt.pop %v1397
        %v1708 = vmul.f32 %v1707, %v1397
        %v1709 = vmul.f32 %v1708, %v1707
        %v1710 = vmul.f32 0.5, %v1709
        %v1711 = vsub.f32 1.5, %v1710
        %v1712 = vmul.f32 %v1707, %v1711
        %v1713 = vmul.f32 %v1397, %v1712
        %vm1714 = vcmp.eq.f32.partialorder %v1397, inf
        %v1715 = vsel %vm1714, %v1397, %v1713
        %vm1716 = vcmp.eq.f32.partialorder %v1397, 0.0
        %v1717 = vand.u32 %v1397, 2147483648
        %v1718 = vsel %vm1716, %v1717, %v1715
        %v1719 = vrsqrt.pop %v1400
        %v1720 = vmul.f32 %v1719, %v1400
        %v1721 = vmul.f32 %v1720, %v1719
        %v1722 = vmul.f32 0.5, %v1721
        %v1723 = vsub.f32 1.5, %v1722
        %v1724 = vmul.f32 %v1719, %v1723
        %v1725 = vmul.f32 %v1400, %v1724
        %vm1726 = vcmp.eq.f32.partialorder %v1400, inf
        %v1727 = vsel %vm1726, %v1400, %v1725
        %vm1728 = vcmp.eq.f32.partialorder %v1400, 0.0
        %v1729 = vand.u32 %v1400, 2147483648
        %v1730 = vsel %vm1728, %v1729, %v1727
        %v1731 = vrsqrt.pop %v1403
        %v1732 = vmul.f32 %v1731, %v1403
        %v1733 = vmul.f32 %v1732, %v1731
        %v1734 = vmul.f32 0.5, %v1733
        %v1735 = vsub.f32 1.5, %v1734
        %v1736 = vmul.f32 %v1731, %v1735
        %v1737 = vmul.f32 %v1403, %v1736
        %vm1738 = vcmp.eq.f32.partialorder %v1403, inf
        %v1739 = vsel %vm1738, %v1403, %v1737
        %vm1740 = vcmp.eq.f32.partialorder %v1403, 0.0
        %v1741 = vand.u32 %v1403, 2147483648
        %v1742 = vsel %vm1740, %v1741, %v1739
        %v1743 = vrsqrt.pop %v1406
        %v1744 = vmul.f32 %v1743, %v1406
        %v1745 = vmul.f32 %v1744, %v1743
        %v1746 = vmul.f32 0.5, %v1745
        %v1747 = vsub.f32 1.5, %v1746
        %v1748 = vmul.f32 %v1743, %v1747
        %v1749 = vmul.f32 %v1406, %v1748
        %vm1750 = vcmp.eq.f32.partialorder %v1406, inf
        %v1751 = vsel %vm1750, %v1406, %v1749
        %vm1752 = vcmp.eq.f32.partialorder %v1406, 0.0
        %v1753 = vand.u32 %v1406, 2147483648
        %v1754 = vsel %vm1752, %v1753, %v1751
        %v1755 = vrsqrt.pop %v1409
        %v1756 = vmul.f32 %v1755, %v1409
        %v1757 = vmul.f32 %v1756, %v1755
        %v1758 = vmul.f32 0.5, %v1757
        %v1759 = vsub.f32 1.5, %v1758
        %v1760 = vmul.f32 %v1755, %v1759
        %v1761 = vmul.f32 %v1409, %v1760
        %vm1762 = vcmp.eq.f32.partialorder %v1409, inf
        %v1763 = vsel %vm1762, %v1409, %v1761
        %vm1764 = vcmp.eq.f32.partialorder %v1409, 0.0
        %v1765 = vand.u32 %v1409, 2147483648
        %v1766 = vsel %vm1764, %v1765, %v1763
        %v1767 = vrsqrt.pop %v1412
        %v1768 = vmul.f32 %v1767, %v1412
        %v1769 = vmul.f32 %v1768, %v1767
        %v1770 = vmul.f32 0.5, %v1769
        %v1771 = vsub.f32 1.5, %v1770
        %v1772 = vmul.f32 %v1767, %v1771
        %v1773 = vmul.f32 %v1412, %v1772
        %vm1774 = vcmp.eq.f32.partialorder %v1412, inf
        %v1775 = vsel %vm1774, %v1412, %v1773
        %vm1776 = vcmp.eq.f32.partialorder %v1412, 0.0
        %v1777 = vand.u32 %v1412, 2147483648
        %v1778 = vsel %vm1776, %v1777, %v1775
        %v1779 = vrsqrt.pop %v1415
        %v1780 = vmul.f32 %v1779, %v1415
        %v1781 = vmul.f32 %v1780, %v1779
        %v1782 = vmul.f32 0.5, %v1781
        %v1783 = vsub.f32 1.5, %v1782
        %v1784 = vmul.f32 %v1779, %v1783
        %v1785 = vmul.f32 %v1415, %v1784
        %vm1786 = vcmp.eq.f32.partialorder %v1415, inf
        %v1787 = vsel %vm1786, %v1415, %v1785
        %vm1788 = vcmp.eq.f32.partialorder %v1415, 0.0
        %v1789 = vand.u32 %v1415, 2147483648
        %v1790 = vsel %vm1788, %v1789, %v1787
        %v1791 = vrsqrt.pop %v1418
        %v1792 = vmul.f32 %v1791, %v1418
        %v1793 = vmul.f32 %v1792, %v1791
        %v1794 = vmul.f32 0.5, %v1793
        %v1795 = vsub.f32 1.5, %v1794
        %v1796 = vmul.f32 %v1791, %v1795
        %v1797 = vmul.f32 %v1418, %v1796
        %vm1798 = vcmp.eq.f32.partialorder %v1418, inf
        %v1799 = vsel %vm1798, %v1418, %v1797
        %vm1800 = vcmp.eq.f32.partialorder %v1418, 0.0
        %v1801 = vand.u32 %v1418, 2147483648
        %v1802 = vsel %vm1800, %v1801, %v1799
        %v1803 = vmul.f32 %v1430, -0.5
        %v1804 = vmul.f32 %v1442, -0.5
        %v1805 = vmul.f32 %v1454, -0.5
        %v1806 = vmul.f32 %v1466, -0.5
        %v1807 = vmul.f32 %v1478, -0.5
        %v1808 = vmul.f32 %v1490, -0.5
        %v1809 = vmul.f32 %v1502, -0.5
        %v1810 = vmul.f32 %v1514, -0.5
        %v1811 = vmul.f32 %v1526, -0.5
        %v1812 = vmul.f32 %v1538, -0.5
        %v1813 = vmul.f32 %v1550, -0.5
        %v1814 = vmul.f32 %v1562, -0.5
        %v1815 = vmul.f32 %v1574, -0.5
        %v1816 = vmul.f32 %v1586, -0.5
        %v1817 = vmul.f32 %v1598, -0.5
        %v1818 = vmul.f32 %v1610, -0.5
        %v1819 = vmul.f32 %v1622, -0.5
        %v1820 = vmul.f32 %v1634, -0.5
        %v1821 = vmul.f32 %v1646, -0.5
        %v1822 = vmul.f32 %v1658, -0.5
        %v1823 = vmul.f32 %v1670, -0.5
        %v1824 = vmul.f32 %v1682, -0.5
        %v1825 = vmul.f32 %v1694, -0.5
        %v1826 = vmul.f32 %v1706, -0.5
        %v1827 = vmul.f32 %v1718, -0.5
        %v1828 = vmul.f32 %v1730, -0.5
        %v1829 = vmul.f32 %v1742, -0.5
        %v1830 = vmul.f32 %v1754, -0.5
        %v1831 = vmul.f32 %v1766, -0.5
        %v1832 = vmul.f32 %v1778, -0.5
        %v1833 = vmul.f32 %v1790, -0.5
        %v1834 = vmul.f32 %v1802, -0.5
        %v1835 = vlaneseq
        %v1836 = vshrl.u32 %v1835, 7
        %v1837 = vadd.s32 %v1836, 8
        %v1838 = vadd.s32 %v1836, 16
        %v1839 = vadd.s32 %v1836, 24
        %v1840 = vadd.s32 %v1836, 32
        %v1841 = vadd.s32 %v1836, 40
        %v1842 = vadd.s32 %v1836, 48
        %v1843 = vadd.s32 %v1836, 56
        %v1844 = vadd.s32 %v1836, 64
        %v1845 = vadd.s32 %v1836, 72
        %v1846 = vadd.s32 %v1836, 80
        %v1847 = vadd.s32 %v1836, 88
        %v1848 = vadd.s32 %v1836, 96
        %v1849 = vadd.s32 %v1836, 104
        %v1850 = vadd.s32 %v1836, 112
        %v1851 = vadd.s32 %v1836, 120
        %v1852 = vadd.s32 %v1836, 128
        %v1853 = vadd.s32 %v1836, 136
        %v1854 = vadd.s32 %v1836, 144
        %v1855 = vadd.s32 %v1836, 152
        %v1856 = vadd.s32 %v1836, 160
        %v1857 = vadd.s32 %v1836, 168
        %v1858 = vadd.s32 %v1836, 176
        %v1859 = vadd.s32 %v1836, 184
        %v1860 = vadd.s32 %v1836, 192
        %v1861 = vadd.s32 %v1836, 200
        %v1862 = vadd.s32 %v1836, 208
        %v1863 = vadd.s32 %v1836, 216
        %v1864 = vadd.s32 %v1836, 224
        %v1865 = vadd.s32 %v1836, 232
        %v1866 = vadd.s32 %v1836, 240
        %v1867 = vadd.s32 %v1836, 248
        %s1868 = smul.u32 %s19, 128
        %v1869 = vlaneseq
        %v1870 = vand.u32 %v1869, 127
        %v1871 = vstv %s1868
        %v1872 = vadd.s32 %v1871, %v1870
        %vm1873 = vcmp.lt.s32.totalorder %v1836, 196
        %vm1874 = vcmp.lt.s32.totalorder %v1837, 196
        %vm1875 = vcmp.lt.s32.totalorder %v1838, 196
        %vm1876 = vcmp.lt.s32.totalorder %v1839, 196
        %vm1877 = vcmp.lt.s32.totalorder %v1840, 196
        %vm1878 = vcmp.lt.s32.totalorder %v1841, 196
        %vm1879 = vcmp.lt.s32.totalorder %v1842, 196
        %vm1880 = vcmp.lt.s32.totalorder %v1843, 196
        %vm1881 = vcmp.lt.s32.totalorder %v1844, 196
        %vm1882 = vcmp.lt.s32.totalorder %v1845, 196
        %vm1883 = vcmp.lt.s32.totalorder %v1846, 196
        %vm1884 = vcmp.lt.s32.totalorder %v1847, 196
        %vm1885 = vcmp.lt.s32.totalorder %v1848, 196
        %vm1886 = vcmp.lt.s32.totalorder %v1849, 196
        %vm1887 = vcmp.lt.s32.totalorder %v1850, 196
        %vm1888 = vcmp.lt.s32.totalorder %v1851, 196
        %vm1889 = vcmp.lt.s32.totalorder %v1852, 196
        %vm1890 = vcmp.lt.s32.totalorder %v1853, 196
        %vm1891 = vcmp.lt.s32.totalorder %v1854, 196
        %vm1892 = vcmp.lt.s32.totalorder %v1855, 196
        %vm1893 = vcmp.lt.s32.totalorder %v1856, 196
        %vm1894 = vcmp.lt.s32.totalorder %v1857, 196
        %vm1895 = vcmp.lt.s32.totalorder %v1858, 196
        %vm1896 = vcmp.lt.s32.totalorder %v1859, 196
        %vm1897 = vcmp.lt.s32.totalorder %v1860, 196
        %vm1898 = vcmp.lt.s32.totalorder %v1861, 196
        %vm1899 = vcmp.lt.s32.totalorder %v1862, 196
        %vm1900 = vcmp.lt.s32.totalorder %v1863, 196
        %vm1901 = vcmp.lt.s32.totalorder %v1864, 196
        %vm1902 = vcmp.lt.s32.totalorder %v1865, 196
        %vm1903 = vcmp.lt.s32.totalorder %v1866, 196
        %vm1904 = vcmp.lt.s32.totalorder %v1867, 196
        %vm1905 = vcmp.lt.s32.totalorder %v1872, 196
        %vm1906 = vcmp.ne.s32.totalorder %v1836, %v1872
        %vm1907 = vcmp.ne.s32.totalorder %v1837, %v1872
        %vm1908 = vcmp.ne.s32.totalorder %v1838, %v1872
        %vm1909 = vcmp.ne.s32.totalorder %v1839, %v1872
        %vm1910 = vcmp.ne.s32.totalorder %v1840, %v1872
        %vm1911 = vcmp.ne.s32.totalorder %v1841, %v1872
        %vm1912 = vcmp.ne.s32.totalorder %v1842, %v1872
        %vm1913 = vcmp.ne.s32.totalorder %v1843, %v1872
        %vm1914 = vcmp.ne.s32.totalorder %v1844, %v1872
        %vm1915 = vcmp.ne.s32.totalorder %v1845, %v1872
        %vm1916 = vcmp.ne.s32.totalorder %v1846, %v1872
        %vm1917 = vcmp.ne.s32.totalorder %v1847, %v1872
        %vm1918 = vcmp.ne.s32.totalorder %v1848, %v1872
        %vm1919 = vcmp.ne.s32.totalorder %v1849, %v1872
        %vm1920 = vcmp.ne.s32.totalorder %v1850, %v1872
        %vm1921 = vcmp.ne.s32.totalorder %v1851, %v1872
        %vm1922 = vcmp.ne.s32.totalorder %v1852, %v1872
        %vm1923 = vcmp.ne.s32.totalorder %v1853, %v1872
        %vm1924 = vcmp.ne.s32.totalorder %v1854, %v1872
        %vm1925 = vcmp.ne.s32.totalorder %v1855, %v1872
        %vm1926 = vcmp.ne.s32.totalorder %v1856, %v1872
        %vm1927 = vcmp.ne.s32.totalorder %v1857, %v1872
        %vm1928 = vcmp.ne.s32.totalorder %v1858, %v1872
        %vm1929 = vcmp.ne.s32.totalorder %v1859, %v1872
        %vm1930 = vcmp.ne.s32.totalorder %v1860, %v1872
        %vm1931 = vcmp.ne.s32.totalorder %v1861, %v1872
        %vm1932 = vcmp.ne.s32.totalorder %v1862, %v1872
        %vm1933 = vcmp.ne.s32.totalorder %v1863, %v1872
        %vm1934 = vcmp.ne.s32.totalorder %v1864, %v1872
        %vm1935 = vcmp.ne.s32.totalorder %v1865, %v1872
        %vm1936 = vcmp.ne.s32.totalorder %v1866, %v1872
        %vm1937 = vcmp.ne.s32.totalorder %v1867, %v1872
        %v1938 = vsel %vm1873, 1, 0
        %v1939 = vsel %vm1874, 1, 0
        %v1940 = vsel %vm1875, 1, 0
        %v1941 = vsel %vm1876, 1, 0
        %v1942 = vsel %vm1877, 1, 0
        %v1943 = vsel %vm1878, 1, 0
        %v1944 = vsel %vm1879, 1, 0
        %v1945 = vsel %vm1880, 1, 0
        %v1946 = vsel %vm1881, 1, 0
        %v1947 = vsel %vm1882, 1, 0
        %v1948 = vsel %vm1883, 1, 0
        %v1949 = vsel %vm1884, 1, 0
        %v1950 = vsel %vm1885, 1, 0
        %v1951 = vsel %vm1886, 1, 0
        %v1952 = vsel %vm1887, 1, 0
        %v1953 = vsel %vm1888, 1, 0
        %v1954 = vsel %vm1889, 1, 0
        %v1955 = vsel %vm1890, 1, 0
        %v1956 = vsel %vm1891, 1, 0
        %v1957 = vsel %vm1892, 1, 0
        %v1958 = vsel %vm1893, 1, 0
        %v1959 = vsel %vm1894, 1, 0
        %v1960 = vsel %vm1895, 1, 0
        %v1961 = vsel %vm1896, 1, 0
        %v1962 = vsel %vm1897, 1, 0
        %v1963 = vsel %vm1898, 1, 0
        %v1964 = vsel %vm1899, 1, 0
        %v1965 = vsel %vm1900, 1, 0
        %v1966 = vsel %vm1901, 1, 0
        %v1967 = vsel %vm1902, 1, 0
        %v1968 = vsel %vm1903, 1, 0
        %v1969 = vsel %vm1904, 1, 0
        %vm1970 = vcmp.eq.s32.totalorder %v1938, 1
        %vm1971 = vcmp.eq.s32.totalorder %v1939, 1
        %vm1972 = vcmp.eq.s32.totalorder %v1940, 1
        %vm1973 = vcmp.eq.s32.totalorder %v1941, 1
        %vm1974 = vcmp.eq.s32.totalorder %v1942, 1
        %vm1975 = vcmp.eq.s32.totalorder %v1943, 1
        %vm1976 = vcmp.eq.s32.totalorder %v1944, 1
        %vm1977 = vcmp.eq.s32.totalorder %v1945, 1
        %vm1978 = vcmp.eq.s32.totalorder %v1946, 1
        %vm1979 = vcmp.eq.s32.totalorder %v1947, 1
        %vm1980 = vcmp.eq.s32.totalorder %v1948, 1
        %vm1981 = vcmp.eq.s32.totalorder %v1949, 1
        %vm1982 = vcmp.eq.s32.totalorder %v1950, 1
        %vm1983 = vcmp.eq.s32.totalorder %v1951, 1
        %vm1984 = vcmp.eq.s32.totalorder %v1952, 1
        %vm1985 = vcmp.eq.s32.totalorder %v1953, 1
        %vm1986 = vcmp.eq.s32.totalorder %v1954, 1
        %vm1987 = vcmp.eq.s32.totalorder %v1955, 1
        %vm1988 = vcmp.eq.s32.totalorder %v1956, 1
        %vm1989 = vcmp.eq.s32.totalorder %v1957, 1
        %vm1990 = vcmp.eq.s32.totalorder %v1958, 1
        %vm1991 = vcmp.eq.s32.totalorder %v1959, 1
        %vm1992 = vcmp.eq.s32.totalorder %v1960, 1
        %vm1993 = vcmp.eq.s32.totalorder %v1961, 1
        %vm1994 = vcmp.eq.s32.totalorder %v1962, 1
        %vm1995 = vcmp.eq.s32.totalorder %v1963, 1
        %vm1996 = vcmp.eq.s32.totalorder %v1964, 1
        %vm1997 = vcmp.eq.s32.totalorder %v1965, 1
        %vm1998 = vcmp.eq.s32.totalorder %v1966, 1
        %vm1999 = vcmp.eq.s32.totalorder %v1967, 1
        %vm2000 = vcmp.eq.s32.totalorder %v1968, 1
        %vm2001 = vcmp.eq.s32.totalorder %v1969, 1
        %v2002 = vsel %vm1970, %v1803, -1e+30
        %v2003 = vsel %vm1971, %v1804, -1e+30
        %v2004 = vsel %vm1972, %v1805, -1e+30
        %v2005 = vsel %vm1973, %v1806, -1e+30
        %v2006 = vsel %vm1974, %v1807, -1e+30
        %v2007 = vsel %vm1975, %v1808, -1e+30
        %v2008 = vsel %vm1976, %v1809, -1e+30
        %v2009 = vsel %vm1977, %v1810, -1e+30
        %v2010 = vsel %vm1978, %v1811, -1e+30
        %v2011 = vsel %vm1979, %v1812, -1e+30
        %v2012 = vsel %vm1980, %v1813, -1e+30
        %v2013 = vsel %vm1981, %v1814, -1e+30
        %v2014 = vsel %vm1982, %v1815, -1e+30
        %v2015 = vsel %vm1983, %v1816, -1e+30
        %v2016 = vsel %vm1984, %v1817, -1e+30
        %v2017 = vsel %vm1985, %v1818, -1e+30
        %v2018 = vsel %vm1986, %v1819, -1e+30
        %v2019 = vsel %vm1987, %v1820, -1e+30
        %v2020 = vsel %vm1988, %v1821, -1e+30
        %v2021 = vsel %vm1989, %v1822, -1e+30
        %v2022 = vsel %vm1990, %v1823, -1e+30
        %v2023 = vsel %vm1991, %v1824, -1e+30
        %v2024 = vsel %vm1992, %v1825, -1e+30
        %v2025 = vsel %vm1993, %v1826, -1e+30
        %v2026 = vsel %vm1994, %v1827, -1e+30
        %v2027 = vsel %vm1995, %v1828, -1e+30
        %v2028 = vsel %vm1996, %v1829, -1e+30
        %v2029 = vsel %vm1997, %v1830, -1e+30
        %v2030 = vsel %vm1998, %v1831, -1e+30
        %v2031 = vsel %vm1999, %v1832, -1e+30
        %v2032 = vsel %vm2000, %v1833, -1e+30
        %v2033 = vsel %vm2001, %v1834, -1e+30
        %v2034 = vmax.f32 %v2002, %v2006
        %v2035 = vmax.f32 %v2003, %v2007
        %v2036 = vmax.f32 %v2004, %v2008
        %v2037 = vmax.f32 %v2005, %v2009
        %v2038 = vmax.f32 %v2034, %v2010
        %v2039 = vmax.f32 %v2035, %v2011
        %v2040 = vmax.f32 %v2036, %v2012
        %v2041 = vmax.f32 %v2037, %v2013
        %v2042 = vmax.f32 %v2038, %v2014
        %v2043 = vmax.f32 %v2039, %v2015
        %v2044 = vmax.f32 %v2040, %v2016
        %v2045 = vmax.f32 %v2041, %v2017
        %v2046 = vmax.f32 %v2042, %v2018
        %v2047 = vmax.f32 %v2043, %v2019
        %v2048 = vmax.f32 %v2044, %v2020
        %v2049 = vmax.f32 %v2045, %v2021
        %v2050 = vmax.f32 %v2046, %v2022
        %v2051 = vmax.f32 %v2047, %v2023
        %v2052 = vmax.f32 %v2048, %v2024
        %v2053 = vmax.f32 %v2049, %v2025
        %v2054 = vmax.f32 %v2050, %v2026
        %v2055 = vmax.f32 %v2051, %v2027
        %v2056 = vmax.f32 %v2052, %v2028
        %v2057 = vmax.f32 %v2053, %v2029
        %v2058 = vmax.f32 %v2054, %v2030
        %v2059 = vmax.f32 %v2055, %v2031
        %v2060 = vmax.f32 %v2056, %v2032
        %v2061 = vmax.f32 %v2057, %v2033
        %v2062 = vmax.f32 %v2058, %v2059
        %v2063 = vmax.f32 %v2060, %v2061
        %v2064 = vmax.f32 %v2062, %v2063
        %v2065 = vrot.slane %v2064, 4
        %v2066 = vmax.f32 %v2064, %v2065
        %v2067 = vrot.slane %v2066, 2
        %v2068 = vmax.f32 %v2066, %v2067
        %v2069 = vrot.slane %v2068, 1
        %v2070 = vmax.f32 %v2068, %v2069
        %v2071 = vsub.f32 %v1803, %v2070
        %v2072 = vsub.f32 %v1804, %v2070
        %v2073 = vsub.f32 %v1805, %v2070
        %v2074 = vsub.f32 %v1806, %v2070
        %v2075 = vsub.f32 %v1807, %v2070
        %v2076 = vsub.f32 %v1808, %v2070
        %v2077 = vsub.f32 %v1809, %v2070
        %v2078 = vsub.f32 %v1810, %v2070
        %v2079 = vsub.f32 %v1811, %v2070
        %v2080 = vsub.f32 %v1812, %v2070
        %v2081 = vsub.f32 %v1813, %v2070
        %v2082 = vsub.f32 %v1814, %v2070
        %v2083 = vsub.f32 %v1815, %v2070
        %v2084 = vsub.f32 %v1816, %v2070
        %v2085 = vsub.f32 %v1817, %v2070
        %v2086 = vsub.f32 %v1818, %v2070
        %v2087 = vsub.f32 %v1819, %v2070
        %v2088 = vsub.f32 %v1820, %v2070
        %v2089 = vsub.f32 %v1821, %v2070
        %v2090 = vsub.f32 %v1822, %v2070
        %v2091 = vsub.f32 %v1823, %v2070
        %v2092 = vsub.f32 %v1824, %v2070
        %v2093 = vsub.f32 %v1825, %v2070
        %v2094 = vsub.f32 %v1826, %v2070
        %v2095 = vsub.f32 %v1827, %v2070
        %v2096 = vsub.f32 %v1828, %v2070
        %v2097 = vsub.f32 %v1829, %v2070
        %v2098 = vsub.f32 %v1830, %v2070
        %v2099 = vsub.f32 %v1831, %v2070
        %v2100 = vsub.f32 %v1832, %v2070
        %v2101 = vsub.f32 %v1833, %v2070
        %v2102 = vsub.f32 %v1834, %v2070
        %v2103 = vmul.f32 %v2071, 1.442695
        %v2104 = vpow.pop %v2103
        %v2105 = vmul.f32 %v2072, 1.442695
        %v2106 = vpow.pop %v2105
        %v2107 = vmul.f32 %v2073, 1.442695
        %v2108 = vpow.pop %v2107
        %v2109 = vmul.f32 %v2074, 1.442695
        %v2110 = vpow.pop %v2109
        %v2111 = vmul.f32 %v2075, 1.442695
        %v2112 = vpow.pop %v2111
        %v2113 = vmul.f32 %v2076, 1.442695
        %v2114 = vpow.pop %v2113
        %v2115 = vmul.f32 %v2077, 1.442695
        %v2116 = vpow.pop %v2115
        %v2117 = vmul.f32 %v2078, 1.442695
        %v2118 = vpow.pop %v2117
        %v2119 = vmul.f32 %v2079, 1.442695
        %v2120 = vpow.pop %v2119
        %v2121 = vmul.f32 %v2080, 1.442695
        %v2122 = vpow.pop %v2121
        %v2123 = vmul.f32 %v2081, 1.442695
        %v2124 = vpow.pop %v2123
        %v2125 = vmul.f32 %v2082, 1.442695
        %v2126 = vpow.pop %v2125
        %v2127 = vmul.f32 %v2083, 1.442695
        %v2128 = vpow.pop %v2127
        %v2129 = vmul.f32 %v2084, 1.442695
        %v2130 = vpow.pop %v2129
        %v2131 = vmul.f32 %v2085, 1.442695
        %v2132 = vpow.pop %v2131
        %v2133 = vmul.f32 %v2086, 1.442695
        %v2134 = vpow.pop %v2133
        %v2135 = vmul.f32 %v2087, 1.442695
        %v2136 = vpow.pop %v2135
        %v2137 = vmul.f32 %v2088, 1.442695
        %v2138 = vpow.pop %v2137
        %v2139 = vmul.f32 %v2089, 1.442695
        %v2140 = vpow.pop %v2139
        %v2141 = vmul.f32 %v2090, 1.442695
        %v2142 = vpow.pop %v2141
        %v2143 = vmul.f32 %v2091, 1.442695
        %v2144 = vpow.pop %v2143
        %v2145 = vmul.f32 %v2092, 1.442695
        %v2146 = vpow.pop %v2145
        %v2147 = vmul.f32 %v2093, 1.442695
        %v2148 = vpow.pop %v2147
        %v2149 = vmul.f32 %v2094, 1.442695
        %v2150 = vpow.pop %v2149
        %v2151 = vmul.f32 %v2095, 1.442695
        %v2152 = vpow.pop %v2151
        %v2153 = vmul.f32 %v2096, 1.442695
        %v2154 = vpow.pop %v2153
        %v2155 = vmul.f32 %v2097, 1.442695
        %v2156 = vpow.pop %v2155
        %v2157 = vmul.f32 %v2098, 1.442695
        %v2158 = vpow.pop %v2157
        %v2159 = vmul.f32 %v2099, 1.442695
        %v2160 = vpow.pop %v2159
        %v2161 = vmul.f32 %v2100, 1.442695
        %v2162 = vpow.pop %v2161
        %v2163 = vmul.f32 %v2101, 1.442695
        %v2164 = vpow.pop %v2163
        %v2165 = vmul.f32 %v2102, 1.442695
        %v2166 = vpow.pop %v2165
        %v2167 = vsel %vm1970, %v2104, 0.0
        %v2168 = vsel %vm1971, %v2106, 0.0
        %v2169 = vsel %vm1972, %v2108, 0.0
        %v2170 = vsel %vm1973, %v2110, 0.0
        %v2171 = vsel %vm1974, %v2112, 0.0
        %v2172 = vsel %vm1975, %v2114, 0.0
        %v2173 = vsel %vm1976, %v2116, 0.0
        %v2174 = vsel %vm1977, %v2118, 0.0
        %v2175 = vsel %vm1978, %v2120, 0.0
        %v2176 = vsel %vm1979, %v2122, 0.0
        %v2177 = vsel %vm1980, %v2124, 0.0
        %v2178 = vsel %vm1981, %v2126, 0.0
        %v2179 = vsel %vm1982, %v2128, 0.0
        %v2180 = vsel %vm1983, %v2130, 0.0
        %v2181 = vsel %vm1984, %v2132, 0.0
        %v2182 = vsel %vm1985, %v2134, 0.0
        %v2183 = vsel %vm1986, %v2136, 0.0
        %v2184 = vsel %vm1987, %v2138, 0.0
        %v2185 = vsel %vm1988, %v2140, 0.0
        %v2186 = vsel %vm1989, %v2142, 0.0
        %v2187 = vsel %vm1990, %v2144, 0.0
        %v2188 = vsel %vm1991, %v2146, 0.0
        %v2189 = vsel %vm1992, %v2148, 0.0
        %v2190 = vsel %vm1993, %v2150, 0.0
        %v2191 = vsel %vm1994, %v2152, 0.0
        %v2192 = vsel %vm1995, %v2154, 0.0
        %v2193 = vsel %vm1996, %v2156, 0.0
        %v2194 = vsel %vm1997, %v2158, 0.0
        %v2195 = vsel %vm1998, %v2160, 0.0
        %v2196 = vsel %vm1999, %v2162, 0.0
        %v2197 = vsel %vm2000, %v2164, 0.0
        %v2198 = vsel %vm2001, %v2166, 0.0
        %v2199 = vadd.f32 %v2167, %v2168
        %v2200 = vadd.f32 %v2199, %v2169
        %v2201 = vadd.f32 %v2200, %v2170
        %v2202 = vadd.f32 %v2201, %v2171
        %v2203 = vadd.f32 %v2202, %v2172
        %v2204 = vadd.f32 %v2203, %v2173
        %v2205 = vadd.f32 %v2204, %v2174
        %v2206 = vadd.f32 %v2205, %v2175
        %v2207 = vadd.f32 %v2206, %v2176
        %v2208 = vadd.f32 %v2207, %v2177
        %v2209 = vadd.f32 %v2208, %v2178
        %v2210 = vadd.f32 %v2209, %v2179
        %v2211 = vadd.f32 %v2210, %v2180
        %v2212 = vadd.f32 %v2211, %v2181
        %v2213 = vadd.f32 %v2212, %v2182
        %v2214 = vadd.f32 %v2213, %v2183
        %v2215 = vadd.f32 %v2214, %v2184
        %v2216 = vadd.f32 %v2215, %v2185
        %v2217 = vadd.f32 %v2216, %v2186
        %v2218 = vadd.f32 %v2217, %v2187
        %v2219 = vadd.f32 %v2218, %v2188
        %v2220 = vadd.f32 %v2219, %v2189
        %v2221 = vadd.f32 %v2220, %v2190
        %v2222 = vadd.f32 %v2221, %v2191
        %v2223 = vadd.f32 %v2222, %v2192
        %v2224 = vadd.f32 %v2223, %v2193
        %v2225 = vadd.f32 %v2224, %v2194
        %v2226 = vadd.f32 %v2225, %v2195
        %v2227 = vadd.f32 %v2226, %v2196
        %v2228 = vadd.f32 %v2227, %v2197
        %v2229 = vadd.f32 %v2228, %v2198
        %v2230 = vrot.slane %v2229, 4
        %v2231 = vadd.f32 %v2229, %v2230
        %v2232 = vrot.slane %v2231, 2
        %v2233 = vadd.f32 %v2231, %v2232
        %v2234 = vrot.slane %v2233, 1
        %v2235 = vadd.f32 %v2233, %v2234
        %v2236 = vrcp.pop %v2235
        %v2237 = vmul.f32 %v2235, %v2236
        %v2238 = vsub.f32 2.0, %v2237
        %v2239 = vmul.f32 %v2236, %v2238
        %vm2240 = vmand %vm1970, %vm1906
        %vm2241 = vmand %vm1971, %vm1907
        %vm2242 = vmand %vm1972, %vm1908
        %vm2243 = vmand %vm1973, %vm1909
        %vm2244 = vmand %vm1974, %vm1910
        %vm2245 = vmand %vm1975, %vm1911
        %vm2246 = vmand %vm1976, %vm1912
        %vm2247 = vmand %vm1977, %vm1913
        %vm2248 = vmand %vm1978, %vm1914
        %vm2249 = vmand %vm1979, %vm1915
        %vm2250 = vmand %vm1980, %vm1916
        %vm2251 = vmand %vm1981, %vm1917
        %vm2252 = vmand %vm1982, %vm1918
        %vm2253 = vmand %vm1983, %vm1919
        %vm2254 = vmand %vm1984, %vm1920
        %vm2255 = vmand %vm1985, %vm1921
        %vm2256 = vmand %vm1986, %vm1922
        %vm2257 = vmand %vm1987, %vm1923
        %vm2258 = vmand %vm1988, %vm1924
        %vm2259 = vmand %vm1989, %vm1925
        %vm2260 = vmand %vm1990, %vm1926
        %vm2261 = vmand %vm1991, %vm1927
        %vm2262 = vmand %vm1992, %vm1928
        %vm2263 = vmand %vm1993, %vm1929
        %vm2264 = vmand %vm1994, %vm1930
        %vm2265 = vmand %vm1995, %vm1931
        %vm2266 = vmand %vm1996, %vm1932
        %vm2267 = vmand %vm1997, %vm1933
        %vm2268 = vmand %vm1998, %vm1934
        %vm2269 = vmand %vm1999, %vm1935
        %vm2270 = vmand %vm2000, %vm1936
        %vm2271 = vmand %vm2001, %vm1937
        %v2272 = vmul.f32 %v2167, %v2239
        %v2273 = vmul.f32 %v2168, %v2239
        %v2274 = vmul.f32 %v2169, %v2239
        %v2275 = vmul.f32 %v2170, %v2239
        %v2276 = vmul.f32 %v2171, %v2239
        %v2277 = vmul.f32 %v2172, %v2239
        %v2278 = vmul.f32 %v2173, %v2239
        %v2279 = vmul.f32 %v2174, %v2239
        %v2280 = vmul.f32 %v2175, %v2239
        %v2281 = vmul.f32 %v2176, %v2239
        %v2282 = vmul.f32 %v2177, %v2239
        %v2283 = vmul.f32 %v2178, %v2239
        %v2284 = vmul.f32 %v2179, %v2239
        %v2285 = vmul.f32 %v2180, %v2239
        %v2286 = vmul.f32 %v2181, %v2239
        %v2287 = vmul.f32 %v2182, %v2239
        %v2288 = vmul.f32 %v2183, %v2239
        %v2289 = vmul.f32 %v2184, %v2239
        %v2290 = vmul.f32 %v2185, %v2239
        %v2291 = vmul.f32 %v2186, %v2239
        %v2292 = vmul.f32 %v2187, %v2239
        %v2293 = vmul.f32 %v2188, %v2239
        %v2294 = vmul.f32 %v2189, %v2239
        %v2295 = vmul.f32 %v2190, %v2239
        %v2296 = vmul.f32 %v2191, %v2239
        %v2297 = vmul.f32 %v2192, %v2239
        %v2298 = vmul.f32 %v2193, %v2239
        %v2299 = vmul.f32 %v2194, %v2239
        %v2300 = vmul.f32 %v2195, %v2239
        %v2301 = vmul.f32 %v2196, %v2239
        %v2302 = vmul.f32 %v2197, %v2239
        %v2303 = vmul.f32 %v2198, %v2239
        %v2304 = vsel %vm2240, %v2272, 0.0
        %v2305 = vsel %vm2241, %v2273, 0.0
        %v2306 = vsel %vm2242, %v2274, 0.0
        %v2307 = vsel %vm2243, %v2275, 0.0
        %v2308 = vsel %vm2244, %v2276, 0.0
        %v2309 = vsel %vm2245, %v2277, 0.0
        %v2310 = vsel %vm2246, %v2278, 0.0
        %v2311 = vsel %vm2247, %v2279, 0.0
        %v2312 = vsel %vm2248, %v2280, 0.0
        %v2313 = vsel %vm2249, %v2281, 0.0
        %v2314 = vsel %vm2250, %v2282, 0.0
        %v2315 = vsel %vm2251, %v2283, 0.0
        %v2316 = vsel %vm2252, %v2284, 0.0
        %v2317 = vsel %vm2253, %v2285, 0.0
        %v2318 = vsel %vm2254, %v2286, 0.0
        %v2319 = vsel %vm2255, %v2287, 0.0
        %v2320 = vsel %vm2256, %v2288, 0.0
        %v2321 = vsel %vm2257, %v2289, 0.0
        %v2322 = vsel %vm2258, %v2290, 0.0
        %v2323 = vsel %vm2259, %v2291, 0.0
        %v2324 = vsel %vm2260, %v2292, 0.0
        %v2325 = vsel %vm2261, %v2293, 0.0
        %v2326 = vsel %vm2262, %v2294, 0.0
        %v2327 = vsel %vm2263, %v2295, 0.0
        %v2328 = vsel %vm2264, %v2296, 0.0
        %v2329 = vsel %vm2265, %v2297, 0.0
        %v2330 = vsel %vm2266, %v2298, 0.0
        %v2331 = vsel %vm2267, %v2299, 0.0
        %v2332 = vsel %vm2268, %v2300, 0.0
        %v2333 = vsel %vm2269, %v2301, 0.0
        %v2334 = vsel %vm2270, %v2302, 0.0
        %v2335 = vsel %vm2271, %v2303, 0.0
        %v2336 = vld [vmem:[%s2] sm:$0xff]
        %v2337 = vld [vmem:[%s2 + $0x8] sm:$0xff]
        %v2338 = vld [vmem:[%s2 + $0x10] sm:$0xff]
        %v2339 = vld [vmem:[%s2 + $0x18] sm:$0xff]
        %v2340 = vld [vmem:[%s2 + $0x20] sm:$0xff]
        %v2341 = vld [vmem:[%s2 + $0x28] sm:$0xff]
        %v2342 = vld [vmem:[%s2 + $0x30] sm:$0xff]
        %v2343 = vld [vmem:[%s2 + $0x38] sm:$0xff]
        %v2344 = vld [vmem:[%s2 + $0x40] sm:$0xff]
        %v2345 = vld [vmem:[%s2 + $0x48] sm:$0xff]
        %v2346 = vld [vmem:[%s2 + $0x50] sm:$0xff]
        %v2347 = vld [vmem:[%s2 + $0x58] sm:$0xff]
        %v2348 = vld [vmem:[%s2 + $0x60] sm:$0xff]
        %v2349 = vld [vmem:[%s2 + $0x68] sm:$0xff]
        %v2350 = vld [vmem:[%s2 + $0x70] sm:$0xff]
        %v2351 = vld [vmem:[%s2 + $0x78] sm:$0xff]
        %v2352 = vld [vmem:[%s2 + $0x80] sm:$0xff]
        %v2353 = vld [vmem:[%s2 + $0x88] sm:$0xff]
        %v2354 = vld [vmem:[%s2 + $0x90] sm:$0xff]
        %v2355 = vld [vmem:[%s2 + $0x98] sm:$0xff]
        %v2356 = vld [vmem:[%s2 + $0xa0] sm:$0xff]
        %v2357 = vld [vmem:[%s2 + $0xa8] sm:$0xff]
        %v2358 = vld [vmem:[%s2 + $0xb0] sm:$0xff]
        %v2359 = vld [vmem:[%s2 + $0xb8] sm:$0xff]
        %v2360 = vld [vmem:[%s2 + $0xc0] sm:$0xff]
        %v2361 = vld [vmem:[%s2 + $0xc8] sm:$0xff]
        %v2362 = vld [vmem:[%s2 + $0xd0] sm:$0xff]
        %v2363 = vld [vmem:[%s2 + $0xd8] sm:$0xff]
        %v2364 = vld [vmem:[%s2 + $0xe0] sm:$0xff]
        %v2365 = vld [vmem:[%s2 + $0xe8] sm:$0xff]
        %v2366 = vld [vmem:[%s2 + $0xf0] sm:$0xff]
        %v2367 = vld [vmem:[%s2 + $0xf8] sm:$0xff]
        %v2368 = vld [vmem:[%s282] sm:$0x1]
        %2370 = vset.pattern.permute.xlu0 0
        %2371 = vperm.xlu0 %2370, %v2336
        %v2372 = vpop.permute.xlu0 %2371
        %2375 = vset.pattern.permute.xlu0 0
        %2376 = vperm.xlu0 %2375, %v2337
        %v2377 = vpop.permute.xlu0 %2376
        %2380 = vset.pattern.permute.xlu0 0
        %2381 = vperm.xlu0 %2380, %v2338
        %v2382 = vpop.permute.xlu0 %2381
        %2385 = vset.pattern.permute.xlu0 0
        %2386 = vperm.xlu0 %2385, %v2339
        %v2387 = vpop.permute.xlu0 %2386
        %2390 = vset.pattern.permute.xlu0 0
        %2391 = vperm.xlu0 %2390, %v2340
        %v2392 = vpop.permute.xlu0 %2391
        %2395 = vset.pattern.permute.xlu0 0
        %2396 = vperm.xlu0 %2395, %v2341
        %v2397 = vpop.permute.xlu0 %2396
        %2400 = vset.pattern.permute.xlu0 0
        %2401 = vperm.xlu0 %2400, %v2342
        %v2402 = vpop.permute.xlu0 %2401
        %2405 = vset.pattern.permute.xlu0 0
        %2406 = vperm.xlu0 %2405, %v2343
        %v2407 = vpop.permute.xlu0 %2406
        %2410 = vset.pattern.permute.xlu0 0
        %2411 = vperm.xlu0 %2410, %v2344
        %v2412 = vpop.permute.xlu0 %2411
        %2415 = vset.pattern.permute.xlu0 0
        %2416 = vperm.xlu0 %2415, %v2345
        %v2417 = vpop.permute.xlu0 %2416
        %2420 = vset.pattern.permute.xlu0 0
        %2421 = vperm.xlu0 %2420, %v2346
        %v2422 = vpop.permute.xlu0 %2421
        %2425 = vset.pattern.permute.xlu0 0
        %2426 = vperm.xlu0 %2425, %v2347
        %v2427 = vpop.permute.xlu0 %2426
        %2430 = vset.pattern.permute.xlu0 0
        %2431 = vperm.xlu0 %2430, %v2348
        %v2432 = vpop.permute.xlu0 %2431
        %2435 = vset.pattern.permute.xlu0 0
        %2436 = vperm.xlu0 %2435, %v2349
        %v2437 = vpop.permute.xlu0 %2436
        %2440 = vset.pattern.permute.xlu0 0
        %2441 = vperm.xlu0 %2440, %v2350
        %v2442 = vpop.permute.xlu0 %2441
        %2445 = vset.pattern.permute.xlu0 0
        %2446 = vperm.xlu0 %2445, %v2351
        %v2447 = vpop.permute.xlu0 %2446
        %2450 = vset.pattern.permute.xlu0 0
        %2451 = vperm.xlu0 %2450, %v2352
        %v2452 = vpop.permute.xlu0 %2451
        %2455 = vset.pattern.permute.xlu0 0
        %2456 = vperm.xlu0 %2455, %v2353
        %v2457 = vpop.permute.xlu0 %2456
        %2460 = vset.pattern.permute.xlu0 0
        %2461 = vperm.xlu0 %2460, %v2354
        %v2462 = vpop.permute.xlu0 %2461
        %2465 = vset.pattern.permute.xlu0 0
        %2466 = vperm.xlu0 %2465, %v2355
        %v2467 = vpop.permute.xlu0 %2466
        %2470 = vset.pattern.permute.xlu0 0
        %2471 = vperm.xlu0 %2470, %v2356
        %v2472 = vpop.permute.xlu0 %2471
        %2475 = vset.pattern.permute.xlu0 0
        %2476 = vperm.xlu0 %2475, %v2357
        %v2477 = vpop.permute.xlu0 %2476
        %2480 = vset.pattern.permute.xlu0 0
        %2481 = vperm.xlu0 %2480, %v2358
        %v2482 = vpop.permute.xlu0 %2481
        %2485 = vset.pattern.permute.xlu0 0
        %2486 = vperm.xlu0 %2485, %v2359
        %v2487 = vpop.permute.xlu0 %2486
        %2490 = vset.pattern.permute.xlu0 0
        %2491 = vperm.xlu0 %2490, %v2360
        %v2492 = vpop.permute.xlu0 %2491
        %2495 = vset.pattern.permute.xlu0 0
        %2496 = vperm.xlu0 %2495, %v2361
        %v2497 = vpop.permute.xlu0 %2496
        %2500 = vset.pattern.permute.xlu0 0
        %2501 = vperm.xlu0 %2500, %v2362
        %v2502 = vpop.permute.xlu0 %2501
        %2505 = vset.pattern.permute.xlu0 0
        %2506 = vperm.xlu0 %2505, %v2363
        %v2507 = vpop.permute.xlu0 %2506
        %2510 = vset.pattern.permute.xlu0 0
        %2511 = vperm.xlu0 %2510, %v2364
        %v2512 = vpop.permute.xlu0 %2511
        %2515 = vset.pattern.permute.xlu0 0
        %2516 = vperm.xlu0 %2515, %v2365
        %v2517 = vpop.permute.xlu0 %2516
        %2520 = vset.pattern.permute.xlu0 0
        %2521 = vperm.xlu0 %2520, %v2366
        %v2522 = vpop.permute.xlu0 %2521
        %2525 = vset.pattern.permute.xlu0 0
        %2526 = vperm.xlu0 %2525, %v2367
        %v2527 = vpop.permute.xlu0 %2526
        %v2530 = vperm.slane %v2368, 0
        %v2532 = vsub.f32 %v2372, %v2530
        %v2533 = vsub.f32 %v2377, %v2530
        %v2534 = vsub.f32 %v2382, %v2530
        %v2535 = vsub.f32 %v2387, %v2530
        %v2536 = vsub.f32 %v2392, %v2530
        %v2537 = vsub.f32 %v2397, %v2530
        %v2538 = vsub.f32 %v2402, %v2530
        %v2539 = vsub.f32 %v2407, %v2530
        %v2540 = vsub.f32 %v2412, %v2530
        %v2541 = vsub.f32 %v2417, %v2530
        %v2542 = vsub.f32 %v2422, %v2530
        %v2543 = vsub.f32 %v2427, %v2530
        %v2544 = vsub.f32 %v2432, %v2530
        %v2545 = vsub.f32 %v2437, %v2530
        %v2546 = vsub.f32 %v2442, %v2530
        %v2547 = vsub.f32 %v2447, %v2530
        %v2548 = vsub.f32 %v2452, %v2530
        %v2549 = vsub.f32 %v2457, %v2530
        %v2550 = vsub.f32 %v2462, %v2530
        %v2551 = vsub.f32 %v2467, %v2530
        %v2552 = vsub.f32 %v2472, %v2530
        %v2553 = vsub.f32 %v2477, %v2530
        %v2554 = vsub.f32 %v2482, %v2530
        %v2555 = vsub.f32 %v2487, %v2530
        %v2556 = vsub.f32 %v2492, %v2530
        %v2557 = vsub.f32 %v2497, %v2530
        %v2558 = vsub.f32 %v2502, %v2530
        %v2559 = vsub.f32 %v2507, %v2530
        %v2560 = vsub.f32 %v2512, %v2530
        %v2561 = vsub.f32 %v2517, %v2530
        %v2562 = vsub.f32 %v2522, %v2530
        %v2563 = vsub.f32 %v2527, %v2530
        %v2564 = vand.u32 2147483647, %v2532
        %v2565 = vand.u32 2147483647, %v2533
        %v2566 = vand.u32 2147483647, %v2534
        %v2567 = vand.u32 2147483647, %v2535
        %v2568 = vand.u32 2147483647, %v2536
        %v2569 = vand.u32 2147483647, %v2537
        %v2570 = vand.u32 2147483647, %v2538
        %v2571 = vand.u32 2147483647, %v2539
        %v2572 = vand.u32 2147483647, %v2540
        %v2573 = vand.u32 2147483647, %v2541
        %v2574 = vand.u32 2147483647, %v2542
        %v2575 = vand.u32 2147483647, %v2543
        %v2576 = vand.u32 2147483647, %v2544
        %v2577 = vand.u32 2147483647, %v2545
        %v2578 = vand.u32 2147483647, %v2546
        %v2579 = vand.u32 2147483647, %v2547
        %v2580 = vand.u32 2147483647, %v2548
        %v2581 = vand.u32 2147483647, %v2549
        %v2582 = vand.u32 2147483647, %v2550
        %v2583 = vand.u32 2147483647, %v2551
        %v2584 = vand.u32 2147483647, %v2552
        %v2585 = vand.u32 2147483647, %v2553
        %v2586 = vand.u32 2147483647, %v2554
        %v2587 = vand.u32 2147483647, %v2555
        %v2588 = vand.u32 2147483647, %v2556
        %v2589 = vand.u32 2147483647, %v2557
        %v2590 = vand.u32 2147483647, %v2558
        %v2591 = vand.u32 2147483647, %v2559
        %v2592 = vand.u32 2147483647, %v2560
        %v2593 = vand.u32 2147483647, %v2561
        %v2594 = vand.u32 2147483647, %v2562
        %v2595 = vand.u32 2147483647, %v2563
        %v2596 = vsel %vm1905, 1, 0
        %vm2597 = vcmp.eq.s32.totalorder %v2596, 1
        %vm2598 = vmand %vm1970, %vm2597
        %vm2599 = vmand %vm1971, %vm2597
        %vm2600 = vmand %vm1972, %vm2597
        %vm2601 = vmand %vm1973, %vm2597
        %vm2602 = vmand %vm1974, %vm2597
        %vm2603 = vmand %vm1975, %vm2597
        %vm2604 = vmand %vm1976, %vm2597
        %vm2605 = vmand %vm1977, %vm2597
        %vm2606 = vmand %vm1978, %vm2597
        %vm2607 = vmand %vm1979, %vm2597
        %vm2608 = vmand %vm1980, %vm2597
        %vm2609 = vmand %vm1981, %vm2597
        %vm2610 = vmand %vm1982, %vm2597
        %vm2611 = vmand %vm1983, %vm2597
        %vm2612 = vmand %vm1984, %vm2597
        %vm2613 = vmand %vm1985, %vm2597
        %vm2614 = vmand %vm1986, %vm2597
        %vm2615 = vmand %vm1987, %vm2597
        %vm2616 = vmand %vm1988, %vm2597
        %vm2617 = vmand %vm1989, %vm2597
        %vm2618 = vmand %vm1990, %vm2597
        %vm2619 = vmand %vm1991, %vm2597
        %vm2620 = vmand %vm1992, %vm2597
        %vm2621 = vmand %vm1993, %vm2597
        %vm2622 = vmand %vm1994, %vm2597
        %vm2623 = vmand %vm1995, %vm2597
        %vm2624 = vmand %vm1996, %vm2597
        %vm2625 = vmand %vm1997, %vm2597
        %vm2626 = vmand %vm1998, %vm2597
        %vm2627 = vmand %vm1999, %vm2597
        %vm2628 = vmand %vm2000, %vm2597
        %vm2629 = vmand %vm2001, %vm2597
        %vm2630 = vmand %vm2598, %vm1906
        %vm2631 = vmand %vm2599, %vm1907
        %vm2632 = vmand %vm2600, %vm1908
        %vm2633 = vmand %vm2601, %vm1909
        %vm2634 = vmand %vm2602, %vm1910
        %vm2635 = vmand %vm2603, %vm1911
        %vm2636 = vmand %vm2604, %vm1912
        %vm2637 = vmand %vm2605, %vm1913
        %vm2638 = vmand %vm2606, %vm1914
        %vm2639 = vmand %vm2607, %vm1915
        %vm2640 = vmand %vm2608, %vm1916
        %vm2641 = vmand %vm2609, %vm1917
        %vm2642 = vmand %vm2610, %vm1918
        %vm2643 = vmand %vm2611, %vm1919
        %vm2644 = vmand %vm2612, %vm1920
        %vm2645 = vmand %vm2613, %vm1921
        %vm2646 = vmand %vm2614, %vm1922
        %vm2647 = vmand %vm2615, %vm1923
        %vm2648 = vmand %vm2616, %vm1924
        %vm2649 = vmand %vm2617, %vm1925
        %vm2650 = vmand %vm2618, %vm1926
        %vm2651 = vmand %vm2619, %vm1927
        %vm2652 = vmand %vm2620, %vm1928
        %vm2653 = vmand %vm2621, %vm1929
        %vm2654 = vmand %vm2622, %vm1930
        %vm2655 = vmand %vm2623, %vm1931
        %vm2656 = vmand %vm2624, %vm1932
        %vm2657 = vmand %vm2625, %vm1933
        %vm2658 = vmand %vm2626, %vm1934
        %vm2659 = vmand %vm2627, %vm1935
        %vm2660 = vmand %vm2628, %vm1936
        %vm2661 = vmand %vm2629, %vm1937
        %v2662 = vsel %vm2630, %v2071, 0.0
        %v2663 = vsel %vm2631, %v2072, 0.0
        %v2664 = vsel %vm2632, %v2073, 0.0
        %v2665 = vsel %vm2633, %v2074, 0.0
        %v2666 = vsel %vm2634, %v2075, 0.0
        %v2667 = vsel %vm2635, %v2076, 0.0
        %v2668 = vsel %vm2636, %v2077, 0.0
        %v2669 = vsel %vm2637, %v2078, 0.0
        %v2670 = vsel %vm2638, %v2079, 0.0
        %v2671 = vsel %vm2639, %v2080, 0.0
        %v2672 = vsel %vm2640, %v2081, 0.0
        %v2673 = vsel %vm2641, %v2082, 0.0
        %v2674 = vsel %vm2642, %v2083, 0.0
        %v2675 = vsel %vm2643, %v2084, 0.0
        %v2676 = vsel %vm2644, %v2085, 0.0
        %v2677 = vsel %vm2645, %v2086, 0.0
        %v2678 = vsel %vm2646, %v2087, 0.0
        %v2679 = vsel %vm2647, %v2088, 0.0
        %v2680 = vsel %vm2648, %v2089, 0.0
        %v2681 = vsel %vm2649, %v2090, 0.0
        %v2682 = vsel %vm2650, %v2091, 0.0
        %v2683 = vsel %vm2651, %v2092, 0.0
        %v2684 = vsel %vm2652, %v2093, 0.0
        %v2685 = vsel %vm2653, %v2094, 0.0
        %v2686 = vsel %vm2654, %v2095, 0.0
        %v2687 = vsel %vm2655, %v2096, 0.0
        %v2688 = vsel %vm2656, %v2097, 0.0
        %v2689 = vsel %vm2657, %v2098, 0.0
        %v2690 = vsel %vm2658, %v2099, 0.0
        %v2691 = vsel %vm2659, %v2100, 0.0
        %v2692 = vsel %vm2660, %v2101, 0.0
        %v2693 = vsel %vm2661, %v2102, 0.0
        %2694 = vst [vmem:[%s279] sm:$0xff] %v2662
        %2695 = vst [vmem:[%s279 + $0x8] sm:$0xff] %v2663
        %2696 = vst [vmem:[%s279 + $0x10] sm:$0xff] %v2664
        %2697 = vst [vmem:[%s279 + $0x18] sm:$0xff] %v2665
        %2698 = vst [vmem:[%s279 + $0x20] sm:$0xff] %v2666
        %2699 = vst [vmem:[%s279 + $0x28] sm:$0xff] %v2667
        %2700 = vst [vmem:[%s279 + $0x30] sm:$0xff] %v2668
        %2701 = vst [vmem:[%s279 + $0x38] sm:$0xff] %v2669
        %2702 = vst [vmem:[%s279 + $0x40] sm:$0xff] %v2670
        %2703 = vst [vmem:[%s279 + $0x48] sm:$0xff] %v2671
        %2704 = vst [vmem:[%s279 + $0x50] sm:$0xff] %v2672
        %2705 = vst [vmem:[%s279 + $0x58] sm:$0xff] %v2673
        %2706 = vst [vmem:[%s279 + $0x60] sm:$0xff] %v2674
        %2707 = vst [vmem:[%s279 + $0x68] sm:$0xff] %v2675
        %2708 = vst [vmem:[%s279 + $0x70] sm:$0xff] %v2676
        %2709 = vst [vmem:[%s279 + $0x78] sm:$0xff] %v2677
        %2710 = vst [vmem:[%s279 + $0x80] sm:$0xff] %v2678
        %2711 = vst [vmem:[%s279 + $0x88] sm:$0xff] %v2679
        %2712 = vst [vmem:[%s279 + $0x90] sm:$0xff] %v2680
        %2713 = vst [vmem:[%s279 + $0x98] sm:$0xff] %v2681
        %2714 = vst [vmem:[%s279 + $0xa0] sm:$0xff] %v2682
        %2715 = vst [vmem:[%s279 + $0xa8] sm:$0xff] %v2683
        %2716 = vst [vmem:[%s279 + $0xb0] sm:$0xff] %v2684
        %2717 = vst [vmem:[%s279 + $0xb8] sm:$0xff] %v2685
        %2718 = vst [vmem:[%s279 + $0xc0] sm:$0xff] %v2686
        %2719 = vst [vmem:[%s279 + $0xc8] sm:$0xff] %v2687
        %2720 = vst [vmem:[%s279 + $0xd0] sm:$0xff] %v2688
        %2721 = vst [vmem:[%s279 + $0xd8] sm:$0xff] %v2689
        %2722 = vst [vmem:[%s279 + $0xe0] sm:$0xff] %v2690
        %2723 = vst [vmem:[%s279 + $0xe8] sm:$0xff] %v2691
        %2724 = vst [vmem:[%s279 + $0xf0] sm:$0xff] %v2692
        %2725 = vst [vmem:[%s279 + $0xf8] sm:$0xff] %v2693
        loop: start=0, step=1, limit=8
        $region75: #{tpu_custom_call.1} parent=69 // loop_pre_header
          _
        $region76: #{tpu_custom_call.1} parent=69 // loop_header
          %s2727 = sphi 0, %s2731
          %p2728 = scmp.ge.s32.totalorder %s2727, 8
        $region77: #{tpu_custom_call.1} parent=69 // loop_header_branch
          %2730 = sbr.rel (%p2728) target = $region81
        $region78: #{tpu_custom_call.1} parent=69 // loop_body
          %s2732 = smul.u32 %s2727, 32
          %s2733 = scalar_lea.vmem %s4, %s2732
          %v2734 = vld [vmem:[%s2733] sm:$0x1]
          %v2735 = vld [vmem:[%s2733 + $0x1] sm:$0x1]
          %v2736 = vld [vmem:[%s2733 + $0x2] sm:$0x1]
          %v2737 = vld [vmem:[%s2733 + $0x3] sm:$0x1]
          %v2738 = vld [vmem:[%s2733 + $0x4] sm:$0x1]
          %v2739 = vld [vmem:[%s2733 + $0x5] sm:$0x1]
          %v2740 = vld [vmem:[%s2733 + $0x6] sm:$0x1]
          %v2741 = vld [vmem:[%s2733 + $0x7] sm:$0x1]
          %v2742 = vld [vmem:[%s2733 + $0x8] sm:$0x1]
          %v2743 = vld [vmem:[%s2733 + $0x9] sm:$0x1]
          %v2744 = vld [vmem:[%s2733 + $0xa] sm:$0x1]
          %v2745 = vld [vmem:[%s2733 + $0xb] sm:$0x1]
          %v2746 = vld [vmem:[%s2733 + $0xc] sm:$0x1]
          %v2747 = vld [vmem:[%s2733 + $0xd] sm:$0x1]
          %v2748 = vld [vmem:[%s2733 + $0xe] sm:$0x1]
          %v2749 = vld [vmem:[%s2733 + $0xf] sm:$0x1]
          %v2750 = vld [vmem:[%s2733 + $0x10] sm:$0x1]
          %v2751 = vld [vmem:[%s2733 + $0x11] sm:$0x1]
          %v2752 = vld [vmem:[%s2733 + $0x12] sm:$0x1]
          %v2753 = vld [vmem:[%s2733 + $0x13] sm:$0x1]
          %v2754 = vld [vmem:[%s2733 + $0x14] sm:$0x1]
          %v2755 = vld [vmem:[%s2733 + $0x15] sm:$0x1]
          %v2756 = vld [vmem:[%s2733 + $0x16] sm:$0x1]
          %v2757 = vld [vmem:[%s2733 + $0x17] sm:$0x1]
          %v2758 = vld [vmem:[%s2733 + $0x18] sm:$0x1]
          %v2759 = vld [vmem:[%s2733 + $0x19] sm:$0x1]
          %v2760 = vld [vmem:[%s2733 + $0x1a] sm:$0x1]
          %v2761 = vld [vmem:[%s2733 + $0x1b] sm:$0x1]
          %v2762 = vld [vmem:[%s2733 + $0x1c] sm:$0x1]
          %v2763 = vld [vmem:[%s2733 + $0x1d] sm:$0x1]
          %v2764 = vld [vmem:[%s2733 + $0x1e] sm:$0x1]
          %v2765 = vld [vmem:[%s2733 + $0x1f] sm:$0x1]
          %v2766 = vld [vmem:[%s282] sm:$0x1]
          %2768 = vset.pattern.permute.xlu0 0
          %2769 = vperm.xlu0 %2768, %v2734
          %v2770 = vpop.permute.xlu0 %2769
          %v2772 = vperm.slane %v2770, 0
          %2774 = vset.pattern.permute.xlu0 0
          %2775 = vperm.xlu0 %2774, %v2735
          %v2776 = vpop.permute.xlu0 %2775
          %v2778 = vperm.slane %v2776, 0
          %2780 = vset.pattern.permute.xlu0 0
          %2781 = vperm.xlu0 %2780, %v2736
          %v2782 = vpop.permute.xlu0 %2781
          %v2784 = vperm.slane %v2782, 0
          %2786 = vset.pattern.permute.xlu0 0
          %2787 = vperm.xlu0 %2786, %v2737
          %v2788 = vpop.permute.xlu0 %2787
          %v2790 = vperm.slane %v2788, 0
          %2792 = vset.pattern.permute.xlu0 0
          %2793 = vperm.xlu0 %2792, %v2738
          %v2794 = vpop.permute.xlu0 %2793
          %v2796 = vperm.slane %v2794, 0
          %2798 = vset.pattern.permute.xlu0 0
          %2799 = vperm.xlu0 %2798, %v2739
          %v2800 = vpop.permute.xlu0 %2799
          %v2802 = vperm.slane %v2800, 0
          %2804 = vset.pattern.permute.xlu0 0
          %2805 = vperm.xlu0 %2804, %v2740
          %v2806 = vpop.permute.xlu0 %2805
          %v2808 = vperm.slane %v2806, 0
          %2810 = vset.pattern.permute.xlu0 0
          %2811 = vperm.xlu0 %2810, %v2741
          %v2812 = vpop.permute.xlu0 %2811
          %v2814 = vperm.slane %v2812, 0
          %2816 = vset.pattern.permute.xlu0 0
          %2817 = vperm.xlu0 %2816, %v2742
          %v2818 = vpop.permute.xlu0 %2817
          %v2820 = vperm.slane %v2818, 0
          %2822 = vset.pattern.permute.xlu0 0
          %2823 = vperm.xlu0 %2822, %v2743
          %v2824 = vpop.permute.xlu0 %2823
          %v2826 = vperm.slane %v2824, 0
          %2828 = vset.pattern.permute.xlu0 0
          %2829 = vperm.xlu0 %2828, %v2744
          %v2830 = vpop.permute.xlu0 %2829
          %v2832 = vperm.slane %v2830, 0
          %2834 = vset.pattern.permute.xlu0 0
          %2835 = vperm.xlu0 %2834, %v2745
          %v2836 = vpop.permute.xlu0 %2835
          %v2838 = vperm.slane %v2836, 0
          %2840 = vset.pattern.permute.xlu0 0
          %2841 = vperm.xlu0 %2840, %v2746
          %v2842 = vpop.permute.xlu0 %2841
          %v2844 = vperm.slane %v2842, 0
          %2846 = vset.pattern.permute.xlu0 0
          %2847 = vperm.xlu0 %2846, %v2747
          %v2848 = vpop.permute.xlu0 %2847
          %v2850 = vperm.slane %v2848, 0
          %2852 = vset.pattern.permute.xlu0 0
          %2853 = vperm.xlu0 %2852, %v2748
          %v2854 = vpop.permute.xlu0 %2853
          %v2856 = vperm.slane %v2854, 0
          %2858 = vset.pattern.permute.xlu0 0
          %2859 = vperm.xlu0 %2858, %v2749
          %v2860 = vpop.permute.xlu0 %2859
          %v2862 = vperm.slane %v2860, 0
          %2864 = vset.pattern.permute.xlu0 0
          %2865 = vperm.xlu0 %2864, %v2750
          %v2866 = vpop.permute.xlu0 %2865
          %v2868 = vperm.slane %v2866, 0
          %2870 = vset.pattern.permute.xlu0 0
          %2871 = vperm.xlu0 %2870, %v2751
          %v2872 = vpop.permute.xlu0 %2871
          %v2874 = vperm.slane %v2872, 0
          %2876 = vset.pattern.permute.xlu0 0
          %2877 = vperm.xlu0 %2876, %v2752
          %v2878 = vpop.permute.xlu0 %2877
          %v2880 = vperm.slane %v2878, 0
          %2882 = vset.pattern.permute.xlu0 0
          %2883 = vperm.xlu0 %2882, %v2753
          %v2884 = vpop.permute.xlu0 %2883
          %v2886 = vperm.slane %v2884, 0
          %2888 = vset.pattern.permute.xlu0 0
          %2889 = vperm.xlu0 %2888, %v2754
          %v2890 = vpop.permute.xlu0 %2889
          %v2892 = vperm.slane %v2890, 0
          %2894 = vset.pattern.permute.xlu0 0
          %2895 = vperm.xlu0 %2894, %v2755
          %v2896 = vpop.permute.xlu0 %2895
          %v2898 = vperm.slane %v2896, 0
          %2900 = vset.pattern.permute.xlu0 0
          %2901 = vperm.xlu0 %2900, %v2756
          %v2902 = vpop.permute.xlu0 %2901
          %v2904 = vperm.slane %v2902, 0
          %2906 = vset.pattern.permute.xlu0 0
          %2907 = vperm.xlu0 %2906, %v2757
          %v2908 = vpop.permute.xlu0 %2907
          %v2910 = vperm.slane %v2908, 0
          %2912 = vset.pattern.permute.xlu0 0
          %2913 = vperm.xlu0 %2912, %v2758
          %v2914 = vpop.permute.xlu0 %2913
          %v2916 = vperm.slane %v2914, 0
          %2918 = vset.pattern.permute.xlu0 0
          %2919 = vperm.xlu0 %2918, %v2759
          %v2920 = vpop.permute.xlu0 %2919
          %v2922 = vperm.slane %v2920, 0
          %2924 = vset.pattern.permute.xlu0 0
          %2925 = vperm.xlu0 %2924, %v2760
          %v2926 = vpop.permute.xlu0 %2925
          %v2928 = vperm.slane %v2926, 0
          %2930 = vset.pattern.permute.xlu0 0
          %2931 = vperm.xlu0 %2930, %v2761
          %v2932 = vpop.permute.xlu0 %2931
          %v2934 = vperm.slane %v2932, 0
          %2936 = vset.pattern.permute.xlu0 0
          %2937 = vperm.xlu0 %2936, %v2762
          %v2938 = vpop.permute.xlu0 %2937
          %v2940 = vperm.slane %v2938, 0
          %2942 = vset.pattern.permute.xlu0 0
          %2943 = vperm.xlu0 %2942, %v2763
          %v2944 = vpop.permute.xlu0 %2943
          %v2946 = vperm.slane %v2944, 0
          %2948 = vset.pattern.permute.xlu0 0
          %2949 = vperm.xlu0 %2948, %v2764
          %v2950 = vpop.permute.xlu0 %2949
          %v2952 = vperm.slane %v2950, 0
          %2954 = vset.pattern.permute.xlu0 0
          %2955 = vperm.xlu0 %2954, %v2765
          %v2956 = vpop.permute.xlu0 %2955
          %v2958 = vperm.slane %v2956, 0
          %v2959 = vsub.f32 %v2772, %v2766
          %v2960 = vsub.f32 %v2778, %v2766
          %v2961 = vsub.f32 %v2784, %v2766
          %v2962 = vsub.f32 %v2790, %v2766
          %v2963 = vsub.f32 %v2796, %v2766
          %v2964 = vsub.f32 %v2802, %v2766
          %v2965 = vsub.f32 %v2808, %v2766
          %v2966 = vsub.f32 %v2814, %v2766
          %v2967 = vsub.f32 %v2820, %v2766
          %v2968 = vsub.f32 %v2826, %v2766
          %v2969 = vsub.f32 %v2832, %v2766
          %v2970 = vsub.f32 %v2838, %v2766
          %v2971 = vsub.f32 %v2844, %v2766
          %v2972 = vsub.f32 %v2850, %v2766
          %v2973 = vsub.f32 %v2856, %v2766
          %v2974 = vsub.f32 %v2862, %v2766
          %v2975 = vsub.f32 %v2868, %v2766
          %v2976 = vsub.f32 %v2874, %v2766
          %v2977 = vsub.f32 %v2880, %v2766
          %v2978 = vsub.f32 %v2886, %v2766
          %v2979 = vsub.f32 %v2892, %v2766
          %v2980 = vsub.f32 %v2898, %v2766
          %v2981 = vsub.f32 %v2904, %v2766
          %v2982 = vsub.f32 %v2910, %v2766
          %v2983 = vsub.f32 %v2916, %v2766
          %v2984 = vsub.f32 %v2922, %v2766
          %v2985 = vsub.f32 %v2928, %v2766
          %v2986 = vsub.f32 %v2934, %v2766
          %v2987 = vsub.f32 %v2940, %v2766
          %v2988 = vsub.f32 %v2946, %v2766
          %v2989 = vsub.f32 %v2952, %v2766
          %v2990 = vsub.f32 %v2958, %v2766
          %v2991 = vand.u32 2147483647, %v2959
          %v2992 = vand.u32 2147483647, %v2960
          %v2993 = vand.u32 2147483647, %v2961
          %v2994 = vand.u32 2147483647, %v2962
          %v2995 = vand.u32 2147483647, %v2963
          %v2996 = vand.u32 2147483647, %v2964
          %v2997 = vand.u32 2147483647, %v2965
          %v2998 = vand.u32 2147483647, %v2966
          %v2999 = vand.u32 2147483647, %v2967
          %v3000 = vand.u32 2147483647, %v2968
          %v3001 = vand.u32 2147483647, %v2969
          %v3002 = vand.u32 2147483647, %v2970
          %v3003 = vand.u32 2147483647, %v2971
          %v3004 = vand.u32 2147483647, %v2972
          %v3005 = vand.u32 2147483647, %v2973
          %v3006 = vand.u32 2147483647, %v2974
          %v3007 = vand.u32 2147483647, %v2975
          %v3008 = vand.u32 2147483647, %v2976
          %v3009 = vand.u32 2147483647, %v2977
          %v3010 = vand.u32 2147483647, %v2978
          %v3011 = vand.u32 2147483647, %v2979
          %v3012 = vand.u32 2147483647, %v2980
          %v3013 = vand.u32 2147483647, %v2981
          %v3014 = vand.u32 2147483647, %v2982
          %v3015 = vand.u32 2147483647, %v2983
          %v3016 = vand.u32 2147483647, %v2984
          %v3017 = vand.u32 2147483647, %v2985
          %v3018 = vand.u32 2147483647, %v2986
          %v3019 = vand.u32 2147483647, %v2987
          %v3020 = vand.u32 2147483647, %v2988
          %v3021 = vand.u32 2147483647, %v2989
          %v3022 = vand.u32 2147483647, %v2990
          %v3055 = vperm.slane %v2991, 0
          %v3056 = vperm.slane %v2992, 0
          %v3057 = vperm.slane %v2993, 0
          %v3058 = vperm.slane %v2994, 0
          %v3059 = vperm.slane %v2995, 0
          %v3060 = vperm.slane %v2996, 0
          %v3061 = vperm.slane %v2997, 0
          %v3062 = vperm.slane %v2998, 0
          %v3063 = vperm.slane %v2999, 0
          %v3064 = vperm.slane %v3000, 0
          %v3065 = vperm.slane %v3001, 0
          %v3066 = vperm.slane %v3002, 0
          %v3067 = vperm.slane %v3003, 0
          %v3068 = vperm.slane %v3004, 0
          %v3069 = vperm.slane %v3005, 0
          %v3070 = vperm.slane %v3006, 0
          %v3071 = vperm.slane %v3007, 0
          %v3072 = vperm.slane %v3008, 0
          %v3073 = vperm.slane %v3009, 0
          %v3074 = vperm.slane %v3010, 0
          %v3075 = vperm.slane %v3011, 0
          %v3076 = vperm.slane %v3012, 0
          %v3077 = vperm.slane %v3013, 0
          %v3078 = vperm.slane %v3014, 0
          %v3079 = vperm.slane %v3015, 0
          %v3080 = vperm.slane %v3016, 0
          %v3081 = vperm.slane %v3017, 0
          %v3082 = vperm.slane %v3018, 0
          %v3083 = vperm.slane %v3019, 0
          %v3084 = vperm.slane %v3020, 0
          %v3085 = vperm.slane %v3021, 0
          %v3086 = vperm.slane %v3022, 0
          %vm3119 = vcmp.ge.f32.partialorder %v2564, %v3055
          %vm3120 = vcmp.ge.f32.partialorder %v2565, %v3055
          %vm3121 = vcmp.ge.f32.partialorder %v2566, %v3055
          %vm3122 = vcmp.ge.f32.partialorder %v2567, %v3055
          %vm3123 = vcmp.ge.f32.partialorder %v2568, %v3055
          %vm3124 = vcmp.ge.f32.partialorder %v2569, %v3055
          %vm3125 = vcmp.ge.f32.partialorder %v2570, %v3055
          %vm3126 = vcmp.ge.f32.partialorder %v2571, %v3055
          %vm3127 = vcmp.ge.f32.partialorder %v2572, %v3055
          %vm3128 = vcmp.ge.f32.partialorder %v2573, %v3055
          %vm3129 = vcmp.ge.f32.partialorder %v2574, %v3055
          %vm3130 = vcmp.ge.f32.partialorder %v2575, %v3055
          %vm3131 = vcmp.ge.f32.partialorder %v2576, %v3055
          %vm3132 = vcmp.ge.f32.partialorder %v2577, %v3055
          %vm3133 = vcmp.ge.f32.partialorder %v2578, %v3055
          %vm3134 = vcmp.ge.f32.partialorder %v2579, %v3055
          %vm3135 = vcmp.ge.f32.partialorder %v2580, %v3055
          %vm3136 = vcmp.ge.f32.partialorder %v2581, %v3055
          %vm3137 = vcmp.ge.f32.partialorder %v2582, %v3055
          %vm3138 = vcmp.ge.f32.partialorder %v2583, %v3055
          %vm3139 = vcmp.ge.f32.partialorder %v2584, %v3055
          %vm3140 = vcmp.ge.f32.partialorder %v2585, %v3055
          %vm3141 = vcmp.ge.f32.partialorder %v2586, %v3055
          %vm3142 = vcmp.ge.f32.partialorder %v2587, %v3055
          %vm3143 = vcmp.ge.f32.partialorder %v2588, %v3055
          %vm3144 = vcmp.ge.f32.partialorder %v2589, %v3055
          %vm3145 = vcmp.ge.f32.partialorder %v2590, %v3055
          %vm3146 = vcmp.ge.f32.partialorder %v2591, %v3055
          %vm3147 = vcmp.ge.f32.partialorder %v2592, %v3055
          %vm3148 = vcmp.ge.f32.partialorder %v2593, %v3055
          %vm3149 = vcmp.ge.f32.partialorder %v2594, %v3055
          %vm3150 = vcmp.ge.f32.partialorder %v2595, %v3055
          %vm3151 = vcmp.ge.f32.partialorder %v2564, %v3056
          %vm3152 = vcmp.ge.f32.partialorder %v2565, %v3056
          %vm3153 = vcmp.ge.f32.partialorder %v2566, %v3056
          %vm3154 = vcmp.ge.f32.partialorder %v2567, %v3056
          %vm3155 = vcmp.ge.f32.partialorder %v2568, %v3056
          %vm3156 = vcmp.ge.f32.partialorder %v2569, %v3056
          %vm3157 = vcmp.ge.f32.partialorder %v2570, %v3056
          %vm3158 = vcmp.ge.f32.partialorder %v2571, %v3056
          %vm3159 = vcmp.ge.f32.partialorder %v2572, %v3056
          %vm3160 = vcmp.ge.f32.partialorder %v2573, %v3056
          %vm3161 = vcmp.ge.f32.partialorder %v2574, %v3056
          %vm3162 = vcmp.ge.f32.partialorder %v2575, %v3056
          %vm3163 = vcmp.ge.f32.partialorder %v2576, %v3056
          %vm3164 = vcmp.ge.f32.partialorder %v2577, %v3056
          %vm3165 = vcmp.ge.f32.partialorder %v2578, %v3056
          %vm3166 = vcmp.ge.f32.partialorder %v2579, %v3056
          %vm3167 = vcmp.ge.f32.partialorder %v2580, %v3056
          %vm3168 = vcmp.ge.f32.partialorder %v2581, %v3056
          %vm3169 = vcmp.ge.f32.partialorder %v2582, %v3056
          %vm3170 = vcmp.ge.f32.partialorder %v2583, %v3056
          %vm3171 = vcmp.ge.f32.partialorder %v2584, %v3056
          %vm3172 = vcmp.ge.f32.partialorder %v2585, %v3056
          %vm3173 = vcmp.ge.f32.partialorder %v2586, %v3056
          %vm3174 = vcmp.ge.f32.partialorder %v2587, %v3056
          %vm3175 = vcmp.ge.f32.partialorder %v2588, %v3056
          %vm3176 = vcmp.ge.f32.partialorder %v2589, %v3056
          %vm3177 = vcmp.ge.f32.partialorder %v2590, %v3056
          %vm3178 = vcmp.ge.f32.partialorder %v2591, %v3056
          %vm3179 = vcmp.ge.f32.partialorder %v2592, %v3056
          %vm3180 = vcmp.ge.f32.partialorder %v2593, %v3056
          %vm3181 = vcmp.ge.f32.partialorder %v2594, %v3056
          %vm3182 = vcmp.ge.f32.partialorder %v2595, %v3056
          %vm3183 = vcmp.ge.f32.partialorder %v2564, %v3057
          %vm3184 = vcmp.ge.f32.partialorder %v2565, %v3057
          %vm3185 = vcmp.ge.f32.partialorder %v2566, %v3057
          %vm3186 = vcmp.ge.f32.partialorder %v2567, %v3057
          %vm3187 = vcmp.ge.f32.partialorder %v2568, %v3057
          %vm3188 = vcmp.ge.f32.partialorder %v2569, %v3057
          %vm3189 = vcmp.ge.f32.partialorder %v2570, %v3057
          %vm3190 = vcmp.ge.f32.partialorder %v2571, %v3057
          %vm3191 = vcmp.ge.f32.partialorder %v2572, %v3057
          %vm3192 = vcmp.ge.f32.partialorder %v2573, %v3057
          %vm3193 = vcmp.ge.f32.partialorder %v2574, %v3057
          %vm3194 = vcmp.ge.f32.partialorder %v2575, %v3057
          %vm3195 = vcmp.ge.f32.partialorder %v2576, %v3057
          %vm3196 = vcmp.ge.f32.partialorder %v2577, %v3057
          %vm3197 = vcmp.ge.f32.partialorder %v2578, %v3057
          %vm3198 = vcmp.ge.f32.partialorder %v2579, %v3057
          %vm3199 = vcmp.ge.f32.partialorder %v2580, %v3057
          %vm3200 = vcmp.ge.f32.partialorder %v2581, %v3057
          %vm3201 = vcmp.ge.f32.partialorder %v2582, %v3057
          %vm3202 = vcmp.ge.f32.partialorder %v2583, %v3057
          %vm3203 = vcmp.ge.f32.partialorder %v2584, %v3057
          %vm3204 = vcmp.ge.f32.partialorder %v2585, %v3057
          %vm3205 = vcmp.ge.f32.partialorder %v2586, %v3057
          %vm3206 = vcmp.ge.f32.partialorder %v2587, %v3057
          %vm3207 = vcmp.ge.f32.partialorder %v2588, %v3057
          %vm3208 = vcmp.ge.f32.partialorder %v2589, %v3057
          %vm3209 = vcmp.ge.f32.partialorder %v2590, %v3057
          %vm3210 = vcmp.ge.f32.partialorder %v2591, %v3057
          %vm3211 = vcmp.ge.f32.partialorder %v2592, %v3057
          %vm3212 = vcmp.ge.f32.partialorder %v2593, %v3057
          %vm3213 = vcmp.ge.f32.partialorder %v2594, %v3057
          %vm3214 = vcmp.ge.f32.partialorder %v2595, %v3057
          %vm3215 = vcmp.ge.f32.partialorder %v2564, %v3058
          %vm3216 = vcmp.ge.f32.partialorder %v2565, %v3058
          %vm3217 = vcmp.ge.f32.partialorder %v2566, %v3058
          %vm3218 = vcmp.ge.f32.partialorder %v2567, %v3058
          %vm3219 = vcmp.ge.f32.partialorder %v2568, %v3058
          %vm3220 = vcmp.ge.f32.partialorder %v2569, %v3058
          %vm3221 = vcmp.ge.f32.partialorder %v2570, %v3058
          %vm3222 = vcmp.ge.f32.partialorder %v2571, %v3058
          %vm3223 = vcmp.ge.f32.partialorder %v2572, %v3058
          %vm3224 = vcmp.ge.f32.partialorder %v2573, %v3058
          %vm3225 = vcmp.ge.f32.partialorder %v2574, %v3058
          %vm3226 = vcmp.ge.f32.partialorder %v2575, %v3058
          %vm3227 = vcmp.ge.f32.partialorder %v2576, %v3058
          %vm3228 = vcmp.ge.f32.partialorder %v2577, %v3058
          %vm3229 = vcmp.ge.f32.partialorder %v2578, %v3058
          %vm3230 = vcmp.ge.f32.partialorder %v2579, %v3058
          %vm3231 = vcmp.ge.f32.partialorder %v2580, %v3058
          %vm3232 = vcmp.ge.f32.partialorder %v2581, %v3058
          %vm3233 = vcmp.ge.f32.partialorder %v2582, %v3058
          %vm3234 = vcmp.ge.f32.partialorder %v2583, %v3058
          %vm3235 = vcmp.ge.f32.partialorder %v2584, %v3058
          %vm3236 = vcmp.ge.f32.partialorder %v2585, %v3058
          %vm3237 = vcmp.ge.f32.partialorder %v2586, %v3058
          %vm3238 = vcmp.ge.f32.partialorder %v2587, %v3058
          %vm3239 = vcmp.ge.f32.partialorder %v2588, %v3058
          %vm3240 = vcmp.ge.f32.partialorder %v2589, %v3058
          %vm3241 = vcmp.ge.f32.partialorder %v2590, %v3058
          %vm3242 = vcmp.ge.f32.partialorder %v2591, %v3058
          %vm3243 = vcmp.ge.f32.partialorder %v2592, %v3058
          %vm3244 = vcmp.ge.f32.partialorder %v2593, %v3058
          %vm3245 = vcmp.ge.f32.partialorder %v2594, %v3058
          %vm3246 = vcmp.ge.f32.partialorder %v2595, %v3058
          %vm3247 = vcmp.ge.f32.partialorder %v2564, %v3059
          %vm3248 = vcmp.ge.f32.partialorder %v2565, %v3059
          %vm3249 = vcmp.ge.f32.partialorder %v2566, %v3059
          %vm3250 = vcmp.ge.f32.partialorder %v2567, %v3059
          %vm3251 = vcmp.ge.f32.partialorder %v2568, %v3059
          %vm3252 = vcmp.ge.f32.partialorder %v2569, %v3059
          %vm3253 = vcmp.ge.f32.partialorder %v2570, %v3059
          %vm3254 = vcmp.ge.f32.partialorder %v2571, %v3059
          %vm3255 = vcmp.ge.f32.partialorder %v2572, %v3059
          %vm3256 = vcmp.ge.f32.partialorder %v2573, %v3059
          %vm3257 = vcmp.ge.f32.partialorder %v2574, %v3059
          %vm3258 = vcmp.ge.f32.partialorder %v2575, %v3059
          %vm3259 = vcmp.ge.f32.partialorder %v2576, %v3059
          %vm3260 = vcmp.ge.f32.partialorder %v2577, %v3059
          %vm3261 = vcmp.ge.f32.partialorder %v2578, %v3059
          %vm3262 = vcmp.ge.f32.partialorder %v2579, %v3059
          %vm3263 = vcmp.ge.f32.partialorder %v2580, %v3059
          %vm3264 = vcmp.ge.f32.partialorder %v2581, %v3059
          %vm3265 = vcmp.ge.f32.partialorder %v2582, %v3059
          %vm3266 = vcmp.ge.f32.partialorder %v2583, %v3059
          %vm3267 = vcmp.ge.f32.partialorder %v2584, %v3059
          %vm3268 = vcmp.ge.f32.partialorder %v2585, %v3059
          %vm3269 = vcmp.ge.f32.partialorder %v2586, %v3059
          %vm3270 = vcmp.ge.f32.partialorder %v2587, %v3059
          %vm3271 = vcmp.ge.f32.partialorder %v2588, %v3059
          %vm3272 = vcmp.ge.f32.partialorder %v2589, %v3059
          %vm3273 = vcmp.ge.f32.partialorder %v2590, %v3059
          %vm3274 = vcmp.ge.f32.partialorder %v2591, %v3059
          %vm3275 = vcmp.ge.f32.partialorder %v2592, %v3059
          %vm3276 = vcmp.ge.f32.partialorder %v2593, %v3059
          %vm3277 = vcmp.ge.f32.partialorder %v2594, %v3059
          %vm3278 = vcmp.ge.f32.partialorder %v2595, %v3059
          %vm3279 = vcmp.ge.f32.partialorder %v2564, %v3060
          %vm3280 = vcmp.ge.f32.partialorder %v2565, %v3060
          %vm3281 = vcmp.ge.f32.partialorder %v2566, %v3060
          %vm3282 = vcmp.ge.f32.partialorder %v2567, %v3060
          %vm3283 = vcmp.ge.f32.partialorder %v2568, %v3060
          %vm3284 = vcmp.ge.f32.partialorder %v2569, %v3060
          %vm3285 = vcmp.ge.f32.partialorder %v2570, %v3060
          %vm3286 = vcmp.ge.f32.partialorder %v2571, %v3060
          %vm3287 = vcmp.ge.f32.partialorder %v2572, %v3060
          %vm3288 = vcmp.ge.f32.partialorder %v2573, %v3060
          %vm3289 = vcmp.ge.f32.partialorder %v2574, %v3060
          %vm3290 = vcmp.ge.f32.partialorder %v2575, %v3060
          %vm3291 = vcmp.ge.f32.partialorder %v2576, %v3060
          %vm3292 = vcmp.ge.f32.partialorder %v2577, %v3060
          %vm3293 = vcmp.ge.f32.partialorder %v2578, %v3060
          %vm3294 = vcmp.ge.f32.partialorder %v2579, %v3060
          %vm3295 = vcmp.ge.f32.partialorder %v2580, %v3060
          %vm3296 = vcmp.ge.f32.partialorder %v2581, %v3060
          %vm3297 = vcmp.ge.f32.partialorder %v2582, %v3060
          %vm3298 = vcmp.ge.f32.partialorder %v2583, %v3060
          %vm3299 = vcmp.ge.f32.partialorder %v2584, %v3060
          %vm3300 = vcmp.ge.f32.partialorder %v2585, %v3060
          %vm3301 = vcmp.ge.f32.partialorder %v2586, %v3060
          %vm3302 = vcmp.ge.f32.partialorder %v2587, %v3060
          %vm3303 = vcmp.ge.f32.partialorder %v2588, %v3060
          %vm3304 = vcmp.ge.f32.partialorder %v2589, %v3060
          %vm3305 = vcmp.ge.f32.partialorder %v2590, %v3060
          %vm3306 = vcmp.ge.f32.partialorder %v2591, %v3060
          %vm3307 = vcmp.ge.f32.partialorder %v2592, %v3060
          %vm3308 = vcmp.ge.f32.partialorder %v2593, %v3060
          %vm3309 = vcmp.ge.f32.partialorder %v2594, %v3060
          %vm3310 = vcmp.ge.f32.partialorder %v2595, %v3060
          %vm3311 = vcmp.ge.f32.partialorder %v2564, %v3061
          %vm3312 = vcmp.ge.f32.partialorder %v2565, %v3061
          %vm3313 = vcmp.ge.f32.partialorder %v2566, %v3061
          %vm3314 = vcmp.ge.f32.partialorder %v2567, %v3061
          %vm3315 = vcmp.ge.f32.partialorder %v2568, %v3061
          %vm3316 = vcmp.ge.f32.partialorder %v2569, %v3061
          %vm3317 = vcmp.ge.f32.partialorder %v2570, %v3061
          %vm3318 = vcmp.ge.f32.partialorder %v2571, %v3061
          %vm3319 = vcmp.ge.f32.partialorder %v2572, %v3061
          %vm3320 = vcmp.ge.f32.partialorder %v2573, %v3061
          %vm3321 = vcmp.ge.f32.partialorder %v2574, %v3061
          %vm3322 = vcmp.ge.f32.partialorder %v2575, %v3061
          %vm3323 = vcmp.ge.f32.partialorder %v2576, %v3061
          %vm3324 = vcmp.ge.f32.partialorder %v2577, %v3061
          %vm3325 = vcmp.ge.f32.partialorder %v2578, %v3061
          %vm3326 = vcmp.ge.f32.partialorder %v2579, %v3061
          %vm3327 = vcmp.ge.f32.partialorder %v2580, %v3061
          %vm3328 = vcmp.ge.f32.partialorder %v2581, %v3061
          %vm3329 = vcmp.ge.f32.partialorder %v2582, %v3061
          %vm3330 = vcmp.ge.f32.partialorder %v2583, %v3061
          %vm3331 = vcmp.ge.f32.partialorder %v2584, %v3061
          %vm3332 = vcmp.ge.f32.partialorder %v2585, %v3061
          %vm3333 = vcmp.ge.f32.partialorder %v2586, %v3061
          %vm3334 = vcmp.ge.f32.partialorder %v2587, %v3061
          %vm3335 = vcmp.ge.f32.partialorder %v2588, %v3061
          %vm3336 = vcmp.ge.f32.partialorder %v2589, %v3061
          %vm3337 = vcmp.ge.f32.partialorder %v2590, %v3061
          %vm3338 = vcmp.ge.f32.partialorder %v2591, %v3061
          %vm3339 = vcmp.ge.f32.partialorder %v2592, %v3061
          %vm3340 = vcmp.ge.f32.partialorder %v2593, %v3061
          %vm3341 = vcmp.ge.f32.partialorder %v2594, %v3061
          %vm3342 = vcmp.ge.f32.partialorder %v2595, %v3061
          %vm3343 = vcmp.ge.f32.partialorder %v2564, %v3062
          %vm3344 = vcmp.ge.f32.partialorder %v2565, %v3062
          %vm3345 = vcmp.ge.f32.partialorder %v2566, %v3062
          %vm3346 = vcmp.ge.f32.partialorder %v2567, %v3062
          %vm3347 = vcmp.ge.f32.partialorder %v2568, %v3062
          %vm3348 = vcmp.ge.f32.partialorder %v2569, %v3062
          %vm3349 = vcmp.ge.f32.partialorder %v2570, %v3062
          %vm3350 = vcmp.ge.f32.partialorder %v2571, %v3062
          %vm3351 = vcmp.ge.f32.partialorder %v2572, %v3062
          %vm3352 = vcmp.ge.f32.partialorder %v2573, %v3062
          %vm3353 = vcmp.ge.f32.partialorder %v2574, %v3062
          %vm3354 = vcmp.ge.f32.partialorder %v2575, %v3062
          %vm3355 = vcmp.ge.f32.partialorder %v2576, %v3062
          %vm3356 = vcmp.ge.f32.partialorder %v2577, %v3062
          %vm3357 = vcmp.ge.f32.partialorder %v2578, %v3062
          %vm3358 = vcmp.ge.f32.partialorder %v2579, %v3062
          %vm3359 = vcmp.ge.f32.partialorder %v2580, %v3062
          %vm3360 = vcmp.ge.f32.partialorder %v2581, %v3062
          %vm3361 = vcmp.ge.f32.partialorder %v2582, %v3062
          %vm3362 = vcmp.ge.f32.partialorder %v2583, %v3062
          %vm3363 = vcmp.ge.f32.partialorder %v2584, %v3062
          %vm3364 = vcmp.ge.f32.partialorder %v2585, %v3062
          %vm3365 = vcmp.ge.f32.partialorder %v2586, %v3062
          %vm3366 = vcmp.ge.f32.partialorder %v2587, %v3062
          %vm3367 = vcmp.ge.f32.partialorder %v2588, %v3062
          %vm3368 = vcmp.ge.f32.partialorder %v2589, %v3062
          %vm3369 = vcmp.ge.f32.partialorder %v2590, %v3062
          %vm3370 = vcmp.ge.f32.partialorder %v2591, %v3062
          %vm3371 = vcmp.ge.f32.partialorder %v2592, %v3062
          %vm3372 = vcmp.ge.f32.partialorder %v2593, %v3062
          %vm3373 = vcmp.ge.f32.partialorder %v2594, %v3062
          %vm3374 = vcmp.ge.f32.partialorder %v2595, %v3062
          %vm3375 = vcmp.ge.f32.partialorder %v2564, %v3063
          %vm3376 = vcmp.ge.f32.partialorder %v2565, %v3063
          %vm3377 = vcmp.ge.f32.partialorder %v2566, %v3063
          %vm3378 = vcmp.ge.f32.partialorder %v2567, %v3063
          %vm3379 = vcmp.ge.f32.partialorder %v2568, %v3063
          %vm3380 = vcmp.ge.f32.partialorder %v2569, %v3063
          %vm3381 = vcmp.ge.f32.partialorder %v2570, %v3063
          %vm3382 = vcmp.ge.f32.partialorder %v2571, %v3063
          %vm3383 = vcmp.ge.f32.partialorder %v2572, %v3063
          %vm3384 = vcmp.ge.f32.partialorder %v2573, %v3063
          %vm3385 = vcmp.ge.f32.partialorder %v2574, %v3063
          %vm3386 = vcmp.ge.f32.partialorder %v2575, %v3063
          %vm3387 = vcmp.ge.f32.partialorder %v2576, %v3063
          %vm3388 = vcmp.ge.f32.partialorder %v2577, %v3063
          %vm3389 = vcmp.ge.f32.partialorder %v2578, %v3063
          %vm3390 = vcmp.ge.f32.partialorder %v2579, %v3063
          %vm3391 = vcmp.ge.f32.partialorder %v2580, %v3063
          %vm3392 = vcmp.ge.f32.partialorder %v2581, %v3063
          %vm3393 = vcmp.ge.f32.partialorder %v2582, %v3063
          %vm3394 = vcmp.ge.f32.partialorder %v2583, %v3063
          %vm3395 = vcmp.ge.f32.partialorder %v2584, %v3063
          %vm3396 = vcmp.ge.f32.partialorder %v2585, %v3063
          %vm3397 = vcmp.ge.f32.partialorder %v2586, %v3063
          %vm3398 = vcmp.ge.f32.partialorder %v2587, %v3063
          %vm3399 = vcmp.ge.f32.partialorder %v2588, %v3063
          %vm3400 = vcmp.ge.f32.partialorder %v2589, %v3063
          %vm3401 = vcmp.ge.f32.partialorder %v2590, %v3063
          %vm3402 = vcmp.ge.f32.partialorder %v2591, %v3063
          %vm3403 = vcmp.ge.f32.partialorder %v2592, %v3063
          %vm3404 = vcmp.ge.f32.partialorder %v2593, %v3063
          %vm3405 = vcmp.ge.f32.partialorder %v2594, %v3063
          %vm3406 = vcmp.ge.f32.partialorder %v2595, %v3063
          %vm3407 = vcmp.ge.f32.partialorder %v2564, %v3064
          %vm3408 = vcmp.ge.f32.partialorder %v2565, %v3064
          %vm3409 = vcmp.ge.f32.partialorder %v2566, %v3064
          %vm3410 = vcmp.ge.f32.partialorder %v2567, %v3064
          %vm3411 = vcmp.ge.f32.partialorder %v2568, %v3064
          %vm3412 = vcmp.ge.f32.partialorder %v2569, %v3064
          %vm3413 = vcmp.ge.f32.partialorder %v2570, %v3064
          %vm3414 = vcmp.ge.f32.partialorder %v2571, %v3064
          %vm3415 = vcmp.ge.f32.partialorder %v2572, %v3064
          %vm3416 = vcmp.ge.f32.partialorder %v2573, %v3064
          %vm3417 = vcmp.ge.f32.partialorder %v2574, %v3064
          %vm3418 = vcmp.ge.f32.partialorder %v2575, %v3064
          %vm3419 = vcmp.ge.f32.partialorder %v2576, %v3064
          %vm3420 = vcmp.ge.f32.partialorder %v2577, %v3064
          %vm3421 = vcmp.ge.f32.partialorder %v2578, %v3064
          %vm3422 = vcmp.ge.f32.partialorder %v2579, %v3064
          %vm3423 = vcmp.ge.f32.partialorder %v2580, %v3064
          %vm3424 = vcmp.ge.f32.partialorder %v2581, %v3064
          %vm3425 = vcmp.ge.f32.partialorder %v2582, %v3064
          %vm3426 = vcmp.ge.f32.partialorder %v2583, %v3064
          %vm3427 = vcmp.ge.f32.partialorder %v2584, %v3064
          %vm3428 = vcmp.ge.f32.partialorder %v2585, %v3064
          %vm3429 = vcmp.ge.f32.partialorder %v2586, %v3064
          %vm3430 = vcmp.ge.f32.partialorder %v2587, %v3064
          %vm3431 = vcmp.ge.f32.partialorder %v2588, %v3064
          %vm3432 = vcmp.ge.f32.partialorder %v2589, %v3064
          %vm3433 = vcmp.ge.f32.partialorder %v2590, %v3064
          %vm3434 = vcmp.ge.f32.partialorder %v2591, %v3064
          %vm3435 = vcmp.ge.f32.partialorder %v2592, %v3064
          %vm3436 = vcmp.ge.f32.partialorder %v2593, %v3064
          %vm3437 = vcmp.ge.f32.partialorder %v2594, %v3064
          %vm3438 = vcmp.ge.f32.partialorder %v2595, %v3064
          %vm3439 = vcmp.ge.f32.partialorder %v2564, %v3065
          %vm3440 = vcmp.ge.f32.partialorder %v2565, %v3065
          %vm3441 = vcmp.ge.f32.partialorder %v2566, %v3065
          %vm3442 = vcmp.ge.f32.partialorder %v2567, %v3065
          %vm3443 = vcmp.ge.f32.partialorder %v2568, %v3065
          %vm3444 = vcmp.ge.f32.partialorder %v2569, %v3065
          %vm3445 = vcmp.ge.f32.partialorder %v2570, %v3065
          %vm3446 = vcmp.ge.f32.partialorder %v2571, %v3065
          %vm3447 = vcmp.ge.f32.partialorder %v2572, %v3065
          %vm3448 = vcmp.ge.f32.partialorder %v2573, %v3065
          %vm3449 = vcmp.ge.f32.partialorder %v2574, %v3065
          %vm3450 = vcmp.ge.f32.partialorder %v2575, %v3065
          %vm3451 = vcmp.ge.f32.partialorder %v2576, %v3065
          %vm3452 = vcmp.ge.f32.partialorder %v2577, %v3065
          %vm3453 = vcmp.ge.f32.partialorder %v2578, %v3065
          %vm3454 = vcmp.ge.f32.partialorder %v2579, %v3065
          %vm3455 = vcmp.ge.f32.partialorder %v2580, %v3065
          %vm3456 = vcmp.ge.f32.partialorder %v2581, %v3065
          %vm3457 = vcmp.ge.f32.partialorder %v2582, %v3065
          %vm3458 = vcmp.ge.f32.partialorder %v2583, %v3065
          %vm3459 = vcmp.ge.f32.partialorder %v2584, %v3065
          %vm3460 = vcmp.ge.f32.partialorder %v2585, %v3065
          %vm3461 = vcmp.ge.f32.partialorder %v2586, %v3065
          %vm3462 = vcmp.ge.f32.partialorder %v2587, %v3065
          %vm3463 = vcmp.ge.f32.partialorder %v2588, %v3065
          %vm3464 = vcmp.ge.f32.partialorder %v2589, %v3065
          %vm3465 = vcmp.ge.f32.partialorder %v2590, %v3065
          %vm3466 = vcmp.ge.f32.partialorder %v2591, %v3065
          %vm3467 = vcmp.ge.f32.partialorder %v2592, %v3065
          %vm3468 = vcmp.ge.f32.partialorder %v2593, %v3065
          %vm3469 = vcmp.ge.f32.partialorder %v2594, %v3065
          %vm3470 = vcmp.ge.f32.partialorder %v2595, %v3065
          %vm3471 = vcmp.ge.f32.partialorder %v2564, %v3066
          %vm3472 = vcmp.ge.f32.partialorder %v2565, %v3066
          %vm3473 = vcmp.ge.f32.partialorder %v2566, %v3066
          %vm3474 = vcmp.ge.f32.partialorder %v2567, %v3066
          %vm3475 = vcmp.ge.f32.partialorder %v2568, %v3066
          %vm3476 = vcmp.ge.f32.partialorder %v2569, %v3066
          %vm3477 = vcmp.ge.f32.partialorder %v2570, %v3066
          %vm3478 = vcmp.ge.f32.partialorder %v2571, %v3066
          %vm3479 = vcmp.ge.f32.partialorder %v2572, %v3066
          %vm3480 = vcmp.ge.f32.partialorder %v2573, %v3066
          %vm3481 = vcmp.ge.f32.partialorder %v2574, %v3066
          %vm3482 = vcmp.ge.f32.partialorder %v2575, %v3066
          %vm3483 = vcmp.ge.f32.partialorder %v2576, %v3066
          %vm3484 = vcmp.ge.f32.partialorder %v2577, %v3066
          %vm3485 = vcmp.ge.f32.partialorder %v2578, %v3066
          %vm3486 = vcmp.ge.f32.partialorder %v2579, %v3066
          %vm3487 = vcmp.ge.f32.partialorder %v2580, %v3066
          %vm3488 = vcmp.ge.f32.partialorder %v2581, %v3066
          %vm3489 = vcmp.ge.f32.partialorder %v2582, %v3066
          %vm3490 = vcmp.ge.f32.partialorder %v2583, %v3066
          %vm3491 = vcmp.ge.f32.partialorder %v2584, %v3066
          %vm3492 = vcmp.ge.f32.partialorder %v2585, %v3066
          %vm3493 = vcmp.ge.f32.partialorder %v2586, %v3066
          %vm3494 = vcmp.ge.f32.partialorder %v2587, %v3066
          %vm3495 = vcmp.ge.f32.partialorder %v2588, %v3066
          %vm3496 = vcmp.ge.f32.partialorder %v2589, %v3066
          %vm3497 = vcmp.ge.f32.partialorder %v2590, %v3066
          %vm3498 = vcmp.ge.f32.partialorder %v2591, %v3066
          %vm3499 = vcmp.ge.f32.partialorder %v2592, %v3066
          %vm3500 = vcmp.ge.f32.partialorder %v2593, %v3066
          %vm3501 = vcmp.ge.f32.partialorder %v2594, %v3066
          %vm3502 = vcmp.ge.f32.partialorder %v2595, %v3066
          %vm3503 = vcmp.ge.f32.partialorder %v2564, %v3067
          %vm3504 = vcmp.ge.f32.partialorder %v2565, %v3067
          %vm3505 = vcmp.ge.f32.partialorder %v2566, %v3067
          %vm3506 = vcmp.ge.f32.partialorder %v2567, %v3067
          %vm3507 = vcmp.ge.f32.partialorder %v2568, %v3067
          %vm3508 = vcmp.ge.f32.partialorder %v2569, %v3067
          %vm3509 = vcmp.ge.f32.partialorder %v2570, %v3067
          %vm3510 = vcmp.ge.f32.partialorder %v2571, %v3067
          %vm3511 = vcmp.ge.f32.partialorder %v2572, %v3067
          %vm3512 = vcmp.ge.f32.partialorder %v2573, %v3067
          %vm3513 = vcmp.ge.f32.partialorder %v2574, %v3067
          %vm3514 = vcmp.ge.f32.partialorder %v2575, %v3067
          %vm3515 = vcmp.ge.f32.partialorder %v2576, %v3067
          %vm3516 = vcmp.ge.f32.partialorder %v2577, %v3067
          %vm3517 = vcmp.ge.f32.partialorder %v2578, %v3067
          %vm3518 = vcmp.ge.f32.partialorder %v2579, %v3067
          %vm3519 = vcmp.ge.f32.partialorder %v2580, %v3067
          %vm3520 = vcmp.ge.f32.partialorder %v2581, %v3067
          %vm3521 = vcmp.ge.f32.partialorder %v2582, %v3067
          %vm3522 = vcmp.ge.f32.partialorder %v2583, %v3067
          %vm3523 = vcmp.ge.f32.partialorder %v2584, %v3067
          %vm3524 = vcmp.ge.f32.partialorder %v2585, %v3067
          %vm3525 = vcmp.ge.f32.partialorder %v2586, %v3067
          %vm3526 = vcmp.ge.f32.partialorder %v2587, %v3067
          %vm3527 = vcmp.ge.f32.partialorder %v2588, %v3067
          %vm3528 = vcmp.ge.f32.partialorder %v2589, %v3067
          %vm3529 = vcmp.ge.f32.partialorder %v2590, %v3067
          %vm3530 = vcmp.ge.f32.partialorder %v2591, %v3067
          %vm3531 = vcmp.ge.f32.partialorder %v2592, %v3067
          %vm3532 = vcmp.ge.f32.partialorder %v2593, %v3067
          %vm3533 = vcmp.ge.f32.partialorder %v2594, %v3067
          %vm3534 = vcmp.ge.f32.partialorder %v2595, %v3067
          %vm3535 = vcmp.ge.f32.partialorder %v2564, %v3068
          %vm3536 = vcmp.ge.f32.partialorder %v2565, %v3068
          %vm3537 = vcmp.ge.f32.partialorder %v2566, %v3068
          %vm3538 = vcmp.ge.f32.partialorder %v2567, %v3068
          %vm3539 = vcmp.ge.f32.partialorder %v2568, %v3068
          %vm3540 = vcmp.ge.f32.partialorder %v2569, %v3068
          %vm3541 = vcmp.ge.f32.partialorder %v2570, %v3068
          %vm3542 = vcmp.ge.f32.partialorder %v2571, %v3068
          %vm3543 = vcmp.ge.f32.partialorder %v2572, %v3068
          %vm3544 = vcmp.ge.f32.partialorder %v2573, %v3068
          %vm3545 = vcmp.ge.f32.partialorder %v2574, %v3068
          %vm3546 = vcmp.ge.f32.partialorder %v2575, %v3068
          %vm3547 = vcmp.ge.f32.partialorder %v2576, %v3068
          %vm3548 = vcmp.ge.f32.partialorder %v2577, %v3068
          %vm3549 = vcmp.ge.f32.partialorder %v2578, %v3068
          %vm3550 = vcmp.ge.f32.partialorder %v2579, %v3068
          %vm3551 = vcmp.ge.f32.partialorder %v2580, %v3068
          %vm3552 = vcmp.ge.f32.partialorder %v2581, %v3068
          %vm3553 = vcmp.ge.f32.partialorder %v2582, %v3068
          %vm3554 = vcmp.ge.f32.partialorder %v2583, %v3068
          %vm3555 = vcmp.ge.f32.partialorder %v2584, %v3068
          %vm3556 = vcmp.ge.f32.partialorder %v2585, %v3068
          %vm3557 = vcmp.ge.f32.partialorder %v2586, %v3068
          %vm3558 = vcmp.ge.f32.partialorder %v2587, %v3068
          %vm3559 = vcmp.ge.f32.partialorder %v2588, %v3068
          %vm3560 = vcmp.ge.f32.partialorder %v2589, %v3068
          %vm3561 = vcmp.ge.f32.partialorder %v2590, %v3068
          %vm3562 = vcmp.ge.f32.partialorder %v2591, %v3068
          %vm3563 = vcmp.ge.f32.partialorder %v2592, %v3068
          %vm3564 = vcmp.ge.f32.partialorder %v2593, %v3068
          %vm3565 = vcmp.ge.f32.partialorder %v2594, %v3068
          %vm3566 = vcmp.ge.f32.partialorder %v2595, %v3068
          %vm3567 = vcmp.ge.f32.partialorder %v2564, %v3069
          %vm3568 = vcmp.ge.f32.partialorder %v2565, %v3069
          %vm3569 = vcmp.ge.f32.partialorder %v2566, %v3069
          %vm3570 = vcmp.ge.f32.partialorder %v2567, %v3069
          %vm3571 = vcmp.ge.f32.partialorder %v2568, %v3069
          %vm3572 = vcmp.ge.f32.partialorder %v2569, %v3069
          %vm3573 = vcmp.ge.f32.partialorder %v2570, %v3069
          %vm3574 = vcmp.ge.f32.partialorder %v2571, %v3069
          %vm3575 = vcmp.ge.f32.partialorder %v2572, %v3069
          %vm3576 = vcmp.ge.f32.partialorder %v2573, %v3069
          %vm3577 = vcmp.ge.f32.partialorder %v2574, %v3069
          %vm3578 = vcmp.ge.f32.partialorder %v2575, %v3069
          %vm3579 = vcmp.ge.f32.partialorder %v2576, %v3069
          %vm3580 = vcmp.ge.f32.partialorder %v2577, %v3069
          %vm3581 = vcmp.ge.f32.partialorder %v2578, %v3069
          %vm3582 = vcmp.ge.f32.partialorder %v2579, %v3069
          %vm3583 = vcmp.ge.f32.partialorder %v2580, %v3069
          %vm3584 = vcmp.ge.f32.partialorder %v2581, %v3069
          %vm3585 = vcmp.ge.f32.partialorder %v2582, %v3069
          %vm3586 = vcmp.ge.f32.partialorder %v2583, %v3069
          %vm3587 = vcmp.ge.f32.partialorder %v2584, %v3069
          %vm3588 = vcmp.ge.f32.partialorder %v2585, %v3069
          %vm3589 = vcmp.ge.f32.partialorder %v2586, %v3069
          %vm3590 = vcmp.ge.f32.partialorder %v2587, %v3069
          %vm3591 = vcmp.ge.f32.partialorder %v2588, %v3069
          %vm3592 = vcmp.ge.f32.partialorder %v2589, %v3069
          %vm3593 = vcmp.ge.f32.partialorder %v2590, %v3069
          %vm3594 = vcmp.ge.f32.partialorder %v2591, %v3069
          %vm3595 = vcmp.ge.f32.partialorder %v2592, %v3069
          %vm3596 = vcmp.ge.f32.partialorder %v2593, %v3069
          %vm3597 = vcmp.ge.f32.partialorder %v2594, %v3069
          %vm3598 = vcmp.ge.f32.partialorder %v2595, %v3069
          %vm3599 = vcmp.ge.f32.partialorder %v2564, %v3070
          %vm3600 = vcmp.ge.f32.partialorder %v2565, %v3070
          %vm3601 = vcmp.ge.f32.partialorder %v2566, %v3070
          %vm3602 = vcmp.ge.f32.partialorder %v2567, %v3070
          %vm3603 = vcmp.ge.f32.partialorder %v2568, %v3070
          %vm3604 = vcmp.ge.f32.partialorder %v2569, %v3070
          %vm3605 = vcmp.ge.f32.partialorder %v2570, %v3070
          %vm3606 = vcmp.ge.f32.partialorder %v2571, %v3070
          %vm3607 = vcmp.ge.f32.partialorder %v2572, %v3070
          %vm3608 = vcmp.ge.f32.partialorder %v2573, %v3070
          %vm3609 = vcmp.ge.f32.partialorder %v2574, %v3070
          %vm3610 = vcmp.ge.f32.partialorder %v2575, %v3070
          %vm3611 = vcmp.ge.f32.partialorder %v2576, %v3070
          %vm3612 = vcmp.ge.f32.partialorder %v2577, %v3070
          %vm3613 = vcmp.ge.f32.partialorder %v2578, %v3070
          %vm3614 = vcmp.ge.f32.partialorder %v2579, %v3070
          %vm3615 = vcmp.ge.f32.partialorder %v2580, %v3070
          %vm3616 = vcmp.ge.f32.partialorder %v2581, %v3070
          %vm3617 = vcmp.ge.f32.partialorder %v2582, %v3070
          %vm3618 = vcmp.ge.f32.partialorder %v2583, %v3070
          %vm3619 = vcmp.ge.f32.partialorder %v2584, %v3070
          %vm3620 = vcmp.ge.f32.partialorder %v2585, %v3070
          %vm3621 = vcmp.ge.f32.partialorder %v2586, %v3070
          %vm3622 = vcmp.ge.f32.partialorder %v2587, %v3070
          %vm3623 = vcmp.ge.f32.partialorder %v2588, %v3070
          %vm3624 = vcmp.ge.f32.partialorder %v2589, %v3070
          %vm3625 = vcmp.ge.f32.partialorder %v2590, %v3070
          %vm3626 = vcmp.ge.f32.partialorder %v2591, %v3070
          %vm3627 = vcmp.ge.f32.partialorder %v2592, %v3070
          %vm3628 = vcmp.ge.f32.partialorder %v2593, %v3070
          %vm3629 = vcmp.ge.f32.partialorder %v2594, %v3070
          %vm3630 = vcmp.ge.f32.partialorder %v2595, %v3070
          %vm3631 = vcmp.ge.f32.partialorder %v2564, %v3071
          %vm3632 = vcmp.ge.f32.partialorder %v2565, %v3071
          %vm3633 = vcmp.ge.f32.partialorder %v2566, %v3071
          %vm3634 = vcmp.ge.f32.partialorder %v2567, %v3071
          %vm3635 = vcmp.ge.f32.partialorder %v2568, %v3071
          %vm3636 = vcmp.ge.f32.partialorder %v2569, %v3071
          %vm3637 = vcmp.ge.f32.partialorder %v2570, %v3071
          %vm3638 = vcmp.ge.f32.partialorder %v2571, %v3071
          %vm3639 = vcmp.ge.f32.partialorder %v2572, %v3071
          %vm3640 = vcmp.ge.f32.partialorder %v2573, %v3071
          %vm3641 = vcmp.ge.f32.partialorder %v2574, %v3071
          %vm3642 = vcmp.ge.f32.partialorder %v2575, %v3071
          %vm3643 = vcmp.ge.f32.partialorder %v2576, %v3071
          %vm3644 = vcmp.ge.f32.partialorder %v2577, %v3071
          %vm3645 = vcmp.ge.f32.partialorder %v2578, %v3071
          %vm3646 = vcmp.ge.f32.partialorder %v2579, %v3071
          %vm3647 = vcmp.ge.f32.partialorder %v2580, %v3071
          %vm3648 = vcmp.ge.f32.partialorder %v2581, %v3071
          %vm3649 = vcmp.ge.f32.partialorder %v2582, %v3071
          %vm3650 = vcmp.ge.f32.partialorder %v2583, %v3071
          %vm3651 = vcmp.ge.f32.partialorder %v2584, %v3071
          %vm3652 = vcmp.ge.f32.partialorder %v2585, %v3071
          %vm3653 = vcmp.ge.f32.partialorder %v2586, %v3071
          %vm3654 = vcmp.ge.f32.partialorder %v2587, %v3071
          %vm3655 = vcmp.ge.f32.partialorder %v2588, %v3071
          %vm3656 = vcmp.ge.f32.partialorder %v2589, %v3071
          %vm3657 = vcmp.ge.f32.partialorder %v2590, %v3071
          %vm3658 = vcmp.ge.f32.partialorder %v2591, %v3071
          %vm3659 = vcmp.ge.f32.partialorder %v2592, %v3071
          %vm3660 = vcmp.ge.f32.partialorder %v2593, %v3071
          %vm3661 = vcmp.ge.f32.partialorder %v2594, %v3071
          %vm3662 = vcmp.ge.f32.partialorder %v2595, %v3071
          %vm3663 = vcmp.ge.f32.partialorder %v2564, %v3072
          %vm3664 = vcmp.ge.f32.partialorder %v2565, %v3072
          %vm3665 = vcmp.ge.f32.partialorder %v2566, %v3072
          %vm3666 = vcmp.ge.f32.partialorder %v2567, %v3072
          %vm3667 = vcmp.ge.f32.partialorder %v2568, %v3072
          %vm3668 = vcmp.ge.f32.partialorder %v2569, %v3072
          %vm3669 = vcmp.ge.f32.partialorder %v2570, %v3072
          %vm3670 = vcmp.ge.f32.partialorder %v2571, %v3072
          %vm3671 = vcmp.ge.f32.partialorder %v2572, %v3072
          %vm3672 = vcmp.ge.f32.partialorder %v2573, %v3072
          %vm3673 = vcmp.ge.f32.partialorder %v2574, %v3072
          %vm3674 = vcmp.ge.f32.partialorder %v2575, %v3072
          %vm3675 = vcmp.ge.f32.partialorder %v2576, %v3072
          %vm3676 = vcmp.ge.f32.partialorder %v2577, %v3072
          %vm3677 = vcmp.ge.f32.partialorder %v2578, %v3072
          %vm3678 = vcmp.ge.f32.partialorder %v2579, %v3072
          %vm3679 = vcmp.ge.f32.partialorder %v2580, %v3072
          %vm3680 = vcmp.ge.f32.partialorder %v2581, %v3072
          %vm3681 = vcmp.ge.f32.partialorder %v2582, %v3072
          %vm3682 = vcmp.ge.f32.partialorder %v2583, %v3072
          %vm3683 = vcmp.ge.f32.partialorder %v2584, %v3072
          %vm3684 = vcmp.ge.f32.partialorder %v2585, %v3072
          %vm3685 = vcmp.ge.f32.partialorder %v2586, %v3072
          %vm3686 = vcmp.ge.f32.partialorder %v2587, %v3072
          %vm3687 = vcmp.ge.f32.partialorder %v2588, %v3072
          %vm3688 = vcmp.ge.f32.partialorder %v2589, %v3072
          %vm3689 = vcmp.ge.f32.partialorder %v2590, %v3072
          %vm3690 = vcmp.ge.f32.partialorder %v2591, %v3072
          %vm3691 = vcmp.ge.f32.partialorder %v2592, %v3072
          %vm3692 = vcmp.ge.f32.partialorder %v2593, %v3072
          %vm3693 = vcmp.ge.f32.partialorder %v2594, %v3072
          %vm3694 = vcmp.ge.f32.partialorder %v2595, %v3072
          %vm3695 = vcmp.ge.f32.partialorder %v2564, %v3073
          %vm3696 = vcmp.ge.f32.partialorder %v2565, %v3073
          %vm3697 = vcmp.ge.f32.partialorder %v2566, %v3073
          %vm3698 = vcmp.ge.f32.partialorder %v2567, %v3073
          %vm3699 = vcmp.ge.f32.partialorder %v2568, %v3073
          %vm3700 = vcmp.ge.f32.partialorder %v2569, %v3073
          %vm3701 = vcmp.ge.f32.partialorder %v2570, %v3073
          %vm3702 = vcmp.ge.f32.partialorder %v2571, %v3073
          %vm3703 = vcmp.ge.f32.partialorder %v2572, %v3073
          %vm3704 = vcmp.ge.f32.partialorder %v2573, %v3073
          %vm3705 = vcmp.ge.f32.partialorder %v2574, %v3073
          %vm3706 = vcmp.ge.f32.partialorder %v2575, %v3073
          %vm3707 = vcmp.ge.f32.partialorder %v2576, %v3073
          %vm3708 = vcmp.ge.f32.partialorder %v2577, %v3073
          %vm3709 = vcmp.ge.f32.partialorder %v2578, %v3073
          %vm3710 = vcmp.ge.f32.partialorder %v2579, %v3073
          %vm3711 = vcmp.ge.f32.partialorder %v2580, %v3073
          %vm3712 = vcmp.ge.f32.partialorder %v2581, %v3073
          %vm3713 = vcmp.ge.f32.partialorder %v2582, %v3073
          %vm3714 = vcmp.ge.f32.partialorder %v2583, %v3073
          %vm3715 = vcmp.ge.f32.partialorder %v2584, %v3073
          %vm3716 = vcmp.ge.f32.partialorder %v2585, %v3073
          %vm3717 = vcmp.ge.f32.partialorder %v2586, %v3073
          %vm3718 = vcmp.ge.f32.partialorder %v2587, %v3073
          %vm3719 = vcmp.ge.f32.partialorder %v2588, %v3073
          %vm3720 = vcmp.ge.f32.partialorder %v2589, %v3073
          %vm3721 = vcmp.ge.f32.partialorder %v2590, %v3073
          %vm3722 = vcmp.ge.f32.partialorder %v2591, %v3073
          %vm3723 = vcmp.ge.f32.partialorder %v2592, %v3073
          %vm3724 = vcmp.ge.f32.partialorder %v2593, %v3073
          %vm3725 = vcmp.ge.f32.partialorder %v2594, %v3073
          %vm3726 = vcmp.ge.f32.partialorder %v2595, %v3073
          %vm3727 = vcmp.ge.f32.partialorder %v2564, %v3074
          %vm3728 = vcmp.ge.f32.partialorder %v2565, %v3074
          %vm3729 = vcmp.ge.f32.partialorder %v2566, %v3074
          %vm3730 = vcmp.ge.f32.partialorder %v2567, %v3074
          %vm3731 = vcmp.ge.f32.partialorder %v2568, %v3074
          %vm3732 = vcmp.ge.f32.partialorder %v2569, %v3074
          %vm3733 = vcmp.ge.f32.partialorder %v2570, %v3074
          %vm3734 = vcmp.ge.f32.partialorder %v2571, %v3074
          %vm3735 = vcmp.ge.f32.partialorder %v2572, %v3074
          %vm3736 = vcmp.ge.f32.partialorder %v2573, %v3074
          %vm3737 = vcmp.ge.f32.partialorder %v2574, %v3074
          %vm3738 = vcmp.ge.f32.partialorder %v2575, %v3074
          %vm3739 = vcmp.ge.f32.partialorder %v2576, %v3074
          %vm3740 = vcmp.ge.f32.partialorder %v2577, %v3074
          %vm3741 = vcmp.ge.f32.partialorder %v2578, %v3074
          %vm3742 = vcmp.ge.f32.partialorder %v2579, %v3074
          %vm3743 = vcmp.ge.f32.partialorder %v2580, %v3074
          %vm3744 = vcmp.ge.f32.partialorder %v2581, %v3074
          %vm3745 = vcmp.ge.f32.partialorder %v2582, %v3074
          %vm3746 = vcmp.ge.f32.partialorder %v2583, %v3074
          %vm3747 = vcmp.ge.f32.partialorder %v2584, %v3074
          %vm3748 = vcmp.ge.f32.partialorder %v2585, %v3074
          %vm3749 = vcmp.ge.f32.partialorder %v2586, %v3074
          %vm3750 = vcmp.ge.f32.partialorder %v2587, %v3074
          %vm3751 = vcmp.ge.f32.partialorder %v2588, %v3074
          %vm3752 = vcmp.ge.f32.partialorder %v2589, %v3074
          %vm3753 = vcmp.ge.f32.partialorder %v2590, %v3074
          %vm3754 = vcmp.ge.f32.partialorder %v2591, %v3074
          %vm3755 = vcmp.ge.f32.partialorder %v2592, %v3074
          %vm3756 = vcmp.ge.f32.partialorder %v2593, %v3074
          %vm3757 = vcmp.ge.f32.partialorder %v2594, %v3074
          %vm3758 = vcmp.ge.f32.partialorder %v2595, %v3074
          %vm3759 = vcmp.ge.f32.partialorder %v2564, %v3075
          %vm3760 = vcmp.ge.f32.partialorder %v2565, %v3075
          %vm3761 = vcmp.ge.f32.partialorder %v2566, %v3075
          %vm3762 = vcmp.ge.f32.partialorder %v2567, %v3075
          %vm3763 = vcmp.ge.f32.partialorder %v2568, %v3075
          %vm3764 = vcmp.ge.f32.partialorder %v2569, %v3075
          %vm3765 = vcmp.ge.f32.partialorder %v2570, %v3075
          %vm3766 = vcmp.ge.f32.partialorder %v2571, %v3075
          %vm3767 = vcmp.ge.f32.partialorder %v2572, %v3075
          %vm3768 = vcmp.ge.f32.partialorder %v2573, %v3075
          %vm3769 = vcmp.ge.f32.partialorder %v2574, %v3075
          %vm3770 = vcmp.ge.f32.partialorder %v2575, %v3075
          %vm3771 = vcmp.ge.f32.partialorder %v2576, %v3075
          %vm3772 = vcmp.ge.f32.partialorder %v2577, %v3075
          %vm3773 = vcmp.ge.f32.partialorder %v2578, %v3075
          %vm3774 = vcmp.ge.f32.partialorder %v2579, %v3075
          %vm3775 = vcmp.ge.f32.partialorder %v2580, %v3075
          %vm3776 = vcmp.ge.f32.partialorder %v2581, %v3075
          %vm3777 = vcmp.ge.f32.partialorder %v2582, %v3075
          %vm3778 = vcmp.ge.f32.partialorder %v2583, %v3075
          %vm3779 = vcmp.ge.f32.partialorder %v2584, %v3075
          %vm3780 = vcmp.ge.f32.partialorder %v2585, %v3075
          %vm3781 = vcmp.ge.f32.partialorder %v2586, %v3075
          %vm3782 = vcmp.ge.f32.partialorder %v2587, %v3075
          %vm3783 = vcmp.ge.f32.partialorder %v2588, %v3075
          %vm3784 = vcmp.ge.f32.partialorder %v2589, %v3075
          %vm3785 = vcmp.ge.f32.partialorder %v2590, %v3075
          %vm3786 = vcmp.ge.f32.partialorder %v2591, %v3075
          %vm3787 = vcmp.ge.f32.partialorder %v2592, %v3075
          %vm3788 = vcmp.ge.f32.partialorder %v2593, %v3075
          %vm3789 = vcmp.ge.f32.partialorder %v2594, %v3075
          %vm3790 = vcmp.ge.f32.partialorder %v2595, %v3075
          %vm3791 = vcmp.ge.f32.partialorder %v2564, %v3076
          %vm3792 = vcmp.ge.f32.partialorder %v2565, %v3076
          %vm3793 = vcmp.ge.f32.partialorder %v2566, %v3076
          %vm3794 = vcmp.ge.f32.partialorder %v2567, %v3076
          %vm3795 = vcmp.ge.f32.partialorder %v2568, %v3076
          %vm3796 = vcmp.ge.f32.partialorder %v2569, %v3076
          %vm3797 = vcmp.ge.f32.partialorder %v2570, %v3076
          %vm3798 = vcmp.ge.f32.partialorder %v2571, %v3076
          %vm3799 = vcmp.ge.f32.partialorder %v2572, %v3076
          %vm3800 = vcmp.ge.f32.partialorder %v2573, %v3076
          %vm3801 = vcmp.ge.f32.partialorder %v2574, %v3076
          %vm3802 = vcmp.ge.f32.partialorder %v2575, %v3076
          %vm3803 = vcmp.ge.f32.partialorder %v2576, %v3076
          %vm3804 = vcmp.ge.f32.partialorder %v2577, %v3076
          %vm3805 = vcmp.ge.f32.partialorder %v2578, %v3076
          %vm3806 = vcmp.ge.f32.partialorder %v2579, %v3076
          %vm3807 = vcmp.ge.f32.partialorder %v2580, %v3076
          %vm3808 = vcmp.ge.f32.partialorder %v2581, %v3076
          %vm3809 = vcmp.ge.f32.partialorder %v2582, %v3076
          %vm3810 = vcmp.ge.f32.partialorder %v2583, %v3076
          %vm3811 = vcmp.ge.f32.partialorder %v2584, %v3076
          %vm3812 = vcmp.ge.f32.partialorder %v2585, %v3076
          %vm3813 = vcmp.ge.f32.partialorder %v2586, %v3076
          %vm3814 = vcmp.ge.f32.partialorder %v2587, %v3076
          %vm3815 = vcmp.ge.f32.partialorder %v2588, %v3076
          %vm3816 = vcmp.ge.f32.partialorder %v2589, %v3076
          %vm3817 = vcmp.ge.f32.partialorder %v2590, %v3076
          %vm3818 = vcmp.ge.f32.partialorder %v2591, %v3076
          %vm3819 = vcmp.ge.f32.partialorder %v2592, %v3076
          %vm3820 = vcmp.ge.f32.partialorder %v2593, %v3076
          %vm3821 = vcmp.ge.f32.partialorder %v2594, %v3076
          %vm3822 = vcmp.ge.f32.partialorder %v2595, %v3076
          %vm3823 = vcmp.ge.f32.partialorder %v2564, %v3077
          %vm3824 = vcmp.ge.f32.partialorder %v2565, %v3077
          %vm3825 = vcmp.ge.f32.partialorder %v2566, %v3077
          %vm3826 = vcmp.ge.f32.partialorder %v2567, %v3077
          %vm3827 = vcmp.ge.f32.partialorder %v2568, %v3077
          %vm3828 = vcmp.ge.f32.partialorder %v2569, %v3077
          %vm3829 = vcmp.ge.f32.partialorder %v2570, %v3077
          %vm3830 = vcmp.ge.f32.partialorder %v2571, %v3077
          %vm3831 = vcmp.ge.f32.partialorder %v2572, %v3077
          %vm3832 = vcmp.ge.f32.partialorder %v2573, %v3077
          %vm3833 = vcmp.ge.f32.partialorder %v2574, %v3077
          %vm3834 = vcmp.ge.f32.partialorder %v2575, %v3077
          %vm3835 = vcmp.ge.f32.partialorder %v2576, %v3077
          %vm3836 = vcmp.ge.f32.partialorder %v2577, %v3077
          %vm3837 = vcmp.ge.f32.partialorder %v2578, %v3077
          %vm3838 = vcmp.ge.f32.partialorder %v2579, %v3077
          %vm3839 = vcmp.ge.f32.partialorder %v2580, %v3077
          %vm3840 = vcmp.ge.f32.partialorder %v2581, %v3077
          %vm3841 = vcmp.ge.f32.partialorder %v2582, %v3077
          %vm3842 = vcmp.ge.f32.partialorder %v2583, %v3077
          %vm3843 = vcmp.ge.f32.partialorder %v2584, %v3077
          %vm3844 = vcmp.ge.f32.partialorder %v2585, %v3077
          %vm3845 = vcmp.ge.f32.partialorder %v2586, %v3077
          %vm3846 = vcmp.ge.f32.partialorder %v2587, %v3077
          %vm3847 = vcmp.ge.f32.partialorder %v2588, %v3077
          %vm3848 = vcmp.ge.f32.partialorder %v2589, %v3077
          %vm3849 = vcmp.ge.f32.partialorder %v2590, %v3077
          %vm3850 = vcmp.ge.f32.partialorder %v2591, %v3077
          %vm3851 = vcmp.ge.f32.partialorder %v2592, %v3077
          %vm3852 = vcmp.ge.f32.partialorder %v2593, %v3077
          %vm3853 = vcmp.ge.f32.partialorder %v2594, %v3077
          %vm3854 = vcmp.ge.f32.partialorder %v2595, %v3077
          %vm3855 = vcmp.ge.f32.partialorder %v2564, %v3078
          %vm3856 = vcmp.ge.f32.partialorder %v2565, %v3078
          %vm3857 = vcmp.ge.f32.partialorder %v2566, %v3078
          %vm3858 = vcmp.ge.f32.partialorder %v2567, %v3078
          %vm3859 = vcmp.ge.f32.partialorder %v2568, %v3078
          %vm3860 = vcmp.ge.f32.partialorder %v2569, %v3078
          %vm3861 = vcmp.ge.f32.partialorder %v2570, %v3078
          %vm3862 = vcmp.ge.f32.partialorder %v2571, %v3078
          %vm3863 = vcmp.ge.f32.partialorder %v2572, %v3078
          %vm3864 = vcmp.ge.f32.partialorder %v2573, %v3078
          %vm3865 = vcmp.ge.f32.partialorder %v2574, %v3078
          %vm3866 = vcmp.ge.f32.partialorder %v2575, %v3078
          %vm3867 = vcmp.ge.f32.partialorder %v2576, %v3078
          %vm3868 = vcmp.ge.f32.partialorder %v2577, %v3078
          %vm3869 = vcmp.ge.f32.partialorder %v2578, %v3078
          %vm3870 = vcmp.ge.f32.partialorder %v2579, %v3078
          %vm3871 = vcmp.ge.f32.partialorder %v2580, %v3078
          %vm3872 = vcmp.ge.f32.partialorder %v2581, %v3078
          %vm3873 = vcmp.ge.f32.partialorder %v2582, %v3078
          %vm3874 = vcmp.ge.f32.partialorder %v2583, %v3078
          %vm3875 = vcmp.ge.f32.partialorder %v2584, %v3078
          %vm3876 = vcmp.ge.f32.partialorder %v2585, %v3078
          %vm3877 = vcmp.ge.f32.partialorder %v2586, %v3078
          %vm3878 = vcmp.ge.f32.partialorder %v2587, %v3078
          %vm3879 = vcmp.ge.f32.partialorder %v2588, %v3078
          %vm3880 = vcmp.ge.f32.partialorder %v2589, %v3078
          %vm3881 = vcmp.ge.f32.partialorder %v2590, %v3078
          %vm3882 = vcmp.ge.f32.partialorder %v2591, %v3078
          %vm3883 = vcmp.ge.f32.partialorder %v2592, %v3078
          %vm3884 = vcmp.ge.f32.partialorder %v2593, %v3078
          %vm3885 = vcmp.ge.f32.partialorder %v2594, %v3078
          %vm3886 = vcmp.ge.f32.partialorder %v2595, %v3078
          %vm3887 = vcmp.ge.f32.partialorder %v2564, %v3079
          %vm3888 = vcmp.ge.f32.partialorder %v2565, %v3079
          %vm3889 = vcmp.ge.f32.partialorder %v2566, %v3079
          %vm3890 = vcmp.ge.f32.partialorder %v2567, %v3079
          %vm3891 = vcmp.ge.f32.partialorder %v2568, %v3079
          %vm3892 = vcmp.ge.f32.partialorder %v2569, %v3079
          %vm3893 = vcmp.ge.f32.partialorder %v2570, %v3079
          %vm3894 = vcmp.ge.f32.partialorder %v2571, %v3079
          %vm3895 = vcmp.ge.f32.partialorder %v2572, %v3079
          %vm3896 = vcmp.ge.f32.partialorder %v2573, %v3079
          %vm3897 = vcmp.ge.f32.partialorder %v2574, %v3079
          %vm3898 = vcmp.ge.f32.partialorder %v2575, %v3079
          %vm3899 = vcmp.ge.f32.partialorder %v2576, %v3079
          %vm3900 = vcmp.ge.f32.partialorder %v2577, %v3079
          %vm3901 = vcmp.ge.f32.partialorder %v2578, %v3079
          %vm3902 = vcmp.ge.f32.partialorder %v2579, %v3079
          %vm3903 = vcmp.ge.f32.partialorder %v2580, %v3079
          %vm3904 = vcmp.ge.f32.partialorder %v2581, %v3079
          %vm3905 = vcmp.ge.f32.partialorder %v2582, %v3079
          %vm3906 = vcmp.ge.f32.partialorder %v2583, %v3079
          %vm3907 = vcmp.ge.f32.partialorder %v2584, %v3079
          %vm3908 = vcmp.ge.f32.partialorder %v2585, %v3079
          %vm3909 = vcmp.ge.f32.partialorder %v2586, %v3079
          %vm3910 = vcmp.ge.f32.partialorder %v2587, %v3079
          %vm3911 = vcmp.ge.f32.partialorder %v2588, %v3079
          %vm3912 = vcmp.ge.f32.partialorder %v2589, %v3079
          %vm3913 = vcmp.ge.f32.partialorder %v2590, %v3079
          %vm3914 = vcmp.ge.f32.partialorder %v2591, %v3079
          %vm3915 = vcmp.ge.f32.partialorder %v2592, %v3079
          %vm3916 = vcmp.ge.f32.partialorder %v2593, %v3079
          %vm3917 = vcmp.ge.f32.partialorder %v2594, %v3079
          %vm3918 = vcmp.ge.f32.partialorder %v2595, %v3079
          %vm3919 = vcmp.ge.f32.partialorder %v2564, %v3080
          %vm3920 = vcmp.ge.f32.partialorder %v2565, %v3080
          %vm3921 = vcmp.ge.f32.partialorder %v2566, %v3080
          %vm3922 = vcmp.ge.f32.partialorder %v2567, %v3080
          %vm3923 = vcmp.ge.f32.partialorder %v2568, %v3080
          %vm3924 = vcmp.ge.f32.partialorder %v2569, %v3080
          %vm3925 = vcmp.ge.f32.partialorder %v2570, %v3080
          %vm3926 = vcmp.ge.f32.partialorder %v2571, %v3080
          %vm3927 = vcmp.ge.f32.partialorder %v2572, %v3080
          %vm3928 = vcmp.ge.f32.partialorder %v2573, %v3080
          %vm3929 = vcmp.ge.f32.partialorder %v2574, %v3080
          %vm3930 = vcmp.ge.f32.partialorder %v2575, %v3080
          %vm3931 = vcmp.ge.f32.partialorder %v2576, %v3080
          %vm3932 = vcmp.ge.f32.partialorder %v2577, %v3080
          %vm3933 = vcmp.ge.f32.partialorder %v2578, %v3080
          %vm3934 = vcmp.ge.f32.partialorder %v2579, %v3080
          %vm3935 = vcmp.ge.f32.partialorder %v2580, %v3080
          %vm3936 = vcmp.ge.f32.partialorder %v2581, %v3080
          %vm3937 = vcmp.ge.f32.partialorder %v2582, %v3080
          %vm3938 = vcmp.ge.f32.partialorder %v2583, %v3080
          %vm3939 = vcmp.ge.f32.partialorder %v2584, %v3080
          %vm3940 = vcmp.ge.f32.partialorder %v2585, %v3080
          %vm3941 = vcmp.ge.f32.partialorder %v2586, %v3080
          %vm3942 = vcmp.ge.f32.partialorder %v2587, %v3080
          %vm3943 = vcmp.ge.f32.partialorder %v2588, %v3080
          %vm3944 = vcmp.ge.f32.partialorder %v2589, %v3080
          %vm3945 = vcmp.ge.f32.partialorder %v2590, %v3080
          %vm3946 = vcmp.ge.f32.partialorder %v2591, %v3080
          %vm3947 = vcmp.ge.f32.partialorder %v2592, %v3080
          %vm3948 = vcmp.ge.f32.partialorder %v2593, %v3080
          %vm3949 = vcmp.ge.f32.partialorder %v2594, %v3080
          %vm3950 = vcmp.ge.f32.partialorder %v2595, %v3080
          %vm3951 = vcmp.ge.f32.partialorder %v2564, %v3081
          %vm3952 = vcmp.ge.f32.partialorder %v2565, %v3081
          %vm3953 = vcmp.ge.f32.partialorder %v2566, %v3081
          %vm3954 = vcmp.ge.f32.partialorder %v2567, %v3081
          %vm3955 = vcmp.ge.f32.partialorder %v2568, %v3081
          %vm3956 = vcmp.ge.f32.partialorder %v2569, %v3081
          %vm3957 = vcmp.ge.f32.partialorder %v2570, %v3081
          %vm3958 = vcmp.ge.f32.partialorder %v2571, %v3081
          %vm3959 = vcmp.ge.f32.partialorder %v2572, %v3081
          %vm3960 = vcmp.ge.f32.partialorder %v2573, %v3081
          %vm3961 = vcmp.ge.f32.partialorder %v2574, %v3081
          %vm3962 = vcmp.ge.f32.partialorder %v2575, %v3081
          %vm3963 = vcmp.ge.f32.partialorder %v2576, %v3081
          %vm3964 = vcmp.ge.f32.partialorder %v2577, %v3081
          %vm3965 = vcmp.ge.f32.partialorder %v2578, %v3081
          %vm3966 = vcmp.ge.f32.partialorder %v2579, %v3081
          %vm3967 = vcmp.ge.f32.partialorder %v2580, %v3081
          %vm3968 = vcmp.ge.f32.partialorder %v2581, %v3081
          %vm3969 = vcmp.ge.f32.partialorder %v2582, %v3081
          %vm3970 = vcmp.ge.f32.partialorder %v2583, %v3081
          %vm3971 = vcmp.ge.f32.partialorder %v2584, %v3081
          %vm3972 = vcmp.ge.f32.partialorder %v2585, %v3081
          %vm3973 = vcmp.ge.f32.partialorder %v2586, %v3081
          %vm3974 = vcmp.ge.f32.partialorder %v2587, %v3081
          %vm3975 = vcmp.ge.f32.partialorder %v2588, %v3081
          %vm3976 = vcmp.ge.f32.partialorder %v2589, %v3081
          %vm3977 = vcmp.ge.f32.partialorder %v2590, %v3081
          %vm3978 = vcmp.ge.f32.partialorder %v2591, %v3081
          %vm3979 = vcmp.ge.f32.partialorder %v2592, %v3081
          %vm3980 = vcmp.ge.f32.partialorder %v2593, %v3081
          %vm3981 = vcmp.ge.f32.partialorder %v2594, %v3081
          %vm3982 = vcmp.ge.f32.partialorder %v2595, %v3081
          %vm3983 = vcmp.ge.f32.partialorder %v2564, %v3082
          %vm3984 = vcmp.ge.f32.partialorder %v2565, %v3082
          %vm3985 = vcmp.ge.f32.partialorder %v2566, %v3082
          %vm3986 = vcmp.ge.f32.partialorder %v2567, %v3082
          %vm3987 = vcmp.ge.f32.partialorder %v2568, %v3082
          %vm3988 = vcmp.ge.f32.partialorder %v2569, %v3082
          %vm3989 = vcmp.ge.f32.partialorder %v2570, %v3082
          %vm3990 = vcmp.ge.f32.partialorder %v2571, %v3082
          %vm3991 = vcmp.ge.f32.partialorder %v2572, %v3082
          %vm3992 = vcmp.ge.f32.partialorder %v2573, %v3082
          %vm3993 = vcmp.ge.f32.partialorder %v2574, %v3082
          %vm3994 = vcmp.ge.f32.partialorder %v2575, %v3082
          %vm3995 = vcmp.ge.f32.partialorder %v2576, %v3082
          %vm3996 = vcmp.ge.f32.partialorder %v2577, %v3082
          %vm3997 = vcmp.ge.f32.partialorder %v2578, %v3082
          %vm3998 = vcmp.ge.f32.partialorder %v2579, %v3082
          %vm3999 = vcmp.ge.f32.partialorder %v2580, %v3082
          %vm4000 = vcmp.ge.f32.partialorder %v2581, %v3082
          %vm4001 = vcmp.ge.f32.partialorder %v2582, %v3082
          %vm4002 = vcmp.ge.f32.partialorder %v2583, %v3082
          %vm4003 = vcmp.ge.f32.partialorder %v2584, %v3082
          %vm4004 = vcmp.ge.f32.partialorder %v2585, %v3082
          %vm4005 = vcmp.ge.f32.partialorder %v2586, %v3082
          %vm4006 = vcmp.ge.f32.partialorder %v2587, %v3082
          %vm4007 = vcmp.ge.f32.partialorder %v2588, %v3082
          %vm4008 = vcmp.ge.f32.partialorder %v2589, %v3082
          %vm4009 = vcmp.ge.f32.partialorder %v2590, %v3082
          %vm4010 = vcmp.ge.f32.partialorder %v2591, %v3082
          %vm4011 = vcmp.ge.f32.partialorder %v2592, %v3082
          %vm4012 = vcmp.ge.f32.partialorder %v2593, %v3082
          %vm4013 = vcmp.ge.f32.partialorder %v2594, %v3082
          %vm4014 = vcmp.ge.f32.partialorder %v2595, %v3082
          %vm4015 = vcmp.ge.f32.partialorder %v2564, %v3083
          %vm4016 = vcmp.ge.f32.partialorder %v2565, %v3083
          %vm4017 = vcmp.ge.f32.partialorder %v2566, %v3083
          %vm4018 = vcmp.ge.f32.partialorder %v2567, %v3083
          %vm4019 = vcmp.ge.f32.partialorder %v2568, %v3083
          %vm4020 = vcmp.ge.f32.partialorder %v2569, %v3083
          %vm4021 = vcmp.ge.f32.partialorder %v2570, %v3083
          %vm4022 = vcmp.ge.f32.partialorder %v2571, %v3083
          %vm4023 = vcmp.ge.f32.partialorder %v2572, %v3083
          %vm4024 = vcmp.ge.f32.partialorder %v2573, %v3083
          %vm4025 = vcmp.ge.f32.partialorder %v2574, %v3083
          %vm4026 = vcmp.ge.f32.partialorder %v2575, %v3083
          %vm4027 = vcmp.ge.f32.partialorder %v2576, %v3083
          %vm4028 = vcmp.ge.f32.partialorder %v2577, %v3083
          %vm4029 = vcmp.ge.f32.partialorder %v2578, %v3083
          %vm4030 = vcmp.ge.f32.partialorder %v2579, %v3083
          %vm4031 = vcmp.ge.f32.partialorder %v2580, %v3083
          %vm4032 = vcmp.ge.f32.partialorder %v2581, %v3083
          %vm4033 = vcmp.ge.f32.partialorder %v2582, %v3083
          %vm4034 = vcmp.ge.f32.partialorder %v2583, %v3083
          %vm4035 = vcmp.ge.f32.partialorder %v2584, %v3083
          %vm4036 = vcmp.ge.f32.partialorder %v2585, %v3083
          %vm4037 = vcmp.ge.f32.partialorder %v2586, %v3083
          %vm4038 = vcmp.ge.f32.partialorder %v2587, %v3083
          %vm4039 = vcmp.ge.f32.partialorder %v2588, %v3083
          %vm4040 = vcmp.ge.f32.partialorder %v2589, %v3083
          %vm4041 = vcmp.ge.f32.partialorder %v2590, %v3083
          %vm4042 = vcmp.ge.f32.partialorder %v2591, %v3083
          %vm4043 = vcmp.ge.f32.partialorder %v2592, %v3083
          %vm4044 = vcmp.ge.f32.partialorder %v2593, %v3083
          %vm4045 = vcmp.ge.f32.partialorder %v2594, %v3083
          %vm4046 = vcmp.ge.f32.partialorder %v2595, %v3083
          %vm4047 = vcmp.ge.f32.partialorder %v2564, %v3084
          %vm4048 = vcmp.ge.f32.partialorder %v2565, %v3084
          %vm4049 = vcmp.ge.f32.partialorder %v2566, %v3084
          %vm4050 = vcmp.ge.f32.partialorder %v2567, %v3084
          %vm4051 = vcmp.ge.f32.partialorder %v2568, %v3084
          %vm4052 = vcmp.ge.f32.partialorder %v2569, %v3084
          %vm4053 = vcmp.ge.f32.partialorder %v2570, %v3084
          %vm4054 = vcmp.ge.f32.partialorder %v2571, %v3084
          %vm4055 = vcmp.ge.f32.partialorder %v2572, %v3084
          %vm4056 = vcmp.ge.f32.partialorder %v2573, %v3084
          %vm4057 = vcmp.ge.f32.partialorder %v2574, %v3084
          %vm4058 = vcmp.ge.f32.partialorder %v2575, %v3084
          %vm4059 = vcmp.ge.f32.partialorder %v2576, %v3084
          %vm4060 = vcmp.ge.f32.partialorder %v2577, %v3084
          %vm4061 = vcmp.ge.f32.partialorder %v2578, %v3084
          %vm4062 = vcmp.ge.f32.partialorder %v2579, %v3084
          %vm4063 = vcmp.ge.f32.partialorder %v2580, %v3084
          %vm4064 = vcmp.ge.f32.partialorder %v2581, %v3084
          %vm4065 = vcmp.ge.f32.partialorder %v2582, %v3084
          %vm4066 = vcmp.ge.f32.partialorder %v2583, %v3084
          %vm4067 = vcmp.ge.f32.partialorder %v2584, %v3084
          %vm4068 = vcmp.ge.f32.partialorder %v2585, %v3084
          %vm4069 = vcmp.ge.f32.partialorder %v2586, %v3084
          %vm4070 = vcmp.ge.f32.partialorder %v2587, %v3084
          %vm4071 = vcmp.ge.f32.partialorder %v2588, %v3084
          %vm4072 = vcmp.ge.f32.partialorder %v2589, %v3084
          %vm4073 = vcmp.ge.f32.partialorder %v2590, %v3084
          %vm4074 = vcmp.ge.f32.partialorder %v2591, %v3084
          %vm4075 = vcmp.ge.f32.partialorder %v2592, %v3084
          %vm4076 = vcmp.ge.f32.partialorder %v2593, %v3084
          %vm4077 = vcmp.ge.f32.partialorder %v2594, %v3084
          %vm4078 = vcmp.ge.f32.partialorder %v2595, %v3084
          %vm4079 = vcmp.ge.f32.partialorder %v2564, %v3085
          %vm4080 = vcmp.ge.f32.partialorder %v2565, %v3085
          %vm4081 = vcmp.ge.f32.partialorder %v2566, %v3085
          %vm4082 = vcmp.ge.f32.partialorder %v2567, %v3085
          %vm4083 = vcmp.ge.f32.partialorder %v2568, %v3085
          %vm4084 = vcmp.ge.f32.partialorder %v2569, %v3085
          %vm4085 = vcmp.ge.f32.partialorder %v2570, %v3085
          %vm4086 = vcmp.ge.f32.partialorder %v2571, %v3085
          %vm4087 = vcmp.ge.f32.partialorder %v2572, %v3085
          %vm4088 = vcmp.ge.f32.partialorder %v2573, %v3085
          %vm4089 = vcmp.ge.f32.partialorder %v2574, %v3085
          %vm4090 = vcmp.ge.f32.partialorder %v2575, %v3085
          %vm4091 = vcmp.ge.f32.partialorder %v2576, %v3085
          %vm4092 = vcmp.ge.f32.partialorder %v2577, %v3085
          %vm4093 = vcmp.ge.f32.partialorder %v2578, %v3085
          %vm4094 = vcmp.ge.f32.partialorder %v2579, %v3085
          %vm4095 = vcmp.ge.f32.partialorder %v2580, %v3085
          %vm4096 = vcmp.ge.f32.partialorder %v2581, %v3085
          %vm4097 = vcmp.ge.f32.partialorder %v2582, %v3085
          %vm4098 = vcmp.ge.f32.partialorder %v2583, %v3085
          %vm4099 = vcmp.ge.f32.partialorder %v2584, %v3085
          %vm4100 = vcmp.ge.f32.partialorder %v2585, %v3085
          %vm4101 = vcmp.ge.f32.partialorder %v2586, %v3085
          %vm4102 = vcmp.ge.f32.partialorder %v2587, %v3085
          %vm4103 = vcmp.ge.f32.partialorder %v2588, %v3085
          %vm4104 = vcmp.ge.f32.partialorder %v2589, %v3085
          %vm4105 = vcmp.ge.f32.partialorder %v2590, %v3085
          %vm4106 = vcmp.ge.f32.partialorder %v2591, %v3085
          %vm4107 = vcmp.ge.f32.partialorder %v2592, %v3085
          %vm4108 = vcmp.ge.f32.partialorder %v2593, %v3085
          %vm4109 = vcmp.ge.f32.partialorder %v2594, %v3085
          %vm4110 = vcmp.ge.f32.partialorder %v2595, %v3085
          %vm4111 = vcmp.ge.f32.partialorder %v2564, %v3086
          %vm4112 = vcmp.ge.f32.partialorder %v2565, %v3086
          %vm4113 = vcmp.ge.f32.partialorder %v2566, %v3086
          %vm4114 = vcmp.ge.f32.partialorder %v2567, %v3086
          %vm4115 = vcmp.ge.f32.partialorder %v2568, %v3086
          %vm4116 = vcmp.ge.f32.partialorder %v2569, %v3086
          %vm4117 = vcmp.ge.f32.partialorder %v2570, %v3086
          %vm4118 = vcmp.ge.f32.partialorder %v2571, %v3086
          %vm4119 = vcmp.ge.f32.partialorder %v2572, %v3086
          %vm4120 = vcmp.ge.f32.partialorder %v2573, %v3086
          %vm4121 = vcmp.ge.f32.partialorder %v2574, %v3086
          %vm4122 = vcmp.ge.f32.partialorder %v2575, %v3086
          %vm4123 = vcmp.ge.f32.partialorder %v2576, %v3086
          %vm4124 = vcmp.ge.f32.partialorder %v2577, %v3086
          %vm4125 = vcmp.ge.f32.partialorder %v2578, %v3086
          %vm4126 = vcmp.ge.f32.partialorder %v2579, %v3086
          %vm4127 = vcmp.ge.f32.partialorder %v2580, %v3086
          %vm4128 = vcmp.ge.f32.partialorder %v2581, %v3086
          %vm4129 = vcmp.ge.f32.partialorder %v2582, %v3086
          %vm4130 = vcmp.ge.f32.partialorder %v2583, %v3086
          %vm4131 = vcmp.ge.f32.partialorder %v2584, %v3086
          %vm4132 = vcmp.ge.f32.partialorder %v2585, %v3086
          %vm4133 = vcmp.ge.f32.partialorder %v2586, %v3086
          %vm4134 = vcmp.ge.f32.partialorder %v2587, %v3086
          %vm4135 = vcmp.ge.f32.partialorder %v2588, %v3086
          %vm4136 = vcmp.ge.f32.partialorder %v2589, %v3086
          %vm4137 = vcmp.ge.f32.partialorder %v2590, %v3086
          %vm4138 = vcmp.ge.f32.partialorder %v2591, %v3086
          %vm4139 = vcmp.ge.f32.partialorder %v2592, %v3086
          %vm4140 = vcmp.ge.f32.partialorder %v2593, %v3086
          %vm4141 = vcmp.ge.f32.partialorder %v2594, %v3086
          %vm4142 = vcmp.ge.f32.partialorder %v2595, %v3086
          %v4143 = vsel %vm3119, %v2304, 0.0
          %v4144 = vsel %vm3120, %v2305, 0.0
          %v4145 = vsel %vm3121, %v2306, 0.0
          %v4146 = vsel %vm3122, %v2307, 0.0
          %v4147 = vsel %vm3123, %v2308, 0.0
          %v4148 = vsel %vm3124, %v2309, 0.0
          %v4149 = vsel %vm3125, %v2310, 0.0
          %v4150 = vsel %vm3126, %v2311, 0.0
          %v4151 = vsel %vm3127, %v2312, 0.0
          %v4152 = vsel %vm3128, %v2313, 0.0
          %v4153 = vsel %vm3129, %v2314, 0.0
          %v4154 = vsel %vm3130, %v2315, 0.0
          %v4155 = vsel %vm3131, %v2316, 0.0
          %v4156 = vsel %vm3132, %v2317, 0.0
          %v4157 = vsel %vm3133, %v2318, 0.0
          %v4158 = vsel %vm3134, %v2319, 0.0
          %v4159 = vsel %vm3135, %v2320, 0.0
          %v4160 = vsel %vm3136, %v2321, 0.0
          %v4161 = vsel %vm3137, %v2322, 0.0
          %v4162 = vsel %vm3138, %v2323, 0.0
          %v4163 = vsel %vm3139, %v2324, 0.0
          %v4164 = vsel %vm3140, %v2325, 0.0
          %v4165 = vsel %vm3141, %v2326, 0.0
          %v4166 = vsel %vm3142, %v2327, 0.0
          %v4167 = vsel %vm3143, %v2328, 0.0
          %v4168 = vsel %vm3144, %v2329, 0.0
          %v4169 = vsel %vm3145, %v2330, 0.0
          %v4170 = vsel %vm3146, %v2331, 0.0
          %v4171 = vsel %vm3147, %v2332, 0.0
          %v4172 = vsel %vm3148, %v2333, 0.0
          %v4173 = vsel %vm3149, %v2334, 0.0
          %v4174 = vsel %vm3150, %v2335, 0.0
          %v4175 = vsel %vm3151, %v2304, 0.0
          %v4176 = vsel %vm3152, %v2305, 0.0
          %v4177 = vsel %vm3153, %v2306, 0.0
          %v4178 = vsel %vm3154, %v2307, 0.0
          %v4179 = vsel %vm3155, %v2308, 0.0
          %v4180 = vsel %vm3156, %v2309, 0.0
          %v4181 = vsel %vm3157, %v2310, 0.0
          %v4182 = vsel %vm3158, %v2311, 0.0
          %v4183 = vsel %vm3159, %v2312, 0.0
          %v4184 = vsel %vm3160, %v2313, 0.0
          %v4185 = vsel %vm3161, %v2314, 0.0
          %v4186 = vsel %vm3162, %v2315, 0.0
          %v4187 = vsel %vm3163, %v2316, 0.0
          %v4188 = vsel %vm3164, %v2317, 0.0
          %v4189 = vsel %vm3165, %v2318, 0.0
          %v4190 = vsel %vm3166, %v2319, 0.0
          %v4191 = vsel %vm3167, %v2320, 0.0
          %v4192 = vsel %vm3168, %v2321, 0.0
          %v4193 = vsel %vm3169, %v2322, 0.0
          %v4194 = vsel %vm3170, %v2323, 0.0
          %v4195 = vsel %vm3171, %v2324, 0.0
          %v4196 = vsel %vm3172, %v2325, 0.0
          %v4197 = vsel %vm3173, %v2326, 0.0
          %v4198 = vsel %vm3174, %v2327, 0.0
          %v4199 = vsel %vm3175, %v2328, 0.0
          %v4200 = vsel %vm3176, %v2329, 0.0
          %v4201 = vsel %vm3177, %v2330, 0.0
          %v4202 = vsel %vm3178, %v2331, 0.0
          %v4203 = vsel %vm3179, %v2332, 0.0
          %v4204 = vsel %vm3180, %v2333, 0.0
          %v4205 = vsel %vm3181, %v2334, 0.0
          %v4206 = vsel %vm3182, %v2335, 0.0
          %v4207 = vsel %vm3183, %v2304, 0.0
          %v4208 = vsel %vm3184, %v2305, 0.0
          %v4209 = vsel %vm3185, %v2306, 0.0
          %v4210 = vsel %vm3186, %v2307, 0.0
          %v4211 = vsel %vm3187, %v2308, 0.0
          %v4212 = vsel %vm3188, %v2309, 0.0
          %v4213 = vsel %vm3189, %v2310, 0.0
          %v4214 = vsel %vm3190, %v2311, 0.0
          %v4215 = vsel %vm3191, %v2312, 0.0
          %v4216 = vsel %vm3192, %v2313, 0.0
          %v4217 = vsel %vm3193, %v2314, 0.0
          %v4218 = vsel %vm3194, %v2315, 0.0
          %v4219 = vsel %vm3195, %v2316, 0.0
          %v4220 = vsel %vm3196, %v2317, 0.0
          %v4221 = vsel %vm3197, %v2318, 0.0
          %v4222 = vsel %vm3198, %v2319, 0.0
          %v4223 = vsel %vm3199, %v2320, 0.0
          %v4224 = vsel %vm3200, %v2321, 0.0
          %v4225 = vsel %vm3201, %v2322, 0.0
          %v4226 = vsel %vm3202, %v2323, 0.0
          %v4227 = vsel %vm3203, %v2324, 0.0
          %v4228 = vsel %vm3204, %v2325, 0.0
          %v4229 = vsel %vm3205, %v2326, 0.0
          %v4230 = vsel %vm3206, %v2327, 0.0
          %v4231 = vsel %vm3207, %v2328, 0.0
          %v4232 = vsel %vm3208, %v2329, 0.0
          %v4233 = vsel %vm3209, %v2330, 0.0
          %v4234 = vsel %vm3210, %v2331, 0.0
          %v4235 = vsel %vm3211, %v2332, 0.0
          %v4236 = vsel %vm3212, %v2333, 0.0
          %v4237 = vsel %vm3213, %v2334, 0.0
          %v4238 = vsel %vm3214, %v2335, 0.0
          %v4239 = vsel %vm3215, %v2304, 0.0
          %v4240 = vsel %vm3216, %v2305, 0.0
          %v4241 = vsel %vm3217, %v2306, 0.0
          %v4242 = vsel %vm3218, %v2307, 0.0
          %v4243 = vsel %vm3219, %v2308, 0.0
          %v4244 = vsel %vm3220, %v2309, 0.0
          %v4245 = vsel %vm3221, %v2310, 0.0
          %v4246 = vsel %vm3222, %v2311, 0.0
          %v4247 = vsel %vm3223, %v2312, 0.0
          %v4248 = vsel %vm3224, %v2313, 0.0
          %v4249 = vsel %vm3225, %v2314, 0.0
          %v4250 = vsel %vm3226, %v2315, 0.0
          %v4251 = vsel %vm3227, %v2316, 0.0
          %v4252 = vsel %vm3228, %v2317, 0.0
          %v4253 = vsel %vm3229, %v2318, 0.0
          %v4254 = vsel %vm3230, %v2319, 0.0
          %v4255 = vsel %vm3231, %v2320, 0.0
          %v4256 = vsel %vm3232, %v2321, 0.0
          %v4257 = vsel %vm3233, %v2322, 0.0
          %v4258 = vsel %vm3234, %v2323, 0.0
          %v4259 = vsel %vm3235, %v2324, 0.0
          %v4260 = vsel %vm3236, %v2325, 0.0
          %v4261 = vsel %vm3237, %v2326, 0.0
          %v4262 = vsel %vm3238, %v2327, 0.0
          %v4263 = vsel %vm3239, %v2328, 0.0
          %v4264 = vsel %vm3240, %v2329, 0.0
          %v4265 = vsel %vm3241, %v2330, 0.0
          %v4266 = vsel %vm3242, %v2331, 0.0
          %v4267 = vsel %vm3243, %v2332, 0.0
          %v4268 = vsel %vm3244, %v2333, 0.0
          %v4269 = vsel %vm3245, %v2334, 0.0
          %v4270 = vsel %vm3246, %v2335, 0.0
          %v4271 = vsel %vm3247, %v2304, 0.0
          %v4272 = vsel %vm3248, %v2305, 0.0
          %v4273 = vsel %vm3249, %v2306, 0.0
          %v4274 = vsel %vm3250, %v2307, 0.0
          %v4275 = vsel %vm3251, %v2308, 0.0
          %v4276 = vsel %vm3252, %v2309, 0.0
          %v4277 = vsel %vm3253, %v2310, 0.0
          %v4278 = vsel %vm3254, %v2311, 0.0
          %v4279 = vsel %vm3255, %v2312, 0.0
          %v4280 = vsel %vm3256, %v2313, 0.0
          %v4281 = vsel %vm3257, %v2314, 0.0
          %v4282 = vsel %vm3258, %v2315, 0.0
          %v4283 = vsel %vm3259, %v2316, 0.0
          %v4284 = vsel %vm3260, %v2317, 0.0
          %v4285 = vsel %vm3261, %v2318, 0.0
          %v4286 = vsel %vm3262, %v2319, 0.0
          %v4287 = vsel %vm3263, %v2320, 0.0
          %v4288 = vsel %vm3264, %v2321, 0.0
          %v4289 = vsel %vm3265, %v2322, 0.0
          %v4290 = vsel %vm3266, %v2323, 0.0
          %v4291 = vsel %vm3267, %v2324, 0.0
          %v4292 = vsel %vm3268, %v2325, 0.0
          %v4293 = vsel %vm3269, %v2326, 0.0
          %v4294 = vsel %vm3270, %v2327, 0.0
          %v4295 = vsel %vm3271, %v2328, 0.0
          %v4296 = vsel %vm3272, %v2329, 0.0
          %v4297 = vsel %vm3273, %v2330, 0.0
          %v4298 = vsel %vm3274, %v2331, 0.0
          %v4299 = vsel %vm3275, %v2332, 0.0
          %v4300 = vsel %vm3276, %v2333, 0.0
          %v4301 = vsel %vm3277, %v2334, 0.0
          %v4302 = vsel %vm3278, %v2335, 0.0
          %v4303 = vsel %vm3279, %v2304, 0.0
          %v4304 = vsel %vm3280, %v2305, 0.0
          %v4305 = vsel %vm3281, %v2306, 0.0
          %v4306 = vsel %vm3282, %v2307, 0.0
          %v4307 = vsel %vm3283, %v2308, 0.0
          %v4308 = vsel %vm3284, %v2309, 0.0
          %v4309 = vsel %vm3285, %v2310, 0.0
          %v4310 = vsel %vm3286, %v2311, 0.0
          %v4311 = vsel %vm3287, %v2312, 0.0
          %v4312 = vsel %vm3288, %v2313, 0.0
          %v4313 = vsel %vm3289, %v2314, 0.0
          %v4314 = vsel %vm3290, %v2315, 0.0
          %v4315 = vsel %vm3291, %v2316, 0.0
          %v4316 = vsel %vm3292, %v2317, 0.0
          %v4317 = vsel %vm3293, %v2318, 0.0
          %v4318 = vsel %vm3294, %v2319, 0.0
          %v4319 = vsel %vm3295, %v2320, 0.0
          %v4320 = vsel %vm3296, %v2321, 0.0
          %v4321 = vsel %vm3297, %v2322, 0.0
          %v4322 = vsel %vm3298, %v2323, 0.0
          %v4323 = vsel %vm3299, %v2324, 0.0
          %v4324 = vsel %vm3300, %v2325, 0.0
          %v4325 = vsel %vm3301, %v2326, 0.0
          %v4326 = vsel %vm3302, %v2327, 0.0
          %v4327 = vsel %vm3303, %v2328, 0.0
          %v4328 = vsel %vm3304, %v2329, 0.0
          %v4329 = vsel %vm3305, %v2330, 0.0
          %v4330 = vsel %vm3306, %v2331, 0.0
          %v4331 = vsel %vm3307, %v2332, 0.0
          %v4332 = vsel %vm3308, %v2333, 0.0
          %v4333 = vsel %vm3309, %v2334, 0.0
          %v4334 = vsel %vm3310, %v2335, 0.0
          %v4335 = vsel %vm3311, %v2304, 0.0
          %v4336 = vsel %vm3312, %v2305, 0.0
          %v4337 = vsel %vm3313, %v2306, 0.0
          %v4338 = vsel %vm3314, %v2307, 0.0
          %v4339 = vsel %vm3315, %v2308, 0.0
          %v4340 = vsel %vm3316, %v2309, 0.0
          %v4341 = vsel %vm3317, %v2310, 0.0
          %v4342 = vsel %vm3318, %v2311, 0.0
          %v4343 = vsel %vm3319, %v2312, 0.0
          %v4344 = vsel %vm3320, %v2313, 0.0
          %v4345 = vsel %vm3321, %v2314, 0.0
          %v4346 = vsel %vm3322, %v2315, 0.0
          %v4347 = vsel %vm3323, %v2316, 0.0
          %v4348 = vsel %vm3324, %v2317, 0.0
          %v4349 = vsel %vm3325, %v2318, 0.0
          %v4350 = vsel %vm3326, %v2319, 0.0
          %v4351 = vsel %vm3327, %v2320, 0.0
          %v4352 = vsel %vm3328, %v2321, 0.0
          %v4353 = vsel %vm3329, %v2322, 0.0
          %v4354 = vsel %vm3330, %v2323, 0.0
          %v4355 = vsel %vm3331, %v2324, 0.0
          %v4356 = vsel %vm3332, %v2325, 0.0
          %v4357 = vsel %vm3333, %v2326, 0.0
          %v4358 = vsel %vm3334, %v2327, 0.0
          %v4359 = vsel %vm3335, %v2328, 0.0
          %v4360 = vsel %vm3336, %v2329, 0.0
          %v4361 = vsel %vm3337, %v2330, 0.0
          %v4362 = vsel %vm3338, %v2331, 0.0
          %v4363 = vsel %vm3339, %v2332, 0.0
          %v4364 = vsel %vm3340, %v2333, 0.0
          %v4365 = vsel %vm3341, %v2334, 0.0
          %v4366 = vsel %vm3342, %v2335, 0.0
          %v4367 = vsel %vm3343, %v2304, 0.0
          %v4368 = vsel %vm3344, %v2305, 0.0
          %v4369 = vsel %vm3345, %v2306, 0.0
          %v4370 = vsel %vm3346, %v2307, 0.0
          %v4371 = vsel %vm3347, %v2308, 0.0
          %v4372 = vsel %vm3348, %v2309, 0.0
          %v4373 = vsel %vm3349, %v2310, 0.0
          %v4374 = vsel %vm3350, %v2311, 0.0
          %v4375 = vsel %vm3351, %v2312, 0.0
          %v4376 = vsel %vm3352, %v2313, 0.0
          %v4377 = vsel %vm3353, %v2314, 0.0
          %v4378 = vsel %vm3354, %v2315, 0.0
          %v4379 = vsel %vm3355, %v2316, 0.0
          %v4380 = vsel %vm3356, %v2317, 0.0
          %v4381 = vsel %vm3357, %v2318, 0.0
          %v4382 = vsel %vm3358, %v2319, 0.0
          %v4383 = vsel %vm3359, %v2320, 0.0
          %v4384 = vsel %vm3360, %v2321, 0.0
          %v4385 = vsel %vm3361, %v2322, 0.0
          %v4386 = vsel %vm3362, %v2323, 0.0
          %v4387 = vsel %vm3363, %v2324, 0.0
          %v4388 = vsel %vm3364, %v2325, 0.0
          %v4389 = vsel %vm3365, %v2326, 0.0
          %v4390 = vsel %vm3366, %v2327, 0.0
          %v4391 = vsel %vm3367, %v2328, 0.0
          %v4392 = vsel %vm3368, %v2329, 0.0
          %v4393 = vsel %vm3369, %v2330, 0.0
          %v4394 = vsel %vm3370, %v2331, 0.0
          %v4395 = vsel %vm3371, %v2332, 0.0
          %v4396 = vsel %vm3372, %v2333, 0.0
          %v4397 = vsel %vm3373, %v2334, 0.0
          %v4398 = vsel %vm3374, %v2335, 0.0
          %v4399 = vsel %vm3375, %v2304, 0.0
          %v4400 = vsel %vm3376, %v2305, 0.0
          %v4401 = vsel %vm3377, %v2306, 0.0
          %v4402 = vsel %vm3378, %v2307, 0.0
          %v4403 = vsel %vm3379, %v2308, 0.0
          %v4404 = vsel %vm3380, %v2309, 0.0
          %v4405 = vsel %vm3381, %v2310, 0.0
          %v4406 = vsel %vm3382, %v2311, 0.0
          %v4407 = vsel %vm3383, %v2312, 0.0
          %v4408 = vsel %vm3384, %v2313, 0.0
          %v4409 = vsel %vm3385, %v2314, 0.0
          %v4410 = vsel %vm3386, %v2315, 0.0
          %v4411 = vsel %vm3387, %v2316, 0.0
          %v4412 = vsel %vm3388, %v2317, 0.0
          %v4413 = vsel %vm3389, %v2318, 0.0
          %v4414 = vsel %vm3390, %v2319, 0.0
          %v4415 = vsel %vm3391, %v2320, 0.0
          %v4416 = vsel %vm3392, %v2321, 0.0
          %v4417 = vsel %vm3393, %v2322, 0.0
          %v4418 = vsel %vm3394, %v2323, 0.0
          %v4419 = vsel %vm3395, %v2324, 0.0
          %v4420 = vsel %vm3396, %v2325, 0.0
          %v4421 = vsel %vm3397, %v2326, 0.0
          %v4422 = vsel %vm3398, %v2327, 0.0
          %v4423 = vsel %vm3399, %v2328, 0.0
          %v4424 = vsel %vm3400, %v2329, 0.0
          %v4425 = vsel %vm3401, %v2330, 0.0
          %v4426 = vsel %vm3402, %v2331, 0.0
          %v4427 = vsel %vm3403, %v2332, 0.0
          %v4428 = vsel %vm3404, %v2333, 0.0
          %v4429 = vsel %vm3405, %v2334, 0.0
          %v4430 = vsel %vm3406, %v2335, 0.0
          %v4431 = vsel %vm3407, %v2304, 0.0
          %v4432 = vsel %vm3408, %v2305, 0.0
          %v4433 = vsel %vm3409, %v2306, 0.0
          %v4434 = vsel %vm3410, %v2307, 0.0
          %v4435 = vsel %vm3411, %v2308, 0.0
          %v4436 = vsel %vm3412, %v2309, 0.0
          %v4437 = vsel %vm3413, %v2310, 0.0
          %v4438 = vsel %vm3414, %v2311, 0.0
          %v4439 = vsel %vm3415, %v2312, 0.0
          %v4440 = vsel %vm3416, %v2313, 0.0
          %v4441 = vsel %vm3417, %v2314, 0.0
          %v4442 = vsel %vm3418, %v2315, 0.0
          %v4443 = vsel %vm3419, %v2316, 0.0
          %v4444 = vsel %vm3420, %v2317, 0.0
          %v4445 = vsel %vm3421, %v2318, 0.0
          %v4446 = vsel %vm3422, %v2319, 0.0
          %v4447 = vsel %vm3423, %v2320, 0.0
          %v4448 = vsel %vm3424, %v2321, 0.0
          %v4449 = vsel %vm3425, %v2322, 0.0
          %v4450 = vsel %vm3426, %v2323, 0.0
          %v4451 = vsel %vm3427, %v2324, 0.0
          %v4452 = vsel %vm3428, %v2325, 0.0
          %v4453 = vsel %vm3429, %v2326, 0.0
          %v4454 = vsel %vm3430, %v2327, 0.0
          %v4455 = vsel %vm3431, %v2328, 0.0
          %v4456 = vsel %vm3432, %v2329, 0.0
          %v4457 = vsel %vm3433, %v2330, 0.0
          %v4458 = vsel %vm3434, %v2331, 0.0
          %v4459 = vsel %vm3435, %v2332, 0.0
          %v4460 = vsel %vm3436, %v2333, 0.0
          %v4461 = vsel %vm3437, %v2334, 0.0
          %v4462 = vsel %vm3438, %v2335, 0.0
          %v4463 = vsel %vm3439, %v2304, 0.0
          %v4464 = vsel %vm3440, %v2305, 0.0
          %v4465 = vsel %vm3441, %v2306, 0.0
          %v4466 = vsel %vm3442, %v2307, 0.0
          %v4467 = vsel %vm3443, %v2308, 0.0
          %v4468 = vsel %vm3444, %v2309, 0.0
          %v4469 = vsel %vm3445, %v2310, 0.0
          %v4470 = vsel %vm3446, %v2311, 0.0
          %v4471 = vsel %vm3447, %v2312, 0.0
          %v4472 = vsel %vm3448, %v2313, 0.0
          %v4473 = vsel %vm3449, %v2314, 0.0
          %v4474 = vsel %vm3450, %v2315, 0.0
          %v4475 = vsel %vm3451, %v2316, 0.0
          %v4476 = vsel %vm3452, %v2317, 0.0
          %v4477 = vsel %vm3453, %v2318, 0.0
          %v4478 = vsel %vm3454, %v2319, 0.0
          %v4479 = vsel %vm3455, %v2320, 0.0
          %v4480 = vsel %vm3456, %v2321, 0.0
          %v4481 = vsel %vm3457, %v2322, 0.0
          %v4482 = vsel %vm3458, %v2323, 0.0
          %v4483 = vsel %vm3459, %v2324, 0.0
          %v4484 = vsel %vm3460, %v2325, 0.0
          %v4485 = vsel %vm3461, %v2326, 0.0
          %v4486 = vsel %vm3462, %v2327, 0.0
          %v4487 = vsel %vm3463, %v2328, 0.0
          %v4488 = vsel %vm3464, %v2329, 0.0
          %v4489 = vsel %vm3465, %v2330, 0.0
          %v4490 = vsel %vm3466, %v2331, 0.0
          %v4491 = vsel %vm3467, %v2332, 0.0
          %v4492 = vsel %vm3468, %v2333, 0.0
          %v4493 = vsel %vm3469, %v2334, 0.0
          %v4494 = vsel %vm3470, %v2335, 0.0
          %v4495 = vsel %vm3471, %v2304, 0.0
          %v4496 = vsel %vm3472, %v2305, 0.0
          %v4497 = vsel %vm3473, %v2306, 0.0
          %v4498 = vsel %vm3474, %v2307, 0.0
          %v4499 = vsel %vm3475, %v2308, 0.0
          %v4500 = vsel %vm3476, %v2309, 0.0
          %v4501 = vsel %vm3477, %v2310, 0.0
          %v4502 = vsel %vm3478, %v2311, 0.0
          %v4503 = vsel %vm3479, %v2312, 0.0
          %v4504 = vsel %vm3480, %v2313, 0.0
          %v4505 = vsel %vm3481, %v2314, 0.0
          %v4506 = vsel %vm3482, %v2315, 0.0
          %v4507 = vsel %vm3483, %v2316, 0.0
          %v4508 = vsel %vm3484, %v2317, 0.0
          %v4509 = vsel %vm3485, %v2318, 0.0
          %v4510 = vsel %vm3486, %v2319, 0.0
          %v4511 = vsel %vm3487, %v2320, 0.0
          %v4512 = vsel %vm3488, %v2321, 0.0
          %v4513 = vsel %vm3489, %v2322, 0.0
          %v4514 = vsel %vm3490, %v2323, 0.0
          %v4515 = vsel %vm3491, %v2324, 0.0
          %v4516 = vsel %vm3492, %v2325, 0.0
          %v4517 = vsel %vm3493, %v2326, 0.0
          %v4518 = vsel %vm3494, %v2327, 0.0
          %v4519 = vsel %vm3495, %v2328, 0.0
          %v4520 = vsel %vm3496, %v2329, 0.0
          %v4521 = vsel %vm3497, %v2330, 0.0
          %v4522 = vsel %vm3498, %v2331, 0.0
          %v4523 = vsel %vm3499, %v2332, 0.0
          %v4524 = vsel %vm3500, %v2333, 0.0
          %v4525 = vsel %vm3501, %v2334, 0.0
          %v4526 = vsel %vm3502, %v2335, 0.0
          %v4527 = vsel %vm3503, %v2304, 0.0
          %v4528 = vsel %vm3504, %v2305, 0.0
          %v4529 = vsel %vm3505, %v2306, 0.0
          %v4530 = vsel %vm3506, %v2307, 0.0
          %v4531 = vsel %vm3507, %v2308, 0.0
          %v4532 = vsel %vm3508, %v2309, 0.0
          %v4533 = vsel %vm3509, %v2310, 0.0
          %v4534 = vsel %vm3510, %v2311, 0.0
          %v4535 = vsel %vm3511, %v2312, 0.0
          %v4536 = vsel %vm3512, %v2313, 0.0
          %v4537 = vsel %vm3513, %v2314, 0.0
          %v4538 = vsel %vm3514, %v2315, 0.0
          %v4539 = vsel %vm3515, %v2316, 0.0
          %v4540 = vsel %vm3516, %v2317, 0.0
          %v4541 = vsel %vm3517, %v2318, 0.0
          %v4542 = vsel %vm3518, %v2319, 0.0
          %v4543 = vsel %vm3519, %v2320, 0.0
          %v4544 = vsel %vm3520, %v2321, 0.0
          %v4545 = vsel %vm3521, %v2322, 0.0
          %v4546 = vsel %vm3522, %v2323, 0.0
          %v4547 = vsel %vm3523, %v2324, 0.0
          %v4548 = vsel %vm3524, %v2325, 0.0
          %v4549 = vsel %vm3525, %v2326, 0.0
          %v4550 = vsel %vm3526, %v2327, 0.0
          %v4551 = vsel %vm3527, %v2328, 0.0
          %v4552 = vsel %vm3528, %v2329, 0.0
          %v4553 = vsel %vm3529, %v2330, 0.0
          %v4554 = vsel %vm3530, %v2331, 0.0
          %v4555 = vsel %vm3531, %v2332, 0.0
          %v4556 = vsel %vm3532, %v2333, 0.0
          %v4557 = vsel %vm3533, %v2334, 0.0
          %v4558 = vsel %vm3534, %v2335, 0.0
          %v4559 = vsel %vm3535, %v2304, 0.0
          %v4560 = vsel %vm3536, %v2305, 0.0
          %v4561 = vsel %vm3537, %v2306, 0.0
          %v4562 = vsel %vm3538, %v2307, 0.0
          %v4563 = vsel %vm3539, %v2308, 0.0
          %v4564 = vsel %vm3540, %v2309, 0.0
          %v4565 = vsel %vm3541, %v2310, 0.0
          %v4566 = vsel %vm3542, %v2311, 0.0
          %v4567 = vsel %vm3543, %v2312, 0.0
          %v4568 = vsel %vm3544, %v2313, 0.0
          %v4569 = vsel %vm3545, %v2314, 0.0
          %v4570 = vsel %vm3546, %v2315, 0.0
          %v4571 = vsel %vm3547, %v2316, 0.0
          %v4572 = vsel %vm3548, %v2317, 0.0
          %v4573 = vsel %vm3549, %v2318, 0.0
          %v4574 = vsel %vm3550, %v2319, 0.0
          %v4575 = vsel %vm3551, %v2320, 0.0
          %v4576 = vsel %vm3552, %v2321, 0.0
          %v4577 = vsel %vm3553, %v2322, 0.0
          %v4578 = vsel %vm3554, %v2323, 0.0
          %v4579 = vsel %vm3555, %v2324, 0.0
          %v4580 = vsel %vm3556, %v2325, 0.0
          %v4581 = vsel %vm3557, %v2326, 0.0
          %v4582 = vsel %vm3558, %v2327, 0.0
          %v4583 = vsel %vm3559, %v2328, 0.0
          %v4584 = vsel %vm3560, %v2329, 0.0
          %v4585 = vsel %vm3561, %v2330, 0.0
          %v4586 = vsel %vm3562, %v2331, 0.0
          %v4587 = vsel %vm3563, %v2332, 0.0
          %v4588 = vsel %vm3564, %v2333, 0.0
          %v4589 = vsel %vm3565, %v2334, 0.0
          %v4590 = vsel %vm3566, %v2335, 0.0
          %v4591 = vsel %vm3567, %v2304, 0.0
          %v4592 = vsel %vm3568, %v2305, 0.0
          %v4593 = vsel %vm3569, %v2306, 0.0
          %v4594 = vsel %vm3570, %v2307, 0.0
          %v4595 = vsel %vm3571, %v2308, 0.0
          %v4596 = vsel %vm3572, %v2309, 0.0
          %v4597 = vsel %vm3573, %v2310, 0.0
          %v4598 = vsel %vm3574, %v2311, 0.0
          %v4599 = vsel %vm3575, %v2312, 0.0
          %v4600 = vsel %vm3576, %v2313, 0.0
          %v4601 = vsel %vm3577, %v2314, 0.0
          %v4602 = vsel %vm3578, %v2315, 0.0
          %v4603 = vsel %vm3579, %v2316, 0.0
          %v4604 = vsel %vm3580, %v2317, 0.0
          %v4605 = vsel %vm3581, %v2318, 0.0
          %v4606 = vsel %vm3582, %v2319, 0.0
          %v4607 = vsel %vm3583, %v2320, 0.0
          %v4608 = vsel %vm3584, %v2321, 0.0
          %v4609 = vsel %vm3585, %v2322, 0.0
          %v4610 = vsel %vm3586, %v2323, 0.0
          %v4611 = vsel %vm3587, %v2324, 0.0
          %v4612 = vsel %vm3588, %v2325, 0.0
          %v4613 = vsel %vm3589, %v2326, 0.0
          %v4614 = vsel %vm3590, %v2327, 0.0
          %v4615 = vsel %vm3591, %v2328, 0.0
          %v4616 = vsel %vm3592, %v2329, 0.0
          %v4617 = vsel %vm3593, %v2330, 0.0
          %v4618 = vsel %vm3594, %v2331, 0.0
          %v4619 = vsel %vm3595, %v2332, 0.0
          %v4620 = vsel %vm3596, %v2333, 0.0
          %v4621 = vsel %vm3597, %v2334, 0.0
          %v4622 = vsel %vm3598, %v2335, 0.0
          %v4623 = vsel %vm3599, %v2304, 0.0
          %v4624 = vsel %vm3600, %v2305, 0.0
          %v4625 = vsel %vm3601, %v2306, 0.0
          %v4626 = vsel %vm3602, %v2307, 0.0
          %v4627 = vsel %vm3603, %v2308, 0.0
          %v4628 = vsel %vm3604, %v2309, 0.0
          %v4629 = vsel %vm3605, %v2310, 0.0
          %v4630 = vsel %vm3606, %v2311, 0.0
          %v4631 = vsel %vm3607, %v2312, 0.0
          %v4632 = vsel %vm3608, %v2313, 0.0
          %v4633 = vsel %vm3609, %v2314, 0.0
          %v4634 = vsel %vm3610, %v2315, 0.0
          %v4635 = vsel %vm3611, %v2316, 0.0
          %v4636 = vsel %vm3612, %v2317, 0.0
          %v4637 = vsel %vm3613, %v2318, 0.0
          %v4638 = vsel %vm3614, %v2319, 0.0
          %v4639 = vsel %vm3615, %v2320, 0.0
          %v4640 = vsel %vm3616, %v2321, 0.0
          %v4641 = vsel %vm3617, %v2322, 0.0
          %v4642 = vsel %vm3618, %v2323, 0.0
          %v4643 = vsel %vm3619, %v2324, 0.0
          %v4644 = vsel %vm3620, %v2325, 0.0
          %v4645 = vsel %vm3621, %v2326, 0.0
          %v4646 = vsel %vm3622, %v2327, 0.0
          %v4647 = vsel %vm3623, %v2328, 0.0
          %v4648 = vsel %vm3624, %v2329, 0.0
          %v4649 = vsel %vm3625, %v2330, 0.0
          %v4650 = vsel %vm3626, %v2331, 0.0
          %v4651 = vsel %vm3627, %v2332, 0.0
          %v4652 = vsel %vm3628, %v2333, 0.0
          %v4653 = vsel %vm3629, %v2334, 0.0
          %v4654 = vsel %vm3630, %v2335, 0.0
          %v4655 = vsel %vm3631, %v2304, 0.0
          %v4656 = vsel %vm3632, %v2305, 0.0
          %v4657 = vsel %vm3633, %v2306, 0.0
          %v4658 = vsel %vm3634, %v2307, 0.0
          %v4659 = vsel %vm3635, %v2308, 0.0
          %v4660 = vsel %vm3636, %v2309, 0.0
          %v4661 = vsel %vm3637, %v2310, 0.0
          %v4662 = vsel %vm3638, %v2311, 0.0
          %v4663 = vsel %vm3639, %v2312, 0.0
          %v4664 = vsel %vm3640, %v2313, 0.0
          %v4665 = vsel %vm3641, %v2314, 0.0
          %v4666 = vsel %vm3642, %v2315, 0.0
          %v4667 = vsel %vm3643, %v2316, 0.0
          %v4668 = vsel %vm3644, %v2317, 0.0
          %v4669 = vsel %vm3645, %v2318, 0.0
          %v4670 = vsel %vm3646, %v2319, 0.0
          %v4671 = vsel %vm3647, %v2320, 0.0
          %v4672 = vsel %vm3648, %v2321, 0.0
          %v4673 = vsel %vm3649, %v2322, 0.0
          %v4674 = vsel %vm3650, %v2323, 0.0
          %v4675 = vsel %vm3651, %v2324, 0.0
          %v4676 = vsel %vm3652, %v2325, 0.0
          %v4677 = vsel %vm3653, %v2326, 0.0
          %v4678 = vsel %vm3654, %v2327, 0.0
          %v4679 = vsel %vm3655, %v2328, 0.0
          %v4680 = vsel %vm3656, %v2329, 0.0
          %v4681 = vsel %vm3657, %v2330, 0.0
          %v4682 = vsel %vm3658, %v2331, 0.0
          %v4683 = vsel %vm3659, %v2332, 0.0
          %v4684 = vsel %vm3660, %v2333, 0.0
          %v4685 = vsel %vm3661, %v2334, 0.0
          %v4686 = vsel %vm3662, %v2335, 0.0
          %v4687 = vsel %vm3663, %v2304, 0.0
          %v4688 = vsel %vm3664, %v2305, 0.0
          %v4689 = vsel %vm3665, %v2306, 0.0
          %v4690 = vsel %vm3666, %v2307, 0.0
          %v4691 = vsel %vm3667, %v2308, 0.0
          %v4692 = vsel %vm3668, %v2309, 0.0
          %v4693 = vsel %vm3669, %v2310, 0.0
          %v4694 = vsel %vm3670, %v2311, 0.0
          %v4695 = vsel %vm3671, %v2312, 0.0
          %v4696 = vsel %vm3672, %v2313, 0.0
          %v4697 = vsel %vm3673, %v2314, 0.0
          %v4698 = vsel %vm3674, %v2315, 0.0
          %v4699 = vsel %vm3675, %v2316, 0.0
          %v4700 = vsel %vm3676, %v2317, 0.0
          %v4701 = vsel %vm3677, %v2318, 0.0
          %v4702 = vsel %vm3678, %v2319, 0.0
          %v4703 = vsel %vm3679, %v2320, 0.0
          %v4704 = vsel %vm3680, %v2321, 0.0
          %v4705 = vsel %vm3681, %v2322, 0.0
          %v4706 = vsel %vm3682, %v2323, 0.0
          %v4707 = vsel %vm3683, %v2324, 0.0
          %v4708 = vsel %vm3684, %v2325, 0.0
          %v4709 = vsel %vm3685, %v2326, 0.0
          %v4710 = vsel %vm3686, %v2327, 0.0
          %v4711 = vsel %vm3687, %v2328, 0.0
          %v4712 = vsel %vm3688, %v2329, 0.0
          %v4713 = vsel %vm3689, %v2330, 0.0
          %v4714 = vsel %vm3690, %v2331, 0.0
          %v4715 = vsel %vm3691, %v2332, 0.0
          %v4716 = vsel %vm3692, %v2333, 0.0
          %v4717 = vsel %vm3693, %v2334, 0.0
          %v4718 = vsel %vm3694, %v2335, 0.0
          %v4719 = vsel %vm3695, %v2304, 0.0
          %v4720 = vsel %vm3696, %v2305, 0.0
          %v4721 = vsel %vm3697, %v2306, 0.0
          %v4722 = vsel %vm3698, %v2307, 0.0
          %v4723 = vsel %vm3699, %v2308, 0.0
          %v4724 = vsel %vm3700, %v2309, 0.0
          %v4725 = vsel %vm3701, %v2310, 0.0
          %v4726 = vsel %vm3702, %v2311, 0.0
          %v4727 = vsel %vm3703, %v2312, 0.0
          %v4728 = vsel %vm3704, %v2313, 0.0
          %v4729 = vsel %vm3705, %v2314, 0.0
          %v4730 = vsel %vm3706, %v2315, 0.0
          %v4731 = vsel %vm3707, %v2316, 0.0
          %v4732 = vsel %vm3708, %v2317, 0.0
          %v4733 = vsel %vm3709, %v2318, 0.0
          %v4734 = vsel %vm3710, %v2319, 0.0
          %v4735 = vsel %vm3711, %v2320, 0.0
          %v4736 = vsel %vm3712, %v2321, 0.0
          %v4737 = vsel %vm3713, %v2322, 0.0
          %v4738 = vsel %vm3714, %v2323, 0.0
          %v4739 = vsel %vm3715, %v2324, 0.0
          %v4740 = vsel %vm3716, %v2325, 0.0
          %v4741 = vsel %vm3717, %v2326, 0.0
          %v4742 = vsel %vm3718, %v2327, 0.0
          %v4743 = vsel %vm3719, %v2328, 0.0
          %v4744 = vsel %vm3720, %v2329, 0.0
          %v4745 = vsel %vm3721, %v2330, 0.0
          %v4746 = vsel %vm3722, %v2331, 0.0
          %v4747 = vsel %vm3723, %v2332, 0.0
          %v4748 = vsel %vm3724, %v2333, 0.0
          %v4749 = vsel %vm3725, %v2334, 0.0
          %v4750 = vsel %vm3726, %v2335, 0.0
          %v4751 = vsel %vm3727, %v2304, 0.0
          %v4752 = vsel %vm3728, %v2305, 0.0
          %v4753 = vsel %vm3729, %v2306, 0.0
          %v4754 = vsel %vm3730, %v2307, 0.0
          %v4755 = vsel %vm3731, %v2308, 0.0
          %v4756 = vsel %vm3732, %v2309, 0.0
          %v4757 = vsel %vm3733, %v2310, 0.0
          %v4758 = vsel %vm3734, %v2311, 0.0
          %v4759 = vsel %vm3735, %v2312, 0.0
          %v4760 = vsel %vm3736, %v2313, 0.0
          %v4761 = vsel %vm3737, %v2314, 0.0
          %v4762 = vsel %vm3738, %v2315, 0.0
          %v4763 = vsel %vm3739, %v2316, 0.0
          %v4764 = vsel %vm3740, %v2317, 0.0
          %v4765 = vsel %vm3741, %v2318, 0.0
          %v4766 = vsel %vm3742, %v2319, 0.0
          %v4767 = vsel %vm3743, %v2320, 0.0
          %v4768 = vsel %vm3744, %v2321, 0.0
          %v4769 = vsel %vm3745, %v2322, 0.0
          %v4770 = vsel %vm3746, %v2323, 0.0
          %v4771 = vsel %vm3747, %v2324, 0.0
          %v4772 = vsel %vm3748, %v2325, 0.0
          %v4773 = vsel %vm3749, %v2326, 0.0
          %v4774 = vsel %vm3750, %v2327, 0.0
          %v4775 = vsel %vm3751, %v2328, 0.0
          %v4776 = vsel %vm3752, %v2329, 0.0
          %v4777 = vsel %vm3753, %v2330, 0.0
          %v4778 = vsel %vm3754, %v2331, 0.0
          %v4779 = vsel %vm3755, %v2332, 0.0
          %v4780 = vsel %vm3756, %v2333, 0.0
          %v4781 = vsel %vm3757, %v2334, 0.0
          %v4782 = vsel %vm3758, %v2335, 0.0
          %v4783 = vsel %vm3759, %v2304, 0.0
          %v4784 = vsel %vm3760, %v2305, 0.0
          %v4785 = vsel %vm3761, %v2306, 0.0
          %v4786 = vsel %vm3762, %v2307, 0.0
          %v4787 = vsel %vm3763, %v2308, 0.0
          %v4788 = vsel %vm3764, %v2309, 0.0
          %v4789 = vsel %vm3765, %v2310, 0.0
          %v4790 = vsel %vm3766, %v2311, 0.0
          %v4791 = vsel %vm3767, %v2312, 0.0
          %v4792 = vsel %vm3768, %v2313, 0.0
          %v4793 = vsel %vm3769, %v2314, 0.0
          %v4794 = vsel %vm3770, %v2315, 0.0
          %v4795 = vsel %vm3771, %v2316, 0.0
          %v4796 = vsel %vm3772, %v2317, 0.0
          %v4797 = vsel %vm3773, %v2318, 0.0
          %v4798 = vsel %vm3774, %v2319, 0.0
          %v4799 = vsel %vm3775, %v2320, 0.0
          %v4800 = vsel %vm3776, %v2321, 0.0
          %v4801 = vsel %vm3777, %v2322, 0.0
          %v4802 = vsel %vm3778, %v2323, 0.0
          %v4803 = vsel %vm3779, %v2324, 0.0
          %v4804 = vsel %vm3780, %v2325, 0.0
          %v4805 = vsel %vm3781, %v2326, 0.0
          %v4806 = vsel %vm3782, %v2327, 0.0
          %v4807 = vsel %vm3783, %v2328, 0.0
          %v4808 = vsel %vm3784, %v2329, 0.0
          %v4809 = vsel %vm3785, %v2330, 0.0
          %v4810 = vsel %vm3786, %v2331, 0.0
          %v4811 = vsel %vm3787, %v2332, 0.0
          %v4812 = vsel %vm3788, %v2333, 0.0
          %v4813 = vsel %vm3789, %v2334, 0.0
          %v4814 = vsel %vm3790, %v2335, 0.0
          %v4815 = vsel %vm3791, %v2304, 0.0
          %v4816 = vsel %vm3792, %v2305, 0.0
          %v4817 = vsel %vm3793, %v2306, 0.0
          %v4818 = vsel %vm3794, %v2307, 0.0
          %v4819 = vsel %vm3795, %v2308, 0.0
          %v4820 = vsel %vm3796, %v2309, 0.0
          %v4821 = vsel %vm3797, %v2310, 0.0
          %v4822 = vsel %vm3798, %v2311, 0.0
          %v4823 = vsel %vm3799, %v2312, 0.0
          %v4824 = vsel %vm3800, %v2313, 0.0
          %v4825 = vsel %vm3801, %v2314, 0.0
          %v4826 = vsel %vm3802, %v2315, 0.0
          %v4827 = vsel %vm3803, %v2316, 0.0
          %v4828 = vsel %vm3804, %v2317, 0.0
          %v4829 = vsel %vm3805, %v2318, 0.0
          %v4830 = vsel %vm3806, %v2319, 0.0
          %v4831 = vsel %vm3807, %v2320, 0.0
          %v4832 = vsel %vm3808, %v2321, 0.0
          %v4833 = vsel %vm3809, %v2322, 0.0
          %v4834 = vsel %vm3810, %v2323, 0.0
          %v4835 = vsel %vm3811, %v2324, 0.0
          %v4836 = vsel %vm3812, %v2325, 0.0
          %v4837 = vsel %vm3813, %v2326, 0.0
          %v4838 = vsel %vm3814, %v2327, 0.0
          %v4839 = vsel %vm3815, %v2328, 0.0
          %v4840 = vsel %vm3816, %v2329, 0.0
          %v4841 = vsel %vm3817, %v2330, 0.0
          %v4842 = vsel %vm3818, %v2331, 0.0
          %v4843 = vsel %vm3819, %v2332, 0.0
          %v4844 = vsel %vm3820, %v2333, 0.0
          %v4845 = vsel %vm3821, %v2334, 0.0
          %v4846 = vsel %vm3822, %v2335, 0.0
          %v4847 = vsel %vm3823, %v2304, 0.0
          %v4848 = vsel %vm3824, %v2305, 0.0
          %v4849 = vsel %vm3825, %v2306, 0.0
          %v4850 = vsel %vm3826, %v2307, 0.0
          %v4851 = vsel %vm3827, %v2308, 0.0
          %v4852 = vsel %vm3828, %v2309, 0.0
          %v4853 = vsel %vm3829, %v2310, 0.0
          %v4854 = vsel %vm3830, %v2311, 0.0
          %v4855 = vsel %vm3831, %v2312, 0.0
          %v4856 = vsel %vm3832, %v2313, 0.0
          %v4857 = vsel %vm3833, %v2314, 0.0
          %v4858 = vsel %vm3834, %v2315, 0.0
          %v4859 = vsel %vm3835, %v2316, 0.0
          %v4860 = vsel %vm3836, %v2317, 0.0
          %v4861 = vsel %vm3837, %v2318, 0.0
          %v4862 = vsel %vm3838, %v2319, 0.0
          %v4863 = vsel %vm3839, %v2320, 0.0
          %v4864 = vsel %vm3840, %v2321, 0.0
          %v4865 = vsel %vm3841, %v2322, 0.0
          %v4866 = vsel %vm3842, %v2323, 0.0
          %v4867 = vsel %vm3843, %v2324, 0.0
          %v4868 = vsel %vm3844, %v2325, 0.0
          %v4869 = vsel %vm3845, %v2326, 0.0
          %v4870 = vsel %vm3846, %v2327, 0.0
          %v4871 = vsel %vm3847, %v2328, 0.0
          %v4872 = vsel %vm3848, %v2329, 0.0
          %v4873 = vsel %vm3849, %v2330, 0.0
          %v4874 = vsel %vm3850, %v2331, 0.0
          %v4875 = vsel %vm3851, %v2332, 0.0
          %v4876 = vsel %vm3852, %v2333, 0.0
          %v4877 = vsel %vm3853, %v2334, 0.0
          %v4878 = vsel %vm3854, %v2335, 0.0
          %v4879 = vsel %vm3855, %v2304, 0.0
          %v4880 = vsel %vm3856, %v2305, 0.0
          %v4881 = vsel %vm3857, %v2306, 0.0
          %v4882 = vsel %vm3858, %v2307, 0.0
          %v4883 = vsel %vm3859, %v2308, 0.0
          %v4884 = vsel %vm3860, %v2309, 0.0
          %v4885 = vsel %vm3861, %v2310, 0.0
          %v4886 = vsel %vm3862, %v2311, 0.0
          %v4887 = vsel %vm3863, %v2312, 0.0
          %v4888 = vsel %vm3864, %v2313, 0.0
          %v4889 = vsel %vm3865, %v2314, 0.0
          %v4890 = vsel %vm3866, %v2315, 0.0
          %v4891 = vsel %vm3867, %v2316, 0.0
          %v4892 = vsel %vm3868, %v2317, 0.0
          %v4893 = vsel %vm3869, %v2318, 0.0
          %v4894 = vsel %vm3870, %v2319, 0.0
          %v4895 = vsel %vm3871, %v2320, 0.0
          %v4896 = vsel %vm3872, %v2321, 0.0
          %v4897 = vsel %vm3873, %v2322, 0.0
          %v4898 = vsel %vm3874, %v2323, 0.0
          %v4899 = vsel %vm3875, %v2324, 0.0
          %v4900 = vsel %vm3876, %v2325, 0.0
          %v4901 = vsel %vm3877, %v2326, 0.0
          %v4902 = vsel %vm3878, %v2327, 0.0
          %v4903 = vsel %vm3879, %v2328, 0.0
          %v4904 = vsel %vm3880, %v2329, 0.0
          %v4905 = vsel %vm3881, %v2330, 0.0
          %v4906 = vsel %vm3882, %v2331, 0.0
          %v4907 = vsel %vm3883, %v2332, 0.0
          %v4908 = vsel %vm3884, %v2333, 0.0
          %v4909 = vsel %vm3885, %v2334, 0.0
          %v4910 = vsel %vm3886, %v2335, 0.0
          %v4911 = vsel %vm3887, %v2304, 0.0
          %v4912 = vsel %vm3888, %v2305, 0.0
          %v4913 = vsel %vm3889, %v2306, 0.0
          %v4914 = vsel %vm3890, %v2307, 0.0
          %v4915 = vsel %vm3891, %v2308, 0.0
          %v4916 = vsel %vm3892, %v2309, 0.0
          %v4917 = vsel %vm3893, %v2310, 0.0
          %v4918 = vsel %vm3894, %v2311, 0.0
          %v4919 = vsel %vm3895, %v2312, 0.0
          %v4920 = vsel %vm3896, %v2313, 0.0
          %v4921 = vsel %vm3897, %v2314, 0.0
          %v4922 = vsel %vm3898, %v2315, 0.0
          %v4923 = vsel %vm3899, %v2316, 0.0
          %v4924 = vsel %vm3900, %v2317, 0.0
          %v4925 = vsel %vm3901, %v2318, 0.0
          %v4926 = vsel %vm3902, %v2319, 0.0
          %v4927 = vsel %vm3903, %v2320, 0.0
          %v4928 = vsel %vm3904, %v2321, 0.0
          %v4929 = vsel %vm3905, %v2322, 0.0
          %v4930 = vsel %vm3906, %v2323, 0.0
          %v4931 = vsel %vm3907, %v2324, 0.0
          %v4932 = vsel %vm3908, %v2325, 0.0
          %v4933 = vsel %vm3909, %v2326, 0.0
          %v4934 = vsel %vm3910, %v2327, 0.0
          %v4935 = vsel %vm3911, %v2328, 0.0
          %v4936 = vsel %vm3912, %v2329, 0.0
          %v4937 = vsel %vm3913, %v2330, 0.0
          %v4938 = vsel %vm3914, %v2331, 0.0
          %v4939 = vsel %vm3915, %v2332, 0.0
          %v4940 = vsel %vm3916, %v2333, 0.0
          %v4941 = vsel %vm3917, %v2334, 0.0
          %v4942 = vsel %vm3918, %v2335, 0.0
          %v4943 = vsel %vm3919, %v2304, 0.0
          %v4944 = vsel %vm3920, %v2305, 0.0
          %v4945 = vsel %vm3921, %v2306, 0.0
          %v4946 = vsel %vm3922, %v2307, 0.0
          %v4947 = vsel %vm3923, %v2308, 0.0
          %v4948 = vsel %vm3924, %v2309, 0.0
          %v4949 = vsel %vm3925, %v2310, 0.0
          %v4950 = vsel %vm3926, %v2311, 0.0
          %v4951 = vsel %vm3927, %v2312, 0.0
          %v4952 = vsel %vm3928, %v2313, 0.0
          %v4953 = vsel %vm3929, %v2314, 0.0
          %v4954 = vsel %vm3930, %v2315, 0.0
          %v4955 = vsel %vm3931, %v2316, 0.0
          %v4956 = vsel %vm3932, %v2317, 0.0
          %v4957 = vsel %vm3933, %v2318, 0.0
          %v4958 = vsel %vm3934, %v2319, 0.0
          %v4959 = vsel %vm3935, %v2320, 0.0
          %v4960 = vsel %vm3936, %v2321, 0.0
          %v4961 = vsel %vm3937, %v2322, 0.0
          %v4962 = vsel %vm3938, %v2323, 0.0
          %v4963 = vsel %vm3939, %v2324, 0.0
          %v4964 = vsel %vm3940, %v2325, 0.0
          %v4965 = vsel %vm3941, %v2326, 0.0
          %v4966 = vsel %vm3942, %v2327, 0.0
          %v4967 = vsel %vm3943, %v2328, 0.0
          %v4968 = vsel %vm3944, %v2329, 0.0
          %v4969 = vsel %vm3945, %v2330, 0.0
          %v4970 = vsel %vm3946, %v2331, 0.0
          %v4971 = vsel %vm3947, %v2332, 0.0
          %v4972 = vsel %vm3948, %v2333, 0.0
          %v4973 = vsel %vm3949, %v2334, 0.0
          %v4974 = vsel %vm3950, %v2335, 0.0
          %v4975 = vsel %vm3951, %v2304, 0.0
          %v4976 = vsel %vm3952, %v2305, 0.0
          %v4977 = vsel %vm3953, %v2306, 0.0
          %v4978 = vsel %vm3954, %v2307, 0.0
          %v4979 = vsel %vm3955, %v2308, 0.0
          %v4980 = vsel %vm3956, %v2309, 0.0
          %v4981 = vsel %vm3957, %v2310, 0.0
          %v4982 = vsel %vm3958, %v2311, 0.0
          %v4983 = vsel %vm3959, %v2312, 0.0
          %v4984 = vsel %vm3960, %v2313, 0.0
          %v4985 = vsel %vm3961, %v2314, 0.0
          %v4986 = vsel %vm3962, %v2315, 0.0
          %v4987 = vsel %vm3963, %v2316, 0.0
          %v4988 = vsel %vm3964, %v2317, 0.0
          %v4989 = vsel %vm3965, %v2318, 0.0
          %v4990 = vsel %vm3966, %v2319, 0.0
          %v4991 = vsel %vm3967, %v2320, 0.0
          %v4992 = vsel %vm3968, %v2321, 0.0
          %v4993 = vsel %vm3969, %v2322, 0.0
          %v4994 = vsel %vm3970, %v2323, 0.0
          %v4995 = vsel %vm3971, %v2324, 0.0
          %v4996 = vsel %vm3972, %v2325, 0.0
          %v4997 = vsel %vm3973, %v2326, 0.0
          %v4998 = vsel %vm3974, %v2327, 0.0
          %v4999 = vsel %vm3975, %v2328, 0.0
          %v5000 = vsel %vm3976, %v2329, 0.0
          %v5001 = vsel %vm3977, %v2330, 0.0
          %v5002 = vsel %vm3978, %v2331, 0.0
          %v5003 = vsel %vm3979, %v2332, 0.0
          %v5004 = vsel %vm3980, %v2333, 0.0
          %v5005 = vsel %vm3981, %v2334, 0.0
          %v5006 = vsel %vm3982, %v2335, 0.0
          %v5007 = vsel %vm3983, %v2304, 0.0
          %v5008 = vsel %vm3984, %v2305, 0.0
          %v5009 = vsel %vm3985, %v2306, 0.0
          %v5010 = vsel %vm3986, %v2307, 0.0
          %v5011 = vsel %vm3987, %v2308, 0.0
          %v5012 = vsel %vm3988, %v2309, 0.0
          %v5013 = vsel %vm3989, %v2310, 0.0
          %v5014 = vsel %vm3990, %v2311, 0.0
          %v5015 = vsel %vm3991, %v2312, 0.0
          %v5016 = vsel %vm3992, %v2313, 0.0
          %v5017 = vsel %vm3993, %v2314, 0.0
          %v5018 = vsel %vm3994, %v2315, 0.0
          %v5019 = vsel %vm3995, %v2316, 0.0
          %v5020 = vsel %vm3996, %v2317, 0.0
          %v5021 = vsel %vm3997, %v2318, 0.0
          %v5022 = vsel %vm3998, %v2319, 0.0
          %v5023 = vsel %vm3999, %v2320, 0.0
          %v5024 = vsel %vm4000, %v2321, 0.0
          %v5025 = vsel %vm4001, %v2322, 0.0
          %v5026 = vsel %vm4002, %v2323, 0.0
          %v5027 = vsel %vm4003, %v2324, 0.0
          %v5028 = vsel %vm4004, %v2325, 0.0
          %v5029 = vsel %vm4005, %v2326, 0.0
          %v5030 = vsel %vm4006, %v2327, 0.0
          %v5031 = vsel %vm4007, %v2328, 0.0
          %v5032 = vsel %vm4008, %v2329, 0.0
          %v5033 = vsel %vm4009, %v2330, 0.0
          %v5034 = vsel %vm4010, %v2331, 0.0
          %v5035 = vsel %vm4011, %v2332, 0.0
          %v5036 = vsel %vm4012, %v2333, 0.0
          %v5037 = vsel %vm4013, %v2334, 0.0
          %v5038 = vsel %vm4014, %v2335, 0.0
          %v5039 = vsel %vm4015, %v2304, 0.0
          %v5040 = vsel %vm4016, %v2305, 0.0
          %v5041 = vsel %vm4017, %v2306, 0.0
          %v5042 = vsel %vm4018, %v2307, 0.0
          %v5043 = vsel %vm4019, %v2308, 0.0
          %v5044 = vsel %vm4020, %v2309, 0.0
          %v5045 = vsel %vm4021, %v2310, 0.0
          %v5046 = vsel %vm4022, %v2311, 0.0
          %v5047 = vsel %vm4023, %v2312, 0.0
          %v5048 = vsel %vm4024, %v2313, 0.0
          %v5049 = vsel %vm4025, %v2314, 0.0
          %v5050 = vsel %vm4026, %v2315, 0.0
          %v5051 = vsel %vm4027, %v2316, 0.0
          %v5052 = vsel %vm4028, %v2317, 0.0
          %v5053 = vsel %vm4029, %v2318, 0.0
          %v5054 = vsel %vm4030, %v2319, 0.0
          %v5055 = vsel %vm4031, %v2320, 0.0
          %v5056 = vsel %vm4032, %v2321, 0.0
          %v5057 = vsel %vm4033, %v2322, 0.0
          %v5058 = vsel %vm4034, %v2323, 0.0
          %v5059 = vsel %vm4035, %v2324, 0.0
          %v5060 = vsel %vm4036, %v2325, 0.0
          %v5061 = vsel %vm4037, %v2326, 0.0
          %v5062 = vsel %vm4038, %v2327, 0.0
          %v5063 = vsel %vm4039, %v2328, 0.0
          %v5064 = vsel %vm4040, %v2329, 0.0
          %v5065 = vsel %vm4041, %v2330, 0.0
          %v5066 = vsel %vm4042, %v2331, 0.0
          %v5067 = vsel %vm4043, %v2332, 0.0
          %v5068 = vsel %vm4044, %v2333, 0.0
          %v5069 = vsel %vm4045, %v2334, 0.0
          %v5070 = vsel %vm4046, %v2335, 0.0
          %v5071 = vsel %vm4047, %v2304, 0.0
          %v5072 = vsel %vm4048, %v2305, 0.0
          %v5073 = vsel %vm4049, %v2306, 0.0
          %v5074 = vsel %vm4050, %v2307, 0.0
          %v5075 = vsel %vm4051, %v2308, 0.0
          %v5076 = vsel %vm4052, %v2309, 0.0
          %v5077 = vsel %vm4053, %v2310, 0.0
          %v5078 = vsel %vm4054, %v2311, 0.0
          %v5079 = vsel %vm4055, %v2312, 0.0
          %v5080 = vsel %vm4056, %v2313, 0.0
          %v5081 = vsel %vm4057, %v2314, 0.0
          %v5082 = vsel %vm4058, %v2315, 0.0
          %v5083 = vsel %vm4059, %v2316, 0.0
          %v5084 = vsel %vm4060, %v2317, 0.0
          %v5085 = vsel %vm4061, %v2318, 0.0
          %v5086 = vsel %vm4062, %v2319, 0.0
          %v5087 = vsel %vm4063, %v2320, 0.0
          %v5088 = vsel %vm4064, %v2321, 0.0
          %v5089 = vsel %vm4065, %v2322, 0.0
          %v5090 = vsel %vm4066, %v2323, 0.0
          %v5091 = vsel %vm4067, %v2324, 0.0
          %v5092 = vsel %vm4068, %v2325, 0.0
          %v5093 = vsel %vm4069, %v2326, 0.0
          %v5094 = vsel %vm4070, %v2327, 0.0
          %v5095 = vsel %vm4071, %v2328, 0.0
          %v5096 = vsel %vm4072, %v2329, 0.0
          %v5097 = vsel %vm4073, %v2330, 0.0
          %v5098 = vsel %vm4074, %v2331, 0.0
          %v5099 = vsel %vm4075, %v2332, 0.0
          %v5100 = vsel %vm4076, %v2333, 0.0
          %v5101 = vsel %vm4077, %v2334, 0.0
          %v5102 = vsel %vm4078, %v2335, 0.0
          %v5103 = vsel %vm4079, %v2304, 0.0
          %v5104 = vsel %vm4080, %v2305, 0.0
          %v5105 = vsel %vm4081, %v2306, 0.0
          %v5106 = vsel %vm4082, %v2307, 0.0
          %v5107 = vsel %vm4083, %v2308, 0.0
          %v5108 = vsel %vm4084, %v2309, 0.0
          %v5109 = vsel %vm4085, %v2310, 0.0
          %v5110 = vsel %vm4086, %v2311, 0.0
          %v5111 = vsel %vm4087, %v2312, 0.0
          %v5112 = vsel %vm4088, %v2313, 0.0
          %v5113 = vsel %vm4089, %v2314, 0.0
          %v5114 = vsel %vm4090, %v2315, 0.0
          %v5115 = vsel %vm4091, %v2316, 0.0
          %v5116 = vsel %vm4092, %v2317, 0.0
          %v5117 = vsel %vm4093, %v2318, 0.0
          %v5118 = vsel %vm4094, %v2319, 0.0
          %v5119 = vsel %vm4095, %v2320, 0.0
          %v5120 = vsel %vm4096, %v2321, 0.0
          %v5121 = vsel %vm4097, %v2322, 0.0
          %v5122 = vsel %vm4098, %v2323, 0.0
          %v5123 = vsel %vm4099, %v2324, 0.0
          %v5124 = vsel %vm4100, %v2325, 0.0
          %v5125 = vsel %vm4101, %v2326, 0.0
          %v5126 = vsel %vm4102, %v2327, 0.0
          %v5127 = vsel %vm4103, %v2328, 0.0
          %v5128 = vsel %vm4104, %v2329, 0.0
          %v5129 = vsel %vm4105, %v2330, 0.0
          %v5130 = vsel %vm4106, %v2331, 0.0
          %v5131 = vsel %vm4107, %v2332, 0.0
          %v5132 = vsel %vm4108, %v2333, 0.0
          %v5133 = vsel %vm4109, %v2334, 0.0
          %v5134 = vsel %vm4110, %v2335, 0.0
          %v5135 = vsel %vm4111, %v2304, 0.0
          %v5136 = vsel %vm4112, %v2305, 0.0
          %v5137 = vsel %vm4113, %v2306, 0.0
          %v5138 = vsel %vm4114, %v2307, 0.0
          %v5139 = vsel %vm4115, %v2308, 0.0
          %v5140 = vsel %vm4116, %v2309, 0.0
          %v5141 = vsel %vm4117, %v2310, 0.0
          %v5142 = vsel %vm4118, %v2311, 0.0
          %v5143 = vsel %vm4119, %v2312, 0.0
          %v5144 = vsel %vm4120, %v2313, 0.0
          %v5145 = vsel %vm4121, %v2314, 0.0
          %v5146 = vsel %vm4122, %v2315, 0.0
          %v5147 = vsel %vm4123, %v2316, 0.0
          %v5148 = vsel %vm4124, %v2317, 0.0
          %v5149 = vsel %vm4125, %v2318, 0.0
          %v5150 = vsel %vm4126, %v2319, 0.0
          %v5151 = vsel %vm4127, %v2320, 0.0
          %v5152 = vsel %vm4128, %v2321, 0.0
          %v5153 = vsel %vm4129, %v2322, 0.0
          %v5154 = vsel %vm4130, %v2323, 0.0
          %v5155 = vsel %vm4131, %v2324, 0.0
          %v5156 = vsel %vm4132, %v2325, 0.0
          %v5157 = vsel %vm4133, %v2326, 0.0
          %v5158 = vsel %vm4134, %v2327, 0.0
          %v5159 = vsel %vm4135, %v2328, 0.0
          %v5160 = vsel %vm4136, %v2329, 0.0
          %v5161 = vsel %vm4137, %v2330, 0.0
          %v5162 = vsel %vm4138, %v2331, 0.0
          %v5163 = vsel %vm4139, %v2332, 0.0
          %v5164 = vsel %vm4140, %v2333, 0.0
          %v5165 = vsel %vm4141, %v2334, 0.0
          %v5166 = vsel %vm4142, %v2335, 0.0
          %v5167 = vadd.f32 %v4143, %v4144
          %v5168 = vadd.f32 %v5167, %v4145
          %v5169 = vadd.f32 %v5168, %v4146
          %v5170 = vadd.f32 %v5169, %v4147
          %v5171 = vadd.f32 %v5170, %v4148
          %v5172 = vadd.f32 %v5171, %v4149
          %v5173 = vadd.f32 %v5172, %v4150
          %v5174 = vadd.f32 %v5173, %v4151
          %v5175 = vadd.f32 %v5174, %v4152
          %v5176 = vadd.f32 %v5175, %v4153
          %v5177 = vadd.f32 %v5176, %v4154
          %v5178 = vadd.f32 %v5177, %v4155
          %v5179 = vadd.f32 %v5178, %v4156
          %v5180 = vadd.f32 %v5179, %v4157
          %v5181 = vadd.f32 %v5180, %v4158
          %v5182 = vadd.f32 %v5181, %v4159
          %v5183 = vadd.f32 %v5182, %v4160
          %v5184 = vadd.f32 %v5183, %v4161
          %v5185 = vadd.f32 %v5184, %v4162
          %v5186 = vadd.f32 %v5185, %v4163
          %v5187 = vadd.f32 %v5186, %v4164
          %v5188 = vadd.f32 %v5187, %v4165
          %v5189 = vadd.f32 %v5188, %v4166
          %v5190 = vadd.f32 %v5189, %v4167
          %v5191 = vadd.f32 %v5190, %v4168
          %v5192 = vadd.f32 %v5191, %v4169
          %v5193 = vadd.f32 %v5192, %v4170
          %v5194 = vadd.f32 %v5193, %v4171
          %v5195 = vadd.f32 %v5194, %v4172
          %v5196 = vadd.f32 %v5195, %v4173
          %v5197 = vadd.f32 %v5196, %v4174
          %v5198 = vrot.slane %v5197, 4
          %v5199 = vadd.f32 %v5197, %v5198
          %v5200 = vrot.slane %v5199, 2
          %v5201 = vadd.f32 %v5199, %v5200
          %v5202 = vrot.slane %v5201, 1
          %v5203 = vadd.f32 %v5201, %v5202
          %v5204 = vadd.f32 %v4175, %v4176
          %v5205 = vadd.f32 %v5204, %v4177
          %v5206 = vadd.f32 %v5205, %v4178
          %v5207 = vadd.f32 %v5206, %v4179
          %v5208 = vadd.f32 %v5207, %v4180
          %v5209 = vadd.f32 %v5208, %v4181
          %v5210 = vadd.f32 %v5209, %v4182
          %v5211 = vadd.f32 %v5210, %v4183
          %v5212 = vadd.f32 %v5211, %v4184
          %v5213 = vadd.f32 %v5212, %v4185
          %v5214 = vadd.f32 %v5213, %v4186
          %v5215 = vadd.f32 %v5214, %v4187
          %v5216 = vadd.f32 %v5215, %v4188
          %v5217 = vadd.f32 %v5216, %v4189
          %v5218 = vadd.f32 %v5217, %v4190
          %v5219 = vadd.f32 %v5218, %v4191
          %v5220 = vadd.f32 %v5219, %v4192
          %v5221 = vadd.f32 %v5220, %v4193
          %v5222 = vadd.f32 %v5221, %v4194
          %v5223 = vadd.f32 %v5222, %v4195
          %v5224 = vadd.f32 %v5223, %v4196
          %v5225 = vadd.f32 %v5224, %v4197
          %v5226 = vadd.f32 %v5225, %v4198
          %v5227 = vadd.f32 %v5226, %v4199
          %v5228 = vadd.f32 %v5227, %v4200
          %v5229 = vadd.f32 %v5228, %v4201
          %v5230 = vadd.f32 %v5229, %v4202
          %v5231 = vadd.f32 %v5230, %v4203
          %v5232 = vadd.f32 %v5231, %v4204
          %v5233 = vadd.f32 %v5232, %v4205
          %v5234 = vadd.f32 %v5233, %v4206
          %v5235 = vrot.slane %v5234, 4
          %v5236 = vadd.f32 %v5234, %v5235
          %v5237 = vrot.slane %v5236, 2
          %v5238 = vadd.f32 %v5236, %v5237
          %v5239 = vrot.slane %v5238, 1
          %v5240 = vadd.f32 %v5238, %v5239
          %v5241 = vadd.f32 %v4207, %v4208
          %v5242 = vadd.f32 %v5241, %v4209
          %v5243 = vadd.f32 %v5242, %v4210
          %v5244 = vadd.f32 %v5243, %v4211
          %v5245 = vadd.f32 %v5244, %v4212
          %v5246 = vadd.f32 %v5245, %v4213
          %v5247 = vadd.f32 %v5246, %v4214
          %v5248 = vadd.f32 %v5247, %v4215
          %v5249 = vadd.f32 %v5248, %v4216
          %v5250 = vadd.f32 %v5249, %v4217
          %v5251 = vadd.f32 %v5250, %v4218
          %v5252 = vadd.f32 %v5251, %v4219
          %v5253 = vadd.f32 %v5252, %v4220
          %v5254 = vadd.f32 %v5253, %v4221
          %v5255 = vadd.f32 %v5254, %v4222
          %v5256 = vadd.f32 %v5255, %v4223
          %v5257 = vadd.f32 %v5256, %v4224
          %v5258 = vadd.f32 %v5257, %v4225
          %v5259 = vadd.f32 %v5258, %v4226
          %v5260 = vadd.f32 %v5259, %v4227
          %v5261 = vadd.f32 %v5260, %v4228
          %v5262 = vadd.f32 %v5261, %v4229
          %v5263 = vadd.f32 %v5262, %v4230
          %v5264 = vadd.f32 %v5263, %v4231
          %v5265 = vadd.f32 %v5264, %v4232
          %v5266 = vadd.f32 %v5265, %v4233
          %v5267 = vadd.f32 %v5266, %v4234
          %v5268 = vadd.f32 %v5267, %v4235
          %v5269 = vadd.f32 %v5268, %v4236
          %v5270 = vadd.f32 %v5269, %v4237
          %v5271 = vadd.f32 %v5270, %v4238
          %v5272 = vrot.slane %v5271, 4
          %v5273 = vadd.f32 %v5271, %v5272
          %v5274 = vrot.slane %v5273, 2
          %v5275 = vadd.f32 %v5273, %v5274
          %v5276 = vrot.slane %v5275, 1
          %v5277 = vadd.f32 %v5275, %v5276
          %v5278 = vadd.f32 %v4239, %v4240
          %v5279 = vadd.f32 %v5278, %v4241
          %v5280 = vadd.f32 %v5279, %v4242
          %v5281 = vadd.f32 %v5280, %v4243
          %v5282 = vadd.f32 %v5281, %v4244
          %v5283 = vadd.f32 %v5282, %v4245
          %v5284 = vadd.f32 %v5283, %v4246
          %v5285 = vadd.f32 %v5284, %v4247
          %v5286 = vadd.f32 %v5285, %v4248
          %v5287 = vadd.f32 %v5286, %v4249
          %v5288 = vadd.f32 %v5287, %v4250
          %v5289 = vadd.f32 %v5288, %v4251
          %v5290 = vadd.f32 %v5289, %v4252
          %v5291 = vadd.f32 %v5290, %v4253
          %v5292 = vadd.f32 %v5291, %v4254
          %v5293 = vadd.f32 %v5292, %v4255
          %v5294 = vadd.f32 %v5293, %v4256
          %v5295 = vadd.f32 %v5294, %v4257
          %v5296 = vadd.f32 %v5295, %v4258
          %v5297 = vadd.f32 %v5296, %v4259
          %v5298 = vadd.f32 %v5297, %v4260
          %v5299 = vadd.f32 %v5298, %v4261
          %v5300 = vadd.f32 %v5299, %v4262
          %v5301 = vadd.f32 %v5300, %v4263
          %v5302 = vadd.f32 %v5301, %v4264
          %v5303 = vadd.f32 %v5302, %v4265
          %v5304 = vadd.f32 %v5303, %v4266
          %v5305 = vadd.f32 %v5304, %v4267
          %v5306 = vadd.f32 %v5305, %v4268
          %v5307 = vadd.f32 %v5306, %v4269
          %v5308 = vadd.f32 %v5307, %v4270
          %v5309 = vrot.slane %v5308, 4
          %v5310 = vadd.f32 %v5308, %v5309
          %v5311 = vrot.slane %v5310, 2
          %v5312 = vadd.f32 %v5310, %v5311
          %v5313 = vrot.slane %v5312, 1
          %v5314 = vadd.f32 %v5312, %v5313
          %v5315 = vadd.f32 %v4271, %v4272
          %v5316 = vadd.f32 %v5315, %v4273
          %v5317 = vadd.f32 %v5316, %v4274
          %v5318 = vadd.f32 %v5317, %v4275
          %v5319 = vadd.f32 %v5318, %v4276
          %v5320 = vadd.f32 %v5319, %v4277
          %v5321 = vadd.f32 %v5320, %v4278
          %v5322 = vadd.f32 %v5321, %v4279
          %v5323 = vadd.f32 %v5322, %v4280
          %v5324 = vadd.f32 %v5323, %v4281
          %v5325 = vadd.f32 %v5324, %v4282
          %v5326 = vadd.f32 %v5325, %v4283
          %v5327 = vadd.f32 %v5326, %v4284
          %v5328 = vadd.f32 %v5327, %v4285
          %v5329 = vadd.f32 %v5328, %v4286
          %v5330 = vadd.f32 %v5329, %v4287
          %v5331 = vadd.f32 %v5330, %v4288
          %v5332 = vadd.f32 %v5331, %v4289
          %v5333 = vadd.f32 %v5332, %v4290
          %v5334 = vadd.f32 %v5333, %v4291
          %v5335 = vadd.f32 %v5334, %v4292
          %v5336 = vadd.f32 %v5335, %v4293
          %v5337 = vadd.f32 %v5336, %v4294
          %v5338 = vadd.f32 %v5337, %v4295
          %v5339 = vadd.f32 %v5338, %v4296
          %v5340 = vadd.f32 %v5339, %v4297
          %v5341 = vadd.f32 %v5340, %v4298
          %v5342 = vadd.f32 %v5341, %v4299
          %v5343 = vadd.f32 %v5342, %v4300
          %v5344 = vadd.f32 %v5343, %v4301
          %v5345 = vadd.f32 %v5344, %v4302
          %v5346 = vrot.slane %v5345, 4
          %v5347 = vadd.f32 %v5345, %v5346
          %v5348 = vrot.slane %v5347, 2
          %v5349 = vadd.f32 %v5347, %v5348
          %v5350 = vrot.slane %v5349, 1
          %v5351 = vadd.f32 %v5349, %v5350
          %v5352 = vadd.f32 %v4303, %v4304
          %v5353 = vadd.f32 %v5352, %v4305
          %v5354 = vadd.f32 %v5353, %v4306
          %v5355 = vadd.f32 %v5354, %v4307
          %v5356 = vadd.f32 %v5355, %v4308
          %v5357 = vadd.f32 %v5356, %v4309
          %v5358 = vadd.f32 %v5357, %v4310
          %v5359 = vadd.f32 %v5358, %v4311
          %v5360 = vadd.f32 %v5359, %v4312
          %v5361 = vadd.f32 %v5360, %v4313
          %v5362 = vadd.f32 %v5361, %v4314
          %v5363 = vadd.f32 %v5362, %v4315
          %v5364 = vadd.f32 %v5363, %v4316
          %v5365 = vadd.f32 %v5364, %v4317
          %v5366 = vadd.f32 %v5365, %v4318
          %v5367 = vadd.f32 %v5366, %v4319
          %v5368 = vadd.f32 %v5367, %v4320
          %v5369 = vadd.f32 %v5368, %v4321
          %v5370 = vadd.f32 %v5369, %v4322
          %v5371 = vadd.f32 %v5370, %v4323
          %v5372 = vadd.f32 %v5371, %v4324
          %v5373 = vadd.f32 %v5372, %v4325
          %v5374 = vadd.f32 %v5373, %v4326
          %v5375 = vadd.f32 %v5374, %v4327
          %v5376 = vadd.f32 %v5375, %v4328
          %v5377 = vadd.f32 %v5376, %v4329
          %v5378 = vadd.f32 %v5377, %v4330
          %v5379 = vadd.f32 %v5378, %v4331
          %v5380 = vadd.f32 %v5379, %v4332
          %v5381 = vadd.f32 %v5380, %v4333
          %v5382 = vadd.f32 %v5381, %v4334
          %v5383 = vrot.slane %v5382, 4
          %v5384 = vadd.f32 %v5382, %v5383
          %v5385 = vrot.slane %v5384, 2
          %v5386 = vadd.f32 %v5384, %v5385
          %v5387 = vrot.slane %v5386, 1
          %v5388 = vadd.f32 %v5386, %v5387
          %v5389 = vadd.f32 %v4335, %v4336
          %v5390 = vadd.f32 %v5389, %v4337
          %v5391 = vadd.f32 %v5390, %v4338
          %v5392 = vadd.f32 %v5391, %v4339
          %v5393 = vadd.f32 %v5392, %v4340
          %v5394 = vadd.f32 %v5393, %v4341
          %v5395 = vadd.f32 %v5394, %v4342
          %v5396 = vadd.f32 %v5395, %v4343
          %v5397 = vadd.f32 %v5396, %v4344
          %v5398 = vadd.f32 %v5397, %v4345
          %v5399 = vadd.f32 %v5398, %v4346
          %v5400 = vadd.f32 %v5399, %v4347
          %v5401 = vadd.f32 %v5400, %v4348
          %v5402 = vadd.f32 %v5401, %v4349
          %v5403 = vadd.f32 %v5402, %v4350
          %v5404 = vadd.f32 %v5403, %v4351
          %v5405 = vadd.f32 %v5404, %v4352
          %v5406 = vadd.f32 %v5405, %v4353
          %v5407 = vadd.f32 %v5406, %v4354
          %v5408 = vadd.f32 %v5407, %v4355
          %v5409 = vadd.f32 %v5408, %v4356
          %v5410 = vadd.f32 %v5409, %v4357
          %v5411 = vadd.f32 %v5410, %v4358
          %v5412 = vadd.f32 %v5411, %v4359
          %v5413 = vadd.f32 %v5412, %v4360
          %v5414 = vadd.f32 %v5413, %v4361
          %v5415 = vadd.f32 %v5414, %v4362
          %v5416 = vadd.f32 %v5415, %v4363
          %v5417 = vadd.f32 %v5416, %v4364
          %v5418 = vadd.f32 %v5417, %v4365
          %v5419 = vadd.f32 %v5418, %v4366
          %v5420 = vrot.slane %v5419, 4
          %v5421 = vadd.f32 %v5419, %v5420
          %v5422 = vrot.slane %v5421, 2
          %v5423 = vadd.f32 %v5421, %v5422
          %v5424 = vrot.slane %v5423, 1
          %v5425 = vadd.f32 %v5423, %v5424
          %v5426 = vadd.f32 %v4367, %v4368
          %v5427 = vadd.f32 %v5426, %v4369
          %v5428 = vadd.f32 %v5427, %v4370
          %v5429 = vadd.f32 %v5428, %v4371
          %v5430 = vadd.f32 %v5429, %v4372
          %v5431 = vadd.f32 %v5430, %v4373
          %v5432 = vadd.f32 %v5431, %v4374
          %v5433 = vadd.f32 %v5432, %v4375
          %v5434 = vadd.f32 %v5433, %v4376
          %v5435 = vadd.f32 %v5434, %v4377
          %v5436 = vadd.f32 %v5435, %v4378
          %v5437 = vadd.f32 %v5436, %v4379
          %v5438 = vadd.f32 %v5437, %v4380
          %v5439 = vadd.f32 %v5438, %v4381
          %v5440 = vadd.f32 %v5439, %v4382
          %v5441 = vadd.f32 %v5440, %v4383
          %v5442 = vadd.f32 %v5441, %v4384
          %v5443 = vadd.f32 %v5442, %v4385
          %v5444 = vadd.f32 %v5443, %v4386
          %v5445 = vadd.f32 %v5444, %v4387
          %v5446 = vadd.f32 %v5445, %v4388
          %v5447 = vadd.f32 %v5446, %v4389
          %v5448 = vadd.f32 %v5447, %v4390
          %v5449 = vadd.f32 %v5448, %v4391
          %v5450 = vadd.f32 %v5449, %v4392
          %v5451 = vadd.f32 %v5450, %v4393
          %v5452 = vadd.f32 %v5451, %v4394
          %v5453 = vadd.f32 %v5452, %v4395
          %v5454 = vadd.f32 %v5453, %v4396
          %v5455 = vadd.f32 %v5454, %v4397
          %v5456 = vadd.f32 %v5455, %v4398
          %v5457 = vrot.slane %v5456, 4
          %v5458 = vadd.f32 %v5456, %v5457
          %v5459 = vrot.slane %v5458, 2
          %v5460 = vadd.f32 %v5458, %v5459
          %v5461 = vrot.slane %v5460, 1
          %v5462 = vadd.f32 %v5460, %v5461
          %v5463 = vadd.f32 %v4399, %v4400
          %v5464 = vadd.f32 %v5463, %v4401
          %v5465 = vadd.f32 %v5464, %v4402
          %v5466 = vadd.f32 %v5465, %v4403
          %v5467 = vadd.f32 %v5466, %v4404
          %v5468 = vadd.f32 %v5467, %v4405
          %v5469 = vadd.f32 %v5468, %v4406
          %v5470 = vadd.f32 %v5469, %v4407
          %v5471 = vadd.f32 %v5470, %v4408
          %v5472 = vadd.f32 %v5471, %v4409
          %v5473 = vadd.f32 %v5472, %v4410
          %v5474 = vadd.f32 %v5473, %v4411
          %v5475 = vadd.f32 %v5474, %v4412
          %v5476 = vadd.f32 %v5475, %v4413
          %v5477 = vadd.f32 %v5476, %v4414
          %v5478 = vadd.f32 %v5477, %v4415
          %v5479 = vadd.f32 %v5478, %v4416
          %v5480 = vadd.f32 %v5479, %v4417
          %v5481 = vadd.f32 %v5480, %v4418
          %v5482 = vadd.f32 %v5481, %v4419
          %v5483 = vadd.f32 %v5482, %v4420
          %v5484 = vadd.f32 %v5483, %v4421
          %v5485 = vadd.f32 %v5484, %v4422
          %v5486 = vadd.f32 %v5485, %v4423
          %v5487 = vadd.f32 %v5486, %v4424
          %v5488 = vadd.f32 %v5487, %v4425
          %v5489 = vadd.f32 %v5488, %v4426
          %v5490 = vadd.f32 %v5489, %v4427
          %v5491 = vadd.f32 %v5490, %v4428
          %v5492 = vadd.f32 %v5491, %v4429
          %v5493 = vadd.f32 %v5492, %v4430
          %v5494 = vrot.slane %v5493, 4
          %v5495 = vadd.f32 %v5493, %v5494
          %v5496 = vrot.slane %v5495, 2
          %v5497 = vadd.f32 %v5495, %v5496
          %v5498 = vrot.slane %v5497, 1
          %v5499 = vadd.f32 %v5497, %v5498
          %v5500 = vadd.f32 %v4431, %v4432
          %v5501 = vadd.f32 %v5500, %v4433
          %v5502 = vadd.f32 %v5501, %v4434
          %v5503 = vadd.f32 %v5502, %v4435
          %v5504 = vadd.f32 %v5503, %v4436
          %v5505 = vadd.f32 %v5504, %v4437
          %v5506 = vadd.f32 %v5505, %v4438
          %v5507 = vadd.f32 %v5506, %v4439
          %v5508 = vadd.f32 %v5507, %v4440
          %v5509 = vadd.f32 %v5508, %v4441
          %v5510 = vadd.f32 %v5509, %v4442
          %v5511 = vadd.f32 %v5510, %v4443
          %v5512 = vadd.f32 %v5511, %v4444
          %v5513 = vadd.f32 %v5512, %v4445
          %v5514 = vadd.f32 %v5513, %v4446
          %v5515 = vadd.f32 %v5514, %v4447
          %v5516 = vadd.f32 %v5515, %v4448
          %v5517 = vadd.f32 %v5516, %v4449
          %v5518 = vadd.f32 %v5517, %v4450
          %v5519 = vadd.f32 %v5518, %v4451
          %v5520 = vadd.f32 %v5519, %v4452
          %v5521 = vadd.f32 %v5520, %v4453
          %v5522 = vadd.f32 %v5521, %v4454
          %v5523 = vadd.f32 %v5522, %v4455
          %v5524 = vadd.f32 %v5523, %v4456
          %v5525 = vadd.f32 %v5524, %v4457
          %v5526 = vadd.f32 %v5525, %v4458
          %v5527 = vadd.f32 %v5526, %v4459
          %v5528 = vadd.f32 %v5527, %v4460
          %v5529 = vadd.f32 %v5528, %v4461
          %v5530 = vadd.f32 %v5529, %v4462
          %v5531 = vrot.slane %v5530, 4
          %v5532 = vadd.f32 %v5530, %v5531
          %v5533 = vrot.slane %v5532, 2
          %v5534 = vadd.f32 %v5532, %v5533
          %v5535 = vrot.slane %v5534, 1
          %v5536 = vadd.f32 %v5534, %v5535
          %v5537 = vadd.f32 %v4463, %v4464
          %v5538 = vadd.f32 %v5537, %v4465
          %v5539 = vadd.f32 %v5538, %v4466
          %v5540 = vadd.f32 %v5539, %v4467
          %v5541 = vadd.f32 %v5540, %v4468
          %v5542 = vadd.f32 %v5541, %v4469
          %v5543 = vadd.f32 %v5542, %v4470
          %v5544 = vadd.f32 %v5543, %v4471
          %v5545 = vadd.f32 %v5544, %v4472
          %v5546 = vadd.f32 %v5545, %v4473
          %v5547 = vadd.f32 %v5546, %v4474
          %v5548 = vadd.f32 %v5547, %v4475
          %v5549 = vadd.f32 %v5548, %v4476
          %v5550 = vadd.f32 %v5549, %v4477
          %v5551 = vadd.f32 %v5550, %v4478
          %v5552 = vadd.f32 %v5551, %v4479
          %v5553 = vadd.f32 %v5552, %v4480
          %v5554 = vadd.f32 %v5553, %v4481
          %v5555 = vadd.f32 %v5554, %v4482
          %v5556 = vadd.f32 %v5555, %v4483
          %v5557 = vadd.f32 %v5556, %v4484
          %v5558 = vadd.f32 %v5557, %v4485
          %v5559 = vadd.f32 %v5558, %v4486
          %v5560 = vadd.f32 %v5559, %v4487
          %v5561 = vadd.f32 %v5560, %v4488
          %v5562 = vadd.f32 %v5561, %v4489
          %v5563 = vadd.f32 %v5562, %v4490
          %v5564 = vadd.f32 %v5563, %v4491
          %v5565 = vadd.f32 %v5564, %v4492
          %v5566 = vadd.f32 %v5565, %v4493
          %v5567 = vadd.f32 %v5566, %v4494
          %v5568 = vrot.slane %v5567, 4
          %v5569 = vadd.f32 %v5567, %v5568
          %v5570 = vrot.slane %v5569, 2
          %v5571 = vadd.f32 %v5569, %v5570
          %v5572 = vrot.slane %v5571, 1
          %v5573 = vadd.f32 %v5571, %v5572
          %v5574 = vadd.f32 %v4495, %v4496
          %v5575 = vadd.f32 %v5574, %v4497
          %v5576 = vadd.f32 %v5575, %v4498
          %v5577 = vadd.f32 %v5576, %v4499
          %v5578 = vadd.f32 %v5577, %v4500
          %v5579 = vadd.f32 %v5578, %v4501
          %v5580 = vadd.f32 %v5579, %v4502
          %v5581 = vadd.f32 %v5580, %v4503
          %v5582 = vadd.f32 %v5581, %v4504
          %v5583 = vadd.f32 %v5582, %v4505
          %v5584 = vadd.f32 %v5583, %v4506
          %v5585 = vadd.f32 %v5584, %v4507
          %v5586 = vadd.f32 %v5585, %v4508
          %v5587 = vadd.f32 %v5586, %v4509
          %v5588 = vadd.f32 %v5587, %v4510
          %v5589 = vadd.f32 %v5588, %v4511
          %v5590 = vadd.f32 %v5589, %v4512
          %v5591 = vadd.f32 %v5590, %v4513
          %v5592 = vadd.f32 %v5591, %v4514
          %v5593 = vadd.f32 %v5592, %v4515
          %v5594 = vadd.f32 %v5593, %v4516
          %v5595 = vadd.f32 %v5594, %v4517
          %v5596 = vadd.f32 %v5595, %v4518
          %v5597 = vadd.f32 %v5596, %v4519
          %v5598 = vadd.f32 %v5597, %v4520
          %v5599 = vadd.f32 %v5598, %v4521
          %v5600 = vadd.f32 %v5599, %v4522
          %v5601 = vadd.f32 %v5600, %v4523
          %v5602 = vadd.f32 %v5601, %v4524
          %v5603 = vadd.f32 %v5602, %v4525
          %v5604 = vadd.f32 %v5603, %v4526
          %v5605 = vrot.slane %v5604, 4
          %v5606 = vadd.f32 %v5604, %v5605
          %v5607 = vrot.slane %v5606, 2
          %v5608 = vadd.f32 %v5606, %v5607
          %v5609 = vrot.slane %v5608, 1
          %v5610 = vadd.f32 %v5608, %v5609
          %v5611 = vadd.f32 %v4527, %v4528
          %v5612 = vadd.f32 %v5611, %v4529
          %v5613 = vadd.f32 %v5612, %v4530
          %v5614 = vadd.f32 %v5613, %v4531
          %v5615 = vadd.f32 %v5614, %v4532
          %v5616 = vadd.f32 %v5615, %v4533
          %v5617 = vadd.f32 %v5616, %v4534
          %v5618 = vadd.f32 %v5617, %v4535
          %v5619 = vadd.f32 %v5618, %v4536
          %v5620 = vadd.f32 %v5619, %v4537
          %v5621 = vadd.f32 %v5620, %v4538
          %v5622 = vadd.f32 %v5621, %v4539
          %v5623 = vadd.f32 %v5622, %v4540
          %v5624 = vadd.f32 %v5623, %v4541
          %v5625 = vadd.f32 %v5624, %v4542
          %v5626 = vadd.f32 %v5625, %v4543
          %v5627 = vadd.f32 %v5626, %v4544
          %v5628 = vadd.f32 %v5627, %v4545
          %v5629 = vadd.f32 %v5628, %v4546
          %v5630 = vadd.f32 %v5629, %v4547
          %v5631 = vadd.f32 %v5630, %v4548
          %v5632 = vadd.f32 %v5631, %v4549
          %v5633 = vadd.f32 %v5632, %v4550
          %v5634 = vadd.f32 %v5633, %v4551
          %v5635 = vadd.f32 %v5634, %v4552
          %v5636 = vadd.f32 %v5635, %v4553
          %v5637 = vadd.f32 %v5636, %v4554
          %v5638 = vadd.f32 %v5637, %v4555
          %v5639 = vadd.f32 %v5638, %v4556
          %v5640 = vadd.f32 %v5639, %v4557
          %v5641 = vadd.f32 %v5640, %v4558
          %v5642 = vrot.slane %v5641, 4
          %v5643 = vadd.f32 %v5641, %v5642
          %v5644 = vrot.slane %v5643, 2
          %v5645 = vadd.f32 %v5643, %v5644
          %v5646 = vrot.slane %v5645, 1
          %v5647 = vadd.f32 %v5645, %v5646
          %v5648 = vadd.f32 %v4559, %v4560
          %v5649 = vadd.f32 %v5648, %v4561
          %v5650 = vadd.f32 %v5649, %v4562
          %v5651 = vadd.f32 %v5650, %v4563
          %v5652 = vadd.f32 %v5651, %v4564
          %v5653 = vadd.f32 %v5652, %v4565
          %v5654 = vadd.f32 %v5653, %v4566
          %v5655 = vadd.f32 %v5654, %v4567
          %v5656 = vadd.f32 %v5655, %v4568
          %v5657 = vadd.f32 %v5656, %v4569
          %v5658 = vadd.f32 %v5657, %v4570
          %v5659 = vadd.f32 %v5658, %v4571
          %v5660 = vadd.f32 %v5659, %v4572
          %v5661 = vadd.f32 %v5660, %v4573
          %v5662 = vadd.f32 %v5661, %v4574
          %v5663 = vadd.f32 %v5662, %v4575
          %v5664 = vadd.f32 %v5663, %v4576
          %v5665 = vadd.f32 %v5664, %v4577
          %v5666 = vadd.f32 %v5665, %v4578
          %v5667 = vadd.f32 %v5666, %v4579
          %v5668 = vadd.f32 %v5667, %v4580
          %v5669 = vadd.f32 %v5668, %v4581
          %v5670 = vadd.f32 %v5669, %v4582
          %v5671 = vadd.f32 %v5670, %v4583
          %v5672 = vadd.f32 %v5671, %v4584
          %v5673 = vadd.f32 %v5672, %v4585
          %v5674 = vadd.f32 %v5673, %v4586
          %v5675 = vadd.f32 %v5674, %v4587
          %v5676 = vadd.f32 %v5675, %v4588
          %v5677 = vadd.f32 %v5676, %v4589
          %v5678 = vadd.f32 %v5677, %v4590
          %v5679 = vrot.slane %v5678, 4
          %v5680 = vadd.f32 %v5678, %v5679
          %v5681 = vrot.slane %v5680, 2
          %v5682 = vadd.f32 %v5680, %v5681
          %v5683 = vrot.slane %v5682, 1
          %v5684 = vadd.f32 %v5682, %v5683
          %v5685 = vadd.f32 %v4591, %v4592
          %v5686 = vadd.f32 %v5685, %v4593
          %v5687 = vadd.f32 %v5686, %v4594
          %v5688 = vadd.f32 %v5687, %v4595
          %v5689 = vadd.f32 %v5688, %v4596
          %v5690 = vadd.f32 %v5689, %v4597
          %v5691 = vadd.f32 %v5690, %v4598
          %v5692 = vadd.f32 %v5691, %v4599
          %v5693 = vadd.f32 %v5692, %v4600
          %v5694 = vadd.f32 %v5693, %v4601
          %v5695 = vadd.f32 %v5694, %v4602
          %v5696 = vadd.f32 %v5695, %v4603
          %v5697 = vadd.f32 %v5696, %v4604
          %v5698 = vadd.f32 %v5697, %v4605
          %v5699 = vadd.f32 %v5698, %v4606
          %v5700 = vadd.f32 %v5699, %v4607
          %v5701 = vadd.f32 %v5700, %v4608
          %v5702 = vadd.f32 %v5701, %v4609
          %v5703 = vadd.f32 %v5702, %v4610
          %v5704 = vadd.f32 %v5703, %v4611
          %v5705 = vadd.f32 %v5704, %v4612
          %v5706 = vadd.f32 %v5705, %v4613
          %v5707 = vadd.f32 %v5706, %v4614
          %v5708 = vadd.f32 %v5707, %v4615
          %v5709 = vadd.f32 %v5708, %v4616
          %v5710 = vadd.f32 %v5709, %v4617
          %v5711 = vadd.f32 %v5710, %v4618
          %v5712 = vadd.f32 %v5711, %v4619
          %v5713 = vadd.f32 %v5712, %v4620
          %v5714 = vadd.f32 %v5713, %v4621
          %v5715 = vadd.f32 %v5714, %v4622
          %v5716 = vrot.slane %v5715, 4
          %v5717 = vadd.f32 %v5715, %v5716
          %v5718 = vrot.slane %v5717, 2
          %v5719 = vadd.f32 %v5717, %v5718
          %v5720 = vrot.slane %v5719, 1
          %v5721 = vadd.f32 %v5719, %v5720
          %v5722 = vadd.f32 %v4623, %v4624
          %v5723 = vadd.f32 %v5722, %v4625
          %v5724 = vadd.f32 %v5723, %v4626
          %v5725 = vadd.f32 %v5724, %v4627
          %v5726 = vadd.f32 %v5725, %v4628
          %v5727 = vadd.f32 %v5726, %v4629
          %v5728 = vadd.f32 %v5727, %v4630
          %v5729 = vadd.f32 %v5728, %v4631
          %v5730 = vadd.f32 %v5729, %v4632
          %v5731 = vadd.f32 %v5730, %v4633
          %v5732 = vadd.f32 %v5731, %v4634
          %v5733 = vadd.f32 %v5732, %v4635
          %v5734 = vadd.f32 %v5733, %v4636
          %v5735 = vadd.f32 %v5734, %v4637
          %v5736 = vadd.f32 %v5735, %v4638
          %v5737 = vadd.f32 %v5736, %v4639
          %v5738 = vadd.f32 %v5737, %v4640
          %v5739 = vadd.f32 %v5738, %v4641
          %v5740 = vadd.f32 %v5739, %v4642
          %v5741 = vadd.f32 %v5740, %v4643
          %v5742 = vadd.f32 %v5741, %v4644
          %v5743 = vadd.f32 %v5742, %v4645
          %v5744 = vadd.f32 %v5743, %v4646
          %v5745 = vadd.f32 %v5744, %v4647
          %v5746 = vadd.f32 %v5745, %v4648
          %v5747 = vadd.f32 %v5746, %v4649
          %v5748 = vadd.f32 %v5747, %v4650
          %v5749 = vadd.f32 %v5748, %v4651
          %v5750 = vadd.f32 %v5749, %v4652
          %v5751 = vadd.f32 %v5750, %v4653
          %v5752 = vadd.f32 %v5751, %v4654
          %v5753 = vrot.slane %v5752, 4
          %v5754 = vadd.f32 %v5752, %v5753
          %v5755 = vrot.slane %v5754, 2
          %v5756 = vadd.f32 %v5754, %v5755
          %v5757 = vrot.slane %v5756, 1
          %v5758 = vadd.f32 %v5756, %v5757
          %v5759 = vadd.f32 %v4655, %v4656
          %v5760 = vadd.f32 %v5759, %v4657
          %v5761 = vadd.f32 %v5760, %v4658
          %v5762 = vadd.f32 %v5761, %v4659
          %v5763 = vadd.f32 %v5762, %v4660
          %v5764 = vadd.f32 %v5763, %v4661
          %v5765 = vadd.f32 %v5764, %v4662
          %v5766 = vadd.f32 %v5765, %v4663
          %v5767 = vadd.f32 %v5766, %v4664
          %v5768 = vadd.f32 %v5767, %v4665
          %v5769 = vadd.f32 %v5768, %v4666
          %v5770 = vadd.f32 %v5769, %v4667
          %v5771 = vadd.f32 %v5770, %v4668
          %v5772 = vadd.f32 %v5771, %v4669
          %v5773 = vadd.f32 %v5772, %v4670
          %v5774 = vadd.f32 %v5773, %v4671
          %v5775 = vadd.f32 %v5774, %v4672
          %v5776 = vadd.f32 %v5775, %v4673
          %v5777 = vadd.f32 %v5776, %v4674
          %v5778 = vadd.f32 %v5777, %v4675
          %v5779 = vadd.f32 %v5778, %v4676
          %v5780 = vadd.f32 %v5779, %v4677
          %v5781 = vadd.f32 %v5780, %v4678
          %v5782 = vadd.f32 %v5781, %v4679
          %v5783 = vadd.f32 %v5782, %v4680
          %v5784 = vadd.f32 %v5783, %v4681
          %v5785 = vadd.f32 %v5784, %v4682
          %v5786 = vadd.f32 %v5785, %v4683
          %v5787 = vadd.f32 %v5786, %v4684
          %v5788 = vadd.f32 %v5787, %v4685
          %v5789 = vadd.f32 %v5788, %v4686
          %v5790 = vrot.slane %v5789, 4
          %v5791 = vadd.f32 %v5789, %v5790
          %v5792 = vrot.slane %v5791, 2
          %v5793 = vadd.f32 %v5791, %v5792
          %v5794 = vrot.slane %v5793, 1
          %v5795 = vadd.f32 %v5793, %v5794
          %v5796 = vadd.f32 %v4687, %v4688
          %v5797 = vadd.f32 %v5796, %v4689
          %v5798 = vadd.f32 %v5797, %v4690
          %v5799 = vadd.f32 %v5798, %v4691
          %v5800 = vadd.f32 %v5799, %v4692
          %v5801 = vadd.f32 %v5800, %v4693
          %v5802 = vadd.f32 %v5801, %v4694
          %v5803 = vadd.f32 %v5802, %v4695
          %v5804 = vadd.f32 %v5803, %v4696
          %v5805 = vadd.f32 %v5804, %v4697
          %v5806 = vadd.f32 %v5805, %v4698
          %v5807 = vadd.f32 %v5806, %v4699
          %v5808 = vadd.f32 %v5807, %v4700
          %v5809 = vadd.f32 %v5808, %v4701
          %v5810 = vadd.f32 %v5809, %v4702
          %v5811 = vadd.f32 %v5810, %v4703
          %v5812 = vadd.f32 %v5811, %v4704
          %v5813 = vadd.f32 %v5812, %v4705
          %v5814 = vadd.f32 %v5813, %v4706
          %v5815 = vadd.f32 %v5814, %v4707
          %v5816 = vadd.f32 %v5815, %v4708
          %v5817 = vadd.f32 %v5816, %v4709
          %v5818 = vadd.f32 %v5817, %v4710
          %v5819 = vadd.f32 %v5818, %v4711
          %v5820 = vadd.f32 %v5819, %v4712
          %v5821 = vadd.f32 %v5820, %v4713
          %v5822 = vadd.f32 %v5821, %v4714
          %v5823 = vadd.f32 %v5822, %v4715
          %v5824 = vadd.f32 %v5823, %v4716
          %v5825 = vadd.f32 %v5824, %v4717
          %v5826 = vadd.f32 %v5825, %v4718
          %v5827 = vrot.slane %v5826, 4
          %v5828 = vadd.f32 %v5826, %v5827
          %v5829 = vrot.slane %v5828, 2
          %v5830 = vadd.f32 %v5828, %v5829
          %v5831 = vrot.slane %v5830, 1
          %v5832 = vadd.f32 %v5830, %v5831
          %v5833 = vadd.f32 %v4719, %v4720
          %v5834 = vadd.f32 %v5833, %v4721
          %v5835 = vadd.f32 %v5834, %v4722
          %v5836 = vadd.f32 %v5835, %v4723
          %v5837 = vadd.f32 %v5836, %v4724
          %v5838 = vadd.f32 %v5837, %v4725
          %v5839 = vadd.f32 %v5838, %v4726
          %v5840 = vadd.f32 %v5839, %v4727
          %v5841 = vadd.f32 %v5840, %v4728
          %v5842 = vadd.f32 %v5841, %v4729
          %v5843 = vadd.f32 %v5842, %v4730
          %v5844 = vadd.f32 %v5843, %v4731
          %v5845 = vadd.f32 %v5844, %v4732
          %v5846 = vadd.f32 %v5845, %v4733
          %v5847 = vadd.f32 %v5846, %v4734
          %v5848 = vadd.f32 %v5847, %v4735
          %v5849 = vadd.f32 %v5848, %v4736
          %v5850 = vadd.f32 %v5849, %v4737
          %v5851 = vadd.f32 %v5850, %v4738
          %v5852 = vadd.f32 %v5851, %v4739
          %v5853 = vadd.f32 %v5852, %v4740
          %v5854 = vadd.f32 %v5853, %v4741
          %v5855 = vadd.f32 %v5854, %v4742
          %v5856 = vadd.f32 %v5855, %v4743
          %v5857 = vadd.f32 %v5856, %v4744
          %v5858 = vadd.f32 %v5857, %v4745
          %v5859 = vadd.f32 %v5858, %v4746
          %v5860 = vadd.f32 %v5859, %v4747
          %v5861 = vadd.f32 %v5860, %v4748
          %v5862 = vadd.f32 %v5861, %v4749
          %v5863 = vadd.f32 %v5862, %v4750
          %v5864 = vrot.slane %v5863, 4
          %v5865 = vadd.f32 %v5863, %v5864
          %v5866 = vrot.slane %v5865, 2
          %v5867 = vadd.f32 %v5865, %v5866
          %v5868 = vrot.slane %v5867, 1
          %v5869 = vadd.f32 %v5867, %v5868
          %v5870 = vadd.f32 %v4751, %v4752
          %v5871 = vadd.f32 %v5870, %v4753
          %v5872 = vadd.f32 %v5871, %v4754
          %v5873 = vadd.f32 %v5872, %v4755
          %v5874 = vadd.f32 %v5873, %v4756
          %v5875 = vadd.f32 %v5874, %v4757
          %v5876 = vadd.f32 %v5875, %v4758
          %v5877 = vadd.f32 %v5876, %v4759
          %v5878 = vadd.f32 %v5877, %v4760
          %v5879 = vadd.f32 %v5878, %v4761
          %v5880 = vadd.f32 %v5879, %v4762
          %v5881 = vadd.f32 %v5880, %v4763
          %v5882 = vadd.f32 %v5881, %v4764
          %v5883 = vadd.f32 %v5882, %v4765
          %v5884 = vadd.f32 %v5883, %v4766
          %v5885 = vadd.f32 %v5884, %v4767
          %v5886 = vadd.f32 %v5885, %v4768
          %v5887 = vadd.f32 %v5886, %v4769
          %v5888 = vadd.f32 %v5887, %v4770
          %v5889 = vadd.f32 %v5888, %v4771
          %v5890 = vadd.f32 %v5889, %v4772
          %v5891 = vadd.f32 %v5890, %v4773
          %v5892 = vadd.f32 %v5891, %v4774
          %v5893 = vadd.f32 %v5892, %v4775
          %v5894 = vadd.f32 %v5893, %v4776
          %v5895 = vadd.f32 %v5894, %v4777
          %v5896 = vadd.f32 %v5895, %v4778
          %v5897 = vadd.f32 %v5896, %v4779
          %v5898 = vadd.f32 %v5897, %v4780
          %v5899 = vadd.f32 %v5898, %v4781
          %v5900 = vadd.f32 %v5899, %v4782
          %v5901 = vrot.slane %v5900, 4
          %v5902 = vadd.f32 %v5900, %v5901
          %v5903 = vrot.slane %v5902, 2
          %v5904 = vadd.f32 %v5902, %v5903
          %v5905 = vrot.slane %v5904, 1
          %v5906 = vadd.f32 %v5904, %v5905
          %v5907 = vadd.f32 %v4783, %v4784
          %v5908 = vadd.f32 %v5907, %v4785
          %v5909 = vadd.f32 %v5908, %v4786
          %v5910 = vadd.f32 %v5909, %v4787
          %v5911 = vadd.f32 %v5910, %v4788
          %v5912 = vadd.f32 %v5911, %v4789
          %v5913 = vadd.f32 %v5912, %v4790
          %v5914 = vadd.f32 %v5913, %v4791
          %v5915 = vadd.f32 %v5914, %v4792
          %v5916 = vadd.f32 %v5915, %v4793
          %v5917 = vadd.f32 %v5916, %v4794
          %v5918 = vadd.f32 %v5917, %v4795
          %v5919 = vadd.f32 %v5918, %v4796
          %v5920 = vadd.f32 %v5919, %v4797
          %v5921 = vadd.f32 %v5920, %v4798
          %v5922 = vadd.f32 %v5921, %v4799
          %v5923 = vadd.f32 %v5922, %v4800
          %v5924 = vadd.f32 %v5923, %v4801
          %v5925 = vadd.f32 %v5924, %v4802
          %v5926 = vadd.f32 %v5925, %v4803
          %v5927 = vadd.f32 %v5926, %v4804
          %v5928 = vadd.f32 %v5927, %v4805
          %v5929 = vadd.f32 %v5928, %v4806
          %v5930 = vadd.f32 %v5929, %v4807
          %v5931 = vadd.f32 %v5930, %v4808
          %v5932 = vadd.f32 %v5931, %v4809
          %v5933 = vadd.f32 %v5932, %v4810
          %v5934 = vadd.f32 %v5933, %v4811
          %v5935 = vadd.f32 %v5934, %v4812
          %v5936 = vadd.f32 %v5935, %v4813
          %v5937 = vadd.f32 %v5936, %v4814
          %v5938 = vrot.slane %v5937, 4
          %v5939 = vadd.f32 %v5937, %v5938
          %v5940 = vrot.slane %v5939, 2
          %v5941 = vadd.f32 %v5939, %v5940
          %v5942 = vrot.slane %v5941, 1
          %v5943 = vadd.f32 %v5941, %v5942
          %v5944 = vadd.f32 %v4815, %v4816
          %v5945 = vadd.f32 %v5944, %v4817
          %v5946 = vadd.f32 %v5945, %v4818
          %v5947 = vadd.f32 %v5946, %v4819
          %v5948 = vadd.f32 %v5947, %v4820
          %v5949 = vadd.f32 %v5948, %v4821
          %v5950 = vadd.f32 %v5949, %v4822
          %v5951 = vadd.f32 %v5950, %v4823
          %v5952 = vadd.f32 %v5951, %v4824
          %v5953 = vadd.f32 %v5952, %v4825
          %v5954 = vadd.f32 %v5953, %v4826
          %v5955 = vadd.f32 %v5954, %v4827
          %v5956 = vadd.f32 %v5955, %v4828
          %v5957 = vadd.f32 %v5956, %v4829
          %v5958 = vadd.f32 %v5957, %v4830
          %v5959 = vadd.f32 %v5958, %v4831
          %v5960 = vadd.f32 %v5959, %v4832
          %v5961 = vadd.f32 %v5960, %v4833
          %v5962 = vadd.f32 %v5961, %v4834
          %v5963 = vadd.f32 %v5962, %v4835
          %v5964 = vadd.f32 %v5963, %v4836
          %v5965 = vadd.f32 %v5964, %v4837
          %v5966 = vadd.f32 %v5965, %v4838
          %v5967 = vadd.f32 %v5966, %v4839
          %v5968 = vadd.f32 %v5967, %v4840
          %v5969 = vadd.f32 %v5968, %v4841
          %v5970 = vadd.f32 %v5969, %v4842
          %v5971 = vadd.f32 %v5970, %v4843
          %v5972 = vadd.f32 %v5971, %v4844
          %v5973 = vadd.f32 %v5972, %v4845
          %v5974 = vadd.f32 %v5973, %v4846
          %v5975 = vrot.slane %v5974, 4
          %v5976 = vadd.f32 %v5974, %v5975
          %v5977 = vrot.slane %v5976, 2
          %v5978 = vadd.f32 %v5976, %v5977
          %v5979 = vrot.slane %v5978, 1
          %v5980 = vadd.f32 %v5978, %v5979
          %v5981 = vadd.f32 %v4847, %v4848
          %v5982 = vadd.f32 %v5981, %v4849
          %v5983 = vadd.f32 %v5982, %v4850
          %v5984 = vadd.f32 %v5983, %v4851
          %v5985 = vadd.f32 %v5984, %v4852
          %v5986 = vadd.f32 %v5985, %v4853
          %v5987 = vadd.f32 %v5986, %v4854
          %v5988 = vadd.f32 %v5987, %v4855
          %v5989 = vadd.f32 %v5988, %v4856
          %v5990 = vadd.f32 %v5989, %v4857
          %v5991 = vadd.f32 %v5990, %v4858
          %v5992 = vadd.f32 %v5991, %v4859
          %v5993 = vadd.f32 %v5992, %v4860
          %v5994 = vadd.f32 %v5993, %v4861
          %v5995 = vadd.f32 %v5994, %v4862
          %v5996 = vadd.f32 %v5995, %v4863
          %v5997 = vadd.f32 %v5996, %v4864
          %v5998 = vadd.f32 %v5997, %v4865
          %v5999 = vadd.f32 %v5998, %v4866
          %v6000 = vadd.f32 %v5999, %v4867
          %v6001 = vadd.f32 %v6000, %v4868
          %v6002 = vadd.f32 %v6001, %v4869
          %v6003 = vadd.f32 %v6002, %v4870
          %v6004 = vadd.f32 %v6003, %v4871
          %v6005 = vadd.f32 %v6004, %v4872
          %v6006 = vadd.f32 %v6005, %v4873
          %v6007 = vadd.f32 %v6006, %v4874
          %v6008 = vadd.f32 %v6007, %v4875
          %v6009 = vadd.f32 %v6008, %v4876
          %v6010 = vadd.f32 %v6009, %v4877
          %v6011 = vadd.f32 %v6010, %v4878
          %v6012 = vrot.slane %v6011, 4
          %v6013 = vadd.f32 %v6011, %v6012
          %v6014 = vrot.slane %v6013, 2
          %v6015 = vadd.f32 %v6013, %v6014
          %v6016 = vrot.slane %v6015, 1
          %v6017 = vadd.f32 %v6015, %v6016
          %v6018 = vadd.f32 %v4879, %v4880
          %v6019 = vadd.f32 %v6018, %v4881
          %v6020 = vadd.f32 %v6019, %v4882
          %v6021 = vadd.f32 %v6020, %v4883
          %v6022 = vadd.f32 %v6021, %v4884
          %v6023 = vadd.f32 %v6022, %v4885
          %v6024 = vadd.f32 %v6023, %v4886
          %v6025 = vadd.f32 %v6024, %v4887
          %v6026 = vadd.f32 %v6025, %v4888
          %v6027 = vadd.f32 %v6026, %v4889
          %v6028 = vadd.f32 %v6027, %v4890
          %v6029 = vadd.f32 %v6028, %v4891
          %v6030 = vadd.f32 %v6029, %v4892
          %v6031 = vadd.f32 %v6030, %v4893
          %v6032 = vadd.f32 %v6031, %v4894
          %v6033 = vadd.f32 %v6032, %v4895
          %v6034 = vadd.f32 %v6033, %v4896
          %v6035 = vadd.f32 %v6034, %v4897
          %v6036 = vadd.f32 %v6035, %v4898
          %v6037 = vadd.f32 %v6036, %v4899
          %v6038 = vadd.f32 %v6037, %v4900
          %v6039 = vadd.f32 %v6038, %v4901
          %v6040 = vadd.f32 %v6039, %v4902
          %v6041 = vadd.f32 %v6040, %v4903
          %v6042 = vadd.f32 %v6041, %v4904
          %v6043 = vadd.f32 %v6042, %v4905
          %v6044 = vadd.f32 %v6043, %v4906
          %v6045 = vadd.f32 %v6044, %v4907
          %v6046 = vadd.f32 %v6045, %v4908
          %v6047 = vadd.f32 %v6046, %v4909
          %v6048 = vadd.f32 %v6047, %v4910
          %v6049 = vrot.slane %v6048, 4
          %v6050 = vadd.f32 %v6048, %v6049
          %v6051 = vrot.slane %v6050, 2
          %v6052 = vadd.f32 %v6050, %v6051
          %v6053 = vrot.slane %v6052, 1
          %v6054 = vadd.f32 %v6052, %v6053
          %v6055 = vadd.f32 %v4911, %v4912
          %v6056 = vadd.f32 %v6055, %v4913
          %v6057 = vadd.f32 %v6056, %v4914
          %v6058 = vadd.f32 %v6057, %v4915
          %v6059 = vadd.f32 %v6058, %v4916
          %v6060 = vadd.f32 %v6059, %v4917
          %v6061 = vadd.f32 %v6060, %v4918
          %v6062 = vadd.f32 %v6061, %v4919
          %v6063 = vadd.f32 %v6062, %v4920
          %v6064 = vadd.f32 %v6063, %v4921
          %v6065 = vadd.f32 %v6064, %v4922
          %v6066 = vadd.f32 %v6065, %v4923
          %v6067 = vadd.f32 %v6066, %v4924
          %v6068 = vadd.f32 %v6067, %v4925
          %v6069 = vadd.f32 %v6068, %v4926
          %v6070 = vadd.f32 %v6069, %v4927
          %v6071 = vadd.f32 %v6070, %v4928
          %v6072 = vadd.f32 %v6071, %v4929
          %v6073 = vadd.f32 %v6072, %v4930
          %v6074 = vadd.f32 %v6073, %v4931
          %v6075 = vadd.f32 %v6074, %v4932
          %v6076 = vadd.f32 %v6075, %v4933
          %v6077 = vadd.f32 %v6076, %v4934
          %v6078 = vadd.f32 %v6077, %v4935
          %v6079 = vadd.f32 %v6078, %v4936
          %v6080 = vadd.f32 %v6079, %v4937
          %v6081 = vadd.f32 %v6080, %v4938
          %v6082 = vadd.f32 %v6081, %v4939
          %v6083 = vadd.f32 %v6082, %v4940
          %v6084 = vadd.f32 %v6083, %v4941
          %v6085 = vadd.f32 %v6084, %v4942
          %v6086 = vrot.slane %v6085, 4
          %v6087 = vadd.f32 %v6085, %v6086
          %v6088 = vrot.slane %v6087, 2
          %v6089 = vadd.f32 %v6087, %v6088
          %v6090 = vrot.slane %v6089, 1
          %v6091 = vadd.f32 %v6089, %v6090
          %v6092 = vadd.f32 %v4943, %v4944
          %v6093 = vadd.f32 %v6092, %v4945
          %v6094 = vadd.f32 %v6093, %v4946
          %v6095 = vadd.f32 %v6094, %v4947
          %v6096 = vadd.f32 %v6095, %v4948
          %v6097 = vadd.f32 %v6096, %v4949
          %v6098 = vadd.f32 %v6097, %v4950
          %v6099 = vadd.f32 %v6098, %v4951
          %v6100 = vadd.f32 %v6099, %v4952
          %v6101 = vadd.f32 %v6100, %v4953
          %v6102 = vadd.f32 %v6101, %v4954
          %v6103 = vadd.f32 %v6102, %v4955
          %v6104 = vadd.f32 %v6103, %v4956
          %v6105 = vadd.f32 %v6104, %v4957
          %v6106 = vadd.f32 %v6105, %v4958
          %v6107 = vadd.f32 %v6106, %v4959
          %v6108 = vadd.f32 %v6107, %v4960
          %v6109 = vadd.f32 %v6108, %v4961
          %v6110 = vadd.f32 %v6109, %v4962
          %v6111 = vadd.f32 %v6110, %v4963
          %v6112 = vadd.f32 %v6111, %v4964
          %v6113 = vadd.f32 %v6112, %v4965
          %v6114 = vadd.f32 %v6113, %v4966
          %v6115 = vadd.f32 %v6114, %v4967
          %v6116 = vadd.f32 %v6115, %v4968
          %v6117 = vadd.f32 %v6116, %v4969
          %v6118 = vadd.f32 %v6117, %v4970
          %v6119 = vadd.f32 %v6118, %v4971
          %v6120 = vadd.f32 %v6119, %v4972
          %v6121 = vadd.f32 %v6120, %v4973
          %v6122 = vadd.f32 %v6121, %v4974
          %v6123 = vrot.slane %v6122, 4
          %v6124 = vadd.f32 %v6122, %v6123
          %v6125 = vrot.slane %v6124, 2
          %v6126 = vadd.f32 %v6124, %v6125
          %v6127 = vrot.slane %v6126, 1
          %v6128 = vadd.f32 %v6126, %v6127
          %v6129 = vadd.f32 %v4975, %v4976
          %v6130 = vadd.f32 %v6129, %v4977
          %v6131 = vadd.f32 %v6130, %v4978
          %v6132 = vadd.f32 %v6131, %v4979
          %v6133 = vadd.f32 %v6132, %v4980
          %v6134 = vadd.f32 %v6133, %v4981
          %v6135 = vadd.f32 %v6134, %v4982
          %v6136 = vadd.f32 %v6135, %v4983
          %v6137 = vadd.f32 %v6136, %v4984
          %v6138 = vadd.f32 %v6137, %v4985
          %v6139 = vadd.f32 %v6138, %v4986
          %v6140 = vadd.f32 %v6139, %v4987
          %v6141 = vadd.f32 %v6140, %v4988
          %v6142 = vadd.f32 %v6141, %v4989
          %v6143 = vadd.f32 %v6142, %v4990
          %v6144 = vadd.f32 %v6143, %v4991
          %v6145 = vadd.f32 %v6144, %v4992
          %v6146 = vadd.f32 %v6145, %v4993
          %v6147 = vadd.f32 %v6146, %v4994
          %v6148 = vadd.f32 %v6147, %v4995
          %v6149 = vadd.f32 %v6148, %v4996
          %v6150 = vadd.f32 %v6149, %v4997
          %v6151 = vadd.f32 %v6150, %v4998
          %v6152 = vadd.f32 %v6151, %v4999
          %v6153 = vadd.f32 %v6152, %v5000
          %v6154 = vadd.f32 %v6153, %v5001
          %v6155 = vadd.f32 %v6154, %v5002
          %v6156 = vadd.f32 %v6155, %v5003
          %v6157 = vadd.f32 %v6156, %v5004
          %v6158 = vadd.f32 %v6157, %v5005
          %v6159 = vadd.f32 %v6158, %v5006
          %v6160 = vrot.slane %v6159, 4
          %v6161 = vadd.f32 %v6159, %v6160
          %v6162 = vrot.slane %v6161, 2
          %v6163 = vadd.f32 %v6161, %v6162
          %v6164 = vrot.slane %v6163, 1
          %v6165 = vadd.f32 %v6163, %v6164
          %v6166 = vadd.f32 %v5007, %v5008
          %v6167 = vadd.f32 %v6166, %v5009
          %v6168 = vadd.f32 %v6167, %v5010
          %v6169 = vadd.f32 %v6168, %v5011
          %v6170 = vadd.f32 %v6169, %v5012
          %v6171 = vadd.f32 %v6170, %v5013
          %v6172 = vadd.f32 %v6171, %v5014
          %v6173 = vadd.f32 %v6172, %v5015
          %v6174 = vadd.f32 %v6173, %v5016
          %v6175 = vadd.f32 %v6174, %v5017
          %v6176 = vadd.f32 %v6175, %v5018
          %v6177 = vadd.f32 %v6176, %v5019
          %v6178 = vadd.f32 %v6177, %v5020
          %v6179 = vadd.f32 %v6178, %v5021
          %v6180 = vadd.f32 %v6179, %v5022
          %v6181 = vadd.f32 %v6180, %v5023
          %v6182 = vadd.f32 %v6181, %v5024
          %v6183 = vadd.f32 %v6182, %v5025
          %v6184 = vadd.f32 %v6183, %v5026
          %v6185 = vadd.f32 %v6184, %v5027
          %v6186 = vadd.f32 %v6185, %v5028
          %v6187 = vadd.f32 %v6186, %v5029
          %v6188 = vadd.f32 %v6187, %v5030
          %v6189 = vadd.f32 %v6188, %v5031
          %v6190 = vadd.f32 %v6189, %v5032
          %v6191 = vadd.f32 %v6190, %v5033
          %v6192 = vadd.f32 %v6191, %v5034
          %v6193 = vadd.f32 %v6192, %v5035
          %v6194 = vadd.f32 %v6193, %v5036
          %v6195 = vadd.f32 %v6194, %v5037
          %v6196 = vadd.f32 %v6195, %v5038
          %v6197 = vrot.slane %v6196, 4
          %v6198 = vadd.f32 %v6196, %v6197
          %v6199 = vrot.slane %v6198, 2
          %v6200 = vadd.f32 %v6198, %v6199
          %v6201 = vrot.slane %v6200, 1
          %v6202 = vadd.f32 %v6200, %v6201
          %v6203 = vadd.f32 %v5039, %v5040
          %v6204 = vadd.f32 %v6203, %v5041
          %v6205 = vadd.f32 %v6204, %v5042
          %v6206 = vadd.f32 %v6205, %v5043
          %v6207 = vadd.f32 %v6206, %v5044
          %v6208 = vadd.f32 %v6207, %v5045
          %v6209 = vadd.f32 %v6208, %v5046
          %v6210 = vadd.f32 %v6209, %v5047
          %v6211 = vadd.f32 %v6210, %v5048
          %v6212 = vadd.f32 %v6211, %v5049
          %v6213 = vadd.f32 %v6212, %v5050
          %v6214 = vadd.f32 %v6213, %v5051
          %v6215 = vadd.f32 %v6214, %v5052
          %v6216 = vadd.f32 %v6215, %v5053
          %v6217 = vadd.f32 %v6216, %v5054
          %v6218 = vadd.f32 %v6217, %v5055
          %v6219 = vadd.f32 %v6218, %v5056
          %v6220 = vadd.f32 %v6219, %v5057
          %v6221 = vadd.f32 %v6220, %v5058
          %v6222 = vadd.f32 %v6221, %v5059
          %v6223 = vadd.f32 %v6222, %v5060
          %v6224 = vadd.f32 %v6223, %v5061
          %v6225 = vadd.f32 %v6224, %v5062
          %v6226 = vadd.f32 %v6225, %v5063
          %v6227 = vadd.f32 %v6226, %v5064
          %v6228 = vadd.f32 %v6227, %v5065
          %v6229 = vadd.f32 %v6228, %v5066
          %v6230 = vadd.f32 %v6229, %v5067
          %v6231 = vadd.f32 %v6230, %v5068
          %v6232 = vadd.f32 %v6231, %v5069
          %v6233 = vadd.f32 %v6232, %v5070
          %v6234 = vrot.slane %v6233, 4
          %v6235 = vadd.f32 %v6233, %v6234
          %v6236 = vrot.slane %v6235, 2
          %v6237 = vadd.f32 %v6235, %v6236
          %v6238 = vrot.slane %v6237, 1
          %v6239 = vadd.f32 %v6237, %v6238
          %v6240 = vadd.f32 %v5071, %v5072
          %v6241 = vadd.f32 %v6240, %v5073
          %v6242 = vadd.f32 %v6241, %v5074
          %v6243 = vadd.f32 %v6242, %v5075
          %v6244 = vadd.f32 %v6243, %v5076
          %v6245 = vadd.f32 %v6244, %v5077
          %v6246 = vadd.f32 %v6245, %v5078
          %v6247 = vadd.f32 %v6246, %v5079
          %v6248 = vadd.f32 %v6247, %v5080
          %v6249 = vadd.f32 %v6248, %v5081
          %v6250 = vadd.f32 %v6249, %v5082
          %v6251 = vadd.f32 %v6250, %v5083
          %v6252 = vadd.f32 %v6251, %v5084
          %v6253 = vadd.f32 %v6252, %v5085
          %v6254 = vadd.f32 %v6253, %v5086
          %v6255 = vadd.f32 %v6254, %v5087
          %v6256 = vadd.f32 %v6255, %v5088
          %v6257 = vadd.f32 %v6256, %v5089
          %v6258 = vadd.f32 %v6257, %v5090
          %v6259 = vadd.f32 %v6258, %v5091
          %v6260 = vadd.f32 %v6259, %v5092
          %v6261 = vadd.f32 %v6260, %v5093
          %v6262 = vadd.f32 %v6261, %v5094
          %v6263 = vadd.f32 %v6262, %v5095
          %v6264 = vadd.f32 %v6263, %v5096
          %v6265 = vadd.f32 %v6264, %v5097
          %v6266 = vadd.f32 %v6265, %v5098
          %v6267 = vadd.f32 %v6266, %v5099
          %v6268 = vadd.f32 %v6267, %v5100
          %v6269 = vadd.f32 %v6268, %v5101
          %v6270 = vadd.f32 %v6269, %v5102
          %v6271 = vrot.slane %v6270, 4
          %v6272 = vadd.f32 %v6270, %v6271
          %v6273 = vrot.slane %v6272, 2
          %v6274 = vadd.f32 %v6272, %v6273
          %v6275 = vrot.slane %v6274, 1
          %v6276 = vadd.f32 %v6274, %v6275
          %v6277 = vadd.f32 %v5103, %v5104
          %v6278 = vadd.f32 %v6277, %v5105
          %v6279 = vadd.f32 %v6278, %v5106
          %v6280 = vadd.f32 %v6279, %v5107
          %v6281 = vadd.f32 %v6280, %v5108
          %v6282 = vadd.f32 %v6281, %v5109
          %v6283 = vadd.f32 %v6282, %v5110
          %v6284 = vadd.f32 %v6283, %v5111
          %v6285 = vadd.f32 %v6284, %v5112
          %v6286 = vadd.f32 %v6285, %v5113
          %v6287 = vadd.f32 %v6286, %v5114
          %v6288 = vadd.f32 %v6287, %v5115
          %v6289 = vadd.f32 %v6288, %v5116
          %v6290 = vadd.f32 %v6289, %v5117
          %v6291 = vadd.f32 %v6290, %v5118
          %v6292 = vadd.f32 %v6291, %v5119
          %v6293 = vadd.f32 %v6292, %v5120
          %v6294 = vadd.f32 %v6293, %v5121
          %v6295 = vadd.f32 %v6294, %v5122
          %v6296 = vadd.f32 %v6295, %v5123
          %v6297 = vadd.f32 %v6296, %v5124
          %v6298 = vadd.f32 %v6297, %v5125
          %v6299 = vadd.f32 %v6298, %v5126
          %v6300 = vadd.f32 %v6299, %v5127
          %v6301 = vadd.f32 %v6300, %v5128
          %v6302 = vadd.f32 %v6301, %v5129
          %v6303 = vadd.f32 %v6302, %v5130
          %v6304 = vadd.f32 %v6303, %v5131
          %v6305 = vadd.f32 %v6304, %v5132
          %v6306 = vadd.f32 %v6305, %v5133
          %v6307 = vadd.f32 %v6306, %v5134
          %v6308 = vrot.slane %v6307, 4
          %v6309 = vadd.f32 %v6307, %v6308
          %v6310 = vrot.slane %v6309, 2
          %v6311 = vadd.f32 %v6309, %v6310
          %v6312 = vrot.slane %v6311, 1
          %v6313 = vadd.f32 %v6311, %v6312
          %v6314 = vadd.f32 %v5135, %v5136
          %v6315 = vadd.f32 %v6314, %v5137
          %v6316 = vadd.f32 %v6315, %v5138
          %v6317 = vadd.f32 %v6316, %v5139
          %v6318 = vadd.f32 %v6317, %v5140
          %v6319 = vadd.f32 %v6318, %v5141
          %v6320 = vadd.f32 %v6319, %v5142
          %v6321 = vadd.f32 %v6320, %v5143
          %v6322 = vadd.f32 %v6321, %v5144
          %v6323 = vadd.f32 %v6322, %v5145
          %v6324 = vadd.f32 %v6323, %v5146
          %v6325 = vadd.f32 %v6324, %v5147
          %v6326 = vadd.f32 %v6325, %v5148
          %v6327 = vadd.f32 %v6326, %v5149
          %v6328 = vadd.f32 %v6327, %v5150
          %v6329 = vadd.f32 %v6328, %v5151
          %v6330 = vadd.f32 %v6329, %v5152
          %v6331 = vadd.f32 %v6330, %v5153
          %v6332 = vadd.f32 %v6331, %v5154
          %v6333 = vadd.f32 %v6332, %v5155
          %v6334 = vadd.f32 %v6333, %v5156
          %v6335 = vadd.f32 %v6334, %v5157
          %v6336 = vadd.f32 %v6335, %v5158
          %v6337 = vadd.f32 %v6336, %v5159
          %v6338 = vadd.f32 %v6337, %v5160
          %v6339 = vadd.f32 %v6338, %v5161
          %v6340 = vadd.f32 %v6339, %v5162
          %v6341 = vadd.f32 %v6340, %v5163
          %v6342 = vadd.f32 %v6341, %v5164
          %v6343 = vadd.f32 %v6342, %v5165
          %v6344 = vadd.f32 %v6343, %v5166
          %v6345 = vrot.slane %v6344, 4
          %v6346 = vadd.f32 %v6344, %v6345
          %v6347 = vrot.slane %v6346, 2
          %v6348 = vadd.f32 %v6346, %v6347
          %v6349 = vrot.slane %v6348, 1
          %v6350 = vadd.f32 %v6348, %v6349
          %v6351 = vstv %s2732
          %v6352 = vadd.s32 %v6351, %v1836
          %v6353 = vadd.s32 %v6351, %v1837
          %v6354 = vadd.s32 %v6351, %v1838
          %v6355 = vadd.s32 %v6351, %v1839
          %vm6356 = vcmp.lt.s32.totalorder %v6352, 196
          %vm6357 = vcmp.lt.s32.totalorder %v6353, 196
          %vm6358 = vcmp.lt.s32.totalorder %v6354, 196
          %vm6359 = vcmp.lt.s32.totalorder %v6355, 196
          %v6360 = vsel %vm6356, 1, 0
          %v6361 = vsel %vm6357, 1, 0
          %v6362 = vsel %vm6358, 1, 0
          %v6363 = vsel %vm6359, 1, 0
          %vm6364 = vcmp.eq.s32.totalorder %v6360, 1
          %vm6365 = vcmp.eq.s32.totalorder %v6361, 1
          %vm6366 = vcmp.eq.s32.totalorder %v6362, 1
          %vm6367 = vcmp.eq.s32.totalorder %v6363, 1
          %vm6368 = vmand %vm6364, %vm2597
          %vm6369 = vmand %vm6365, %vm2597
          %vm6370 = vmand %vm6366, %vm2597
          %vm6371 = vmand %vm6367, %vm2597
          %vm6372 = vcmp.ne.s32.totalorder %v6352, %v1872
          %vm6373 = vcmp.ne.s32.totalorder %v6353, %v1872
          %vm6374 = vcmp.ne.s32.totalorder %v6354, %v1872
          %vm6375 = vcmp.ne.s32.totalorder %v6355, %v1872
          %vm6376 = vmand %vm6368, %vm6372
          %vm6377 = vmand %vm6369, %vm6373
          %vm6378 = vmand %vm6370, %vm6374
          %vm6379 = vmand %vm6371, %vm6375
          %s6380 = scalar_lea.vmem %s279, %s2732 [#allocation3]
          %v6381 = vld [vmem:[%s6380] sm:$0xff]
          %v6382 = vld [vmem:[%s6380 + $0x8] sm:$0xff]
          %v6383 = vld [vmem:[%s6380 + $0x10] sm:$0xff]
          %v6384 = vld [vmem:[%s6380 + $0x18] sm:$0xff]
          %v6385 = vadd.f32 %v5203, 1e-07
          %v6386 = vadd.f32 %v5240, 1e-07
          %v6387 = vadd.f32 %v5277, 1e-07
          %v6388 = vadd.f32 %v5314, 1e-07
          %v6389 = vadd.f32 %v5351, 1e-07
          %v6390 = vadd.f32 %v5388, 1e-07
          %v6391 = vadd.f32 %v5425, 1e-07
          %v6392 = vadd.f32 %v5462, 1e-07
          %v6393 = vadd.f32 %v5499, 1e-07
          %v6394 = vadd.f32 %v5536, 1e-07
          %v6395 = vadd.f32 %v5573, 1e-07
          %v6396 = vadd.f32 %v5610, 1e-07
          %v6397 = vadd.f32 %v5647, 1e-07
          %v6398 = vadd.f32 %v5684, 1e-07
          %v6399 = vadd.f32 %v5721, 1e-07
          %v6400 = vadd.f32 %v5758, 1e-07
          %v6401 = vadd.f32 %v5795, 1e-07
          %v6402 = vadd.f32 %v5832, 1e-07
          %v6403 = vadd.f32 %v5869, 1e-07
          %v6404 = vadd.f32 %v5906, 1e-07
          %v6405 = vadd.f32 %v5943, 1e-07
          %v6406 = vadd.f32 %v5980, 1e-07
          %v6407 = vadd.f32 %v6017, 1e-07
          %v6408 = vadd.f32 %v6054, 1e-07
          %v6409 = vadd.f32 %v6091, 1e-07
          %v6410 = vadd.f32 %v6128, 1e-07
          %v6411 = vadd.f32 %v6165, 1e-07
          %v6412 = vadd.f32 %v6202, 1e-07
          %v6413 = vadd.f32 %v6239, 1e-07
          %v6414 = vadd.f32 %v6276, 1e-07
          %v6415 = vadd.f32 %v6313, 1e-07
          %v6416 = vadd.f32 %v6350, 1e-07
          %v6417 = vlog2.pop %v6385
          %v6418 = vmul.f32 %v6417, 0.6931472
          %v6419 = vlog2.pop %v6386
          %v6420 = vmul.f32 %v6419, 0.6931472
          %v6421 = vlog2.pop %v6387
          %v6422 = vmul.f32 %v6421, 0.6931472
          %v6423 = vlog2.pop %v6388
          %v6424 = vmul.f32 %v6423, 0.6931472
          %v6425 = vlog2.pop %v6389
          %v6426 = vmul.f32 %v6425, 0.6931472
          %v6427 = vlog2.pop %v6390
          %v6428 = vmul.f32 %v6427, 0.6931472
          %v6429 = vlog2.pop %v6391
          %v6430 = vmul.f32 %v6429, 0.6931472
          %v6431 = vlog2.pop %v6392
          %v6432 = vmul.f32 %v6431, 0.6931472
          %v6433 = vlog2.pop %v6393
          %v6434 = vmul.f32 %v6433, 0.6931472
          %v6435 = vlog2.pop %v6394
          %v6436 = vmul.f32 %v6435, 0.6931472
          %v6437 = vlog2.pop %v6395
          %v6438 = vmul.f32 %v6437, 0.6931472
          %v6439 = vlog2.pop %v6396
          %v6440 = vmul.f32 %v6439, 0.6931472
          %v6441 = vlog2.pop %v6397
          %v6442 = vmul.f32 %v6441, 0.6931472
          %v6443 = vlog2.pop %v6398
          %v6444 = vmul.f32 %v6443, 0.6931472
          %v6445 = vlog2.pop %v6399
          %v6446 = vmul.f32 %v6445, 0.6931472
          %v6447 = vlog2.pop %v6400
          %v6448 = vmul.f32 %v6447, 0.6931472
          %v6449 = vlog2.pop %v6401
          %v6450 = vmul.f32 %v6449, 0.6931472
          %v6451 = vlog2.pop %v6402
          %v6452 = vmul.f32 %v6451, 0.6931472
          %v6453 = vlog2.pop %v6403
          %v6454 = vmul.f32 %v6453, 0.6931472
          %v6455 = vlog2.pop %v6404
          %v6456 = vmul.f32 %v6455, 0.6931472
          %v6457 = vlog2.pop %v6405
          %v6458 = vmul.f32 %v6457, 0.6931472
          %v6459 = vlog2.pop %v6406
          %v6460 = vmul.f32 %v6459, 0.6931472
          %v6461 = vlog2.pop %v6407
          %v6462 = vmul.f32 %v6461, 0.6931472
          %v6463 = vlog2.pop %v6408
          %v6464 = vmul.f32 %v6463, 0.6931472
          %v6465 = vlog2.pop %v6409
          %v6466 = vmul.f32 %v6465, 0.6931472
          %v6467 = vlog2.pop %v6410
          %v6468 = vmul.f32 %v6467, 0.6931472
          %v6469 = vlog2.pop %v6411
          %v6470 = vmul.f32 %v6469, 0.6931472
          %v6471 = vlog2.pop %v6412
          %v6472 = vmul.f32 %v6471, 0.6931472
          %v6473 = vlog2.pop %v6413
          %v6474 = vmul.f32 %v6473, 0.6931472
          %v6475 = vlog2.pop %v6414
          %v6476 = vmul.f32 %v6475, 0.6931472
          %v6477 = vlog2.pop %v6415
          %v6478 = vmul.f32 %v6477, 0.6931472
          %v6479 = vlog2.pop %v6416
          %v6480 = vmul.f32 %v6479, 0.6931472
          %vm6513 = vcmask 1041409
          %v6514 = vsel %vm6513, %v6420, %v6418
          %vm6515 = vcmask 1042434
          %v6516 = vsel %vm6515, %v6422, %v6514
          %vm6517 = vcmask 1043459
          %v6518 = vsel %vm6517, %v6424, %v6516
          %vm6519 = vcmask 1044484
          %v6520 = vsel %vm6519, %v6426, %v6518
          %vm6521 = vcmask 1045509
          %v6522 = vsel %vm6521, %v6428, %v6520
          %vm6523 = vcmask 1046534
          %v6524 = vsel %vm6523, %v6430, %v6522
          %vm6525 = vcmask 1047559
          %v6526 = vsel %vm6525, %v6432, %v6524
          %v6527 = vsel %vm6513, %v6436, %v6434
          %v6528 = vsel %vm6515, %v6438, %v6527
          %v6529 = vsel %vm6517, %v6440, %v6528
          %v6530 = vsel %vm6519, %v6442, %v6529
          %v6531 = vsel %vm6521, %v6444, %v6530
          %v6532 = vsel %vm6523, %v6446, %v6531
          %v6533 = vsel %vm6525, %v6448, %v6532
          %v6534 = vsel %vm6513, %v6452, %v6450
          %v6535 = vsel %vm6515, %v6454, %v6534
          %v6536 = vsel %vm6517, %v6456, %v6535
          %v6537 = vsel %vm6519, %v6458, %v6536
          %v6538 = vsel %vm6521, %v6460, %v6537
          %v6539 = vsel %vm6523, %v6462, %v6538
          %v6540 = vsel %vm6525, %v6464, %v6539
          %v6541 = vsel %vm6513, %v6468, %v6466
          %v6542 = vsel %vm6515, %v6470, %v6541
          %v6543 = vsel %vm6517, %v6472, %v6542
          %v6544 = vsel %vm6519, %v6474, %v6543
          %v6545 = vsel %vm6521, %v6476, %v6544
          %v6546 = vsel %vm6523, %v6478, %v6545
          %v6547 = vsel %vm6525, %v6480, %v6546
          %v6552 = vsel %vm6376, %v6526, 0.0
          %v6553 = vsel %vm6377, %v6533, 0.0
          %v6554 = vsel %vm6378, %v6540, 0.0
          %v6555 = vsel %vm6379, %v6547, 0.0
          %v6556 = vsub.f32 %v6381, %v6552
          %v6557 = vsub.f32 %v6382, %v6553
          %v6558 = vsub.f32 %v6383, %v6554
          %v6559 = vsub.f32 %v6384, %v6555
          %6560 = vst [vmem:[%s6380] sm:$0xff] %v6556
          %6561 = vst [vmem:[%s6380 + $0x8] sm:$0xff] %v6557
          %6562 = vst [vmem:[%s6380 + $0x10] sm:$0xff] %v6558
          %6563 = vst [vmem:[%s6380 + $0x18] sm:$0xff] %v6559
        $region79: #{tpu_custom_call.1} parent=69 // loop_footer
          %s2731 = sadd.s32 1, %s2727
        $region80: #{tpu_custom_call.1} parent=69 // loop_footer_branch
          %2726 = sbr.rel target = $region76
        $region81: #{tpu_custom_call.1} parent=69 // loop_exit
          _
        %s6564 = sand.u32 %s142, 1
        %s6565 = scalar_lea.sflag [#allocation4], %s6564
        %s6566 = sand.u32 %s142, 1
        %s6567 = smul.addr %s6566, 256
        %s6568 = scalar_lea.vmem [#allocation3], %s6567
        // Predicated region
        $region82: #{tpu_custom_call.1} parent=69 // pred_check
          %p6569 = pneg %p152
        $region83: #{tpu_custom_call.1} parent=69 // pred_check_branch
          %6571 = sbr.rel (%p6569) target = $region85
        $region84: #{tpu_custom_call.1} parent=69 // pred_region
          %6573 = vsyncadd %s6565, 0
          %s6574 = smul.addr %s19, 8
          %s6575 = scalar_lea.hbm %s5, %s6574
          %s6576 = sshll.u32 %s6568, 4
          %s6577 = int_to_ptr.vmem [resolvable:$true] %s6576
          %s6578 = sshll.u32 %s6575, 4
          %s6579 = int_to_ptr.hbm [resolvable:$true] %s6578
          %6584 = dma.vmem_to_hbm [thread:$0]  %s6577, 4096, %s6579, %s6565, 128, 256, 8
        $region85: #{tpu_custom_call.1} parent=69 // pred_fallthru
          _
      $region70: #{tpu_custom_call.1} parent=5 // pred_fallthru
        _
      %p6585 = scmp.le.s32.totalorder 2, %s14
      // Predicated region
      $region86: #{tpu_custom_call.1} parent=5 // pred_check
        %p6586 = pneg %p6585
      $region87: #{tpu_custom_call.1} parent=5 // pred_check_branch
        %6588 = sbr.rel (%p6586) target = $region89
      $region88: #{tpu_custom_call.1} parent=5 // pred_region
        %s6589 = ssub.s32 %s14, 2
        // Predicated region
        $region90: #{tpu_custom_call.1} parent=88 // pred_check
          %p6590 = pneg %p158
        $region91: #{tpu_custom_call.1} parent=88 // pred_check_branch
          %6592 = sbr.rel (%p6590) target = $region93
        $region92: #{tpu_custom_call.1} parent=88 // pred_region
          %s6593 = sand.u32 %s143, 1
          %s6594 = scalar_lea.sflag [#allocation4], %s6593
          %s6595 = sand.u32 %s143, 1
          %s6596 = smul.addr %s6595, 256
          %s6597 = scalar_lea.vmem [#allocation3], %s6596
          %6599 = dma.done %s6594, 4096
        $region93: #{tpu_custom_call.1} parent=88 // pred_fallthru
          _
      $region89: #{tpu_custom_call.1} parent=5 // pred_fallthru
        _
    $region6: #{tpu_custom_call.1} parent=1 // loop_footer
      %s18 = sadd.s32 1, %s14
    $region7: #{tpu_custom_call.1} parent=1 // loop_footer_branch
      %13 = sbr.rel target = $region3
    $region8: #{tpu_custom_call.1} parent=1 // loop_exit
      _
    %6600 = vsyncpa [#allocation4], 1
    %s6601 = scalar_lea.sflag [#allocation4], 1
    %6602 = vsyncpa %s6601, 1

</llo_original>
